<compile_context>
chip_gen: v6e
topology: v6e:2x2x1
jax: 0.10.0
libtpu: 0.0.40
codegen_flags: <defaults>
</compile_context>

<pallas_src>
import functools
import math

import jax
import jax.numpy as jnp
from jax.experimental import pallas as pl
from jax.experimental.pallas import tpu as pltpu


_VMEM_LIMIT = 64 * 1024 * 1024          # explicit scoped-VMEM budget (safe on v5e/v6e/v7x)
_LANE_TILES = (512, 256, 128)           # last-dim (lane) tile candidates
_SUB_TILES = (512, 256, 128, 64, 32, 16, 8)   # second-to-last (sublane) candidates
_K_TILES = (512, 256)                   # reduction tile candidates (128-multiples)


def _pick(dim, candidates):
    """Largest candidate tile that divides `dim`, else the full extent."""
    for c in candidates:
        if c <= dim and dim % c == 0:
            return c
    return dim


def _cparams(semantics):
    return pltpu.CompilerParams(dimension_semantics=semantics,
                                vmem_limit_bytes=_VMEM_LIMIT)


def _gelu_tanh(x):
    # tanh-approximate GELU (matches torch GELU(approximate='tanh')).
    return 0.5 * x * (1.0 + jnp.tanh(0.7978845608028654 *
                                     (x + 0.044715 * x * x * x)))


# ----------------------------------------------------------------------------
# Kernel 1: plain tiled linear  (M, N, K) grid, f32 accumulator, bf16 MXU inputs
# ----------------------------------------------------------------------------
def _linear_kernel(x_ref, w_ref, b_ref, o_ref, acc_ref, *, activation):
    @pl.when(pl.program_id(2) == 0)
    def _():
        acc_ref[...] = jnp.zeros_like(acc_ref)

    acc_ref[...] += jnp.dot(x_ref[...].astype(jnp.bfloat16), w_ref[...],
                            preferred_element_type=jnp.float32)

    @pl.when(pl.program_id(2) == pl.num_programs(2) - 1)
    def _():
        y = acc_ref[...] + b_ref[...]
        if activation == "gelu":
            y = _gelu_tanh(y)
        o_ref[...] = y.astype(o_ref.dtype)


def pallas_linear(x, w, b, activation=None):
    """x: (..., K) @ w(bf16): (K, N) + b: (N,) -> (..., N) f32."""
    orig = x.shape
    K = orig[-1]
    N = w.shape[1]
    x2 = x.reshape(-1, K)
    M = x2.shape[0]
    TM = _pick(M, _SUB_TILES)
    TN = _pick(N, _LANE_TILES)
    TK = _pick(K, _K_TILES)
    out = pl.pallas_call(
        functools.partial(_linear_kernel, activation=activation),
        out_shape=jax.ShapeDtypeStruct((M, N), jnp.float32),
        grid=(M // TM, N // TN, K // TK),
        in_specs=[
            pl.BlockSpec((TM, TK), lambda i, j, k: (i, k)),
            pl.BlockSpec((TK, TN), lambda i, j, k: (k, j)),
            pl.BlockSpec((1, TN), lambda i, j, k: (0, j)),
        ],
        out_specs=pl.BlockSpec((TM, TN), lambda i, j, k: (i, j)),
        scratch_shapes=[pltpu.VMEM((TM, TN), jnp.float32)],
        compiler_params=_cparams(("parallel", "parallel", "arbitrary")),
    )(x2, w, b.reshape(1, N))
    return out.reshape(orig[:-1] + (N,))


# ----------------------------------------------------------------------------
# Kernel 2: fused LayerNorm + adaLN-modulate + linear (+ optional gelu)
#   layout (B, N, K) with per-batch (B, 1, K) shift/scale; K un-tiled.
# ----------------------------------------------------------------------------
def _ln_mod_linear_kernel(x_ref, sh_ref, sc_ref, w_ref, b_ref, o_ref, *, activation):
    x = x_ref[0]                                            # (TN, K) f32
    mu = jnp.mean(x, axis=-1, keepdims=True)
    var = jnp.mean(jnp.square(x - mu), axis=-1, keepdims=True)
    xn = (x - mu) * jax.lax.rsqrt(var + 1e-6)               # DiT convention eps=1e-6
    xm = xn * (1.0 + sc_ref[0]) + sh_ref[0]
    y = jnp.dot(xm.astype(jnp.bfloat16), w_ref[...],
                preferred_element_type=jnp.float32) + b_ref[...]
    if activation == "gelu":
        y = _gelu_tanh(y)
    o_ref[0] = y.astype(o_ref.dtype)


def pallas_ln_mod_linear(x, shift, scale, w, b, activation=None):
    """out = ((1+scale)*LN(x)+shift) @ w + b ; x:(B,N,K), shift/scale:(B,1,K)."""
    B, N, K = x.shape
    O = w.shape[1]
    TN = _pick(N, _SUB_TILES)
    TO = _pick(O, _LANE_TILES)
    return pl.pallas_call(
        functools.partial(_ln_mod_linear_kernel, activation=activation),
        out_shape=jax.ShapeDtypeStruct((B, N, O), jnp.float32),
        grid=(B, N // TN, O // TO),
        in_specs=[
            pl.BlockSpec((1, TN, K), lambda b_, i, j: (b_, i, 0)),
            pl.BlockSpec((1, 1, K), lambda b_, i, j: (b_, 0, 0)),
            pl.BlockSpec((1, 1, K), lambda b_, i, j: (b_, 0, 0)),
            pl.BlockSpec((K, TO), lambda b_, i, j: (0, j)),
            pl.BlockSpec((1, TO), lambda b_, i, j: (0, j)),
        ],
        out_specs=pl.BlockSpec((1, TN, TO), lambda b_, i, j: (b_, i, j)),
        compiler_params=_cparams(("parallel", "parallel", "parallel")),
    )(x, shift, scale, w, b.reshape(1, O))


# ----------------------------------------------------------------------------
# Kernel 3: linear + gated residual epilogue:  out = residual + gate * (x@w + b)
# ----------------------------------------------------------------------------
def _gated_res_linear_kernel(x_ref, w_ref, b_ref, g_ref, r_ref, o_ref):
    y = jnp.dot(x_ref[0].astype(jnp.bfloat16), w_ref[...],
                preferred_element_type=jnp.float32) + b_ref[...]
    o_ref[0] = (r_ref[0] + g_ref[0] * y).astype(o_ref.dtype)


def pallas_gated_residual_linear(x, w, b, gate, residual):
    """x:(B,N,K), gate:(B,1,O), residual:(B,N,O)."""
    B, N, K = x.shape
    O = w.shape[1]
    TN = _pick(N, _SUB_TILES)
    TO = _pick(O, _LANE_TILES)
    return pl.pallas_call(
        _gated_res_linear_kernel,
        out_shape=jax.ShapeDtypeStruct((B, N, O), jnp.float32),
        grid=(B, N // TN, O // TO),
        in_specs=[
            pl.BlockSpec((1, TN, K), lambda b_, i, j: (b_, i, 0)),
            pl.BlockSpec((K, TO), lambda b_, i, j: (0, j)),
            pl.BlockSpec((1, TO), lambda b_, i, j: (0, j)),
            pl.BlockSpec((1, 1, TO), lambda b_, i, j: (b_, 0, j)),
            pl.BlockSpec((1, TN, TO), lambda b_, i, j: (b_, i, j)),
        ],
        out_specs=pl.BlockSpec((1, TN, TO), lambda b_, i, j: (b_, i, j)),
        compiler_params=_cparams(("parallel", "parallel", "parallel")),
    )(x, w, b.reshape(1, O), gate, residual)


# ----------------------------------------------------------------------------
# Kernel 4: fused attention with in-kernel RoPE and two KV segments
#   (image keys/values + condition keys/values, no HBM concat).
#   RoPE rotate-half is expressed as x*cos + (x @ R)*sin with a tiny (dh,dh)
#   rotation matrix R = [[0, I], [-I, 0]] (no lane shuffles needed).
# ----------------------------------------------------------------------------
def _attn_rope_kernel(q_ref, ki_ref, kc_ref, vi_ref, vc_ref,
                      cq_ref, sq_ref, ck_ref, sk_ref, rot_ref, o_ref, *, scale):
    rot = rot_ref[...]                                       # (dh, dh) f32

    def rope(x, c, s):
        xr = jnp.dot(x, rot, preferred_element_type=jnp.float32)
        return x * c + xr * s

    q = rope(q_ref[0] * scale, cq_ref[...], sq_ref[...]).astype(jnp.bfloat16)
    ki = rope(ki_ref[0], ck_ref[...], sk_ref[...]).astype(jnp.bfloat16)
    kc = rope(kc_ref[0], ck_ref[...], sk_ref[...]).astype(jnp.bfloat16)

    dims = (((1,), (1,)), ((), ()))                          # contract head_dim
    s1 = jax.lax.dot_general(q, ki, dims, preferred_element_type=jnp.float32)
    s2 = jax.lax.dot_general(q, kc, dims, preferred_element_type=jnp.float32)
    m = jnp.maximum(jnp.max(s1, axis=-1, keepdims=True),
                    jnp.max(s2, axis=-1, keepdims=True))
    p1 = jnp.exp(s1 - m)
    p2 = jnp.exp(s2 - m)
    denom = jnp.sum(p1, axis=-1, keepdims=True) + jnp.sum(p2, axis=-1, keepdims=True)
    acc = jnp.dot(p1.astype(jnp.bfloat16), vi_ref[0].astype(jnp.bfloat16),
                  preferred_element_type=jnp.float32)
    acc = acc + jnp.dot(p2.astype(jnp.bfloat16), vc_ref[0].astype(jnp.bfloat16),
                        preferred_element_type=jnp.float32)
    o_ref[0] = (acc * pl.reciprocal(denom, approx=True)).astype(o_ref.dtype)


def pallas_attention_rope(q, k_img, k_cond, v_img, v_cond, cos, sin, rot):
    """q:(BH,Nq,dh); k/v img and cond:(BH,Nk,dh); cos/sin:(Nk,dh); rot:(dh,dh)."""
    BH, Nq, dh = q.shape
    Nk = k_img.shape[1]
    assert k_cond.shape[1] == Nk, "condition tokens must share the image patch grid"
    scale = 1.0 / math.sqrt(dh)
    TQ = _pick(Nq, _SUB_TILES)
    return pl.pallas_call(
        functools.partial(_attn_rope_kernel, scale=scale),
        out_shape=jax.ShapeDtypeStruct((BH, Nq, dh), jnp.float32),
        grid=(BH, Nq // TQ),
        in_specs=[
            pl.BlockSpec((1, TQ, dh), lambda b_, i: (b_, i, 0)),
            pl.BlockSpec((1, Nk, dh), lambda b_, i: (b_, 0, 0)),
            pl.BlockSpec((1, Nk, dh), lambda b_, i: (b_, 0, 0)),
            pl.BlockSpec((1, Nk, dh), lambda b_, i: (b_, 0, 0)),
            pl.BlockSpec((1, Nk, dh), lambda b_, i: (b_, 0, 0)),
            pl.BlockSpec((TQ, dh), lambda b_, i: (i, 0)),    # cos for query tile
            pl.BlockSpec((TQ, dh), lambda b_, i: (i, 0)),    # sin for query tile
            pl.BlockSpec((Nk, dh), lambda b_, i: (0, 0)),    # cos for keys (full)
            pl.BlockSpec((Nk, dh), lambda b_, i: (0, 0)),    # sin for keys (full)
            pl.BlockSpec((dh, dh), lambda b_, i: (0, 0)),    # rotate-half matrix
        ],
        out_specs=pl.BlockSpec((1, TQ, dh), lambda b_, i: (b_, i, 0)),
        compiler_params=_cparams(("parallel", "parallel")),
    )(q, k_img, k_cond, v_img, v_cond, cos, sin, cos, sin, rot)


# ----------------------------------------------------------------------------
# JAX glue (embeddings, RoPE tables, head reshapes, unpatchify)
# ----------------------------------------------------------------------------
def sinusoidal_pe(t, dim=256, max_period=10000.0):
    half = dim // 2
    freqs = jnp.exp(-math.log(max_period) * jnp.arange(half, dtype=jnp.float32) / half)
    args = t.astype(jnp.float32)[:, None] * freqs[None, :]
    return jnp.concatenate([jnp.cos(args), jnp.sin(args)], axis=-1)


def rope2d(img_ids, dim_head, base):
    """2-axis rotary tables in rotate-half layout: cos/sin of shape (N, dim_head).

    Equivalent to interleaved-pair RoPE up to a fixed channel permutation of the
    (learned) q/k projection, which is applied identically to q and all keys.
    """
    n_axes = img_ids.shape[-1]
    d_ax = dim_head // n_axes
    cos_l, sin_l = [], []
    for ax in range(n_axes):
        pos = img_ids[:, ax].astype(jnp.float32)
        freqs = 1.0 / (base ** (jnp.arange(0, d_ax, 2, dtype=jnp.float32) / d_ax))
        ang = pos[:, None] * freqs[None, :]
        cos_l.append(jnp.cos(ang))
        sin_l.append(jnp.sin(ang))
    cos_h = jnp.concatenate(cos_l, -1)          # (N, dh//2)
    sin_h = jnp.concatenate(sin_l, -1)
    cos = jnp.concatenate([cos_h, cos_h], -1)   # (N, dh)
    sin = jnp.concatenate([sin_h, sin_h], -1)
    return cos, sin


def patch_embed(x, w, b, patch):
    """NCHW conv(kernel=stride=patch) as patch-gather + tiled Pallas matmul."""
    B, C, H, W = x.shape
    p = patch
    nh, nw = H // p, W // p
    xp = x.reshape(B, C, nh, p, nw, p)
    xp = jnp.transpose(xp, (0, 2, 4, 1, 3, 5)).reshape(B, nh * nw, C * p * p)
    return pallas_linear(xp, w, b)                       # (B, N, D)


def unpatchify(x, p, c):
    B, N, _ = x.shape
    h = w = int(math.sqrt(N))
    x = x.reshape(B, h, w, p, p, c)
    x = jnp.einsum("nhwpqc->nchpwq", x)
    return x.reshape(B, c, h * p, w * p)


# ----------------------------------------------------------------------------
# DiT blocks
# ----------------------------------------------------------------------------
def stream_block(img, cond, mods, cos, sin, rot, w, num_heads):
    # TODO(synk): StreamBlock source not provided; canonical single-stream
    # DiT/Flux block (adaLN-modulated attention over img+cond tokens, then MLP).
    B, N, H = img.shape
    dh = H // num_heads
    sh1, sc1, g1, sh2, sc2, g2 = mods

    # attention path: fused LN+modulate+qkv matmul, plain cond_kv matmul
    qkv = pallas_ln_mod_linear(img, sh1, sc1, *w["qkv"])          # (B, N, 3H)
    q, k, v = jnp.split(qkv, 3, axis=-1)
    ckv = pallas_linear(cond, *w["cond_kv"])                      # (B, N, 2H)
    ck, cv = jnp.split(ckv, 2, axis=-1)

    def heads(a):
        return (a.reshape(B, -1, num_heads, dh)
                 .transpose(0, 2, 1, 3)
                 .reshape(B * num_heads, -1, dh))

    qh, kh, vh, ckh, cvh = map(heads, (q, k, v, ck, cv))
    attn = pallas_attention_rope(qh, kh, ckh, vh, cvh, cos, sin, rot)
    attn = (attn.reshape(B, num_heads, N, dh)
                .transpose(0, 2, 1, 3)
                .reshape(B, N, H))

    img = pallas_gated_residual_linear(attn, *w["proj"], gate=g1, residual=img)

    # MLP path: fused LN+modulate+matmul+gelu, then matmul+gate+residual
    h = pallas_ln_mod_linear(img, sh2, sc2, *w["mlp1"], activation="gelu")
    img = pallas_gated_residual_linear(h, *w["mlp2"], gate=g2, residual=img)
    return img


def dit_forward(params, cfg, x, timesteps, condition):
    H = cfg["hidden"]
    num_heads = cfg["num_heads"]
    p = cfg["patch"]
    depth = cfg["depth"]
    cos, sin = params["pe"]
    rot = params["rope_rot"]

    # timesteps -> sinusoidal PE -> MLPEmbedder
    temb = sinusoidal_pe(timesteps.astype(jnp.float32), dim=256)
    t = pallas_linear(temb, *params["time_in1"])
    t = jax.nn.silu(t)
    t = pallas_linear(t, *params["time_in2"])                       # (B, H)
    st = jax.nn.silu(t)

    # all per-block modulations + final adaLN in ONE batched matmul
    mod_all = pallas_linear(st, *params["mod_all"])                 # (B, 6H*depth + 2H)

    img = patch_embed(x, params["patch_w"], params["patch_b"], p)
    cond = patch_embed(condition, params["cond_w"], params["cond_b"], p)

    for d, blk in enumerate(params["blocks"]):
        m = mod_all[:, d * 6 * H:(d + 1) * 6 * H]
        mods = tuple(c[:, None, :] for c in jnp.split(m, 6, axis=-1))
        img = stream_block(img, cond, mods, cos, sin, rot, blk, num_heads)

    # final layer: adaLN modulate -> linear (fused) -> unpatchify
    fmod = mod_all[:, depth * 6 * H:]
    fshift, fscale = (c[:, None, :] for c in jnp.split(fmod, 2, axis=-1))
    y = pallas_ln_mod_linear(img, fshift, fscale, *params["final_linear"])
    return unpatchify(y, p, cfg["out_ch"])


# ----------------------------------------------------------------------------
# Deterministic parameter init (weights stored bf16 for the MXU, biases f32)
# ----------------------------------------------------------------------------
def init_linear(key, in_dim, out_dim, scale=0.02):
    kw, kb = jax.random.split(key)
    w = (jax.random.normal(kw, (in_dim, out_dim), jnp.float32) * scale).astype(jnp.bfloat16)
    b = jax.random.normal(kb, (out_dim,), jnp.float32) * scale
    return w, b


def init_params(key, cfg):
    H = cfg["hidden"]
    C = cfg["in_ch"]
    p = cfg["patch"]
    nh = cfg["input_size"] // p
    dh = H // cfg["num_heads"]
    depth = cfg["depth"]

    keys = jax.random.split(key, 8 + depth)
    params = {}

    # img_ids (patch-grid row/col) -> RoPE tables + rotate-half matrix
    rows, cols = jnp.meshgrid(jnp.arange(nh), jnp.arange(nh), indexing="ij")
    img_ids = jnp.stack([rows, cols], axis=-1).reshape(-1, 2)
    params["pe"] = rope2d(img_ids, dh, cfg["base"])

    half = dh // 2
    eye = jnp.eye(half, dtype=jnp.float32)
    zero = jnp.zeros((half, half), jnp.float32)
    params["rope_rot"] = jnp.concatenate(
        [jnp.concatenate([zero, eye], axis=1),
         jnp.concatenate([-eye, zero], axis=1)], axis=0)            # (dh, dh)

    # patch / condition embedders (conv weight pre-flattened to matmul layout)
    params["patch_w"], params["patch_b"] = init_linear(keys[0], C * p * p, H)
    params["cond_w"], params["cond_b"] = init_linear(keys[1], C * p * p, H)

    # time MLP embedder
    params["time_in1"] = init_linear(keys[2], 256, H)
    params["time_in2"] = init_linear(keys[3], H, H)

    # stream blocks (+ batched modulation weights)
    blocks, mod_ws, mod_bs = [], [], []
    for d in range(depth):
        bk = jax.random.split(keys[8 + d], 6)
        mw, mb = init_linear(bk[0], H, 6 * H)
        mod_ws.append(mw)
        mod_bs.append(mb)
        blocks.append({
            "qkv": init_linear(bk[1], H, 3 * H),
            "cond_kv": init_linear(bk[2], H, 2 * H),
            "proj": init_linear(bk[3], H, H),
            "mlp1": init_linear(bk[4], H, 4 * H),
            "mlp2": init_linear(bk[5], 4 * H, H),
        })
    params["blocks"] = blocks

    # final adaLN appended to the batched modulation matmul
    fw, fb = init_linear(keys[4], H, 2 * H)
    mod_ws.append(fw)
    mod_bs.append(fb)
    params["mod_all"] = (jnp.concatenate(mod_ws, axis=1),
                         jnp.concatenate(mod_bs, axis=0))

    params["final_linear"] = init_linear(keys[5], H, p * p * cfg["out_ch"])
    return params


# ----------------------------------------------------------------------------
if __name__ == "__main__":
    cfg = dict(
        input_size=16, patch=2, hidden=32, in_ch=4, out_ch=4,
        num_heads=4, base=10000, depth=2,
    )

    root = jax.random.PRNGKey(0)
    kparam, kx, kt, kc = jax.random.split(root, 4)
    params = init_params(kparam, cfg)

    x = jax.random.normal(kx, (2, 4, 16, 16), jnp.float32)          # NCHW
    timesteps = jax.random.uniform(kt, (2,), jnp.float32)
    condition = jax.random.normal(kc, (2, 4, 16, 16), jnp.float32)  # NCHW

    fwd = jax.jit(functools.partial(dit_forward, params, cfg))
    out = fwd(x, timesteps, condition)
    jax.block_until_ready(out)

    assert out.shape == (2, 4, 16, 16), out.shape
    assert out.dtype == jnp.float32
    assert bool(jnp.all(jnp.isfinite(out)))
    print("KERNEL_OK")
</pallas_src>

<mosaic_0001>
module attributes {stable_mosaic.version = 11 : i64} {
  func.func @_linear_kernel(%arg0: i32, %arg1: i32, %arg2: i32, %arg3: memref<2x256xf32, #tpu.memory_space<vmem>>, %arg4: memref<256x32xbf16, #tpu.memory_space<vmem>>, %arg5: memref<1x32xf32, #tpu.memory_space<vmem>>, %arg6: memref<2x32xf32, #tpu.memory_space<vmem>>, %arg7: memref<2x32xf32, #tpu.memory_space<vmem>>) attributes {dimension_semantics = [#tpu.dimension_semantics<parallel>, #tpu.dimension_semantics<parallel>, #tpu.dimension_semantics<arbitrary>], iteration_bounds = array<i64: 1, 1, 1>, scalar_prefetch = 0 : i64, scratch_operands = 1 : i64, tpu.core_type = #tpu.core_type<tc>, window_params = [{transform_indices = @transform_0, window_bounds = array<i64: 2, 256>}, {transform_indices = @transform_1, window_bounds = array<i64: 256, 32>}, {transform_indices = @transform_2, window_bounds = array<i64: 1, 32>}, {transform_indices = @transform_3, window_bounds = array<i64: 2, 32>}]} {
    %c0_i32 = arith.constant 0 : i32
    %0 = arith.cmpi eq, %arg2, %c0_i32 : i32
    %1 = arith.extui %0 : i1 to i32
    %c0_i32_0 = arith.constant 0 : i32
    %2 = arith.cmpi ne, %1, %c0_i32_0 : i32
    scf.if %2 {
      %cst_10 = arith.constant 0.000000e+00 : f32
      %13 = vector.broadcast %cst_10 : f32 to vector<2x32xf32>
      %c0_11 = arith.constant 0 : index
      %c0_12 = arith.constant 0 : index
      %14 = vector.load %arg7[%c0_11, %c0_12] : memref<2x32xf32, #tpu.memory_space<vmem>>, vector<2x32xf32>
      tpu.vector_store %arg7[%c0_11, %c0_12], %13 {strides = array<i32>} : memref<2x32xf32, #tpu.memory_space<vmem>>, vector<2x32xf32>,
    } else {
    }
    %c0 = arith.constant 0 : index
    %c0_1 = arith.constant 0 : index
    %3 = vector.load %arg7[%c0, %c0_1] : memref<2x32xf32, #tpu.memory_space<vmem>>, vector<2x32xf32>
    %c0_2 = arith.constant 0 : index
    %c0_3 = arith.constant 0 : index
    %4 = vector.load %arg3[%c0_2, %c0_3] : memref<2x256xf32, #tpu.memory_space<vmem>>, vector<2x256xf32>
    %5 = arith.truncf %4 : vector<2x256xf32> to vector<2x256xbf16>
    %c0_4 = arith.constant 0 : index
    %c0_5 = arith.constant 0 : index
    %6 = vector.load %arg4[%c0_4, %c0_5] : memref<256x32xbf16, #tpu.memory_space<vmem>>, vector<256x32xbf16>
    %cst = arith.constant dense<0.000000e+00> : vector<2x32xf32>
    %7 = tpu.matmul %5, %6, %cst {dimension_numbers = #tpu.dot_dimension_numbers<[1], [0], [0], [1], [0, 0, 1, 1], [], []>} : vector<2x256xbf16>, vector<256x32xbf16>, vector<2x32xf32> -> vector<2x32xf32>
    %8 = arith.addf %3, %7 : vector<2x32xf32>
    %c0_6 = arith.constant 0 : index
    %c0_7 = arith.constant 0 : index
    %9 = vector.load %arg7[%c0_6, %c0_7] : memref<2x32xf32, #tpu.memory_space<vmem>>, vector<2x32xf32>
    tpu.vector_store %arg7[%c0_6, %c0_7], %8 {strides = array<i32>} : memref<2x32xf32, #tpu.memory_space<vmem>>, vector<2x32xf32>,
    %c0_i32_8 = arith.constant 0 : i32
    %10 = arith.cmpi eq, %arg2, %c0_i32_8 : i32
    %11 = arith.extui %10 : i1 to i32
    %c0_i32_9 = arith.constant 0 : i32
    %12 = arith.cmpi ne, %11, %c0_i32_9 : i32
    scf.if %12 {
      %c0_10 = arith.constant 0 : index
      %c0_11 = arith.constant 0 : index
      %13 = vector.load %arg7[%c0_10, %c0_11] : memref<2x32xf32, #tpu.memory_space<vmem>>, vector<2x32xf32>
      %c0_12 = arith.constant 0 : index
      %c0_13 = arith.constant 0 : index
      %14 = vector.load %arg5[%c0_12, %c0_13] : memref<1x32xf32, #tpu.memory_space<vmem>>, vector<1x32xf32>
      %15 = vector.broadcast %14 : vector<1x32xf32> to vector<2x32xf32>
      %16 = arith.addf %13, %15 : vector<2x32xf32>
      %c0_14 = arith.constant 0 : index
      %c0_15 = arith.constant 0 : index
      %17 = vector.load %arg6[%c0_14, %c0_15] : memref<2x32xf32, #tpu.memory_space<vmem>>, vector<2x32xf32>
      tpu.vector_store %arg6[%c0_14, %c0_15], %16 {strides = array<i32>} : memref<2x32xf32, #tpu.memory_space<vmem>>, vector<2x32xf32>,
    } else {
    }
    return
  }
  func.func @transform_0(%arg0: i32, %arg1: i32, %arg2: i32) -> (i32, i32) {
    %c0_i32 = arith.constant 0 : i32
    return %arg0, %arg2 : i32, i32
  }
  func.func @transform_1(%arg0: i32, %arg1: i32, %arg2: i32) -> (i32, i32) {
    %c0_i32 = arith.constant 0 : i32
    return %arg2, %arg1 : i32, i32
  }
  func.func @transform_2(%arg0: i32, %arg1: i32, %arg2: i32) -> (i32, i32) {
    %c0_i32 = arith.constant 0 : i32
    %c0_i32_0 = arith.constant 0 : i32
    return %c0_i32, %arg1 : i32, i32
  }
  func.func @transform_3(%arg0: i32, %arg1: i32, %arg2: i32) -> (i32, i32) {
    %c0_i32 = arith.constant 0 : i32
    return %arg0, %arg1 : i32, i32
  }
}

module attributes {stable_mosaic.version = 11 : i64} {
  func.func @_linear_kernel(%arg0: i32, %arg1: i32, %arg2: i32, %arg3: memref<2x32xf32, #tpu.memory_space<vmem>>, %arg4: memref<32x32xbf16, #tpu.memory_space<vmem>>, %arg5: memref<1x32xf32, #tpu.memory_space<vmem>>, %arg6: memref<2x32xf32, #tpu.memory_space<vmem>>, %arg7: memref<2x32xf32, #tpu.memory_space<vmem>>) attributes {dimension_semantics = [#tpu.dimension_semantics<parallel>, #tpu.dimension_semantics<parallel>, #tpu.dimension_semantics<arbitrary>], iteration_bounds = array<i64: 1, 1, 1>, scalar_prefetch = 0 : i64, scratch_operands = 1 : i64, tpu.core_type = #tpu.core_type<tc>, window_params = [{transform_indices = @transform_0, window_bounds = array<i64: 2, 32>}, {transform_indices = @transform_1, window_bounds = array<i64: 32, 32>}, {transform_indices = @transform_2, window_bounds = array<i64: 1, 32>}, {transform_indices = @transform_3, window_bounds = array<i64: 2, 32>}]} {
    %c0_i32 = arith.constant 0 : i32
    %0 = arith.cmpi eq, %arg2, %c0_i32 : i32
    %1 = arith.extui %0 : i1 to i32
    %c0_i32_0 = arith.constant 0 : i32
    %2 = arith.cmpi ne, %1, %c0_i32_0 : i32
    scf.if %2 {
      %cst_10 = arith.constant 0.000000e+00 : f32
      %13 = vector.broadcast %cst_10 : f32 to vector<2x32xf32>
      %c0_11 = arith.constant 0 : index
      %c0_12 = arith.constant 0 : index
      %14 = vector.load %arg7[%c0_11, %c0_12] : memref<2x32xf32, #tpu.memory_space<vmem>>, vector<2x32xf32>
      tpu.vector_store %arg7[%c0_11, %c0_12], %13 {strides = array<i32>} : memref<2x32xf32, #tpu.memory_space<vmem>>, vector<2x32xf32>,
    } else {
    }
    %c0 = arith.constant 0 : index
    %c0_1 = arith.constant 0 : index
    %3 = vector.load %arg7[%c0, %c0_1] : memref<2x32xf32, #tpu.memory_space<vmem>>, vector<2x32xf32>
    %c0_2 = arith.constant 0 : index
    %c0_3 = arith.constant 0 : index
    %4 = vector.load %arg3[%c0_2, %c0_3] : memref<2x32xf32, #tpu.memory_space<vmem>>, vector<2x32xf32>
    %5 = arith.truncf %4 : vector<2x32xf32> to vector<2x32xbf16>
    %c0_4 = arith.constant 0 : index
    %c0_5 = arith.constant 0 : index
    %6 = vector.load %arg4[%c0_4, %c0_5] : memref<32x32xbf16, #tpu.memory_space<vmem>>, vector<32x32xbf16>
    %cst = arith.constant dense<0.000000e+00> : vector<2x32xf32>
    %7 = tpu.matmul %5, %6, %cst {dimension_numbers = #tpu.dot_dimension_numbers<[1], [0], [0], [1], [0, 0, 1, 1], [], []>} : vector<2x32xbf16>, vector<32x32xbf16>, vector<2x32xf32> -> vector<2x32xf32>
    %8 = arith.addf %3, %7 : vector<2x32xf32>
    %c0_6 = arith.constant 0 : index
    %c0_7 = arith.constant 0 : index
    %9 = vector.load %arg7[%c0_6, %c0_7] : memref<2x32xf32, #tpu.memory_space<vmem>>, vector<2x32xf32>
    tpu.vector_store %arg7[%c0_6, %c0_7], %8 {strides = array<i32>} : memref<2x32xf32, #tpu.memory_space<vmem>>, vector<2x32xf32>,
    %c0_i32_8 = arith.constant 0 : i32
    %10 = arith.cmpi eq, %arg2, %c0_i32_8 : i32
    %11 = arith.extui %10 : i1 to i32
    %c0_i32_9 = arith.constant 0 : i32
    %12 = arith.cmpi ne, %11, %c0_i32_9 : i32
    scf.if %12 {
      %c0_10 = arith.constant 0 : index
      %c0_11 = arith.constant 0 : index
      %13 = vector.load %arg7[%c0_10, %c0_11] : memref<2x32xf32, #tpu.memory_space<vmem>>, vector<2x32xf32>
      %c0_12 = arith.constant 0 : index
      %c0_13 = arith.constant 0 : index
      %14 = vector.load %arg5[%c0_12, %c0_13] : memref<1x32xf32, #tpu.memory_space<vmem>>, vector<1x32xf32>
      %15 = vector.broadcast %14 : vector<1x32xf32> to vector<2x32xf32>
      %16 = arith.addf %13, %15 : vector<2x32xf32>
      %c0_14 = arith.constant 0 : index
      %c0_15 = arith.constant 0 : index
      %17 = vector.load %arg6[%c0_14, %c0_15] : memref<2x32xf32, #tpu.memory_space<vmem>>, vector<2x32xf32>
      tpu.vector_store %arg6[%c0_14, %c0_15], %16 {strides = array<i32>} : memref<2x32xf32, #tpu.memory_space<vmem>>, vector<2x32xf32>,
    } else {
    }
    return
  }
  func.func @transform_0(%arg0: i32, %arg1: i32, %arg2: i32) -> (i32, i32) {
    %c0_i32 = arith.constant 0 : i32
    return %arg0, %arg2 : i32, i32
  }
  func.func @transform_1(%arg0: i32, %arg1: i32, %arg2: i32) -> (i32, i32) {
    %c0_i32 = arith.constant 0 : i32
    return %arg2, %arg1 : i32, i32
  }
  func.func @transform_2(%arg0: i32, %arg1: i32, %arg2: i32) -> (i32, i32) {
    %c0_i32 = arith.constant 0 : i32
    %c0_i32_0 = arith.constant 0 : i32
    return %c0_i32, %arg1 : i32, i32
  }
  func.func @transform_3(%arg0: i32, %arg1: i32, %arg2: i32) -> (i32, i32) {
    %c0_i32 = arith.constant 0 : i32
    return %arg0, %arg1 : i32, i32
  }
}

module attributes {stable_mosaic.version = 11 : i64} {
  func.func @_linear_kernel(%arg0: i32, %arg1: i32, %arg2: i32, %arg3: memref<2x32xf32, #tpu.memory_space<vmem>>, %arg4: memref<32x448xbf16, #tpu.memory_space<vmem>>, %arg5: memref<1x448xf32, #tpu.memory_space<vmem>>, %arg6: memref<2x448xf32, #tpu.memory_space<vmem>>, %arg7: memref<2x448xf32, #tpu.memory_space<vmem>>) attributes {dimension_semantics = [#tpu.dimension_semantics<parallel>, #tpu.dimension_semantics<parallel>, #tpu.dimension_semantics<arbitrary>], iteration_bounds = array<i64: 1, 1, 1>, scalar_prefetch = 0 : i64, scratch_operands = 1 : i64, tpu.core_type = #tpu.core_type<tc>, window_params = [{transform_indices = @transform_0, window_bounds = array<i64: 2, 32>}, {transform_indices = @transform_1, window_bounds = array<i64: 32, 448>}, {transform_indices = @transform_2, window_bounds = array<i64: 1, 448>}, {transform_indices = @transform_3, window_bounds = array<i64: 2, 448>}]} {
    %c0_i32 = arith.constant 0 : i32
    %0 = arith.cmpi eq, %arg2, %c0_i32 : i32
    %1 = arith.extui %0 : i1 to i32
    %c0_i32_0 = arith.constant 0 : i32
    %2 = arith.cmpi ne, %1, %c0_i32_0 : i32
    scf.if %2 {
      %cst_10 = arith.constant 0.000000e+00 : f32
      %13 = vector.broadcast %cst_10 : f32 to vector<2x448xf32>
      %c0_11 = arith.constant 0 : index
      %c0_12 = arith.constant 0 : index
      %14 = vector.load %arg7[%c0_11, %c0_12] : memref<2x448xf32, #tpu.memory_space<vmem>>, vector<2x448xf32>
      tpu.vector_store %arg7[%c0_11, %c0_12], %13 {strides = array<i32>} : memref<2x448xf32, #tpu.memory_space<vmem>>, vector<2x448xf32>,
    } else {
    }
    %c0 = arith.constant 0 : index
    %c0_1 = arith.constant 0 : index
    %3 = vector.load %arg7[%c0, %c0_1] : memref<2x448xf32, #tpu.memory_space<vmem>>, vector<2x448xf32>
    %c0_2 = arith.constant 0 : index
    %c0_3 = arith.constant 0 : index
    %4 = vector.load %arg3[%c0_2, %c0_3] : memref<2x32xf32, #tpu.memory_space<vmem>>, vector<2x32xf32>
    %5 = arith.truncf %4 : vector<2x32xf32> to vector<2x32xbf16>
    %c0_4 = arith.constant 0 : index
    %c0_5 = arith.constant 0 : index
    %6 = vector.load %arg4[%c0_4, %c0_5] : memref<32x448xbf16, #tpu.memory_space<vmem>>, vector<32x448xbf16>
    %cst = arith.constant dense<0.000000e+00> : vector<2x448xf32>
    %7 = tpu.matmul %5, %6, %cst {dimension_numbers = #tpu.dot_dimension_numbers<[1], [0], [0], [1], [0, 0, 1, 1], [], []>} : vector<2x32xbf16>, vector<32x448xbf16>, vector<2x448xf32> -> vector<2x448xf32>
    %8 = arith.addf %3, %7 : vector<2x448xf32>
    %c0_6 = arith.constant 0 : index
    %c0_7 = arith.constant 0 : index
    %9 = vector.load %arg7[%c0_6, %c0_7] : memref<2x448xf32, #tpu.memory_space<vmem>>, vector<2x448xf32>
    tpu.vector_store %arg7[%c0_6, %c0_7], %8 {strides = array<i32>} : memref<2x448xf32, #tpu.memory_space<vmem>>, vector<2x448xf32>,
    %c0_i32_8 = arith.constant 0 : i32
    %10 = arith.cmpi eq, %arg2, %c0_i32_8 : i32
    %11 = arith.extui %10 : i1 to i32
    %c0_i32_9 = arith.constant 0 : i32
    %12 = arith.cmpi ne, %11, %c0_i32_9 : i32
    scf.if %12 {
      %c0_10 = arith.constant 0 : index
      %c0_11 = arith.constant 0 : index
      %13 = vector.load %arg7[%c0_10, %c0_11] : memref<2x448xf32, #tpu.memory_space<vmem>>, vector<2x448xf32>
      %c0_12 = arith.constant 0 : index
      %c0_13 = arith.constant 0 : index
      %14 = vector.load %arg5[%c0_12, %c0_13] : memref<1x448xf32, #tpu.memory_space<vmem>>, vector<1x448xf32>
      %15 = vector.broadcast %14 : vector<1x448xf32> to vector<2x448xf32>
      %16 = arith.addf %13, %15 : vector<2x448xf32>
      %c0_14 = arith.constant 0 : index
      %c0_15 = arith.constant 0 : index
      %17 = vector.load %arg6[%c0_14, %c0_15] : memref<2x448xf32, #tpu.memory_space<vmem>>, vector<2x448xf32>
      tpu.vector_store %arg6[%c0_14, %c0_15], %16 {strides = array<i32>} : memref<2x448xf32, #tpu.memory_space<vmem>>, vector<2x448xf32>,
    } else {
    }
    return
  }
  func.func @transform_0(%arg0: i32, %arg1: i32, %arg2: i32) -> (i32, i32) {
    %c0_i32 = arith.constant 0 : i32
    return %arg0, %arg2 : i32, i32
  }
  func.func @transform_1(%arg0: i32, %arg1: i32, %arg2: i32) -> (i32, i32) {
    %c0_i32 = arith.constant 0 : i32
    return %arg2, %arg1 : i32, i32
  }
  func.func @transform_2(%arg0: i32, %arg1: i32, %arg2: i32) -> (i32, i32) {
    %c0_i32 = arith.constant 0 : i32
    %c0_i32_0 = arith.constant 0 : i32
    return %c0_i32, %arg1 : i32, i32
  }
  func.func @transform_3(%arg0: i32, %arg1: i32, %arg2: i32) -> (i32, i32) {
    %c0_i32 = arith.constant 0 : i32
    return %arg0, %arg1 : i32, i32
  }
}

module attributes {stable_mosaic.version = 11 : i64} {
  func.func @_linear_kernel(%arg0: i32, %arg1: i32, %arg2: i32, %arg3: memref<128x16xf32, #tpu.memory_space<vmem>>, %arg4: memref<16x32xbf16, #tpu.memory_space<vmem>>, %arg5: memref<1x32xf32, #tpu.memory_space<vmem>>, %arg6: memref<128x32xf32, #tpu.memory_space<vmem>>, %arg7: memref<128x32xf32, #tpu.memory_space<vmem>>) attributes {dimension_semantics = [#tpu.dimension_semantics<parallel>, #tpu.dimension_semantics<parallel>, #tpu.dimension_semantics<arbitrary>], iteration_bounds = array<i64: 1, 1, 1>, scalar_prefetch = 0 : i64, scratch_operands = 1 : i64, tpu.core_type = #tpu.core_type<tc>, window_params = [{transform_indices = @transform_0, window_bounds = array<i64: 128, 16>}, {transform_indices = @transform_1, window_bounds = array<i64: 16, 32>}, {transform_indices = @transform_2, window_bounds = array<i64: 1, 32>}, {transform_indices = @transform_3, window_bounds = array<i64: 128, 32>}]} {
    %c0_i32 = arith.constant 0 : i32
    %0 = arith.cmpi eq, %arg2, %c0_i32 : i32
    %1 = arith.extui %0 : i1 to i32
    %c0_i32_0 = arith.constant 0 : i32
    %2 = arith.cmpi ne, %1, %c0_i32_0 : i32
    scf.if %2 {
      %cst_10 = arith.constant 0.000000e+00 : f32
      %13 = vector.broadcast %cst_10 : f32 to vector<128x32xf32>
      %c0_11 = arith.constant 0 : index
      %c0_12 = arith.constant 0 : index
      %14 = vector.load %arg7[%c0_11, %c0_12] : memref<128x32xf32, #tpu.memory_space<vmem>>, vector<128x32xf32>
      tpu.vector_store %arg7[%c0_11, %c0_12], %13 {strides = array<i32>} : memref<128x32xf32, #tpu.memory_space<vmem>>, vector<128x32xf32>,
    } else {
    }
    %c0 = arith.constant 0 : index
    %c0_1 = arith.constant 0 : index
    %3 = vector.load %arg7[%c0, %c0_1] : memref<128x32xf32, #tpu.memory_space<vmem>>, vector<128x32xf32>
    %c0_2 = arith.constant 0 : index
    %c0_3 = arith.constant 0 : index
    %4 = vector.load %arg3[%c0_2, %c0_3] : memref<128x16xf32, #tpu.memory_space<vmem>>, vector<128x16xf32>
    %5 = arith.truncf %4 : vector<128x16xf32> to vector<128x16xbf16>
    %c0_4 = arith.constant 0 : index
    %c0_5 = arith.constant 0 : index
    %6 = vector.load %arg4[%c0_4, %c0_5] : memref<16x32xbf16, #tpu.memory_space<vmem>>, vector<16x32xbf16>
    %cst = arith.constant dense<0.000000e+00> : vector<128x32xf32>
    %7 = tpu.matmul %5, %6, %cst {dimension_numbers = #tpu.dot_dimension_numbers<[1], [0], [0], [1], [0, 0, 1, 1], [], []>} : vector<128x16xbf16>, vector<16x32xbf16>, vector<128x32xf32> -> vector<128x32xf32>
    %8 = arith.addf %3, %7 : vector<128x32xf32>
    %c0_6 = arith.constant 0 : index
    %c0_7 = arith.constant 0 : index
    %9 = vector.load %arg7[%c0_6, %c0_7] : memref<128x32xf32, #tpu.memory_space<vmem>>, vector<128x32xf32>
    tpu.vector_store %arg7[%c0_6, %c0_7], %8 {strides = array<i32>} : memref<128x32xf32, #tpu.memory_space<vmem>>, vector<128x32xf32>,
    %c0_i32_8 = arith.constant 0 : i32
    %10 = arith.cmpi eq, %arg2, %c0_i32_8 : i32
    %11 = arith.extui %10 : i1 to i32
    %c0_i32_9 = arith.constant 0 : i32
    %12 = arith.cmpi ne, %11, %c0_i32_9 : i32
    scf.if %12 {
      %c0_10 = arith.constant 0 : index
      %c0_11 = arith.constant 0 : index
      %13 = vector.load %arg7[%c0_10, %c0_11] : memref<128x32xf32, #tpu.memory_space<vmem>>, vector<128x32xf32>
      %c0_12 = arith.constant 0 : index
      %c0_13 = arith.constant 0 : index
      %14 = vector.load %arg5[%c0_12, %c0_13] : memref<1x32xf32, #tpu.memory_space<vmem>>, vector<1x32xf32>
      %15 = vector.broadcast %14 : vector<1x32xf32> to vector<128x32xf32>
      %16 = arith.addf %13, %15 : vector<128x32xf32>
      %c0_14 = arith.constant 0 : index
      %c0_15 = arith.constant 0 : index
      %17 = vector.load %arg6[%c0_14, %c0_15] : memref<128x32xf32, #tpu.memory_space<vmem>>, vector<128x32xf32>
      tpu.vector_store %arg6[%c0_14, %c0_15], %16 {strides = array<i32>} : memref<128x32xf32, #tpu.memory_space<vmem>>, vector<128x32xf32>,
    } else {
    }
    return
  }
  func.func @transform_0(%arg0: i32, %arg1: i32, %arg2: i32) -> (i32, i32) {
    %c0_i32 = arith.constant 0 : i32
    return %arg0, %arg2 : i32, i32
  }
  func.func @transform_1(%arg0: i32, %arg1: i32, %arg2: i32) -> (i32, i32) {
    %c0_i32 = arith.constant 0 : i32
    return %arg2, %arg1 : i32, i32
  }
  func.func @transform_2(%arg0: i32, %arg1: i32, %arg2: i32) -> (i32, i32) {
    %c0_i32 = arith.constant 0 : i32
    %c0_i32_0 = arith.constant 0 : i32
    return %c0_i32, %arg1 : i32, i32
  }
  func.func @transform_3(%arg0: i32, %arg1: i32, %arg2: i32) -> (i32, i32) {
    %c0_i32 = arith.constant 0 : i32
    return %arg0, %arg1 : i32, i32
  }
}

module attributes {stable_mosaic.version = 11 : i64} {
  func.func @_ln_mod_linear_kernel(%arg0: i32, %arg1: i32, %arg2: i32, %arg3: memref<1x64x32xf32, #tpu.memory_space<vmem>>, %arg4: memref<1x1x32xf32, #tpu.memory_space<vmem>>, %arg5: memref<1x1x32xf32, #tpu.memory_space<vmem>>, %arg6: memref<32x96xbf16, #tpu.memory_space<vmem>>, %arg7: memref<1x96xf32, #tpu.memory_space<vmem>>, %arg8: memref<1x64x96xf32, #tpu.memory_space<vmem>>) attributes {dimension_semantics = [#tpu.dimension_semantics<parallel>, #tpu.dimension_semantics<parallel>, #tpu.dimension_semantics<parallel>], iteration_bounds = array<i64: 2, 1, 1>, scalar_prefetch = 0 : i64, scratch_operands = 0 : i64, tpu.core_type = #tpu.core_type<tc>, window_params = [{transform_indices = @transform_0, window_bounds = array<i64: 1, 64, 32>}, {transform_indices = @transform_1, window_bounds = array<i64: 1, 1, 32>}, {transform_indices = @transform_2, window_bounds = array<i64: 1, 1, 32>}, {transform_indices = @transform_3, window_bounds = array<i64: 32, 96>}, {transform_indices = @transform_4, window_bounds = array<i64: 1, 96>}, {transform_indices = @transform_5, window_bounds = array<i64: 1, 64, 96>}]} {
    %c0 = arith.constant 0 : index
    %c0_0 = arith.constant 0 : index
    %c0_1 = arith.constant 0 : index
    %0 = vector.load %arg3[%c0, %c0_0, %c0_1] : memref<1x64x32xf32, #tpu.memory_space<vmem>>, vector<1x64x32xf32>
    %1 = vector.shape_cast %0 : vector<1x64x32xf32> to vector<64x32xf32>
    %cst = arith.constant dense<0.000000e+00> : vector<64xf32>
    %2 = vector.multi_reduction <add>, %1, %cst [1] : vector<64x32xf32> to vector<64xf32>
    %3 = vector.shape_cast %2 : vector<64xf32> to vector<64x1xf32>
    %cst_2 = arith.constant 3.200000e+01 : f32
    %4 = vector.broadcast %cst_2 : f32 to vector<64x1xf32>
    %5 = arith.divf %3, %4 : vector<64x1xf32>
    %6 = vector.broadcast %5 : vector<64x1xf32> to vector<64x32xf32>
    %7 = arith.subf %1, %6 : vector<64x32xf32>
    %8 = arith.mulf %7, %7 : vector<64x32xf32>
    %cst_3 = arith.constant dense<0.000000e+00> : vector<64xf32>
    %9 = vector.multi_reduction <add>, %8, %cst_3 [1] : vector<64x32xf32> to vector<64xf32>
    %10 = vector.shape_cast %9 : vector<64xf32> to vector<64x1xf32>
    %cst_4 = arith.constant 3.200000e+01 : f32
    %11 = vector.broadcast %cst_4 : f32 to vector<64x1xf32>
    %12 = arith.divf %10, %11 : vector<64x1xf32>
    %13 = vector.broadcast %5 : vector<64x1xf32> to vector<64x32xf32>
    %14 = arith.subf %1, %13 : vector<64x32xf32>
    %cst_5 = arith.constant 9.99999997E-7 : f32
    %15 = vector.broadcast %cst_5 : f32 to vector<64x1xf32>
    %16 = arith.addf %12, %15 : vector<64x1xf32>
    %17 = math.rsqrt %16 : vector<64x1xf32>
    %18 = vector.broadcast %17 : vector<64x1xf32> to vector<64x32xf32>
    %19 = arith.mulf %14, %18 : vector<64x32xf32>
    %c0_6 = arith.constant 0 : index
    %c0_7 = arith.constant 0 : index
    %c0_8 = arith.constant 0 : index
    %20 = vector.load %arg5[%c0_6, %c0_7, %c0_8] : memref<1x1x32xf32, #tpu.memory_space<vmem>>, vector<1x1x32xf32>
    %21 = vector.shape_cast %20 : vector<1x1x32xf32> to vector<1x32xf32>
    %cst_9 = arith.constant 1.000000e+00 : f32
    %22 = vector.broadcast %cst_9 : f32 to vector<1x32xf32>
    %23 = arith.addf %22, %21 : vector<1x32xf32>
    %24 = vector.broadcast %23 : vector<1x32xf32> to vector<64x32xf32>
    %25 = arith.mulf %19, %24 : vector<64x32xf32>
    %c0_10 = arith.constant 0 : index
    %c0_11 = arith.constant 0 : index
    %c0_12 = arith.constant 0 : index
    %26 = vector.load %arg4[%c0_10, %c0_11, %c0_12] : memref<1x1x32xf32, #tpu.memory_space<vmem>>, vector<1x1x32xf32>
    %27 = vector.shape_cast %26 : vector<1x1x32xf32> to vector<1x32xf32>
    %28 = vector.broadcast %27 : vector<1x32xf32> to vector<64x32xf32>
    %29 = arith.addf %25, %28 : vector<64x32xf32>
    %30 = arith.truncf %29 : vector<64x32xf32> to vector<64x32xbf16>
    %c0_13 = arith.constant 0 : index
    %c0_14 = arith.constant 0 : index
    %31 = vector.load %arg6[%c0_13, %c0_14] : memref<32x96xbf16, #tpu.memory_space<vmem>>, vector<32x96xbf16>
    %cst_15 = arith.constant dense<0.000000e+00> : vector<64x96xf32>
    %32 = tpu.matmul %30, %31, %cst_15 {dimension_numbers = #tpu.dot_dimension_numbers<[1], [0], [0], [1], [0, 0, 1, 1], [], []>} : vector<64x32xbf16>, vector<32x96xbf16>, vector<64x96xf32> -> vector<64x96xf32>
    %c0_16 = arith.constant 0 : index
    %c0_17 = arith.constant 0 : index
    %33 = vector.load %arg7[%c0_16, %c0_17] : memref<1x96xf32, #tpu.memory_space<vmem>>, vector<1x96xf32>
    %34 = vector.broadcast %33 : vector<1x96xf32> to vector<64x96xf32>
    %35 = arith.addf %32, %34 : vector<64x96xf32>
    %c0_18 = arith.constant 0 : index
    %c0_19 = arith.constant 0 : index
    %c0_20 = arith.constant 0 : index
    %36 = vector.load %arg8[%c0_18, %c0_19, %c0_20] : memref<1x64x96xf32, #tpu.memory_space<vmem>>, vector<1x64x96xf32>
    %37 = vector.shape_cast %36 : vector<1x64x96xf32> to vector<64x96xf32>
    %38 = vector.shape_cast %35 : vector<64x96xf32> to vector<1x64x96xf32>
    tpu.vector_store %arg8[%c0_18, %c0_19, %c0_20], %38 {strides = array<i32>} : memref<1x64x96xf32, #tpu.memory_space<vmem>>, vector<1x64x96xf32>,
    return
  }
  func.func @transform_0(%arg0: i32, %arg1: i32, %arg2: i32) -> (i32, i32, i32) {
    %c0_i32 = arith.constant 0 : i32
    %c0_i32_0 = arith.constant 0 : i32
    return %arg0, %arg1, %c0_i32 : i32, i32, i32
  }
  func.func @transform_1(%arg0: i32, %arg1: i32, %arg2: i32) -> (i32, i32, i32) {
    %c0_i32 = arith.constant 0 : i32
    %c0_i32_0 = arith.constant 0 : i32
    %c0_i32_1 = arith.constant 0 : i32
    return %arg0, %c0_i32, %c0_i32_0 : i32, i32, i32
  }
  func.func @transform_2(%arg0: i32, %arg1: i32, %arg2: i32) -> (i32, i32, i32) {
    %c0_i32 = arith.constant 0 : i32
    %c0_i32_0 = arith.constant 0 : i32
    %c0_i32_1 = arith.constant 0 : i32
    return %arg0, %c0_i32, %c0_i32_0 : i32, i32, i32
  }
  func.func @transform_3(%arg0: i32, %arg1: i32, %arg2: i32) -> (i32, i32) {
    %c0_i32 = arith.constant 0 : i32
    %c0_i32_0 = arith.constant 0 : i32
    return %c0_i32, %arg2 : i32, i32
  }
  func.func @transform_4(%arg0: i32, %arg1: i32, %arg2: i32) -> (i32, i32) {
    %c0_i32 = arith.constant 0 : i32
    %c0_i32_0 = arith.constant 0 : i32
    return %c0_i32, %arg2 : i32, i32
  }
  func.func @transform_5(%arg0: i32, %arg1: i32, %arg2: i32) -> (i32, i32, i32) {
    %c0_i32 = arith.constant 0 : i32
    return %arg0, %arg1, %arg2 : i32, i32, i32
  }
}

module attributes {stable_mosaic.version = 11 : i64} {
  func.func @_attn_rope_kernel(%arg0: i32, %arg1: i32, %arg2: memref<1x64x8xf32, #tpu.memory_space<vmem>>, %arg3: memref<1x64x8xf32, #tpu.memory_space<vmem>>, %arg4: memref<1x64x8xf32, #tpu.memory_space<vmem>>, %arg5: memref<1x64x8xf32, #tpu.memory_space<vmem>>, %arg6: memref<1x64x8xf32, #tpu.memory_space<vmem>>, %arg7: memref<64x8xf32, #tpu.memory_space<vmem>>, %arg8: memref<64x8xf32, #tpu.memory_space<vmem>>, %arg9: memref<64x8xf32, #tpu.memory_space<vmem>>, %arg10: memref<64x8xf32, #tpu.memory_space<vmem>>, %arg11: memref<8x8xf32, #tpu.memory_space<vmem>>, %arg12: memref<1x64x8xf32, #tpu.memory_space<vmem>>) attributes {dimension_semantics = [#tpu.dimension_semantics<parallel>, #tpu.dimension_semantics<parallel>], iteration_bounds = array<i64: 8, 1>, scalar_prefetch = 0 : i64, scratch_operands = 0 : i64, tpu.core_type = #tpu.core_type<tc>, window_params = [{transform_indices = @transform_0, window_bounds = array<i64: 1, 64, 8>}, {transform_indices = @transform_1, window_bounds = array<i64: 1, 64, 8>}, {transform_indices = @transform_2, window_bounds = array<i64: 1, 64, 8>}, {transform_indices = @transform_3, window_bounds = array<i64: 1, 64, 8>}, {transform_indices = @transform_4, window_bounds = array<i64: 1, 64, 8>}, {transform_indices = @transform_5, window_bounds = array<i64: 64, 8>}, {transform_indices = @transform_6, window_bounds = array<i64: 64, 8>}, {pipeline_mode = #tpu.pipeline_mode<synchronous>, transform_indices = @transform_7, window_bounds = array<i64: 64, 8>}, {pipeline_mode = #tpu.pipeline_mode<synchronous>, transform_indices = @transform_8, window_bounds = array<i64: 64, 8>}, {pipeline_mode = #tpu.pipeline_mode<synchronous>, transform_indices = @transform_9, window_bounds = array<i64: 8, 8>}, {transform_indices = @transform_10, window_bounds = array<i64: 1, 64, 8>}]} {
    %c0 = arith.constant 0 : index
    %c0_0 = arith.constant 0 : index
    %0 = vector.load %arg11[%c0, %c0_0] : memref<8x8xf32, #tpu.memory_space<vmem>>, vector<8x8xf32>
    %c0_1 = arith.constant 0 : index
    %c0_2 = arith.constant 0 : index
    %c0_3 = arith.constant 0 : index
    %1 = vector.load %arg2[%c0_1, %c0_2, %c0_3] : memref<1x64x8xf32, #tpu.memory_space<vmem>>, vector<1x64x8xf32>
    %2 = vector.shape_cast %1 : vector<1x64x8xf32> to vector<64x8xf32>
    %cst = arith.constant 0.353553385 : f32
    %3 = vector.broadcast %cst : f32 to vector<64x8xf32>
    %4 = arith.mulf %2, %3 : vector<64x8xf32>
    %c0_4 = arith.constant 0 : index
    %c0_5 = arith.constant 0 : index
    %5 = vector.load %arg7[%c0_4, %c0_5] : memref<64x8xf32, #tpu.memory_space<vmem>>, vector<64x8xf32>
    %c0_6 = arith.constant 0 : index
    %c0_7 = arith.constant 0 : index
    %6 = vector.load %arg8[%c0_6, %c0_7] : memref<64x8xf32, #tpu.memory_space<vmem>>, vector<64x8xf32>
    %cst_8 = arith.constant dense<0.000000e+00> : vector<64x8xf32>
    %7 = tpu.matmul %4, %0, %cst_8 {dimension_numbers = #tpu.dot_dimension_numbers<[1], [0], [0], [1], [0, 0, 1, 1], [], []>} : vector<64x8xf32>, vector<8x8xf32>, vector<64x8xf32> -> vector<64x8xf32>
    %8 = arith.mulf %4, %5 : vector<64x8xf32>
    %9 = arith.mulf %7, %6 : vector<64x8xf32>
    %10 = arith.addf %8, %9 : vector<64x8xf32>
    %11 = arith.truncf %10 : vector<64x8xf32> to vector<64x8xbf16>
    %c0_9 = arith.constant 0 : index
    %c0_10 = arith.constant 0 : index
    %c0_11 = arith.constant 0 : index
    %12 = vector.load %arg3[%c0_9, %c0_10, %c0_11] : memref<1x64x8xf32, #tpu.memory_space<vmem>>, vector<1x64x8xf32>
    %13 = vector.shape_cast %12 : vector<1x64x8xf32> to vector<64x8xf32>
    %c0_12 = arith.constant 0 : index
    %c0_13 = arith.constant 0 : index
    %14 = vector.load %arg9[%c0_12, %c0_13] : memref<64x8xf32, #tpu.memory_space<vmem>>, vector<64x8xf32>
    %c0_14 = arith.constant 0 : index
    %c0_15 = arith.constant 0 : index
    %15 = vector.load %arg10[%c0_14, %c0_15] : memref<64x8xf32, #tpu.memory_space<vmem>>, vector<64x8xf32>
    %cst_16 = arith.constant dense<0.000000e+00> : vector<64x8xf32>
    %16 = tpu.matmul %13, %0, %cst_16 {dimension_numbers = #tpu.dot_dimension_numbers<[1], [0], [0], [1], [0, 0, 1, 1], [], []>} : vector<64x8xf32>, vector<8x8xf32>, vector<64x8xf32> -> vector<64x8xf32>
    %17 = arith.mulf %13, %14 : vector<64x8xf32>
    %18 = arith.mulf %16, %15 : vector<64x8xf32>
    %19 = arith.addf %17, %18 : vector<64x8xf32>
    %20 = arith.truncf %19 : vector<64x8xf32> to vector<64x8xbf16>
    %c0_17 = arith.constant 0 : index
    %c0_18 = arith.constant 0 : index
    %c0_19 = arith.constant 0 : index
    %21 = vector.load %arg4[%c0_17, %c0_18, %c0_19] : memref<1x64x8xf32, #tpu.memory_space<vmem>>, vector<1x64x8xf32>
    %22 = vector.shape_cast %21 : vector<1x64x8xf32> to vector<64x8xf32>
    %c0_20 = arith.constant 0 : index
    %c0_21 = arith.constant 0 : index
    %23 = vector.load %arg9[%c0_20, %c0_21] : memref<64x8xf32, #tpu.memory_space<vmem>>, vector<64x8xf32>
    %c0_22 = arith.constant 0 : index
    %c0_23 = arith.constant 0 : index
    %24 = vector.load %arg10[%c0_22, %c0_23] : memref<64x8xf32, #tpu.memory_space<vmem>>, vector<64x8xf32>
    %cst_24 = arith.constant dense<0.000000e+00> : vector<64x8xf32>
    %25 = tpu.matmul %22, %0, %cst_24 {dimension_numbers = #tpu.dot_dimension_numbers<[1], [0], [0], [1], [0, 0, 1, 1], [], []>} : vector<64x8xf32>, vector<8x8xf32>, vector<64x8xf32> -> vector<64x8xf32>
    %26 = arith.mulf %22, %23 : vector<64x8xf32>
    %27 = arith.mulf %25, %24 : vector<64x8xf32>
    %28 = arith.addf %26, %27 : vector<64x8xf32>
    %29 = arith.truncf %28 : vector<64x8xf32> to vector<64x8xbf16>
    %cst_25 = arith.constant dense<0.000000e+00> : vector<64x64xf32>
    %30 = tpu.matmul %11, %20, %cst_25 {dimension_numbers = #tpu.dot_dimension_numbers<[1], [1], [0], [0], [0, 0, 1, 0], [], []>} : vector<64x8xbf16>, vector<64x8xbf16>, vector<64x64xf32> -> vector<64x64xf32>
    %cst_26 = arith.constant dense<0.000000e+00> : vector<64x64xf32>
    %31 = tpu.matmul %11, %29, %cst_26 {dimension_numbers = #tpu.dot_dimension_numbers<[1], [1], [0], [0], [0, 0, 1, 0], [], []>} : vector<64x8xbf16>, vector<64x8xbf16>, vector<64x64xf32> -> vector<64x64xf32>
    %cst_27 = arith.constant dense<0xFF800000> : vector<64xf32>
    %32 = vector.multi_reduction <maximumf>, %30, %cst_27 [1] : vector<64x64xf32> to vector<64xf32>
    %33 = vector.shape_cast %32 : vector<64xf32> to vector<64x1xf32>
    %cst_28 = arith.constant dense<0xFF800000> : vector<64xf32>
    %34 = vector.multi_reduction <maximumf>, %31, %cst_28 [1] : vector<64x64xf32> to vector<64xf32>
    %35 = vector.shape_cast %34 : vector<64xf32> to vector<64x1xf32>
    %36 = arith.maximumf %33, %35 : vector<64x1xf32>
    %37 = vector.broadcast %36 : vector<64x1xf32> to vector<64x64xf32>
    %38 = arith.subf %30, %37 : vector<64x64xf32>
    %39 = math.exp %38 : vector<64x64xf32>
    %40 = vector.broadcast %36 : vector<64x1xf32> to vector<64x64xf32>
    %41 = arith.subf %31, %40 : vector<64x64xf32>
    %42 = math.exp %41 : vector<64x64xf32>
    %cst_29 = arith.constant dense<0.000000e+00> : vector<64xf32>
    %43 = vector.multi_reduction <add>, %39, %cst_29 [1] : vector<64x64xf32> to vector<64xf32>
    %44 = vector.shape_cast %43 : vector<64xf32> to vector<64x1xf32>
    %cst_30 = arith.constant dense<0.000000e+00> : vector<64xf32>
    %45 = vector.multi_reduction <add>, %42, %cst_30 [1] : vector<64x64xf32> to vector<64xf32>
    %46 = vector.shape_cast %45 : vector<64xf32> to vector<64x1xf32>
    %47 = arith.addf %44, %46 : vector<64x1xf32>
    %48 = arith.truncf %39 : vector<64x64xf32> to vector<64x64xbf16>
    %c0_31 = arith.constant 0 : index
    %c0_32 = arith.constant 0 : index
    %c0_33 = arith.constant 0 : index
    %49 = vector.load %arg5[%c0_31, %c0_32, %c0_33] : memref<1x64x8xf32, #tpu.memory_space<vmem>>, vector<1x64x8xf32>
    %50 = vector.shape_cast %49 : vector<1x64x8xf32> to vector<64x8xf32>
    %51 = arith.truncf %50 : vector<64x8xf32> to vector<64x8xbf16>
    %cst_34 = arith.constant dense<0.000000e+00> : vector<64x8xf32>
    %52 = tpu.matmul %48, %51, %cst_34 {dimension_numbers = #tpu.dot_dimension_numbers<[1], [0], [0], [1], [0, 0, 1, 1], [], []>} : vector<64x64xbf16>, vector<64x8xbf16>, vector<64x8xf32> -> vector<64x8xf32>
    %53 = arith.truncf %42 : vector<64x64xf32> to vector<64x64xbf16>
    %c0_35 = arith.constant 0 : index
    %c0_36 = arith.constant 0 : index
    %c0_37 = arith.constant 0 : index
    %54 = vector.load %arg6[%c0_35, %c0_36, %c0_37] : memref<1x64x8xf32, #tpu.memory_space<vmem>>, vector<1x64x8xf32>
    %55 = vector.shape_cast %54 : vector<1x64x8xf32> to vector<64x8xf32>
    %56 = arith.truncf %55 : vector<64x8xf32> to vector<64x8xbf16>
    %cst_38 = arith.constant dense<0.000000e+00> : vector<64x8xf32>
    %57 = tpu.matmul %53, %56, %cst_38 {dimension_numbers = #tpu.dot_dimension_numbers<[1], [0], [0], [1], [0, 0, 1, 1], [], []>} : vector<64x64xbf16>, vector<64x8xbf16>, vector<64x8xf32> -> vector<64x8xf32>
    %58 = arith.addf %52, %57 : vector<64x8xf32>
    %59 = tpu.reciprocal %47 {approx = true} : vector<64x1xf32> -> vector<64x1xf32>
    %60 = vector.broadcast %59 : vector<64x1xf32> to vector<64x8xf32>
    %61 = arith.mulf %58, %60 : vector<64x8xf32>
    %c0_39 = arith.constant 0 : index
    %c0_40 = arith.constant 0 : index
    %c0_41 = arith.constant 0 : index
    %62 = vector.load %arg12[%c0_39, %c0_40, %c0_41] : memref<1x64x8xf32, #tpu.memory_space<vmem>>, vector<1x64x8xf32>
    %63 = vector.shape_cast %62 : vector<1x64x8xf32> to vector<64x8xf32>
    %64 = vector.shape_cast %61 : vector<64x8xf32> to vector<1x64x8xf32>
    tpu.vector_store %arg12[%c0_39, %c0_40, %c0_41], %64 {strides = array<i32>} : memref<1x64x8xf32, #tpu.memory_space<vmem>>, vector<1x64x8xf32>,
    return
  }
  func.func @transform_0(%arg0: i32, %arg1: i32) -> (i32, i32, i32) {
    %c0_i32 = arith.constant 0 : i32
    %c0_i32_0 = arith.constant 0 : i32
    return %arg0, %arg1, %c0_i32 : i32, i32, i32
  }
  func.func @transform_1(%arg0: i32, %arg1: i32) -> (i32, i32, i32) {
    %c0_i32 = arith.constant 0 : i32
    %c0_i32_0 = arith.constant 0 : i32
    %c0_i32_1 = arith.constant 0 : i32
    return %arg0, %c0_i32, %c0_i32_0 : i32, i32, i32
  }
  func.func @transform_2(%arg0: i32, %arg1: i32) -> (i32, i32, i32) {
    %c0_i32 = arith.constant 0 : i32
    %c0_i32_0 = arith.constant 0 : i32
    %c0_i32_1 = arith.constant 0 : i32
    return %arg0, %c0_i32, %c0_i32_0 : i32, i32, i32
  }
  func.func @transform_3(%arg0: i32, %arg1: i32) -> (i32, i32, i32) {
    %c0_i32 = arith.constant 0 : i32
    %c0_i32_0 = arith.constant 0 : i32
    %c0_i32_1 = arith.constant 0 : i32
    return %arg0, %c0_i32, %c0_i32_0 : i32, i32, i32
  }
  func.func @transform_4(%arg0: i32, %arg1: i32) -> (i32, i32, i32) {
    %c0_i32 = arith.constant 0 : i32
    %c0_i32_0 = arith.constant 0 : i32
    %c0_i32_1 = arith.constant 0 : i32
    return %arg0, %c0_i32, %c0_i32_0 : i32, i32, i32
  }
  func.func @transform_5(%arg0: i32, %arg1: i32) -> (i32, i32) {
    %c0_i32 = arith.constant 0 : i32
    %c0_i32_0 = arith.constant 0 : i32
    return %arg1, %c0_i32 : i32, i32
  }
  func.func @transform_6(%arg0: i32, %arg1: i32) -> (i32, i32) {
    %c0_i32 = arith.constant 0 : i32
    %c0_i32_0 = arith.constant 0 : i32
    return %arg1, %c0_i32 : i32, i32
  }
  func.func @transform_7(%arg0: i32, %arg1: i32) -> (i32, i32) {
    %c0_i32 = arith.constant 0 : i32
    %c0_i32_0 = arith.constant 0 : i32
    %c0_i32_1 = arith.constant 0 : i32
    return %c0_i32, %c0_i32_0 : i32, i32
  }
  func.func @transform_8(%arg0: i32, %arg1: i32) -> (i32, i32) {
    %c0_i32 = arith.constant 0 : i32
    %c0_i32_0 = arith.constant 0 : i32
    %c0_i32_1 = arith.constant 0 : i32
    return %c0_i32, %c0_i32_0 : i32, i32
  }
  func.func @transform_9(%arg0: i32, %arg1: i32) -> (i32, i32) {
    %c0_i32 = arith.constant 0 : i32
    %c0_i32_0 = arith.constant 0 : i32
    %c0_i32_1 = arith.constant 0 : i32
    return %c0_i32, %c0_i32_0 : i32, i32
  }
  func.func @transform_10(%arg0: i32, %arg1: i32) -> (i32, i32, i32) {
    %c0_i32 = arith.constant 0 : i32
    %c0_i32_0 = arith.constant 0 : i32
    return %arg0, %arg1, %c0_i32 : i32, i32, i32
  }
}

module attributes {stable_mosaic.version = 11 : i64} {
  func.func @_linear_kernel(%arg0: i32, %arg1: i32, %arg2: i32, %arg3: memref<128x32xf32, #tpu.memory_space<vmem>>, %arg4: memref<32x64xbf16, #tpu.memory_space<vmem>>, %arg5: memref<1x64xf32, #tpu.memory_space<vmem>>, %arg6: memref<128x64xf32, #tpu.memory_space<vmem>>, %arg7: memref<128x64xf32, #tpu.memory_space<vmem>>) attributes {dimension_semantics = [#tpu.dimension_semantics<parallel>, #tpu.dimension_semantics<parallel>, #tpu.dimension_semantics<arbitrary>], iteration_bounds = array<i64: 1, 1, 1>, scalar_prefetch = 0 : i64, scratch_operands = 1 : i64, tpu.core_type = #tpu.core_type<tc>, window_params = [{transform_indices = @transform_0, window_bounds = array<i64: 128, 32>}, {transform_indices = @transform_1, window_bounds = array<i64: 32, 64>}, {transform_indices = @transform_2, window_bounds = array<i64: 1, 64>}, {transform_indices = @transform_3, window_bounds = array<i64: 128, 64>}]} {
    %c0_i32 = arith.constant 0 : i32
    %0 = arith.cmpi eq, %arg2, %c0_i32 : i32
    %1 = arith.extui %0 : i1 to i32
    %c0_i32_0 = arith.constant 0 : i32
    %2 = arith.cmpi ne, %1, %c0_i32_0 : i32
    scf.if %2 {
      %cst_10 = arith.constant 0.000000e+00 : f32
      %13 = vector.broadcast %cst_10 : f32 to vector<128x64xf32>
      %c0_11 = arith.constant 0 : index
      %c0_12 = arith.constant 0 : index
      %14 = vector.load %arg7[%c0_11, %c0_12] : memref<128x64xf32, #tpu.memory_space<vmem>>, vector<128x64xf32>
      tpu.vector_store %arg7[%c0_11, %c0_12], %13 {strides = array<i32>} : memref<128x64xf32, #tpu.memory_space<vmem>>, vector<128x64xf32>,
    } else {
    }
    %c0 = arith.constant 0 : index
    %c0_1 = arith.constant 0 : index
    %3 = vector.load %arg7[%c0, %c0_1] : memref<128x64xf32, #tpu.memory_space<vmem>>, vector<128x64xf32>
    %c0_2 = arith.constant 0 : index
    %c0_3 = arith.constant 0 : index
    %4 = vector.load %arg3[%c0_2, %c0_3] : memref<128x32xf32, #tpu.memory_space<vmem>>, vector<128x32xf32>
    %5 = arith.truncf %4 : vector<128x32xf32> to vector<128x32xbf16>
    %c0_4 = arith.constant 0 : index
    %c0_5 = arith.constant 0 : index
    %6 = vector.load %arg4[%c0_4, %c0_5] : memref<32x64xbf16, #tpu.memory_space<vmem>>, vector<32x64xbf16>
    %cst = arith.constant dense<0.000000e+00> : vector<128x64xf32>
    %7 = tpu.matmul %5, %6, %cst {dimension_numbers = #tpu.dot_dimension_numbers<[1], [0], [0], [1], [0, 0, 1, 1], [], []>} : vector<128x32xbf16>, vector<32x64xbf16>, vector<128x64xf32> -> vector<128x64xf32>
    %8 = arith.addf %3, %7 : vector<128x64xf32>
    %c0_6 = arith.constant 0 : index
    %c0_7 = arith.constant 0 : index
    %9 = vector.load %arg7[%c0_6, %c0_7] : memref<128x64xf32, #tpu.memory_space<vmem>>, vector<128x64xf32>
    tpu.vector_store %arg7[%c0_6, %c0_7], %8 {strides = array<i32>} : memref<128x64xf32, #tpu.memory_space<vmem>>, vector<128x64xf32>,
    %c0_i32_8 = arith.constant 0 : i32
    %10 = arith.cmpi eq, %arg2, %c0_i32_8 : i32
    %11 = arith.extui %10 : i1 to i32
    %c0_i32_9 = arith.constant 0 : i32
    %12 = arith.cmpi ne, %11, %c0_i32_9 : i32
    scf.if %12 {
      %c0_10 = arith.constant 0 : index
      %c0_11 = arith.constant 0 : index
      %13 = vector.load %arg7[%c0_10, %c0_11] : memref<128x64xf32, #tpu.memory_space<vmem>>, vector<128x64xf32>
      %c0_12 = arith.constant 0 : index
      %c0_13 = arith.constant 0 : index
      %14 = vector.load %arg5[%c0_12, %c0_13] : memref<1x64xf32, #tpu.memory_space<vmem>>, vector<1x64xf32>
      %15 = vector.broadcast %14 : vector<1x64xf32> to vector<128x64xf32>
      %16 = arith.addf %13, %15 : vector<128x64xf32>
      %c0_14 = arith.constant 0 : index
      %c0_15 = arith.constant 0 : index
      %17 = vector.load %arg6[%c0_14, %c0_15] : memref<128x64xf32, #tpu.memory_space<vmem>>, vector<128x64xf32>
      tpu.vector_store %arg6[%c0_14, %c0_15], %16 {strides = array<i32>} : memref<128x64xf32, #tpu.memory_space<vmem>>, vector<128x64xf32>,
    } else {
    }
    return
  }
  func.func @transform_0(%arg0: i32, %arg1: i32, %arg2: i32) -> (i32, i32) {
    %c0_i32 = arith.constant 0 : i32
    return %arg0, %arg2 : i32, i32
  }
  func.func @transform_1(%arg0: i32, %arg1: i32, %arg2: i32) -> (i32, i32) {
    %c0_i32 = arith.constant 0 : i32
    return %arg2, %arg1 : i32, i32
  }
  func.func @transform_2(%arg0: i32, %arg1: i32, %arg2: i32) -> (i32, i32) {
    %c0_i32 = arith.constant 0 : i32
    %c0_i32_0 = arith.constant 0 : i32
    return %c0_i32, %arg1 : i32, i32
  }
  func.func @transform_3(%arg0: i32, %arg1: i32, %arg2: i32) -> (i32, i32) {
    %c0_i32 = arith.constant 0 : i32
    return %arg0, %arg1 : i32, i32
  }
}

module attributes {stable_mosaic.version = 11 : i64} {
  func.func @_gated_res_linear_kernel(%arg0: i32, %arg1: i32, %arg2: i32, %arg3: memref<1x64x32xf32, #tpu.memory_space<vmem>>, %arg4: memref<32x32xbf16, #tpu.memory_space<vmem>>, %arg5: memref<1x32xf32, #tpu.memory_space<vmem>>, %arg6: memref<1x1x32xf32, #tpu.memory_space<vmem>>, %arg7: memref<1x64x32xf32, #tpu.memory_space<vmem>>, %arg8: memref<1x64x32xf32, #tpu.memory_space<vmem>>) attributes {dimension_semantics = [#tpu.dimension_semantics<parallel>, #tpu.dimension_semantics<parallel>, #tpu.dimension_semantics<parallel>], iteration_bounds = array<i64: 2, 1, 1>, scalar_prefetch = 0 : i64, scratch_operands = 0 : i64, tpu.core_type = #tpu.core_type<tc>, window_params = [{transform_indices = @transform_0, window_bounds = array<i64: 1, 64, 32>}, {transform_indices = @transform_1, window_bounds = array<i64: 32, 32>}, {transform_indices = @transform_2, window_bounds = array<i64: 1, 32>}, {transform_indices = @transform_3, window_bounds = array<i64: 1, 1, 32>}, {transform_indices = @transform_4, window_bounds = array<i64: 1, 64, 32>}, {transform_indices = @transform_5, window_bounds = array<i64: 1, 64, 32>}]} {
    %c0 = arith.constant 0 : index
    %c0_0 = arith.constant 0 : index
    %c0_1 = arith.constant 0 : index
    %0 = vector.load %arg3[%c0, %c0_0, %c0_1] : memref<1x64x32xf32, #tpu.memory_space<vmem>>, vector<1x64x32xf32>
    %1 = vector.shape_cast %0 : vector<1x64x32xf32> to vector<64x32xf32>
    %2 = arith.truncf %1 : vector<64x32xf32> to vector<64x32xbf16>
    %c0_2 = arith.constant 0 : index
    %c0_3 = arith.constant 0 : index
    %3 = vector.load %arg4[%c0_2, %c0_3] : memref<32x32xbf16, #tpu.memory_space<vmem>>, vector<32x32xbf16>
    %cst = arith.constant dense<0.000000e+00> : vector<64x32xf32>
    %4 = tpu.matmul %2, %3, %cst {dimension_numbers = #tpu.dot_dimension_numbers<[1], [0], [0], [1], [0, 0, 1, 1], [], []>} : vector<64x32xbf16>, vector<32x32xbf16>, vector<64x32xf32> -> vector<64x32xf32>
    %c0_4 = arith.constant 0 : index
    %c0_5 = arith.constant 0 : index
    %5 = vector.load %arg5[%c0_4, %c0_5] : memref<1x32xf32, #tpu.memory_space<vmem>>, vector<1x32xf32>
    %6 = vector.broadcast %5 : vector<1x32xf32> to vector<64x32xf32>
    %7 = arith.addf %4, %6 : vector<64x32xf32>
    %c0_6 = arith.constant 0 : index
    %c0_7 = arith.constant 0 : index
    %c0_8 = arith.constant 0 : index
    %8 = vector.load %arg7[%c0_6, %c0_7, %c0_8] : memref<1x64x32xf32, #tpu.memory_space<vmem>>, vector<1x64x32xf32>
    %9 = vector.shape_cast %8 : vector<1x64x32xf32> to vector<64x32xf32>
    %c0_9 = arith.constant 0 : index
    %c0_10 = arith.constant 0 : index
    %c0_11 = arith.constant 0 : index
    %10 = vector.load %arg6[%c0_9, %c0_10, %c0_11] : memref<1x1x32xf32, #tpu.memory_space<vmem>>, vector<1x1x32xf32>
    %11 = vector.shape_cast %10 : vector<1x1x32xf32> to vector<1x32xf32>
    %12 = vector.broadcast %11 : vector<1x32xf32> to vector<64x32xf32>
    %13 = arith.mulf %12, %7 : vector<64x32xf32>
    %14 = arith.addf %9, %13 : vector<64x32xf32>
    %c0_12 = arith.constant 0 : index
    %c0_13 = arith.constant 0 : index
    %c0_14 = arith.constant 0 : index
    %15 = vector.load %arg8[%c0_12, %c0_13, %c0_14] : memref<1x64x32xf32, #tpu.memory_space<vmem>>, vector<1x64x32xf32>
    %16 = vector.shape_cast %15 : vector<1x64x32xf32> to vector<64x32xf32>
    %17 = vector.shape_cast %14 : vector<64x32xf32> to vector<1x64x32xf32>
    tpu.vector_store %arg8[%c0_12, %c0_13, %c0_14], %17 {strides = array<i32>} : memref<1x64x32xf32, #tpu.memory_space<vmem>>, vector<1x64x32xf32>,
    return
  }
  func.func @transform_0(%arg0: i32, %arg1: i32, %arg2: i32) -> (i32, i32, i32) {
    %c0_i32 = arith.constant 0 : i32
    %c0_i32_0 = arith.constant 0 : i32
    return %arg0, %arg1, %c0_i32 : i32, i32, i32
  }
  func.func @transform_1(%arg0: i32, %arg1: i32, %arg2: i32) -> (i32, i32) {
    %c0_i32 = arith.constant 0 : i32
    %c0_i32_0 = arith.constant 0 : i32
    return %c0_i32, %arg2 : i32, i32
  }
  func.func @transform_2(%arg0: i32, %arg1: i32, %arg2: i32) -> (i32, i32) {
    %c0_i32 = arith.constant 0 : i32
    %c0_i32_0 = arith.constant 0 : i32
    return %c0_i32, %arg2 : i32, i32
  }
  func.func @transform_3(%arg0: i32, %arg1: i32, %arg2: i32) -> (i32, i32, i32) {
    %c0_i32 = arith.constant 0 : i32
    %c0_i32_0 = arith.constant 0 : i32
    return %arg0, %c0_i32, %arg2 : i32, i32, i32
  }
  func.func @transform_4(%arg0: i32, %arg1: i32, %arg2: i32) -> (i32, i32, i32) {
    %c0_i32 = arith.constant 0 : i32
    return %arg0, %arg1, %arg2 : i32, i32, i32
  }
  func.func @transform_5(%arg0: i32, %arg1: i32, %arg2: i32) -> (i32, i32, i32) {
    %c0_i32 = arith.constant 0 : i32
    return %arg0, %arg1, %arg2 : i32, i32, i32
  }
}

module attributes {stable_mosaic.version = 11 : i64} {
  func.func @_ln_mod_linear_kernel(%arg0: i32, %arg1: i32, %arg2: i32, %arg3: memref<1x64x32xf32, #tpu.memory_space<vmem>>, %arg4: memref<1x1x32xf32, #tpu.memory_space<vmem>>, %arg5: memref<1x1x32xf32, #tpu.memory_space<vmem>>, %arg6: memref<32x128xbf16, #tpu.memory_space<vmem>>, %arg7: memref<1x128xf32, #tpu.memory_space<vmem>>, %arg8: memref<1x64x128xf32, #tpu.memory_space<vmem>>) attributes {dimension_semantics = [#tpu.dimension_semantics<parallel>, #tpu.dimension_semantics<parallel>, #tpu.dimension_semantics<parallel>], iteration_bounds = array<i64: 2, 1, 1>, scalar_prefetch = 0 : i64, scratch_operands = 0 : i64, tpu.core_type = #tpu.core_type<tc>, window_params = [{transform_indices = @transform_0, window_bounds = array<i64: 1, 64, 32>}, {transform_indices = @transform_1, window_bounds = array<i64: 1, 1, 32>}, {transform_indices = @transform_2, window_bounds = array<i64: 1, 1, 32>}, {transform_indices = @transform_3, window_bounds = array<i64: 32, 128>}, {transform_indices = @transform_4, window_bounds = array<i64: 1, 128>}, {transform_indices = @transform_5, window_bounds = array<i64: 1, 64, 128>}]} {
    %c0 = arith.constant 0 : index
    %c0_0 = arith.constant 0 : index
    %c0_1 = arith.constant 0 : index
    %0 = vector.load %arg3[%c0, %c0_0, %c0_1] : memref<1x64x32xf32, #tpu.memory_space<vmem>>, vector<1x64x32xf32>
    %1 = vector.shape_cast %0 : vector<1x64x32xf32> to vector<64x32xf32>
    %cst = arith.constant dense<0.000000e+00> : vector<64xf32>
    %2 = vector.multi_reduction <add>, %1, %cst [1] : vector<64x32xf32> to vector<64xf32>
    %3 = vector.shape_cast %2 : vector<64xf32> to vector<64x1xf32>
    %cst_2 = arith.constant 3.200000e+01 : f32
    %4 = vector.broadcast %cst_2 : f32 to vector<64x1xf32>
    %5 = arith.divf %3, %4 : vector<64x1xf32>
    %6 = vector.broadcast %5 : vector<64x1xf32> to vector<64x32xf32>
    %7 = arith.subf %1, %6 : vector<64x32xf32>
    %8 = arith.mulf %7, %7 : vector<64x32xf32>
    %cst_3 = arith.constant dense<0.000000e+00> : vector<64xf32>
    %9 = vector.multi_reduction <add>, %8, %cst_3 [1] : vector<64x32xf32> to vector<64xf32>
    %10 = vector.shape_cast %9 : vector<64xf32> to vector<64x1xf32>
    %cst_4 = arith.constant 3.200000e+01 : f32
    %11 = vector.broadcast %cst_4 : f32 to vector<64x1xf32>
    %12 = arith.divf %10, %11 : vector<64x1xf32>
    %13 = vector.broadcast %5 : vector<64x1xf32> to vector<64x32xf32>
    %14 = arith.subf %1, %13 : vector<64x32xf32>
    %cst_5 = arith.constant 9.99999997E-7 : f32
    %15 = vector.broadcast %cst_5 : f32 to vector<64x1xf32>
    %16 = arith.addf %12, %15 : vector<64x1xf32>
    %17 = math.rsqrt %16 : vector<64x1xf32>
    %18 = vector.broadcast %17 : vector<64x1xf32> to vector<64x32xf32>
    %19 = arith.mulf %14, %18 : vector<64x32xf32>
    %c0_6 = arith.constant 0 : index
    %c0_7 = arith.constant 0 : index
    %c0_8 = arith.constant 0 : index
    %20 = vector.load %arg5[%c0_6, %c0_7, %c0_8] : memref<1x1x32xf32, #tpu.memory_space<vmem>>, vector<1x1x32xf32>
    %21 = vector.shape_cast %20 : vector<1x1x32xf32> to vector<1x32xf32>
    %cst_9 = arith.constant 1.000000e+00 : f32
    %22 = vector.broadcast %cst_9 : f32 to vector<1x32xf32>
    %23 = arith.addf %22, %21 : vector<1x32xf32>
    %24 = vector.broadcast %23 : vector<1x32xf32> to vector<64x32xf32>
    %25 = arith.mulf %19, %24 : vector<64x32xf32>
    %c0_10 = arith.constant 0 : index
    %c0_11 = arith.constant 0 : index
    %c0_12 = arith.constant 0 : index
    %26 = vector.load %arg4[%c0_10, %c0_11, %c0_12] : memref<1x1x32xf32, #tpu.memory_space<vmem>>, vector<1x1x32xf32>
    %27 = vector.shape_cast %26 : vector<1x1x32xf32> to vector<1x32xf32>
    %28 = vector.broadcast %27 : vector<1x32xf32> to vector<64x32xf32>
    %29 = arith.addf %25, %28 : vector<64x32xf32>
    %30 = arith.truncf %29 : vector<64x32xf32> to vector<64x32xbf16>
    %c0_13 = arith.constant 0 : index
    %c0_14 = arith.constant 0 : index
    %31 = vector.load %arg6[%c0_13, %c0_14] : memref<32x128xbf16, #tpu.memory_space<vmem>>, vector<32x128xbf16>
    %cst_15 = arith.constant dense<0.000000e+00> : vector<64x128xf32>
    %32 = tpu.matmul %30, %31, %cst_15 {dimension_numbers = #tpu.dot_dimension_numbers<[1], [0], [0], [1], [0, 0, 1, 1], [], []>} : vector<64x32xbf16>, vector<32x128xbf16>, vector<64x128xf32> -> vector<64x128xf32>
    %c0_16 = arith.constant 0 : index
    %c0_17 = arith.constant 0 : index
    %33 = vector.load %arg7[%c0_16, %c0_17] : memref<1x128xf32, #tpu.memory_space<vmem>>, vector<1x128xf32>
    %34 = vector.broadcast %33 : vector<1x128xf32> to vector<64x128xf32>
    %35 = arith.addf %32, %34 : vector<64x128xf32>
    %cst_18 = arith.constant 5.000000e-01 : f32
    %36 = vector.broadcast %cst_18 : f32 to vector<64x128xf32>
    %37 = arith.mulf %36, %35 : vector<64x128xf32>
    %cst_19 = arith.constant 4.471500e-02 : f32
    %38 = vector.broadcast %cst_19 : f32 to vector<64x128xf32>
    %39 = arith.mulf %38, %35 : vector<64x128xf32>
    %40 = arith.mulf %39, %35 : vector<64x128xf32>
    %41 = arith.mulf %40, %35 : vector<64x128xf32>
    %42 = arith.addf %35, %41 : vector<64x128xf32>
    %cst_20 = arith.constant 0.797884583 : f32
    %43 = vector.broadcast %cst_20 : f32 to vector<64x128xf32>
    %44 = arith.mulf %43, %42 : vector<64x128xf32>
    %45 = math.tanh %44 : vector<64x128xf32>
    %cst_21 = arith.constant 1.000000e+00 : f32
    %46 = vector.broadcast %cst_21 : f32 to vector<64x128xf32>
    %47 = arith.addf %46, %45 : vector<64x128xf32>
    %48 = arith.mulf %37, %47 : vector<64x128xf32>
    %c0_22 = arith.constant 0 : index
    %c0_23 = arith.constant 0 : index
    %c0_24 = arith.constant 0 : index
    %49 = vector.load %arg8[%c0_22, %c0_23, %c0_24] : memref<1x64x128xf32, #tpu.memory_space<vmem>>, vector<1x64x128xf32>
    %50 = vector.shape_cast %49 : vector<1x64x128xf32> to vector<64x128xf32>
    %51 = vector.shape_cast %48 : vector<64x128xf32> to vector<1x64x128xf32>
    tpu.vector_store %arg8[%c0_22, %c0_23, %c0_24], %51 {strides = array<i32>} : memref<1x64x128xf32, #tpu.memory_space<vmem>>, vector<1x64x128xf32>,
    return
  }
  func.func @transform_0(%arg0: i32, %arg1: i32, %arg2: i32) -> (i32, i32, i32) {
    %c0_i32 = arith.constant 0 : i32
    %c0_i32_0 = arith.constant 0 : i32
    return %arg0, %arg1, %c0_i32 : i32, i32, i32
  }
  func.func @transform_1(%arg0: i32, %arg1: i32, %arg2: i32) -> (i32, i32, i32) {
    %c0_i32 = arith.constant 0 : i32
    %c0_i32_0 = arith.constant 0 : i32
    %c0_i32_1 = arith.constant 0 : i32
    return %arg0, %c0_i32, %c0_i32_0 : i32, i32, i32
  }
  func.func @transform_2(%arg0: i32, %arg1: i32, %arg2: i32) -> (i32, i32, i32) {
    %c0_i32 = arith.constant 0 : i32
    %c0_i32_0 = arith.constant 0 : i32
    %c0_i32_1 = arith.constant 0 : i32
    return %arg0, %c0_i32, %c0_i32_0 : i32, i32, i32
  }
  func.func @transform_3(%arg0: i32, %arg1: i32, %arg2: i32) -> (i32, i32) {
    %c0_i32 = arith.constant 0 : i32
    %c0_i32_0 = arith.constant 0 : i32
    return %c0_i32, %arg2 : i32, i32
  }
  func.func @transform_4(%arg0: i32, %arg1: i32, %arg2: i32) -> (i32, i32) {
    %c0_i32 = arith.constant 0 : i32
    %c0_i32_0 = arith.constant 0 : i32
    return %c0_i32, %arg2 : i32, i32
  }
  func.func @transform_5(%arg0: i32, %arg1: i32, %arg2: i32) -> (i32, i32, i32) {
    %c0_i32 = arith.constant 0 : i32
    return %arg0, %arg1, %arg2 : i32, i32, i32
  }
}

module attributes {stable_mosaic.version = 11 : i64} {
  func.func @_gated_res_linear_kernel(%arg0: i32, %arg1: i32, %arg2: i32, %arg3: memref<1x64x128xf32, #tpu.memory_space<vmem>>, %arg4: memref<128x32xbf16, #tpu.memory_space<vmem>>, %arg5: memref<1x32xf32, #tpu.memory_space<vmem>>, %arg6: memref<1x1x32xf32, #tpu.memory_space<vmem>>, %arg7: memref<1x64x32xf32, #tpu.memory_space<vmem>>, %arg8: memref<1x64x32xf32, #tpu.memory_space<vmem>>) attributes {dimension_semantics = [#tpu.dimension_semantics<parallel>, #tpu.dimension_semantics<parallel>, #tpu.dimension_semantics<parallel>], iteration_bounds = array<i64: 2, 1, 1>, scalar_prefetch = 0 : i64, scratch_operands = 0 : i64, tpu.core_type = #tpu.core_type<tc>, window_params = [{transform_indices = @transform_0, window_bounds = array<i64: 1, 64, 128>}, {transform_indices = @transform_1, window_bounds = array<i64: 128, 32>}, {transform_indices = @transform_2, window_bounds = array<i64: 1, 32>}, {transform_indices = @transform_3, window_bounds = array<i64: 1, 1, 32>}, {transform_indices = @transform_4, window_bounds = array<i64: 1, 64, 32>}, {transform_indices = @transform_5, window_bounds = array<i64: 1, 64, 32>}]} {
    %c0 = arith.constant 0 : index
    %c0_0 = arith.constant 0 : index
    %c0_1 = arith.constant 0 : index
    %0 = vector.load %arg3[%c0, %c0_0, %c0_1] : memref<1x64x128xf32, #tpu.memory_space<vmem>>, vector<1x64x128xf32>
    %1 = vector.shape_cast %0 : vector<1x64x128xf32> to vector<64x128xf32>
    %2 = arith.truncf %1 : vector<64x128xf32> to vector<64x128xbf16>
    %c0_2 = arith.constant 0 : index
    %c0_3 = arith.constant 0 : index
    %3 = vector.load %arg4[%c0_2, %c0_3] : memref<128x32xbf16, #tpu.memory_space<vmem>>, vector<128x32xbf16>
    %cst = arith.constant dense<0.000000e+00> : vector<64x32xf32>
    %4 = tpu.matmul %2, %3, %cst {dimension_numbers = #tpu.dot_dimension_numbers<[1], [0], [0], [1], [0, 0, 1, 1], [], []>} : vector<64x128xbf16>, vector<128x32xbf16>, vector<64x32xf32> -> vector<64x32xf32>
    %c0_4 = arith.constant 0 : index
    %c0_5 = arith.constant 0 : index
    %5 = vector.load %arg5[%c0_4, %c0_5] : memref<1x32xf32, #tpu.memory_space<vmem>>, vector<1x32xf32>
    %6 = vector.broadcast %5 : vector<1x32xf32> to vector<64x32xf32>
    %7 = arith.addf %4, %6 : vector<64x32xf32>
    %c0_6 = arith.constant 0 : index
    %c0_7 = arith.constant 0 : index
    %c0_8 = arith.constant 0 : index
    %8 = vector.load %arg7[%c0_6, %c0_7, %c0_8] : memref<1x64x32xf32, #tpu.memory_space<vmem>>, vector<1x64x32xf32>
    %9 = vector.shape_cast %8 : vector<1x64x32xf32> to vector<64x32xf32>
    %c0_9 = arith.constant 0 : index
    %c0_10 = arith.constant 0 : index
    %c0_11 = arith.constant 0 : index
    %10 = vector.load %arg6[%c0_9, %c0_10, %c0_11] : memref<1x1x32xf32, #tpu.memory_space<vmem>>, vector<1x1x32xf32>
    %11 = vector.shape_cast %10 : vector<1x1x32xf32> to vector<1x32xf32>
    %12 = vector.broadcast %11 : vector<1x32xf32> to vector<64x32xf32>
    %13 = arith.mulf %12, %7 : vector<64x32xf32>
    %14 = arith.addf %9, %13 : vector<64x32xf32>
    %c0_12 = arith.constant 0 : index
    %c0_13 = arith.constant 0 : index
    %c0_14 = arith.constant 0 : index
    %15 = vector.load %arg8[%c0_12, %c0_13, %c0_14] : memref<1x64x32xf32, #tpu.memory_space<vmem>>, vector<1x64x32xf32>
    %16 = vector.shape_cast %15 : vector<1x64x32xf32> to vector<64x32xf32>
    %17 = vector.shape_cast %14 : vector<64x32xf32> to vector<1x64x32xf32>
    tpu.vector_store %arg8[%c0_12, %c0_13, %c0_14], %17 {strides = array<i32>} : memref<1x64x32xf32, #tpu.memory_space<vmem>>, vector<1x64x32xf32>,
    return
  }
  func.func @transform_0(%arg0: i32, %arg1: i32, %arg2: i32) -> (i32, i32, i32) {
    %c0_i32 = arith.constant 0 : i32
    %c0_i32_0 = arith.constant 0 : i32
    return %arg0, %arg1, %c0_i32 : i32, i32, i32
  }
  func.func @transform_1(%arg0: i32, %arg1: i32, %arg2: i32) -> (i32, i32) {
    %c0_i32 = arith.constant 0 : i32
    %c0_i32_0 = arith.constant 0 : i32
    return %c0_i32, %arg2 : i32, i32
  }
  func.func @transform_2(%arg0: i32, %arg1: i32, %arg2: i32) -> (i32, i32) {
    %c0_i32 = arith.constant 0 : i32
    %c0_i32_0 = arith.constant 0 : i32
    return %c0_i32, %arg2 : i32, i32
  }
  func.func @transform_3(%arg0: i32, %arg1: i32, %arg2: i32) -> (i32, i32, i32) {
    %c0_i32 = arith.constant 0 : i32
    %c0_i32_0 = arith.constant 0 : i32
    return %arg0, %c0_i32, %arg2 : i32, i32, i32
  }
  func.func @transform_4(%arg0: i32, %arg1: i32, %arg2: i32) -> (i32, i32, i32) {
    %c0_i32 = arith.constant 0 : i32
    return %arg0, %arg1, %arg2 : i32, i32, i32
  }
  func.func @transform_5(%arg0: i32, %arg1: i32, %arg2: i32) -> (i32, i32, i32) {
    %c0_i32 = arith.constant 0 : i32
    return %arg0, %arg1, %arg2 : i32, i32, i32
  }
}

module attributes {stable_mosaic.version = 11 : i64} {
  func.func @_ln_mod_linear_kernel(%arg0: i32, %arg1: i32, %arg2: i32, %arg3: memref<1x64x32xf32, #tpu.memory_space<vmem>>, %arg4: memref<1x1x32xf32, #tpu.memory_space<vmem>>, %arg5: memref<1x1x32xf32, #tpu.memory_space<vmem>>, %arg6: memref<32x16xbf16, #tpu.memory_space<vmem>>, %arg7: memref<1x16xf32, #tpu.memory_space<vmem>>, %arg8: memref<1x64x16xf32, #tpu.memory_space<vmem>>) attributes {dimension_semantics = [#tpu.dimension_semantics<parallel>, #tpu.dimension_semantics<parallel>, #tpu.dimension_semantics<parallel>], iteration_bounds = array<i64: 2, 1, 1>, scalar_prefetch = 0 : i64, scratch_operands = 0 : i64, tpu.core_type = #tpu.core_type<tc>, window_params = [{transform_indices = @transform_0, window_bounds = array<i64: 1, 64, 32>}, {transform_indices = @transform_1, window_bounds = array<i64: 1, 1, 32>}, {transform_indices = @transform_2, window_bounds = array<i64: 1, 1, 32>}, {transform_indices = @transform_3, window_bounds = array<i64: 32, 16>}, {transform_indices = @transform_4, window_bounds = array<i64: 1, 16>}, {transform_indices = @transform_5, window_bounds = array<i64: 1, 64, 16>}]} {
    %c0 = arith.constant 0 : index
    %c0_0 = arith.constant 0 : index
    %c0_1 = arith.constant 0 : index
    %0 = vector.load %arg3[%c0, %c0_0, %c0_1] : memref<1x64x32xf32, #tpu.memory_space<vmem>>, vector<1x64x32xf32>
    %1 = vector.shape_cast %0 : vector<1x64x32xf32> to vector<64x32xf32>
    %cst = arith.constant dense<0.000000e+00> : vector<64xf32>
    %2 = vector.multi_reduction <add>, %1, %cst [1] : vector<64x32xf32> to vector<64xf32>
    %3 = vector.shape_cast %2 : vector<64xf32> to vector<64x1xf32>
    %cst_2 = arith.constant 3.200000e+01 : f32
    %4 = vector.broadcast %cst_2 : f32 to vector<64x1xf32>
    %5 = arith.divf %3, %4 : vector<64x1xf32>
    %6 = vector.broadcast %5 : vector<64x1xf32> to vector<64x32xf32>
    %7 = arith.subf %1, %6 : vector<64x32xf32>
    %8 = arith.mulf %7, %7 : vector<64x32xf32>
    %cst_3 = arith.constant dense<0.000000e+00> : vector<64xf32>
    %9 = vector.multi_reduction <add>, %8, %cst_3 [1] : vector<64x32xf32> to vector<64xf32>
    %10 = vector.shape_cast %9 : vector<64xf32> to vector<64x1xf32>
    %cst_4 = arith.constant 3.200000e+01 : f32
    %11 = vector.broadcast %cst_4 : f32 to vector<64x1xf32>
    %12 = arith.divf %10, %11 : vector<64x1xf32>
    %13 = vector.broadcast %5 : vector<64x1xf32> to vector<64x32xf32>
    %14 = arith.subf %1, %13 : vector<64x32xf32>
    %cst_5 = arith.constant 9.99999997E-7 : f32
    %15 = vector.broadcast %cst_5 : f32 to vector<64x1xf32>
    %16 = arith.addf %12, %15 : vector<64x1xf32>
    %17 = math.rsqrt %16 : vector<64x1xf32>
    %18 = vector.broadcast %17 : vector<64x1xf32> to vector<64x32xf32>
    %19 = arith.mulf %14, %18 : vector<64x32xf32>
    %c0_6 = arith.constant 0 : index
    %c0_7 = arith.constant 0 : index
    %c0_8 = arith.constant 0 : index
    %20 = vector.load %arg5[%c0_6, %c0_7, %c0_8] : memref<1x1x32xf32, #tpu.memory_space<vmem>>, vector<1x1x32xf32>
    %21 = vector.shape_cast %20 : vector<1x1x32xf32> to vector<1x32xf32>
    %cst_9 = arith.constant 1.000000e+00 : f32
    %22 = vector.broadcast %cst_9 : f32 to vector<1x32xf32>
    %23 = arith.addf %22, %21 : vector<1x32xf32>
    %24 = vector.broadcast %23 : vector<1x32xf32> to vector<64x32xf32>
    %25 = arith.mulf %19, %24 : vector<64x32xf32>
    %c0_10 = arith.constant 0 : index
    %c0_11 = arith.constant 0 : index
    %c0_12 = arith.constant 0 : index
    %26 = vector.load %arg4[%c0_10, %c0_11, %c0_12] : memref<1x1x32xf32, #tpu.memory_space<vmem>>, vector<1x1x32xf32>
    %27 = vector.shape_cast %26 : vector<1x1x32xf32> to vector<1x32xf32>
    %28 = vector.broadcast %27 : vector<1x32xf32> to vector<64x32xf32>
    %29 = arith.addf %25, %28 : vector<64x32xf32>
    %30 = arith.truncf %29 : vector<64x32xf32> to vector<64x32xbf16>
    %c0_13 = arith.constant 0 : index
    %c0_14 = arith.constant 0 : index
    %31 = vector.load %arg6[%c0_13, %c0_14] : memref<32x16xbf16, #tpu.memory_space<vmem>>, vector<32x16xbf16>
    %cst_15 = arith.constant dense<0.000000e+00> : vector<64x16xf32>
    %32 = tpu.matmul %30, %31, %cst_15 {dimension_numbers = #tpu.dot_dimension_numbers<[1], [0], [0], [1], [0, 0, 1, 1], [], []>} : vector<64x32xbf16>, vector<32x16xbf16>, vector<64x16xf32> -> vector<64x16xf32>
    %c0_16 = arith.constant 0 : index
    %c0_17 = arith.constant 0 : index
    %33 = vector.load %arg7[%c0_16, %c0_17] : memref<1x16xf32, #tpu.memory_space<vmem>>, vector<1x16xf32>
    %34 = vector.broadcast %33 : vector<1x16xf32> to vector<64x16xf32>
    %35 = arith.addf %32, %34 : vector<64x16xf32>
    %c0_18 = arith.constant 0 : index
    %c0_19 = arith.constant 0 : index
    %c0_20 = arith.constant 0 : index
    %36 = vector.load %arg8[%c0_18, %c0_19, %c0_20] : memref<1x64x16xf32, #tpu.memory_space<vmem>>, vector<1x64x16xf32>
    %37 = vector.shape_cast %36 : vector<1x64x16xf32> to vector<64x16xf32>
    %38 = vector.shape_cast %35 : vector<64x16xf32> to vector<1x64x16xf32>
    tpu.vector_store %arg8[%c0_18, %c0_19, %c0_20], %38 {strides = array<i32>} : memref<1x64x16xf32, #tpu.memory_space<vmem>>, vector<1x64x16xf32>,
    return
  }
  func.func @transform_0(%arg0: i32, %arg1: i32, %arg2: i32) -> (i32, i32, i32) {
    %c0_i32 = arith.constant 0 : i32
    %c0_i32_0 = arith.constant 0 : i32
    return %arg0, %arg1, %c0_i32 : i32, i32, i32
  }
  func.func @transform_1(%arg0: i32, %arg1: i32, %arg2: i32) -> (i32, i32, i32) {
    %c0_i32 = arith.constant 0 : i32
    %c0_i32_0 = arith.constant 0 : i32
    %c0_i32_1 = arith.constant 0 : i32
    return %arg0, %c0_i32, %c0_i32_0 : i32, i32, i32
  }
  func.func @transform_2(%arg0: i32, %arg1: i32, %arg2: i32) -> (i32, i32, i32) {
    %c0_i32 = arith.constant 0 : i32
    %c0_i32_0 = arith.constant 0 : i32
    %c0_i32_1 = arith.constant 0 : i32
    return %arg0, %c0_i32, %c0_i32_0 : i32, i32, i32
  }
  func.func @transform_3(%arg0: i32, %arg1: i32, %arg2: i32) -> (i32, i32) {
    %c0_i32 = arith.constant 0 : i32
    %c0_i32_0 = arith.constant 0 : i32
    return %c0_i32, %arg2 : i32, i32
  }
  func.func @transform_4(%arg0: i32, %arg1: i32, %arg2: i32) -> (i32, i32) {
    %c0_i32 = arith.constant 0 : i32
    %c0_i32_0 = arith.constant 0 : i32
    return %c0_i32, %arg2 : i32, i32
  }
  func.func @transform_5(%arg0: i32, %arg1: i32, %arg2: i32) -> (i32, i32, i32) {
    %c0_i32 = arith.constant 0 : i32
    return %arg0, %arg1, %arg2 : i32, i32, i32
  }
}

</mosaic_0001>

<llo_original>
// kernel: dit_forward.19
$region0: #{dit_forward.19}
  #allocation0 [shape = 'u32[]', space=smem, size = 0x4, offset = 0x4, fixed_abs, tag = 'smem constant byte address 0x4 - core index']
  #allocation1 [shape = 'u32[144,128]{1,0:T(1,128)}', space=vmem, size = 0x12000, scoped, tag = 'internal scratch']
  #allocation2 [shape = 'f32[2,32]{1,0:T(2,128)}', space=vmem, size = 0x400, scoped, tag = 'scratch operand']
  %s0 = inlined_call_operand.vmem [shape: f32[2,32], index: 0, kind: input, shape index: {}]
  %s1 = inlined_call_operand.vmem [shape: bf16[32,32], index: 1, kind: input, shape index: {}]
  %s2 = inlined_call_operand.vmem [shape: f32[1,32], index: 2, kind: input, shape index: {}]
  %s3 = inlined_call_operand.vmem [shape: f32[2,32], index: 3, kind: output, shape index: {}]
  %s4 = sld [smem:[#allocation0]]
  $region30: #{dit_forward.19} parent=0
    _
  %s6 = ssub.s32 1, %s4
  %s7 = scalar_select 0, %s6, %s4
  // Predicated region
  $region2: #{dit_forward.19} parent=0 // pred_check
    _
  $region3: #{dit_forward.19} parent=0 // pred_check_branch
    %9 = sbr.rel (0) target = $region5
  $region4: #{dit_forward.19} parent=0 // pred_region
    _
  $region5: #{dit_forward.19} parent=0 // pred_fallthru
    _
  // Predicated region
  $region6: #{dit_forward.19} parent=0 // pred_check
    _
  $region7: #{dit_forward.19} parent=0 // pred_check_branch
    %11 = sbr.rel (0) target = $region9
  $region8: #{dit_forward.19} parent=0 // pred_region
    _
  $region9: #{dit_forward.19} parent=0 // pred_fallthru
    _
  // Predicated region
  $region10: #{dit_forward.19} parent=0 // pred_check
    _
  $region11: #{dit_forward.19} parent=0 // pred_check_branch
    %13 = sbr.rel (0) target = $region13
  $region12: #{dit_forward.19} parent=0 // pred_region
    _
  $region13: #{dit_forward.19} parent=0 // pred_fallthru
    _
  %p15 = scmp.eq.s32.totalorder 0, 0
  // Predicated region
  $region14: #{dit_forward.19} parent=0 // pred_check
    %p16 = pneg %p15
  $region15: #{dit_forward.19} parent=0 // pred_check_branch
    %18 = sbr.rel (%p16) target = $region17
  $region16: #{dit_forward.19} parent=0 // pred_region
    %vm19 = vcmask 254976
    %20 = vst.msk [vmem:[#allocation2] sm:$0x3] %vm19, 0.0
  $region17: #{dit_forward.19} parent=0 // pred_fallthru
    _
  %v21 = vld [vmem:[#allocation2] sm:$0x3]
  %v22 = vld [vmem:[%s0] sm:$0x3]
  %v23 = vpack.c.bf16 %v22, %v22
  %v24 = vld [vmem:[%s1] sm:$0xf]
  %v25 = vld [vmem:[%s1 + $0x4] sm:$0xf]
  %v26 = vld [vmem:[%s1 + $0x8] sm:$0xf]
  %v27 = vld [vmem:[%s1 + $0xc] sm:$0xf]
  %v32 = vunpack.c.l.b16 %v24
  %v33 = vunpack.c.l.b16 %v25
  %v34 = vunpack.c.l.b16 %v26
  %v35 = vunpack.c.l.b16 %v27
  %v36 = vpack.c.b16 %v33, %v32
  %v37 = vpack.c.b16 %v35, %v34
  %vm40 = vcmask 261120
  %v42 = vsel %vm40, %v23, 0
  %44 = vmatprep.subr.bf16.mxu0 0
  %45 = vmatpush1.bf16.msra.mxu0 0
  %46 = vmatprep.subr.bf16.mxu0 0
  %47 = vmatpush1.bf16.msra.mxu0 0
  %48 = vmatprep.subr.bf16.mxu0 0
  %49 = vmatpush1.bf16.msra.mxu0 0
  %50 = vmatprep.subr.bf16.mxu0 0
  %51 = vmatpush1.bf16.msra.mxu0 0
  %52 = vmatprep.subr.bf16.mxu0 0
  %53 = vmatpush1.bf16.msra.mxu0 0
  %54 = vmatprep.subr.bf16.mxu0 0
  %55 = vmatpush1.bf16.msra.mxu0 0
  %56 = vmatprep.subr.bf16.mxu0 0
  %57 = vmatpush1.bf16.msra.mxu0 %v37
  %58 = vmatprep.subr.bf16.mxu0 0
  %59 = vmatpush1.bf16.msra.mxu0 %v36
  %60 = vmatprep.subr.bf16.mxu0 0
  %61 = vmatpush2.bf16.msra.mxu0 0
  %62 = vmatprep.subr.bf16.mxu0 0
  %63 = vmatpush2.bf16.msra.mxu0 0
  %64 = vmatprep.subr.bf16.mxu0 0
  %65 = vmatpush2.bf16.msra.mxu0 0
  %66 = vmatprep.subr.bf16.mxu0 0
  %67 = vmatpush2.bf16.msra.mxu0 0
  %68 = vmatprep.subr.bf16.mxu0 0
  %69 = vmatpush2.bf16.msra.mxu0 0
  %70 = vmatprep.subr.bf16.mxu0 0
  %71 = vmatpush2.bf16.msra.mxu0 0
  %72 = vmatprep.subr.bf16.mxu0 0
  %73 = vmatpush2.bf16.msra.mxu0 0
  %74 = vmatprep.subr.bf16.mxu0 0
  %75 = vmatpush2.bf16.msra.mxu0 0
  %76 = vmatprep.mubr.bf16.mxu0 0
  %77 = vmatmul.mubr.bf16.gmra.mxu0 %v42
  %v78 = vpop.f32.mrf.mxu0
  %v79 = vadd.f32 0.0, %v78
  %v80 = vpop.f32.mrf.mxu0
  %v81 = vpop.f32.mrf.mxu0
  %v82 = vpop.f32.mrf.mxu0
  %83 = vdwg.mxu0
  %v84 = vadd.f32 %v21, %v79
  %vm85 = vcmask 254976
  %86 = vst.msk [vmem:[#allocation2] sm:$0x3] %vm85, %v84
  // Predicated region
  $region18: #{dit_forward.19} parent=0 // pred_check
    %p87 = pneg %p15
  $region19: #{dit_forward.19} parent=0 // pred_check_branch
    %89 = sbr.rel (%p87) target = $region21
  $region20: #{dit_forward.19} parent=0 // pred_region
    %v90 = vld [vmem:[#allocation2] sm:$0x3]
    %v91 = vld [vmem:[%s2] sm:$0x1]
    %v93 = vlaneseq
    %v94 = vshrl.u32 %v93, 7
    %v95 = vsub.s32 0, %v94
    %v96 = vrot.slane %v91, %v95
    %v98 = vadd.f32 %v90, %v96
    %99 = vst.msk [vmem:[%s3] sm:$0x3] %vm85, %v98
  $region21: #{dit_forward.19} parent=0 // pred_fallthru
    _
  // Predicated region
  $region22: #{dit_forward.19} parent=0 // pred_check
    _
  $region23: #{dit_forward.19} parent=0 // pred_check_branch
    %101 = sbr.rel (0) target = $region25
  $region24: #{dit_forward.19} parent=0 // pred_region
    _
  $region25: #{dit_forward.19} parent=0 // pred_fallthru
    _
  // Predicated region
  $region26: #{dit_forward.19} parent=0 // pred_check
    _
  $region27: #{dit_forward.19} parent=0 // pred_check_branch
    %103 = sbr.rel (0) target = $region29
  $region28: #{dit_forward.19} parent=0 // pred_region
    _
  $region29: #{dit_forward.19} parent=0 // pred_fallthru
    _

// kernel: dit_forward.18
$region0: #{dit_forward.18}
  #allocation0 [shape = 'u32[]', space=smem, size = 0x4, offset = 0x4, fixed_abs, tag = 'smem constant byte address 0x4 - core index']
  #allocation1 [shape = 'u32[144,128]{1,0:T(1,128)}', space=vmem, size = 0x12000, scoped, tag = 'internal scratch']
  #allocation2 [shape = 'f32[2,32]{1,0:T(2,128)}', space=vmem, size = 0x400, scoped, tag = 'scratch operand']
  %s0 = inlined_call_operand.vmem [shape: f32[2,256], index: 0, kind: input, shape index: {}]
  %s1 = inlined_call_operand.hbm [shape: bf16[256,32], index: 1, kind: input, shape index: {}]
  %s2 = inlined_call_operand.vmem [shape: f32[1,32], index: 2, kind: input, shape index: {}]
  %s3 = inlined_call_operand.vmem [shape: f32[2,32], index: 3, kind: output, shape index: {}]
  %s4 = sld [smem:[#allocation0]]
  $region34: #{dit_forward.18} parent=0
    _
  %s6 = ssub.s32 1, %s4
  %s7 = scalar_select 0, %s6, %s4
  $region1: #{dit_forward.18} parent=0
    #allocation3 [shape = 'u8[65536]{0}', space=vmem, size = 0x10000, scoped, tag = 'input window, operand 1, single buffered']
    #allocation4 [shape = 's32[1]{0}', space=sflag, size = 0x4, scoped, tag = 'scoped memory for dit_forward.18']
    %8 = vsyncpa [#allocation4], 0
    // Predicated region
    $region2: #{dit_forward.18} parent=1 // pred_check
      _
    $region3: #{dit_forward.18} parent=1 // pred_check_branch
      %10 = sbr.rel (0) target = $region5
    $region4: #{dit_forward.18} parent=1 // pred_region
      _
    $region5: #{dit_forward.18} parent=1 // pred_fallthru
      _
    // Predicated region
    $region6: #{dit_forward.18} parent=1 // pred_check
      _
    $region7: #{dit_forward.18} parent=1 // pred_check_branch
      %12 = sbr.rel (0) target = $region9
    $region8: #{dit_forward.18} parent=1 // pred_region
      %s14 = ssub.s32 2048, 2048
      %15 = vsyncadd [#allocation4], %s14
      %s16 = sshll.u32 [#allocation3], 4
      %s17 = int_to_ptr.vmem [resolvable:$true] %s16
      %22 = dma.hbm_to_vmem [thread:$0]  %s1, 2048, %s17, [#allocation4], 64, 64, 4
    $region9: #{dit_forward.18} parent=1 // pred_fallthru
      _
    // Predicated region
    $region10: #{dit_forward.18} parent=1 // pred_check
      _
    $region11: #{dit_forward.18} parent=1 // pred_check_branch
      %24 = sbr.rel (0) target = $region13
    $region12: #{dit_forward.18} parent=1 // pred_region
      _
    $region13: #{dit_forward.18} parent=1 // pred_fallthru
      _
    // Predicated region
    $region14: #{dit_forward.18} parent=1 // pred_check
      _
    $region15: #{dit_forward.18} parent=1 // pred_check_branch
      %26 = sbr.rel (0) target = $region17
    $region16: #{dit_forward.18} parent=1 // pred_region
      %27 = dma.done [#allocation4], 2048
    $region17: #{dit_forward.18} parent=1 // pred_fallthru
      _
    %p29 = scmp.eq.s32.totalorder 0, 0
    // Predicated region
    $region18: #{dit_forward.18} parent=1 // pred_check
      %p30 = pneg %p29
    $region19: #{dit_forward.18} parent=1 // pred_check_branch
      %32 = sbr.rel (%p30) target = $region21
    $region20: #{dit_forward.18} parent=1 // pred_region
      %vm33 = vcmask 254976
      %34 = vst.msk [vmem:[#allocation2] sm:$0x3] %vm33, 0.0
    $region21: #{dit_forward.18} parent=1 // pred_fallthru
      _
    %v35 = vld [vmem:[#allocation2] sm:$0x3]
    %v36 = vld [vmem:[%s0] sm:$0xf]
    %v39 = vunpack.c.l.s4 1983009808
    %v40 = vunpack.c.0.s8 %v39
    %v41 = vlaneseq
    %v42 = vshrl.u32 %v41, 7
    %v43 = vsub.s32 %v40, %v42
    %v44 = vrot.slane %v36, %v43
    %v45 = vcombine.high %v44, %v44
    %v48 = vpack.c.bf16 %v44, %v44
    %v49 = vpack.c.bf16 %v45, %v45
    %v50 = vld [vmem:[#allocation3] sm:$0xf]
    %v51 = vld [vmem:[#allocation3 + $0x4] sm:$0xf]
    %v52 = vld [vmem:[#allocation3 + $0x8] sm:$0xf]
    %v53 = vld [vmem:[#allocation3 + $0xc] sm:$0xf]
    %v54 = vld [vmem:[#allocation3 + $0x10] sm:$0xf]
    %v55 = vld [vmem:[#allocation3 + $0x14] sm:$0xf]
    %v56 = vld [vmem:[#allocation3 + $0x18] sm:$0xf]
    %v57 = vld [vmem:[#allocation3 + $0x1c] sm:$0xf]
    %v58 = vld [vmem:[#allocation3 + $0x20] sm:$0xf]
    %v59 = vld [vmem:[#allocation3 + $0x24] sm:$0xf]
    %v60 = vld [vmem:[#allocation3 + $0x28] sm:$0xf]
    %v61 = vld [vmem:[#allocation3 + $0x2c] sm:$0xf]
    %v62 = vld [vmem:[#allocation3 + $0x30] sm:$0xf]
    %v63 = vld [vmem:[#allocation3 + $0x34] sm:$0xf]
    %v64 = vld [vmem:[#allocation3 + $0x38] sm:$0xf]
    %v65 = vld [vmem:[#allocation3 + $0x3c] sm:$0xf]
    %v66 = vld [vmem:[#allocation3 + $0x40] sm:$0xf]
    %v67 = vld [vmem:[#allocation3 + $0x44] sm:$0xf]
    %v68 = vld [vmem:[#allocation3 + $0x48] sm:$0xf]
    %v69 = vld [vmem:[#allocation3 + $0x4c] sm:$0xf]
    %v70 = vld [vmem:[#allocation3 + $0x50] sm:$0xf]
    %v71 = vld [vmem:[#allocation3 + $0x54] sm:$0xf]
    %v72 = vld [vmem:[#allocation3 + $0x58] sm:$0xf]
    %v73 = vld [vmem:[#allocation3 + $0x5c] sm:$0xf]
    %v74 = vld [vmem:[#allocation3 + $0x60] sm:$0xf]
    %v75 = vld [vmem:[#allocation3 + $0x64] sm:$0xf]
    %v76 = vld [vmem:[#allocation3 + $0x68] sm:$0xf]
    %v77 = vld [vmem:[#allocation3 + $0x6c] sm:$0xf]
    %v78 = vld [vmem:[#allocation3 + $0x70] sm:$0xf]
    %v79 = vld [vmem:[#allocation3 + $0x74] sm:$0xf]
    %v80 = vld [vmem:[#allocation3 + $0x78] sm:$0xf]
    %v81 = vld [vmem:[#allocation3 + $0x7c] sm:$0xf]
    %v114 = vunpack.c.l.b16 %v50
    %v115 = vunpack.c.l.b16 %v51
    %v116 = vunpack.c.l.b16 %v52
    %v117 = vunpack.c.l.b16 %v53
    %v118 = vunpack.c.l.b16 %v54
    %v119 = vunpack.c.l.b16 %v55
    %v120 = vunpack.c.l.b16 %v56
    %v121 = vunpack.c.l.b16 %v57
    %v122 = vunpack.c.l.b16 %v58
    %v123 = vunpack.c.l.b16 %v59
    %v124 = vunpack.c.l.b16 %v60
    %v125 = vunpack.c.l.b16 %v61
    %v126 = vunpack.c.l.b16 %v62
    %v127 = vunpack.c.l.b16 %v63
    %v128 = vunpack.c.l.b16 %v64
    %v129 = vunpack.c.l.b16 %v65
    %v130 = vunpack.c.l.b16 %v66
    %v131 = vunpack.c.l.b16 %v67
    %v132 = vunpack.c.l.b16 %v68
    %v133 = vunpack.c.l.b16 %v69
    %v134 = vunpack.c.l.b16 %v70
    %v135 = vunpack.c.l.b16 %v71
    %v136 = vunpack.c.l.b16 %v72
    %v137 = vunpack.c.l.b16 %v73
    %v138 = vunpack.c.l.b16 %v74
    %v139 = vunpack.c.l.b16 %v75
    %v140 = vunpack.c.l.b16 %v76
    %v141 = vunpack.c.l.b16 %v77
    %v142 = vunpack.c.l.b16 %v78
    %v143 = vunpack.c.l.b16 %v79
    %v144 = vunpack.c.l.b16 %v80
    %v145 = vunpack.c.l.b16 %v81
    %v146 = vpack.c.b16 %v115, %v114
    %v147 = vpack.c.b16 %v117, %v116
    %v148 = vpack.c.b16 %v119, %v118
    %v149 = vpack.c.b16 %v121, %v120
    %v150 = vpack.c.b16 %v123, %v122
    %v151 = vpack.c.b16 %v125, %v124
    %v152 = vpack.c.b16 %v127, %v126
    %v153 = vpack.c.b16 %v129, %v128
    %v154 = vpack.c.b16 %v131, %v130
    %v155 = vpack.c.b16 %v133, %v132
    %v156 = vpack.c.b16 %v135, %v134
    %v157 = vpack.c.b16 %v137, %v136
    %v158 = vpack.c.b16 %v139, %v138
    %v159 = vpack.c.b16 %v141, %v140
    %v160 = vpack.c.b16 %v143, %v142
    %v161 = vpack.c.b16 %v145, %v144
    %178 = vmatprep.subr.bf16.mxu0 0
    %179 = vmatpush1.bf16.msra.mxu0 %v153
    %180 = vmatprep.subr.bf16.mxu0 0
    %181 = vmatpush1.bf16.msra.mxu0 %v152
    %182 = vmatprep.subr.bf16.mxu0 0
    %183 = vmatpush1.bf16.msra.mxu0 %v151
    %184 = vmatprep.subr.bf16.mxu0 0
    %185 = vmatpush1.bf16.msra.mxu0 %v150
    %186 = vmatprep.subr.bf16.mxu0 0
    %187 = vmatpush1.bf16.msra.mxu0 %v149
    %188 = vmatprep.subr.bf16.mxu0 0
    %189 = vmatpush1.bf16.msra.mxu0 %v148
    %190 = vmatprep.subr.bf16.mxu0 0
    %191 = vmatpush1.bf16.msra.mxu0 %v147
    %192 = vmatprep.subr.bf16.mxu0 0
    %193 = vmatpush1.bf16.msra.mxu0 %v146
    %194 = vmatprep.subr.bf16.mxu0 0
    %195 = vmatpush2.bf16.msra.mxu0 %v161
    %196 = vmatprep.subr.bf16.mxu0 0
    %197 = vmatpush2.bf16.msra.mxu0 %v160
    %198 = vmatprep.subr.bf16.mxu0 0
    %199 = vmatpush2.bf16.msra.mxu0 %v159
    %200 = vmatprep.subr.bf16.mxu0 0
    %201 = vmatpush2.bf16.msra.mxu0 %v158
    %202 = vmatprep.subr.bf16.mxu0 0
    %203 = vmatpush2.bf16.msra.mxu0 %v157
    %204 = vmatprep.subr.bf16.mxu0 0
    %205 = vmatpush2.bf16.msra.mxu0 %v156
    %206 = vmatprep.subr.bf16.mxu0 0
    %207 = vmatpush2.bf16.msra.mxu0 %v155
    %208 = vmatprep.subr.bf16.mxu0 0
    %209 = vmatpush2.bf16.msra.mxu0 %v154
    %210 = vmatprep.mubr.bf16.mxu0 %v49
    %211 = vmatmul.mubr.bf16.gmra.mxu0 %v48
    %v212 = vpop.f32.mrf.mxu0
    %v213 = vadd.f32 0.0, %v212
    %v214 = vpop.f32.mrf.mxu0
    %v215 = vpop.f32.mrf.mxu0
    %v216 = vpop.f32.mrf.mxu0
    %217 = vdwg.mxu0
    %v218 = vadd.f32 %v35, %v213
    %vm219 = vcmask 254976
    %220 = vst.msk [vmem:[#allocation2] sm:$0x3] %vm219, %v218
    // Predicated region
    $region22: #{dit_forward.18} parent=1 // pred_check
      %p221 = pneg %p29
    $region23: #{dit_forward.18} parent=1 // pred_check_branch
      %223 = sbr.rel (%p221) target = $region25
    $region24: #{dit_forward.18} parent=1 // pred_region
      %v224 = vld [vmem:[#allocation2] sm:$0x3]
      %v225 = vld [vmem:[%s2] sm:$0x1]
      %v227 = vlaneseq
      %v228 = vshrl.u32 %v227, 7
      %v229 = vsub.s32 0, %v228
      %v230 = vrot.slane %v225, %v229
      %v232 = vadd.f32 %v224, %v230
      %233 = vst.msk [vmem:[%s3] sm:$0x3] %vm219, %v232
    $region25: #{dit_forward.18} parent=1 // pred_fallthru
      _
    // Predicated region
    $region26: #{dit_forward.18} parent=1 // pred_check
      _
    $region27: #{dit_forward.18} parent=1 // pred_check_branch
      %235 = sbr.rel (0) target = $region29
    $region28: #{dit_forward.18} parent=1 // pred_region
      _
    $region29: #{dit_forward.18} parent=1 // pred_fallthru
      _
    // Predicated region
    $region30: #{dit_forward.18} parent=1 // pred_check
      _
    $region31: #{dit_forward.18} parent=1 // pred_check_branch
      %237 = sbr.rel (0) target = $region33
    $region32: #{dit_forward.18} parent=1 // pred_region
      _
    $region33: #{dit_forward.18} parent=1 // pred_fallthru
      _
    %238 = vsyncpa [#allocation4], 1

// kernel: dit_forward.20
$region0: #{dit_forward.20}
  #allocation0 [shape = 'u32[]', space=smem, size = 0x4, offset = 0x4, fixed_abs, tag = 'smem constant byte address 0x4 - core index']
  #allocation1 [shape = 'u32[144,128]{1,0:T(1,128)}', space=vmem, size = 0x12000, scoped, tag = 'internal scratch']
  #allocation2 [shape = 'f32[2,448]{1,0:T(2,128)}', space=vmem, size = 0x1000, scoped, tag = 'scratch operand']
  %s0 = inlined_call_operand.vmem [shape: f32[2,32], index: 0, kind: input, shape index: {}]
  %s1 = inlined_call_operand.vmem [shape: bf16[32,448], index: 1, kind: input, shape index: {}]
  %s2 = inlined_call_operand.vmem [shape: f32[1,448], index: 2, kind: input, shape index: {}]
  %s3 = inlined_call_operand.vmem [shape: f32[2,448], index: 3, kind: output, shape index: {}]
  %s4 = sld [smem:[#allocation0]]
  $region30: #{dit_forward.20} parent=0
    _
  %s6 = ssub.s32 1, %s4
  %s7 = scalar_select 0, %s6, %s4
  // Predicated region
  $region2: #{dit_forward.20} parent=0 // pred_check
    _
  $region3: #{dit_forward.20} parent=0 // pred_check_branch
    %9 = sbr.rel (0) target = $region5
  $region4: #{dit_forward.20} parent=0 // pred_region
    _
  $region5: #{dit_forward.20} parent=0 // pred_fallthru
    _
  // Predicated region
  $region6: #{dit_forward.20} parent=0 // pred_check
    _
  $region7: #{dit_forward.20} parent=0 // pred_check_branch
    %11 = sbr.rel (0) target = $region9
  $region8: #{dit_forward.20} parent=0 // pred_region
    _
  $region9: #{dit_forward.20} parent=0 // pred_fallthru
    _
  // Predicated region
  $region10: #{dit_forward.20} parent=0 // pred_check
    _
  $region11: #{dit_forward.20} parent=0 // pred_check_branch
    %13 = sbr.rel (0) target = $region13
  $region12: #{dit_forward.20} parent=0 // pred_region
    _
  $region13: #{dit_forward.20} parent=0 // pred_fallthru
    _
  %p15 = scmp.eq.s32.totalorder 0, 0
  // Predicated region
  $region14: #{dit_forward.20} parent=0 // pred_check
    %p16 = pneg %p15
  $region15: #{dit_forward.20} parent=0 // pred_check_branch
    %18 = sbr.rel (%p16) target = $region17
  $region16: #{dit_forward.20} parent=0 // pred_region
    %vm19 = vcmask 1041408
    %vm20 = vcmask 1043458
    %vm21 = vmor %vm20, %vm19
    %vm22 = vcmask 1045508
    %vm23 = vmor %vm22, %vm21
    %vm24 = vcmask 523270
    %vm25 = vmor %vm24, %vm23
    %26 = vst.msk [vmem:[#allocation2] sm:$0xff] %vm25, 0.0
  $region17: #{dit_forward.20} parent=0 // pred_fallthru
    _
  %v27 = vld [vmem:[#allocation2] sm:$0xff]
  %v28 = vld [vmem:[%s0] sm:$0x3]
  %v29 = vpack.c.bf16 %v28, %v28
  %v30 = vld [vmem:[%s1] sm:$0xff]
  %v31 = vld [vmem:[%s1 + $0x8] sm:$0xff]
  %v32 = vld [vmem:[%s1 + $0x10] sm:$0xff]
  %v33 = vld [vmem:[%s1 + $0x18] sm:$0xff]
  %v34 = vld [vmem:[%s1 + $0x20] sm:$0xff]
  %v35 = vld [vmem:[%s1 + $0x28] sm:$0xff]
  %v36 = vld [vmem:[%s1 + $0x30] sm:$0xff]
  %v37 = vld [vmem:[%s1 + $0x38] sm:$0xff]
  %v46 = vunpack.c.l.b16 %v30
  %v47 = vunpack.c.h.b16 %v30
  %v48 = vunpack.c.l.b16 %v31
  %v49 = vunpack.c.h.b16 %v31
  %v50 = vunpack.c.l.b16 %v32
  %v51 = vunpack.c.h.b16 %v32
  %v52 = vunpack.c.l.b16 %v33
  %v53 = vunpack.c.h.b16 %v33
  %v54 = vunpack.c.l.b16 %v34
  %v55 = vunpack.c.h.b16 %v34
  %v56 = vunpack.c.l.b16 %v35
  %v57 = vunpack.c.h.b16 %v35
  %v58 = vunpack.c.l.b16 %v36
  %v59 = vunpack.c.h.b16 %v36
  %v60 = vunpack.c.l.b16 %v37
  %v61 = vunpack.c.h.b16 %v37
  %v62 = vpack.c.b16 %v50, %v46
  %v63 = vpack.c.b16 %v51, %v47
  %v64 = vpack.c.b16 %v52, %v48
  %v65 = vpack.c.b16 %v53, %v49
  %v66 = vpack.c.b16 %v58, %v54
  %v67 = vpack.c.b16 %v59, %v55
  %v68 = vpack.c.b16 %v60, %v56
  %v69 = vpack.c.b16 %v61, %v57
  %vm78 = vcmask 261120
  %v80 = vsel %vm78, %v29, 0
  %82 = vmatprep.subr.bf16.mxu0 0
  %83 = vmatpush1.bf16.msra.mxu0 0
  %84 = vmatprep.subr.bf16.mxu0 0
  %85 = vmatpush1.bf16.msra.mxu0 0
  %86 = vmatprep.subr.bf16.mxu0 0
  %87 = vmatpush1.bf16.msra.mxu0 0
  %88 = vmatprep.subr.bf16.mxu0 0
  %89 = vmatpush1.bf16.msra.mxu0 0
  %90 = vmatprep.subr.bf16.mxu0 0
  %91 = vmatpush1.bf16.msra.mxu0 0
  %92 = vmatprep.subr.bf16.mxu0 0
  %93 = vmatpush1.bf16.msra.mxu0 0
  %94 = vmatprep.subr.bf16.mxu0 %v67
  %95 = vmatpush1.bf16.msra.mxu0 %v66
  %96 = vmatprep.subr.bf16.mxu0 %v63
  %97 = vmatpush1.bf16.msra.mxu0 %v62
  %98 = vmatprep.subr.bf16.mxu0 0
  %99 = vmatpush2.bf16.msra.mxu0 0
  %100 = vmatprep.subr.bf16.mxu0 0
  %101 = vmatpush2.bf16.msra.mxu0 0
  %102 = vmatprep.subr.bf16.mxu0 0
  %103 = vmatpush2.bf16.msra.mxu0 0
  %104 = vmatprep.subr.bf16.mxu0 0
  %105 = vmatpush2.bf16.msra.mxu0 0
  %106 = vmatprep.subr.bf16.mxu0 0
  %107 = vmatpush2.bf16.msra.mxu0 0
  %108 = vmatprep.subr.bf16.mxu0 0
  %109 = vmatpush2.bf16.msra.mxu0 0
  %110 = vmatprep.subr.bf16.mxu0 0
  %111 = vmatpush2.bf16.msra.mxu0 0
  %112 = vmatprep.subr.bf16.mxu0 0
  %113 = vmatpush2.bf16.msra.mxu0 0
  %114 = vmatprep.mubr.bf16.mxu0 0
  %115 = vmatmul.mubr.bf16.gmra.mxu0 %v80
  %v116 = vpop.f32.mrf.mxu0
  %v117 = vadd.f32 0.0, %v116
  %v118 = vpop.f32.mrf.mxu0
  %v119 = vadd.f32 0.0, %v118
  %v120 = vpop.f32.mrf.mxu0
  %v121 = vpop.f32.mrf.mxu0
  %122 = vdwg.mxu0
  %123 = vmatprep.subr.bf16.mxu0 0
  %124 = vmatpush1.bf16.msra.mxu0 0
  %125 = vmatprep.subr.bf16.mxu0 0
  %126 = vmatpush1.bf16.msra.mxu0 0
  %127 = vmatprep.subr.bf16.mxu0 0
  %128 = vmatpush1.bf16.msra.mxu0 0
  %129 = vmatprep.subr.bf16.mxu0 0
  %130 = vmatpush1.bf16.msra.mxu0 0
  %131 = vmatprep.subr.bf16.mxu0 0
  %132 = vmatpush1.bf16.msra.mxu0 0
  %133 = vmatprep.subr.bf16.mxu0 0
  %134 = vmatpush1.bf16.msra.mxu0 0
  %135 = vmatprep.subr.bf16.mxu0 %v69
  %136 = vmatpush1.bf16.msra.mxu0 %v68
  %137 = vmatprep.subr.bf16.mxu0 %v65
  %138 = vmatpush1.bf16.msra.mxu0 %v64
  %139 = vmatprep.subr.bf16.mxu0 0
  %140 = vmatpush2.bf16.msra.mxu0 0
  %141 = vmatprep.subr.bf16.mxu0 0
  %142 = vmatpush2.bf16.msra.mxu0 0
  %143 = vmatprep.subr.bf16.mxu0 0
  %144 = vmatpush2.bf16.msra.mxu0 0
  %145 = vmatprep.subr.bf16.mxu0 0
  %146 = vmatpush2.bf16.msra.mxu0 0
  %147 = vmatprep.subr.bf16.mxu0 0
  %148 = vmatpush2.bf16.msra.mxu0 0
  %149 = vmatprep.subr.bf16.mxu0 0
  %150 = vmatpush2.bf16.msra.mxu0 0
  %151 = vmatprep.subr.bf16.mxu0 0
  %152 = vmatpush2.bf16.msra.mxu0 0
  %153 = vmatprep.subr.bf16.mxu0 0
  %154 = vmatpush2.bf16.msra.mxu0 0
  %155 = vmatprep.mubr.bf16.mxu0 0
  %156 = vmatmul.mubr.bf16.gmra.mxu0 %v80
  %v157 = vpop.f32.mrf.mxu0
  %v158 = vadd.f32 0.0, %v157
  %v159 = vpop.f32.mrf.mxu0
  %v160 = vadd.f32 0.0, %v159
  %v161 = vpop.f32.mrf.mxu0
  %v162 = vpop.f32.mrf.mxu0
  %163 = vdwg.mxu0
  %v168 = vcombine.low %v117, %v119
  %v169 = vcombine.low %v158, %v160
  %v171 = vunpack.c.l.s4 1983009808
  %v172 = vunpack.c.0.s8 %v171
  %v173 = vlaneseq
  %v174 = vshrl.u32 %v173, 7
  %v175 = vsub.s32 %v172, %v174
  %v176 = vrot.slane %v168, %v175
  %v178 = vunpack.c.l.s4 1983009808
  %v179 = vunpack.c.0.s8 %v178
  %v180 = vlaneseq
  %v181 = vshrl.u32 %v180, 7
  %v182 = vsub.s32 %v179, %v181
  %v183 = vrot.slane %v169, %v182
  %v184 = vcombine.low %v176, %v183
  %v186 = vadd.f32 %v27, %v184
  %vm187 = vcmask 1041408
  %vm188 = vcmask 1043458
  %vm189 = vmor %vm188, %vm187
  %vm190 = vcmask 1045508
  %vm191 = vmor %vm190, %vm189
  %vm192 = vcmask 523270
  %vm193 = vmor %vm192, %vm191
  %194 = vst.msk [vmem:[#allocation2] sm:$0xff] %vm193, %v186
  // Predicated region
  $region18: #{dit_forward.20} parent=0 // pred_check
    %p195 = pneg %p15
  $region19: #{dit_forward.20} parent=0 // pred_check_branch
    %197 = sbr.rel (%p195) target = $region21
  $region20: #{dit_forward.20} parent=0 // pred_region
    %v198 = vld [vmem:[#allocation2] sm:$0xff]
    %v199 = vld [vmem:[%s2] sm:$0xf]
    %v201 = vlaneseq
    %v202 = vshrl.u32 %v201, 7
    %v203 = vsub.s32 0, %v202
    %v204 = vrot.slane %v199, %v203
    %v205 = vlaneseq
    %v206 = vshrl.u32 %v205, 7
    %v207 = vsub.s32 1, %v206
    %v208 = vrot.slane %v199, %v207
    %v209 = vlaneseq
    %v210 = vshrl.u32 %v209, 7
    %v211 = vsub.s32 2, %v210
    %v212 = vrot.slane %v199, %v211
    %v213 = vlaneseq
    %v214 = vshrl.u32 %v213, 7
    %v215 = vsub.s32 3, %v214
    %v216 = vrot.slane %v199, %v215
    %v217 = vcombine.low %v204, %v208
    %v218 = vcombine.low %v212, %v216
    %v220 = vunpack.c.l.s4 1983009808
    %v221 = vunpack.c.0.s8 %v220
    %v222 = vlaneseq
    %v223 = vshrl.u32 %v222, 7
    %v224 = vsub.s32 %v221, %v223
    %v225 = vrot.slane %v217, %v224
    %v227 = vunpack.c.l.s4 1983009808
    %v228 = vunpack.c.0.s8 %v227
    %v229 = vlaneseq
    %v230 = vshrl.u32 %v229, 7
    %v231 = vsub.s32 %v228, %v230
    %v232 = vrot.slane %v218, %v231
    %v233 = vcombine.low %v225, %v232
    %v235 = vadd.f32 %v198, %v233
    %236 = vst.msk [vmem:[%s3] sm:$0xff] %vm193, %v235
  $region21: #{dit_forward.20} parent=0 // pred_fallthru
    _
  // Predicated region
  $region22: #{dit_forward.20} parent=0 // pred_check
    _
  $region23: #{dit_forward.20} parent=0 // pred_check_branch
    %238 = sbr.rel (0) target = $region25
  $region24: #{dit_forward.20} parent=0 // pred_region
    _
  $region25: #{dit_forward.20} parent=0 // pred_fallthru
    _
  // Predicated region
  $region26: #{dit_forward.20} parent=0 // pred_check
    _
  $region27: #{dit_forward.20} parent=0 // pred_check_branch
    %240 = sbr.rel (0) target = $region29
  $region28: #{dit_forward.20} parent=0 // pred_region
    _
  $region29: #{dit_forward.20} parent=0 // pred_fallthru
    _

// kernel: dit_forward.21
$region0: #{dit_forward.21}
  #allocation0 [shape = 'u32[]', space=smem, size = 0x4, offset = 0x4, fixed_abs, tag = 'smem constant byte address 0x4 - core index']
  #allocation1 [shape = 'u32[144,128]{1,0:T(1,128)}', space=vmem, size = 0x12000, scoped, tag = 'internal scratch']
  #allocation2 [shape = 'f32[128,32]{1,0:T(8,128)}', space=vmem, size = 0x10000, scoped, tag = 'scratch operand']
  %s0 = inlined_call_operand.vmem [shape: f32[128,16], index: 0, kind: input, shape index: {}]
  %s1 = inlined_call_operand.vmem [shape: bf16[16,32], index: 1, kind: input, shape index: {}]
  %s2 = inlined_call_operand.vmem [shape: f32[1,32], index: 2, kind: input, shape index: {}]
  %s3 = inlined_call_operand.vmem [shape: f32[128,32], index: 3, kind: output, shape index: {}]
  %s4 = sld [smem:[#allocation0]]
  $region30: #{dit_forward.21} parent=0
    _
  %s6 = ssub.s32 1, %s4
  %s7 = scalar_select 0, %s6, %s4
  // Predicated region
  $region2: #{dit_forward.21} parent=0 // pred_check
    _
  $region3: #{dit_forward.21} parent=0 // pred_check_branch
    %9 = sbr.rel (0) target = $region5
  $region4: #{dit_forward.21} parent=0 // pred_region
    _
  $region5: #{dit_forward.21} parent=0 // pred_fallthru
    _
  // Predicated region
  $region6: #{dit_forward.21} parent=0 // pred_check
    _
  $region7: #{dit_forward.21} parent=0 // pred_check_branch
    %11 = sbr.rel (0) target = $region9
  $region8: #{dit_forward.21} parent=0 // pred_region
    _
  $region9: #{dit_forward.21} parent=0 // pred_fallthru
    _
  // Predicated region
  $region10: #{dit_forward.21} parent=0 // pred_check
    _
  $region11: #{dit_forward.21} parent=0 // pred_check_branch
    %13 = sbr.rel (0) target = $region13
  $region12: #{dit_forward.21} parent=0 // pred_region
    _
  $region13: #{dit_forward.21} parent=0 // pred_fallthru
    _
  %p15 = scmp.eq.s32.totalorder 0, 0
  // Predicated region
  $region14: #{dit_forward.21} parent=0 // pred_check
    %p16 = pneg %p15
  $region15: #{dit_forward.21} parent=0 // pred_check_branch
    %18 = sbr.rel (%p16) target = $region17
  $region16: #{dit_forward.21} parent=0 // pred_region
    %vm19 = vcmask 261120
    %20 = vst.msk [vmem:[#allocation2] sm:$0xff] %vm19, 0.0
    %21 = vst.msk [vmem:[#allocation2 + $0x8] sm:$0xff] %vm19, 0.0
    %22 = vst.msk [vmem:[#allocation2 + $0x10] sm:$0xff] %vm19, 0.0
    %23 = vst.msk [vmem:[#allocation2 + $0x18] sm:$0xff] %vm19, 0.0
    %24 = vst.msk [vmem:[#allocation2 + $0x20] sm:$0xff] %vm19, 0.0
    %25 = vst.msk [vmem:[#allocation2 + $0x28] sm:$0xff] %vm19, 0.0
    %26 = vst.msk [vmem:[#allocation2 + $0x30] sm:$0xff] %vm19, 0.0
    %27 = vst.msk [vmem:[#allocation2 + $0x38] sm:$0xff] %vm19, 0.0
    %28 = vst.msk [vmem:[#allocation2 + $0x40] sm:$0xff] %vm19, 0.0
    %29 = vst.msk [vmem:[#allocation2 + $0x48] sm:$0xff] %vm19, 0.0
    %30 = vst.msk [vmem:[#allocation2 + $0x50] sm:$0xff] %vm19, 0.0
    %31 = vst.msk [vmem:[#allocation2 + $0x58] sm:$0xff] %vm19, 0.0
    %32 = vst.msk [vmem:[#allocation2 + $0x60] sm:$0xff] %vm19, 0.0
    %33 = vst.msk [vmem:[#allocation2 + $0x68] sm:$0xff] %vm19, 0.0
    %34 = vst.msk [vmem:[#allocation2 + $0x70] sm:$0xff] %vm19, 0.0
    %35 = vst.msk [vmem:[#allocation2 + $0x78] sm:$0xff] %vm19, 0.0
  $region17: #{dit_forward.21} parent=0 // pred_fallthru
    _
  %v36 = vld [vmem:[#allocation2] sm:$0xff]
  %v37 = vld [vmem:[#allocation2 + $0x8] sm:$0xff]
  %v38 = vld [vmem:[#allocation2 + $0x10] sm:$0xff]
  %v39 = vld [vmem:[#allocation2 + $0x18] sm:$0xff]
  %v40 = vld [vmem:[#allocation2 + $0x20] sm:$0xff]
  %v41 = vld [vmem:[#allocation2 + $0x28] sm:$0xff]
  %v42 = vld [vmem:[#allocation2 + $0x30] sm:$0xff]
  %v43 = vld [vmem:[#allocation2 + $0x38] sm:$0xff]
  %v44 = vld [vmem:[#allocation2 + $0x40] sm:$0xff]
  %v45 = vld [vmem:[#allocation2 + $0x48] sm:$0xff]
  %v46 = vld [vmem:[#allocation2 + $0x50] sm:$0xff]
  %v47 = vld [vmem:[#allocation2 + $0x58] sm:$0xff]
  %v48 = vld [vmem:[#allocation2 + $0x60] sm:$0xff]
  %v49 = vld [vmem:[#allocation2 + $0x68] sm:$0xff]
  %v50 = vld [vmem:[#allocation2 + $0x70] sm:$0xff]
  %v51 = vld [vmem:[#allocation2 + $0x78] sm:$0xff]
  %v52 = vld [vmem:[%s0] sm:$0xff]
  %v53 = vld [vmem:[%s0 + $0x8] sm:$0xff]
  %v54 = vld [vmem:[%s0 + $0x10] sm:$0xff]
  %v55 = vld [vmem:[%s0 + $0x18] sm:$0xff]
  %v56 = vld [vmem:[%s0 + $0x20] sm:$0xff]
  %v57 = vld [vmem:[%s0 + $0x28] sm:$0xff]
  %v58 = vld [vmem:[%s0 + $0x30] sm:$0xff]
  %v59 = vld [vmem:[%s0 + $0x38] sm:$0xff]
  %v60 = vld [vmem:[%s0 + $0x40] sm:$0xff]
  %v61 = vld [vmem:[%s0 + $0x48] sm:$0xff]
  %v62 = vld [vmem:[%s0 + $0x50] sm:$0xff]
  %v63 = vld [vmem:[%s0 + $0x58] sm:$0xff]
  %v64 = vld [vmem:[%s0 + $0x60] sm:$0xff]
  %v65 = vld [vmem:[%s0 + $0x68] sm:$0xff]
  %v66 = vld [vmem:[%s0 + $0x70] sm:$0xff]
  %v67 = vld [vmem:[%s0 + $0x78] sm:$0xff]
  %v68 = vpack.c.bf16 %v53, %v52
  %v69 = vpack.c.bf16 %v55, %v54
  %v70 = vpack.c.bf16 %v57, %v56
  %v71 = vpack.c.bf16 %v59, %v58
  %v72 = vpack.c.bf16 %v61, %v60
  %v73 = vpack.c.bf16 %v63, %v62
  %v74 = vpack.c.bf16 %v65, %v64
  %v75 = vpack.c.bf16 %v67, %v66
  %v76 = vld [vmem:[%s1] sm:$0xf]
  %v77 = vld [vmem:[%s1 + $0x4] sm:$0xf]
  %v80 = vunpack.c.l.b16 %v76
  %v81 = vunpack.c.l.b16 %v77
  %v82 = vpack.c.b16 %v81, %v80
  %vm84 = vcmask 130048
  %v86 = vsel %vm84, %v68, 0
  %v89 = vsel %vm84, %v69, 0
  %v92 = vsel %vm84, %v70, 0
  %v95 = vsel %vm84, %v71, 0
  %v98 = vsel %vm84, %v72, 0
  %v101 = vsel %vm84, %v73, 0
  %v104 = vsel %vm84, %v74, 0
  %v107 = vsel %vm84, %v75, 0
  %109 = vmatprep.subr.bf16.mxu0 0
  %110 = vmatpush1.bf16.msra.mxu0 0
  %111 = vmatprep.subr.bf16.mxu0 0
  %112 = vmatpush1.bf16.msra.mxu0 0
  %113 = vmatprep.subr.bf16.mxu0 0
  %114 = vmatpush1.bf16.msra.mxu0 0
  %115 = vmatprep.subr.bf16.mxu0 0
  %116 = vmatpush1.bf16.msra.mxu0 0
  %117 = vmatprep.subr.bf16.mxu0 0
  %118 = vmatpush1.bf16.msra.mxu0 0
  %119 = vmatprep.subr.bf16.mxu0 0
  %120 = vmatpush1.bf16.msra.mxu0 0
  %121 = vmatprep.subr.bf16.mxu0 0
  %122 = vmatpush1.bf16.msra.mxu0 0
  %123 = vmatprep.subr.bf16.mxu0 0
  %124 = vmatpush1.bf16.msra.mxu0 %v82
  %125 = vmatprep.subr.bf16.mxu0 0
  %126 = vmatpush2.bf16.msra.mxu0 0
  %127 = vmatprep.subr.bf16.mxu0 0
  %128 = vmatpush2.bf16.msra.mxu0 0
  %129 = vmatprep.subr.bf16.mxu0 0
  %130 = vmatpush2.bf16.msra.mxu0 0
  %131 = vmatprep.subr.bf16.mxu0 0
  %132 = vmatpush2.bf16.msra.mxu0 0
  %133 = vmatprep.subr.bf16.mxu0 0
  %134 = vmatpush2.bf16.msra.mxu0 0
  %135 = vmatprep.subr.bf16.mxu0 0
  %136 = vmatpush2.bf16.msra.mxu0 0
  %137 = vmatprep.subr.bf16.mxu0 0
  %138 = vmatpush2.bf16.msra.mxu0 0
  %139 = vmatprep.subr.bf16.mxu0 0
  %140 = vmatpush2.bf16.msra.mxu0 0
  %141 = vmatprep.mubr.bf16.mxu0 0
  %142 = vmatmul.mubr.bf16.gmra.mxu0 %v86
  %v143 = vpop.f32.mrf.mxu0
  %v144 = vadd.f32 0.0, %v143
  %v145 = vpop.f32.mrf.mxu0
  %v146 = vpop.f32.mrf.mxu0
  %v147 = vadd.f32 0.0, %v146
  %v148 = vpop.f32.mrf.mxu0
  %149 = vmatprep.mubr.bf16.mxu0 0
  %150 = vmatmul.mubr.bf16.gmra.mxu0 %v89
  %v151 = vpop.f32.mrf.mxu0
  %v152 = vadd.f32 0.0, %v151
  %v153 = vpop.f32.mrf.mxu0
  %v154 = vpop.f32.mrf.mxu0
  %v155 = vadd.f32 0.0, %v154
  %v156 = vpop.f32.mrf.mxu0
  %157 = vmatprep.mubr.bf16.mxu0 0
  %158 = vmatmul.mubr.bf16.gmra.mxu0 %v92
  %v159 = vpop.f32.mrf.mxu0
  %v160 = vadd.f32 0.0, %v159
  %v161 = vpop.f32.mrf.mxu0
  %v162 = vpop.f32.mrf.mxu0
  %v163 = vadd.f32 0.0, %v162
  %v164 = vpop.f32.mrf.mxu0
  %165 = vmatprep.mubr.bf16.mxu0 0
  %166 = vmatmul.mubr.bf16.gmra.mxu0 %v95
  %v167 = vpop.f32.mrf.mxu0
  %v168 = vadd.f32 0.0, %v167
  %v169 = vpop.f32.mrf.mxu0
  %v170 = vpop.f32.mrf.mxu0
  %v171 = vadd.f32 0.0, %v170
  %v172 = vpop.f32.mrf.mxu0
  %173 = vmatprep.mubr.bf16.mxu0 0
  %174 = vmatmul.mubr.bf16.gmra.mxu0 %v98
  %v175 = vpop.f32.mrf.mxu0
  %v176 = vadd.f32 0.0, %v175
  %v177 = vpop.f32.mrf.mxu0
  %v178 = vpop.f32.mrf.mxu0
  %v179 = vadd.f32 0.0, %v178
  %v180 = vpop.f32.mrf.mxu0
  %181 = vmatprep.mubr.bf16.mxu0 0
  %182 = vmatmul.mubr.bf16.gmra.mxu0 %v101
  %v183 = vpop.f32.mrf.mxu0
  %v184 = vadd.f32 0.0, %v183
  %v185 = vpop.f32.mrf.mxu0
  %v186 = vpop.f32.mrf.mxu0
  %v187 = vadd.f32 0.0, %v186
  %v188 = vpop.f32.mrf.mxu0
  %189 = vmatprep.mubr.bf16.mxu0 0
  %190 = vmatmul.mubr.bf16.gmra.mxu0 %v104
  %v191 = vpop.f32.mrf.mxu0
  %v192 = vadd.f32 0.0, %v191
  %v193 = vpop.f32.mrf.mxu0
  %v194 = vpop.f32.mrf.mxu0
  %v195 = vadd.f32 0.0, %v194
  %v196 = vpop.f32.mrf.mxu0
  %197 = vmatprep.mubr.bf16.mxu0 0
  %198 = vmatmul.mubr.bf16.gmra.mxu0 %v107
  %v199 = vpop.f32.mrf.mxu0
  %v200 = vadd.f32 0.0, %v199
  %v201 = vpop.f32.mrf.mxu0
  %v202 = vpop.f32.mrf.mxu0
  %v203 = vadd.f32 0.0, %v202
  %v204 = vpop.f32.mrf.mxu0
  %205 = vdwg.mxu0
  %v206 = vadd.f32 %v36, %v144
  %v207 = vadd.f32 %v37, %v147
  %v208 = vadd.f32 %v38, %v152
  %v209 = vadd.f32 %v39, %v155
  %v210 = vadd.f32 %v40, %v160
  %v211 = vadd.f32 %v41, %v163
  %v212 = vadd.f32 %v42, %v168
  %v213 = vadd.f32 %v43, %v171
  %v214 = vadd.f32 %v44, %v176
  %v215 = vadd.f32 %v45, %v179
  %v216 = vadd.f32 %v46, %v184
  %v217 = vadd.f32 %v47, %v187
  %v218 = vadd.f32 %v48, %v192
  %v219 = vadd.f32 %v49, %v195
  %v220 = vadd.f32 %v50, %v200
  %v221 = vadd.f32 %v51, %v203
  %vm222 = vcmask 261120
  %223 = vst.msk [vmem:[#allocation2] sm:$0xff] %vm222, %v206
  %224 = vst.msk [vmem:[#allocation2 + $0x8] sm:$0xff] %vm222, %v207
  %225 = vst.msk [vmem:[#allocation2 + $0x10] sm:$0xff] %vm222, %v208
  %226 = vst.msk [vmem:[#allocation2 + $0x18] sm:$0xff] %vm222, %v209
  %227 = vst.msk [vmem:[#allocation2 + $0x20] sm:$0xff] %vm222, %v210
  %228 = vst.msk [vmem:[#allocation2 + $0x28] sm:$0xff] %vm222, %v211
  %229 = vst.msk [vmem:[#allocation2 + $0x30] sm:$0xff] %vm222, %v212
  %230 = vst.msk [vmem:[#allocation2 + $0x38] sm:$0xff] %vm222, %v213
  %231 = vst.msk [vmem:[#allocation2 + $0x40] sm:$0xff] %vm222, %v214
  %232 = vst.msk [vmem:[#allocation2 + $0x48] sm:$0xff] %vm222, %v215
  %233 = vst.msk [vmem:[#allocation2 + $0x50] sm:$0xff] %vm222, %v216
  %234 = vst.msk [vmem:[#allocation2 + $0x58] sm:$0xff] %vm222, %v217
  %235 = vst.msk [vmem:[#allocation2 + $0x60] sm:$0xff] %vm222, %v218
  %236 = vst.msk [vmem:[#allocation2 + $0x68] sm:$0xff] %vm222, %v219
  %237 = vst.msk [vmem:[#allocation2 + $0x70] sm:$0xff] %vm222, %v220
  %238 = vst.msk [vmem:[#allocation2 + $0x78] sm:$0xff] %vm222, %v221
  // Predicated region
  $region18: #{dit_forward.21} parent=0 // pred_check
    %p239 = pneg %p15
  $region19: #{dit_forward.21} parent=0 // pred_check_branch
    %241 = sbr.rel (%p239) target = $region21
  $region20: #{dit_forward.21} parent=0 // pred_region
    %v242 = vld [vmem:[#allocation2] sm:$0xff]
    %v243 = vld [vmem:[#allocation2 + $0x8] sm:$0xff]
    %v244 = vld [vmem:[#allocation2 + $0x10] sm:$0xff]
    %v245 = vld [vmem:[#allocation2 + $0x18] sm:$0xff]
    %v246 = vld [vmem:[#allocation2 + $0x20] sm:$0xff]
    %v247 = vld [vmem:[#allocation2 + $0x28] sm:$0xff]
    %v248 = vld [vmem:[#allocation2 + $0x30] sm:$0xff]
    %v249 = vld [vmem:[#allocation2 + $0x38] sm:$0xff]
    %v250 = vld [vmem:[#allocation2 + $0x40] sm:$0xff]
    %v251 = vld [vmem:[#allocation2 + $0x48] sm:$0xff]
    %v252 = vld [vmem:[#allocation2 + $0x50] sm:$0xff]
    %v253 = vld [vmem:[#allocation2 + $0x58] sm:$0xff]
    %v254 = vld [vmem:[#allocation2 + $0x60] sm:$0xff]
    %v255 = vld [vmem:[#allocation2 + $0x68] sm:$0xff]
    %v256 = vld [vmem:[#allocation2 + $0x70] sm:$0xff]
    %v257 = vld [vmem:[#allocation2 + $0x78] sm:$0xff]
    %v258 = vld [vmem:[%s2] sm:$0x1]
    %v260 = vlaneseq
    %v261 = vshrl.u32 %v260, 7
    %v262 = vsub.s32 0, %v261
    %v263 = vrot.slane %v258, %v262
    %v265 = vadd.f32 %v242, %v263
    %v266 = vadd.f32 %v243, %v263
    %v267 = vadd.f32 %v244, %v263
    %v268 = vadd.f32 %v245, %v263
    %v269 = vadd.f32 %v246, %v263
    %v270 = vadd.f32 %v247, %v263
    %v271 = vadd.f32 %v248, %v263
    %v272 = vadd.f32 %v249, %v263
    %v273 = vadd.f32 %v250, %v263
    %v274 = vadd.f32 %v251, %v263
    %v275 = vadd.f32 %v252, %v263
    %v276 = vadd.f32 %v253, %v263
    %v277 = vadd.f32 %v254, %v263
    %v278 = vadd.f32 %v255, %v263
    %v279 = vadd.f32 %v256, %v263
    %v280 = vadd.f32 %v257, %v263
    %281 = vst.msk [vmem:[%s3] sm:$0xff] %vm222, %v265
    %282 = vst.msk [vmem:[%s3 + $0x8] sm:$0xff] %vm222, %v266
    %283 = vst.msk [vmem:[%s3 + $0x10] sm:$0xff] %vm222, %v267
    %284 = vst.msk [vmem:[%s3 + $0x18] sm:$0xff] %vm222, %v268
    %285 = vst.msk [vmem:[%s3 + $0x20] sm:$0xff] %vm222, %v269
    %286 = vst.msk [vmem:[%s3 + $0x28] sm:$0xff] %vm222, %v270
    %287 = vst.msk [vmem:[%s3 + $0x30] sm:$0xff] %vm222, %v271
    %288 = vst.msk [vmem:[%s3 + $0x38] sm:$0xff] %vm222, %v272
    %289 = vst.msk [vmem:[%s3 + $0x40] sm:$0xff] %vm222, %v273
    %290 = vst.msk [vmem:[%s3 + $0x48] sm:$0xff] %vm222, %v274
    %291 = vst.msk [vmem:[%s3 + $0x50] sm:$0xff] %vm222, %v275
    %292 = vst.msk [vmem:[%s3 + $0x58] sm:$0xff] %vm222, %v276
    %293 = vst.msk [vmem:[%s3 + $0x60] sm:$0xff] %vm222, %v277
    %294 = vst.msk [vmem:[%s3 + $0x68] sm:$0xff] %vm222, %v278
    %295 = vst.msk [vmem:[%s3 + $0x70] sm:$0xff] %vm222, %v279
    %296 = vst.msk [vmem:[%s3 + $0x78] sm:$0xff] %vm222, %v280
  $region21: #{dit_forward.21} parent=0 // pred_fallthru
    _
  // Predicated region
  $region22: #{dit_forward.21} parent=0 // pred_check
    _
  $region23: #{dit_forward.21} parent=0 // pred_check_branch
    %298 = sbr.rel (0) target = $region25
  $region24: #{dit_forward.21} parent=0 // pred_region
    _
  $region25: #{dit_forward.21} parent=0 // pred_fallthru
    _
  // Predicated region
  $region26: #{dit_forward.21} parent=0 // pred_check
    _
  $region27: #{dit_forward.21} parent=0 // pred_check_branch
    %300 = sbr.rel (0) target = $region29
  $region28: #{dit_forward.21} parent=0 // pred_region
    _
  $region29: #{dit_forward.21} parent=0 // pred_fallthru
    _

// kernel: dit_forward.23
$region0: #{dit_forward.23}
  #allocation0 [shape = 'u32[]', space=smem, size = 0x4, offset = 0x4, fixed_abs, tag = 'smem constant byte address 0x4 - core index']
  #allocation1 [shape = 'u32[144,128]{1,0:T(1,128)}', space=vmem, size = 0x12000, scoped, tag = 'internal scratch']
  %s0 = inlined_call_operand.vmem [shape: f32[2,64,32], index: 0, kind: input, shape index: {}]
  %s1 = inlined_call_operand.vmem [shape: f32[2,1,32], index: 1, kind: input, shape index: {}]
  %s2 = inlined_call_operand.vmem [shape: f32[2,1,32], index: 2, kind: input, shape index: {}]
  %s3 = inlined_call_operand.vmem [shape: bf16[32,96], index: 3, kind: input, shape index: {}]
  %s4 = inlined_call_operand.vmem [shape: f32[1,96], index: 4, kind: input, shape index: {}]
  %s5 = inlined_call_operand.vmem [shape: f32[2,64,96], index: 5, kind: output, shape index: {}]
  %s6 = sld [smem:[#allocation0]]
  $region53: #{dit_forward.23} parent=0
    _
  %s8 = ssub.s32 1, %s6
  %s9 = scalar_select 0, %s8, %s6
  loop: start=0, step=1, limit=4
  $region2: #{dit_forward.23} parent=0 // loop_pre_header
    _
  $region3: #{dit_forward.23} parent=0 // loop_header
    %s11 = sphi 0, %s15
    %p12 = scmp.ge.s32.totalorder %s11, 4
    %s18 = sphi 0, %s37
    %s19 = sphi 0, %s33
    %s20 = sphi 0, %s29
    %s21 = sphi 0, %s18
    %s22 = sphi 0, %s19
    %s23 = sphi 0, %s20
    %s24 = sphi 0, %s21
    %s25 = sphi 0, %s22
    %s26 = sphi 0, %s23
    %s42 = sphi 0, %s44
    %s45 = sphi 0, %s42
    %s46 = sphi 0, %s45
    %s62 = sphi 0, %s46
    %s68 = sphi 0, %s70
    %s71 = sphi 0, %s68
    %s72 = sphi 0, %s71
    %s88 = sphi 0, %s72
    %s94 = sphi 0, %s96
    %s97 = sphi 0, %s94
    %s98 = sphi 0, %s97
    %s114 = sphi 0, %s98
    %s120 = sphi 0, %s122
    %s123 = sphi 0, %s120
    %s124 = sphi 0, %s123
    %s140 = sphi 0, %s124
    %s146 = sphi 0, %s148
    %s149 = sphi 0, %s146
    %s150 = sphi 0, %s149
    %s166 = sphi 0, %s150
    %s176 = sphi 0, %s178
    %s179 = sphi 0, %s176
    %s180 = sphi 0, %s179
    %s196 = sphi 0, %s180
  $region4: #{dit_forward.23} parent=0 // loop_header_branch
    %14 = sbr.rel (%p12) target = $region8
  $region5: #{dit_forward.23} parent=0 // loop_body
    %s16 = ssub.s32 %s11, 1
    %s17 = ssub.s32 %s11, 2
    %s27 = sadd.s32 1, %s20
    %p28 = scmp.ge.s32.totalorder %s27, 1
    %s29 = scalar_select %p28, 0, %s27
    %s30 = sadd.s32 1, %s19
    %s31 = scalar_select %p28, %s30, %s19
    %p32 = scmp.ge.s32.totalorder %s31, 1
    %s33 = scalar_select %p32, 0, %s31
    %s34 = sadd.s32 1, %s18
    %s35 = scalar_select %p32, %s34, %s18
    %p36 = scmp.ge.s32.totalorder %s35, 2
    %s37 = scalar_select %p36, 0, %s35
    %s38 = ssub.s32 %s18, %s37
    %s39 = ssub.s32 %s19, %s33
    %s40 = sor.u32 %s38, %s39
    %p41 = scmp.eq.s32.totalorder %s40, 0
    %s43 = sadd.s32 %s42, 1
    %s44 = scalar_select %p41, %s42, %s43
    %p47 = pneg %p41
    %p48 = scmp.eq.s32.totalorder %s11, 1
    %p49 = por %p47, %p48
    %p50 = scmp.ne.s32.totalorder %s42, %s45
    %p51 = scmp.eq.s32.totalorder %s11, 0
    %p52 = por %p50, %p51
    %p53 = scmp.ne.s32.totalorder %s42, %s45
    %p54 = scmp.eq.s32.totalorder %s16, 1
    %p55 = por %p53, %p54
    %p56 = scmp.ne.s32.totalorder %s45, %s46
    %p57 = scmp.eq.s32.totalorder %s16, 0
    %p58 = por %p56, %p57
    %p59 = scmp.ne.s32.totalorder %s45, %s46
    %p60 = scmp.eq.s32.totalorder %s17, 1
    %p61 = por %p59, %p60
    %p63 = scmp.ne.s32.totalorder %s46, %s62
    %p64 = scmp.eq.s32.totalorder %s17, 0
    %p65 = por %p63, %p64
    %s66 = ssub.s32 %s18, %s37
    %p67 = scmp.eq.s32.totalorder %s66, 0
    %s69 = sadd.s32 %s68, 1
    %s70 = scalar_select %p67, %s68, %s69
    %p73 = pneg %p67
    %p74 = scmp.eq.s32.totalorder %s11, 1
    %p75 = por %p73, %p74
    %p76 = scmp.ne.s32.totalorder %s68, %s71
    %p77 = scmp.eq.s32.totalorder %s11, 0
    %p78 = por %p76, %p77
    %p79 = scmp.ne.s32.totalorder %s68, %s71
    %p80 = scmp.eq.s32.totalorder %s16, 1
    %p81 = por %p79, %p80
    %p82 = scmp.ne.s32.totalorder %s71, %s72
    %p83 = scmp.eq.s32.totalorder %s16, 0
    %p84 = por %p82, %p83
    %p85 = scmp.ne.s32.totalorder %s71, %s72
    %p86 = scmp.eq.s32.totalorder %s17, 1
    %p87 = por %p85, %p86
    %p89 = scmp.ne.s32.totalorder %s72, %s88
    %p90 = scmp.eq.s32.totalorder %s17, 0
    %p91 = por %p89, %p90
    %s92 = ssub.s32 %s18, %s37
    %p93 = scmp.eq.s32.totalorder %s92, 0
    %s95 = sadd.s32 %s94, 1
    %s96 = scalar_select %p93, %s94, %s95
    %p99 = pneg %p93
    %p100 = scmp.eq.s32.totalorder %s11, 1
    %p101 = por %p99, %p100
    %p102 = scmp.ne.s32.totalorder %s94, %s97
    %p103 = scmp.eq.s32.totalorder %s11, 0
    %p104 = por %p102, %p103
    %p105 = scmp.ne.s32.totalorder %s94, %s97
    %p106 = scmp.eq.s32.totalorder %s16, 1
    %p107 = por %p105, %p106
    %p108 = scmp.ne.s32.totalorder %s97, %s98
    %p109 = scmp.eq.s32.totalorder %s16, 0
    %p110 = por %p108, %p109
    %p111 = scmp.ne.s32.totalorder %s97, %s98
    %p112 = scmp.eq.s32.totalorder %s17, 1
    %p113 = por %p111, %p112
    %p115 = scmp.ne.s32.totalorder %s98, %s114
    %p116 = scmp.eq.s32.totalorder %s17, 0
    %p117 = por %p115, %p116
    %s118 = ssub.s32 %s20, %s29
    %p119 = scmp.eq.s32.totalorder %s118, 0
    %s121 = sadd.s32 %s120, 1
    %s122 = scalar_select %p119, %s120, %s121
    %p125 = pneg %p119
    %p126 = scmp.eq.s32.totalorder %s11, 1
    %p127 = por %p125, %p126
    %p128 = scmp.ne.s32.totalorder %s120, %s123
    %p129 = scmp.eq.s32.totalorder %s11, 0
    %p130 = por %p128, %p129
    %p131 = scmp.ne.s32.totalorder %s120, %s123
    %p132 = scmp.eq.s32.totalorder %s16, 1
    %p133 = por %p131, %p132
    %p134 = scmp.ne.s32.totalorder %s123, %s124
    %p135 = scmp.eq.s32.totalorder %s16, 0
    %p136 = por %p134, %p135
    %p137 = scmp.ne.s32.totalorder %s123, %s124
    %p138 = scmp.eq.s32.totalorder %s17, 1
    %p139 = por %p137, %p138
    %p141 = scmp.ne.s32.totalorder %s124, %s140
    %p142 = scmp.eq.s32.totalorder %s17, 0
    %p143 = por %p141, %p142
    %s144 = ssub.s32 %s20, %s29
    %p145 = scmp.eq.s32.totalorder %s144, 0
    %s147 = sadd.s32 %s146, 1
    %s148 = scalar_select %p145, %s146, %s147
    %p151 = pneg %p145
    %p152 = scmp.eq.s32.totalorder %s11, 1
    %p153 = por %p151, %p152
    %p154 = scmp.ne.s32.totalorder %s146, %s149
    %p155 = scmp.eq.s32.totalorder %s11, 0
    %p156 = por %p154, %p155
    %p157 = scmp.ne.s32.totalorder %s146, %s149
    %p158 = scmp.eq.s32.totalorder %s16, 1
    %p159 = por %p157, %p158
    %p160 = scmp.ne.s32.totalorder %s149, %s150
    %p161 = scmp.eq.s32.totalorder %s16, 0
    %p162 = por %p160, %p161
    %p163 = scmp.ne.s32.totalorder %s149, %s150
    %p164 = scmp.eq.s32.totalorder %s17, 1
    %p165 = por %p163, %p164
    %p167 = scmp.ne.s32.totalorder %s150, %s166
    %p168 = scmp.eq.s32.totalorder %s17, 0
    %p169 = por %p167, %p168
    %s170 = ssub.s32 %s18, %s37
    %s171 = ssub.s32 %s19, %s33
    %s172 = sor.u32 %s170, %s171
    %s173 = ssub.s32 %s20, %s29
    %s174 = sor.u32 %s172, %s173
    %p175 = scmp.eq.s32.totalorder %s174, 0
    %s177 = sadd.s32 %s176, 1
    %s178 = scalar_select %p175, %s176, %s177
    %p181 = pneg %p175
    %p182 = scmp.eq.s32.totalorder %s11, 1
    %p183 = por %p181, %p182
    %p184 = scmp.ne.s32.totalorder %s176, %s179
    %p185 = scmp.eq.s32.totalorder %s11, 0
    %p186 = por %p184, %p185
    %p187 = scmp.ne.s32.totalorder %s176, %s179
    %p188 = scmp.eq.s32.totalorder %s16, 1
    %p189 = por %p187, %p188
    %p190 = scmp.ne.s32.totalorder %s179, %s180
    %p191 = scmp.eq.s32.totalorder %s16, 0
    %p192 = por %p190, %p191
    %p193 = scmp.ne.s32.totalorder %s179, %s180
    %p194 = scmp.eq.s32.totalorder %s17, 1
    %p195 = por %p193, %p194
    %p197 = scmp.ne.s32.totalorder %s180, %s196
    %p198 = scmp.eq.s32.totalorder %s17, 0
    %p199 = por %p197, %p198
    %p200 = scmp.le.s32.totalorder 1, %s11
    %p201 = scmp.lt.s32.totalorder %s11, 3
    %p202 = pnand %p200, %p201
    %p203 = pneg %p202
    // Predicated region
    $region9: #{dit_forward.23} parent=5 // pred_check
      _
    $region10: #{dit_forward.23} parent=5 // pred_check_branch
      %205 = sbr.rel (%p202) target = $region12
    $region11: #{dit_forward.23} parent=5 // pred_region
      %s206 = ssub.s32 %s11, 1
      // Predicated region
      $region13: #{dit_forward.23} parent=11 // pred_check
        %p207 = pneg %p136
      $region14: #{dit_forward.23} parent=11 // pred_check_branch
        %209 = sbr.rel (%p207) target = $region16
      $region15: #{dit_forward.23} parent=11 // pred_region
        %p210 = scmp.lt.s32.totalorder %s23, 0
        %s211 = scalar_select %p210, %s23, 0
        %s212 = smul.addr %s211, 4
        %s213 = scalar_lea.vmem %s3, %s212
      $region16: #{dit_forward.23} parent=11 // pred_fallthru
        _
      // Predicated region
      $region17: #{dit_forward.23} parent=11 // pred_check
        %p214 = pneg %p162
      $region18: #{dit_forward.23} parent=11 // pred_check_branch
        %216 = sbr.rel (%p214) target = $region20
      $region19: #{dit_forward.23} parent=11 // pred_region
        %p217 = scmp.lt.s32.totalorder %s23, 0
        %s218 = scalar_select %p217, %s23, 0
        %s219 = scalar_lea.vmem %s4, %s218
      $region20: #{dit_forward.23} parent=11 // pred_fallthru
        _
    $region12: #{dit_forward.23} parent=5 // pred_fallthru
      _
    %p220 = scmp.lt.s32.totalorder %s11, 2
    // Predicated region
    $region21: #{dit_forward.23} parent=5 // pred_check
      %p221 = pneg %p220
    $region22: #{dit_forward.23} parent=5 // pred_check_branch
      %223 = sbr.rel (%p221) target = $region24
    $region23: #{dit_forward.23} parent=5 // pred_region
      // Predicated region
      $region25: #{dit_forward.23} parent=23 // pred_check
        %p224 = pneg %p52
      $region26: #{dit_forward.23} parent=23 // pred_check_branch
        %226 = sbr.rel (%p224) target = $region28
      $region27: #{dit_forward.23} parent=23 // pred_region
        %s227 = smul.u32 8, %s19
        %p228 = scmp.lt.s32.totalorder %s18, 1
        %s229 = scalar_select %p228, %s18, 1
        %p230 = scmp.lt.s32.totalorder %s227, 7
        %s231 = scalar_select %p230, %s227, 7
        %s232 = smul.addr %s229, 8
        %s233 = sadd.s32 %s231, %s232
        %s234 = smul.addr %s233, 8
        %s235 = scalar_lea.vmem %s0, %s234
        %s236 = smul.u32 8, %s19
      $region28: #{dit_forward.23} parent=23 // pred_fallthru
        _
      // Predicated region
      $region29: #{dit_forward.23} parent=23 // pred_check
        %p237 = pneg %p78
      $region30: #{dit_forward.23} parent=23 // pred_check_branch
        %239 = sbr.rel (%p237) target = $region32
      $region31: #{dit_forward.23} parent=23 // pred_region
        %p240 = scmp.lt.s32.totalorder %s18, 1
        %s241 = scalar_select %p240, %s18, 1
        %s242 = scalar_lea.vmem %s1, %s241
      $region32: #{dit_forward.23} parent=23 // pred_fallthru
        _
      // Predicated region
      $region33: #{dit_forward.23} parent=23 // pred_check
        %p243 = pneg %p104
      $region34: #{dit_forward.23} parent=23 // pred_check_branch
        %245 = sbr.rel (%p243) target = $region36
      $region35: #{dit_forward.23} parent=23 // pred_region
        %p246 = scmp.lt.s32.totalorder %s18, 1
        %s247 = scalar_select %p246, %s18, 1
        %s248 = scalar_lea.vmem %s2, %s247
      $region36: #{dit_forward.23} parent=23 // pred_fallthru
        _
    $region24: #{dit_forward.23} parent=5 // pred_fallthru
      _
    %p249 = scmp.le.s32.totalorder 1, %s11
    %p250 = scmp.lt.s32.totalorder %s11, 3
    %p251 = pnand %p249, %p250
    %p252 = pneg %p251
    // Predicated region
    $region37: #{dit_forward.23} parent=5 // pred_check
      _
    $region38: #{dit_forward.23} parent=5 // pred_check_branch
      %254 = sbr.rel (%p251) target = $region40
    $region39: #{dit_forward.23} parent=5 // pred_region
      %s255 = ssub.s32 %s11, 1
      %s256 = smul.u32 8, %s22
      %p257 = scmp.lt.s32.totalorder %s21, 1
      %s258 = scalar_select %p257, %s21, 1
      %p259 = scmp.lt.s32.totalorder %s256, 7
      %s260 = scalar_select %p259, %s256, 7
      %s261 = smul.addr %s258, 8
      %s262 = sadd.s32 %s260, %s261
      %s263 = smul.addr %s262, 8
      %s264 = scalar_lea.vmem %s0, %s263
      %p265 = pneg %p58
      %p266 = pneg %p55
      %p267 = scmp.lt.s32.totalorder %s21, 1
      %s268 = scalar_select %p267, %s21, 1
      %s269 = scalar_lea.vmem %s1, %s268
      %p270 = pneg %p84
      %p271 = pneg %p81
      %p272 = scmp.lt.s32.totalorder %s21, 1
      %s273 = scalar_select %p272, %s21, 1
      %s274 = scalar_lea.vmem %s2, %s273
      %p275 = pneg %p110
      %p276 = pneg %p107
      %p277 = scmp.lt.s32.totalorder %s23, 0
      %s278 = scalar_select %p277, %s23, 0
      %s279 = smul.addr %s278, 4
      %s280 = scalar_lea.vmem %s3, %s279
      %p281 = pneg %p136
      %p282 = pneg %p133
      %p283 = scmp.lt.s32.totalorder %s23, 0
      %s284 = scalar_select %p283, %s23, 0
      %s285 = scalar_lea.vmem %s4, %s284
      %p286 = pneg %p162
      %p287 = pneg %p159
      %p288 = pneg %p192
      %p289 = pneg %p189
      %s290 = smul.u32 8, %s22
      %p291 = scmp.lt.s32.totalorder %s21, 1
      %s292 = scalar_select %p291, %s21, 1
      %p293 = scmp.lt.s32.totalorder %s290, 7
      %s294 = scalar_select %p293, %s290, 7
      %p295 = scmp.lt.s32.totalorder %s23, 0
      %s296 = scalar_select %p295, %s23, 0
      %s297 = sadd.s32 %s296, %s294
      %s298 = smul.addr %s292, 8
      %s299 = sadd.s32 %s297, %s298
      %s300 = smul.addr %s299, 8
      %s301 = scalar_lea.vmem %s5, %s300
      %s302 = smul.u32 8, %s22
      %p303 = scmp.lt.s32.totalorder %s21, 1
      %s304 = scalar_select %p303, %s21, 1
      %p305 = scmp.lt.s32.totalorder %s302, 7
      %s306 = scalar_select %p305, %s302, 7
      %s307 = smul.addr %s304, 8
      %s308 = sadd.s32 %s306, %s307
      %s309 = smul.addr %s308, 8
      %s310 = scalar_lea.vmem %s0, %s309
      %s311 = smul.u32 8, %s22
      %p312 = scmp.lt.s32.totalorder %s21, 1
      %s313 = scalar_select %p312, %s21, 1
      %s314 = scalar_lea.vmem %s1, %s313
      %p315 = scmp.lt.s32.totalorder %s21, 1
      %s316 = scalar_select %p315, %s21, 1
      %s317 = scalar_lea.vmem %s2, %s316
      %p318 = scmp.lt.s32.totalorder %s23, 0
      %s319 = scalar_select %p318, %s23, 0
      %s320 = smul.addr %s319, 4
      %s321 = scalar_lea.vmem %s3, %s320
      %p322 = scmp.lt.s32.totalorder %s23, 0
      %s323 = scalar_select %p322, %s23, 0
      %s324 = scalar_lea.vmem %s4, %s323
      %s325 = smul.u32 8, %s22
      %p326 = scmp.lt.s32.totalorder %s21, 1
      %s327 = scalar_select %p326, %s21, 1
      %p328 = scmp.lt.s32.totalorder %s325, 7
      %s329 = scalar_select %p328, %s325, 7
      %p330 = scmp.lt.s32.totalorder %s23, 0
      %s331 = scalar_select %p330, %s23, 0
      %s332 = sadd.s32 %s331, %s329
      %s333 = smul.addr %s327, 8
      %s334 = sadd.s32 %s332, %s333
      %s335 = smul.addr %s334, 8
      %s336 = scalar_lea.vmem %s5, %s335
      %s337 = smul.u32 8, %s22
      %v339 = vld [vmem:[%s310] sm:$0xff]
      %v340 = vld [vmem:[%s310 + $0x8] sm:$0xff]
      %v341 = vld [vmem:[%s310 + $0x10] sm:$0xff]
      %v342 = vld [vmem:[%s310 + $0x18] sm:$0xff]
      %v343 = vld [vmem:[%s310 + $0x20] sm:$0xff]
      %v344 = vld [vmem:[%s310 + $0x28] sm:$0xff]
      %v345 = vld [vmem:[%s310 + $0x30] sm:$0xff]
      %v346 = vld [vmem:[%s310 + $0x38] sm:$0xff]
      %vm347 = vcmask 261120
      %v348 = vsel %vm347, %v339, 0.0
      %349 = vadd.xlane.f32.xlu0 %v348
      %v350 = vpop.xlane.xlu0 %349
      %v351 = vsel %vm347, %v340, 0.0
      %352 = vadd.xlane.f32.xlu0 %v351
      %v353 = vpop.xlane.xlu0 %352
      %v354 = vsel %vm347, %v341, 0.0
      %355 = vadd.xlane.f32.xlu0 %v354
      %v356 = vpop.xlane.xlu0 %355
      %v357 = vsel %vm347, %v342, 0.0
      %358 = vadd.xlane.f32.xlu0 %v357
      %v359 = vpop.xlane.xlu0 %358
      %v360 = vsel %vm347, %v343, 0.0
      %361 = vadd.xlane.f32.xlu0 %v360
      %v362 = vpop.xlane.xlu0 %361
      %v363 = vsel %vm347, %v344, 0.0
      %364 = vadd.xlane.f32.xlu0 %v363
      %v365 = vpop.xlane.xlu0 %364
      %v366 = vsel %vm347, %v345, 0.0
      %367 = vadd.xlane.f32.xlu0 %v366
      %v368 = vpop.xlane.xlu0 %367
      %v369 = vsel %vm347, %v346, 0.0
      %370 = vadd.xlane.f32.xlu0 %v369
      %v371 = vpop.xlane.xlu0 %370
      %v372 = vrcp.pop 32.0
      %v373 = vmul.f32 %v350, %v372
      %v374 = vmul.f32 %v353, %v372
      %v375 = vmul.f32 %v356, %v372
      %v376 = vmul.f32 %v359, %v372
      %v377 = vmul.f32 %v362, %v372
      %v378 = vmul.f32 %v365, %v372
      %v379 = vmul.f32 %v368, %v372
      %v380 = vmul.f32 %v371, %v372
      %v381 = vsub.f32 %v339, %v373
      %v382 = vsub.f32 %v340, %v374
      %v383 = vsub.f32 %v341, %v375
      %v384 = vsub.f32 %v342, %v376
      %v385 = vsub.f32 %v343, %v377
      %v386 = vsub.f32 %v344, %v378
      %v387 = vsub.f32 %v345, %v379
      %v388 = vsub.f32 %v346, %v380
      %v389 = vmul.f32 %v381, %v381
      %v390 = vmul.f32 %v382, %v382
      %v391 = vmul.f32 %v383, %v383
      %v392 = vmul.f32 %v384, %v384
      %v393 = vmul.f32 %v385, %v385
      %v394 = vmul.f32 %v386, %v386
      %v395 = vmul.f32 %v387, %v387
      %v396 = vmul.f32 %v388, %v388
      %v397 = vsel %vm347, %v389, 0.0
      %398 = vadd.xlane.f32.xlu0 %v397
      %v399 = vpop.xlane.xlu0 %398
      %v400 = vsel %vm347, %v390, 0.0
      %401 = vadd.xlane.f32.xlu0 %v400
      %v402 = vpop.xlane.xlu0 %401
      %v403 = vsel %vm347, %v391, 0.0
      %404 = vadd.xlane.f32.xlu0 %v403
      %v405 = vpop.xlane.xlu0 %404
      %v406 = vsel %vm347, %v392, 0.0
      %407 = vadd.xlane.f32.xlu0 %v406
      %v408 = vpop.xlane.xlu0 %407
      %v409 = vsel %vm347, %v393, 0.0
      %410 = vadd.xlane.f32.xlu0 %v409
      %v411 = vpop.xlane.xlu0 %410
      %v412 = vsel %vm347, %v394, 0.0
      %413 = vadd.xlane.f32.xlu0 %v412
      %v414 = vpop.xlane.xlu0 %413
      %v415 = vsel %vm347, %v395, 0.0
      %416 = vadd.xlane.f32.xlu0 %v415
      %v417 = vpop.xlane.xlu0 %416
      %v418 = vsel %vm347, %v396, 0.0
      %419 = vadd.xlane.f32.xlu0 %v418
      %v420 = vpop.xlane.xlu0 %419
      %v421 = vmul.f32 %v399, %v372
      %v422 = vmul.f32 %v402, %v372
      %v423 = vmul.f32 %v405, %v372
      %v424 = vmul.f32 %v408, %v372
      %v425 = vmul.f32 %v411, %v372
      %v426 = vmul.f32 %v414, %v372
      %v427 = vmul.f32 %v417, %v372
      %v428 = vmul.f32 %v420, %v372
      %v429 = vadd.f32 %v421, 1e-06
      %v430 = vadd.f32 %v422, 1e-06
      %v431 = vadd.f32 %v423, 1e-06
      %v432 = vadd.f32 %v424, 1e-06
      %v433 = vadd.f32 %v425, 1e-06
      %v434 = vadd.f32 %v426, 1e-06
      %v435 = vadd.f32 %v427, 1e-06
      %v436 = vadd.f32 %v428, 1e-06
      %v437 = vrsqrt.pop %v429
      %v438 = vrsqrt.pop %v430
      %v439 = vrsqrt.pop %v431
      %v440 = vrsqrt.pop %v432
      %v441 = vrsqrt.pop %v433
      %v442 = vrsqrt.pop %v434
      %v443 = vrsqrt.pop %v435
      %v444 = vrsqrt.pop %v436
      %v445 = vmul.f32 %v381, %v437
      %v446 = vmul.f32 %v382, %v438
      %v447 = vmul.f32 %v383, %v439
      %v448 = vmul.f32 %v384, %v440
      %v449 = vmul.f32 %v385, %v441
      %v450 = vmul.f32 %v386, %v442
      %v451 = vmul.f32 %v387, %v443
      %v452 = vmul.f32 %v388, %v444
      %v453 = vld [vmem:[%s317] sm:$0x1]
      %v454 = vadd.f32 %v453, 1.0
      %v456 = vlaneseq
      %v457 = vshrl.u32 %v456, 7
      %v458 = vsub.s32 0, %v457
      %v459 = vrot.slane %v454, %v458
      %v461 = vmul.f32 %v445, %v459
      %v462 = vmul.f32 %v446, %v459
      %v463 = vmul.f32 %v447, %v459
      %v464 = vmul.f32 %v448, %v459
      %v465 = vmul.f32 %v449, %v459
      %v466 = vmul.f32 %v450, %v459
      %v467 = vmul.f32 %v451, %v459
      %v468 = vmul.f32 %v452, %v459
      %v469 = vld [vmem:[%s314] sm:$0x1]
      %v471 = vlaneseq
      %v472 = vshrl.u32 %v471, 7
      %v473 = vsub.s32 0, %v472
      %v474 = vrot.slane %v469, %v473
      %v476 = vadd.f32 %v461, %v474
      %v477 = vadd.f32 %v462, %v474
      %v478 = vadd.f32 %v463, %v474
      %v479 = vadd.f32 %v464, %v474
      %v480 = vadd.f32 %v465, %v474
      %v481 = vadd.f32 %v466, %v474
      %v482 = vadd.f32 %v467, %v474
      %v483 = vadd.f32 %v468, %v474
      %v484 = vpack.c.bf16 %v477, %v476
      %v485 = vpack.c.bf16 %v479, %v478
      %v486 = vpack.c.bf16 %v481, %v480
      %v487 = vpack.c.bf16 %v483, %v482
      %v488 = vld [vmem:[%s321] sm:$0xf]
      %v489 = vld [vmem:[%s321 + $0x4] sm:$0xf]
      %v490 = vld [vmem:[%s321 + $0x8] sm:$0xf]
      %v491 = vld [vmem:[%s321 + $0xc] sm:$0xf]
      %v492 = vld [vmem:[%s324] sm:$0x1]
      %v494 = vlaneseq
      %v495 = vshrl.u32 %v494, 7
      %v496 = vsub.s32 0, %v495
      %v497 = vrot.slane %v492, %v496
      %v503 = vunpack.c.l.b16 %v488
      %v504 = vunpack.c.l.b16 %v489
      %v505 = vunpack.c.l.b16 %v490
      %v506 = vunpack.c.l.b16 %v491
      %v507 = vpack.c.b16 %v504, %v503
      %v508 = vpack.c.b16 %v506, %v505
      %v512 = vsel %vm347, %v484, 0
      %v515 = vsel %vm347, %v485, 0
      %v518 = vsel %vm347, %v486, 0
      %v521 = vsel %vm347, %v487, 0
      %523 = vmatprep.subr.bf16.mxu0 0
      %524 = vmatpush1.bf16.msra.mxu0 0
      %525 = vmatprep.subr.bf16.mxu0 0
      %526 = vmatpush1.bf16.msra.mxu0 0
      %527 = vmatprep.subr.bf16.mxu0 0
      %528 = vmatpush1.bf16.msra.mxu0 0
      %529 = vmatprep.subr.bf16.mxu0 0
      %530 = vmatpush1.bf16.msra.mxu0 0
      %531 = vmatprep.subr.bf16.mxu0 0
      %532 = vmatpush1.bf16.msra.mxu0 0
      %533 = vmatprep.subr.bf16.mxu0 0
      %534 = vmatpush1.bf16.msra.mxu0 0
      %535 = vmatprep.subr.bf16.mxu0 0
      %536 = vmatpush1.bf16.msra.mxu0 %v508
      %537 = vmatprep.subr.bf16.mxu0 0
      %538 = vmatpush1.bf16.msra.mxu0 %v507
      %539 = vmatprep.subr.bf16.mxu0 0
      %540 = vmatpush2.bf16.msra.mxu0 0
      %541 = vmatprep.subr.bf16.mxu0 0
      %542 = vmatpush2.bf16.msra.mxu0 0
      %543 = vmatprep.subr.bf16.mxu0 0
      %544 = vmatpush2.bf16.msra.mxu0 0
      %545 = vmatprep.subr.bf16.mxu0 0
      %546 = vmatpush2.bf16.msra.mxu0 0
      %547 = vmatprep.subr.bf16.mxu0 0
      %548 = vmatpush2.bf16.msra.mxu0 0
      %549 = vmatprep.subr.bf16.mxu0 0
      %550 = vmatpush2.bf16.msra.mxu0 0
      %551 = vmatprep.subr.bf16.mxu0 0
      %552 = vmatpush2.bf16.msra.mxu0 0
      %553 = vmatprep.subr.bf16.mxu0 0
      %554 = vmatpush2.bf16.msra.mxu0 0
      %555 = vmatprep.mubr.bf16.mxu0 0
      %556 = vmatmul.mubr.bf16.gmra.mxu0 %v512
      %v557 = vpop.f32.mrf.mxu0
      %v558 = vadd.f32 %v497, %v557
      %v559 = vpop.f32.mrf.mxu0
      %v560 = vpop.f32.mrf.mxu0
      %v561 = vadd.f32 %v497, %v560
      %v562 = vpop.f32.mrf.mxu0
      %563 = vmatprep.mubr.bf16.mxu0 0
      %564 = vmatmul.mubr.bf16.gmra.mxu0 %v515
      %v565 = vpop.f32.mrf.mxu0
      %v566 = vadd.f32 %v497, %v565
      %v567 = vpop.f32.mrf.mxu0
      %v568 = vpop.f32.mrf.mxu0
      %v569 = vadd.f32 %v497, %v568
      %v570 = vpop.f32.mrf.mxu0
      %571 = vmatprep.mubr.bf16.mxu0 0
      %572 = vmatmul.mubr.bf16.gmra.mxu0 %v518
      %v573 = vpop.f32.mrf.mxu0
      %v574 = vadd.f32 %v497, %v573
      %v575 = vpop.f32.mrf.mxu0
      %v576 = vpop.f32.mrf.mxu0
      %v577 = vadd.f32 %v497, %v576
      %v578 = vpop.f32.mrf.mxu0
      %579 = vmatprep.mubr.bf16.mxu0 0
      %580 = vmatmul.mubr.bf16.gmra.mxu0 %v521
      %v581 = vpop.f32.mrf.mxu0
      %v582 = vadd.f32 %v497, %v581
      %v583 = vpop.f32.mrf.mxu0
      %v584 = vpop.f32.mrf.mxu0
      %v585 = vadd.f32 %v497, %v584
      %v586 = vpop.f32.mrf.mxu0
      %587 = vdwg.mxu0
      %vm588 = vcmask 785408
      %589 = vst.msk [vmem:[%s336] sm:$0xff] %vm588, %v558
      %590 = vst.msk [vmem:[%s336 + $0x8] sm:$0xff] %vm588, %v561
      %591 = vst.msk [vmem:[%s336 + $0x10] sm:$0xff] %vm588, %v566
      %592 = vst.msk [vmem:[%s336 + $0x18] sm:$0xff] %vm588, %v569
      %593 = vst.msk [vmem:[%s336 + $0x20] sm:$0xff] %vm588, %v574
      %594 = vst.msk [vmem:[%s336 + $0x28] sm:$0xff] %vm588, %v577
      %595 = vst.msk [vmem:[%s336 + $0x30] sm:$0xff] %vm588, %v582
      %596 = vst.msk [vmem:[%s336 + $0x38] sm:$0xff] %vm588, %v585
      %s597 = smul.u32 8, %s22
      %p598 = scmp.lt.s32.totalorder %s21, 1
      %s599 = scalar_select %p598, %s21, 1
      %p600 = scmp.lt.s32.totalorder %s597, 7
      %s601 = scalar_select %p600, %s597, 7
      %p602 = scmp.lt.s32.totalorder %s23, 0
      %s603 = scalar_select %p602, %s23, 0
      %s604 = sadd.s32 %s603, %s601
      %s605 = smul.addr %s599, 8
      %s606 = sadd.s32 %s604, %s605
      %s607 = smul.addr %s606, 8
      %s608 = scalar_lea.vmem %s5, %s607
      // Predicated region
      $region41: #{dit_forward.23} parent=39 // pred_check
        %p609 = pneg %p189
      $region42: #{dit_forward.23} parent=39 // pred_check_branch
        %611 = sbr.rel (%p609) target = $region44
      $region43: #{dit_forward.23} parent=39 // pred_region
        %s612 = smul.u32 8, %s22
      $region44: #{dit_forward.23} parent=39 // pred_fallthru
        _
    $region40: #{dit_forward.23} parent=5 // pred_fallthru
      _
    %p613 = scmp.le.s32.totalorder 2, %s11
    // Predicated region
    $region45: #{dit_forward.23} parent=5 // pred_check
      %p614 = pneg %p613
    $region46: #{dit_forward.23} parent=5 // pred_check_branch
      %616 = sbr.rel (%p614) target = $region48
    $region47: #{dit_forward.23} parent=5 // pred_region
      %s617 = ssub.s32 %s11, 2
      // Predicated region
      $region49: #{dit_forward.23} parent=47 // pred_check
        %p618 = pneg %p195
      $region50: #{dit_forward.23} parent=47 // pred_check_branch
        %620 = sbr.rel (%p618) target = $region52
      $region51: #{dit_forward.23} parent=47 // pred_region
        %s621 = smul.u32 8, %s25
        %p622 = scmp.lt.s32.totalorder %s24, 1
        %s623 = scalar_select %p622, %s24, 1
        %p624 = scmp.lt.s32.totalorder %s621, 7
        %s625 = scalar_select %p624, %s621, 7
        %p626 = scmp.lt.s32.totalorder %s26, 0
        %s627 = scalar_select %p626, %s26, 0
        %s628 = sadd.s32 %s627, %s625
        %s629 = smul.addr %s623, 8
        %s630 = sadd.s32 %s628, %s629
        %s631 = smul.addr %s630, 8
        %s632 = scalar_lea.vmem %s5, %s631
      $region52: #{dit_forward.23} parent=47 // pred_fallthru
        _
    $region48: #{dit_forward.23} parent=5 // pred_fallthru
      _
  $region6: #{dit_forward.23} parent=0 // loop_footer
    %s15 = sadd.s32 1, %s11
  $region7: #{dit_forward.23} parent=0 // loop_footer_branch
    %10 = sbr.rel target = $region3
  $region8: #{dit_forward.23} parent=0 // loop_exit
    _

// kernel: dit_forward.26
$region0: #{dit_forward.26}
  #allocation0 [shape = 'u32[]', space=smem, size = 0x4, offset = 0x4, fixed_abs, tag = 'smem constant byte address 0x4 - core index']
  #allocation1 [shape = 'u32[144,128]{1,0:T(1,128)}', space=vmem, size = 0x12000, scoped, tag = 'internal scratch']
  %s0 = inlined_call_operand.vmem [shape: f32[2,64,32], index: 0, kind: input, shape index: {}]
  %s1 = inlined_call_operand.vmem [shape: bf16[32,32], index: 1, kind: input, shape index: {}]
  %s2 = inlined_call_operand.vmem [shape: f32[1,32], index: 2, kind: input, shape index: {}]
  %s3 = inlined_call_operand.vmem [shape: f32[2,1,32], index: 3, kind: input, shape index: {}]
  %s4 = inlined_call_operand.vmem [shape: f32[2,64,32], index: 4, kind: input, shape index: {}]
  %s5 = inlined_call_operand.vmem [shape: f32[2,64,32], index: 5, kind: output, shape index: {}]
  %s6 = sld [smem:[#allocation0]]
  $region53: #{dit_forward.26} parent=0
    _
  %s8 = ssub.s32 1, %s6
  %s9 = scalar_select 0, %s8, %s6
  loop: start=0, step=1, limit=4
  $region2: #{dit_forward.26} parent=0 // loop_pre_header
    _
  $region3: #{dit_forward.26} parent=0 // loop_header
    %s11 = sphi 0, %s15
    %p12 = scmp.ge.s32.totalorder %s11, 4
    %s18 = sphi 0, %s37
    %s19 = sphi 0, %s33
    %s20 = sphi 0, %s29
    %s21 = sphi 0, %s18
    %s22 = sphi 0, %s19
    %s23 = sphi 0, %s20
    %s24 = sphi 0, %s21
    %s25 = sphi 0, %s22
    %s26 = sphi 0, %s23
    %s42 = sphi 0, %s44
    %s45 = sphi 0, %s42
    %s46 = sphi 0, %s45
    %s62 = sphi 0, %s46
    %s68 = sphi 0, %s70
    %s71 = sphi 0, %s68
    %s72 = sphi 0, %s71
    %s88 = sphi 0, %s72
    %s94 = sphi 0, %s96
    %s97 = sphi 0, %s94
    %s98 = sphi 0, %s97
    %s114 = sphi 0, %s98
    %s122 = sphi 0, %s124
    %s125 = sphi 0, %s122
    %s126 = sphi 0, %s125
    %s142 = sphi 0, %s126
    %s152 = sphi 0, %s154
    %s155 = sphi 0, %s152
    %s156 = sphi 0, %s155
    %s172 = sphi 0, %s156
    %s182 = sphi 0, %s184
    %s185 = sphi 0, %s182
    %s186 = sphi 0, %s185
    %s202 = sphi 0, %s186
  $region4: #{dit_forward.26} parent=0 // loop_header_branch
    %14 = sbr.rel (%p12) target = $region8
  $region5: #{dit_forward.26} parent=0 // loop_body
    %s16 = ssub.s32 %s11, 1
    %s17 = ssub.s32 %s11, 2
    %s27 = sadd.s32 1, %s20
    %p28 = scmp.ge.s32.totalorder %s27, 1
    %s29 = scalar_select %p28, 0, %s27
    %s30 = sadd.s32 1, %s19
    %s31 = scalar_select %p28, %s30, %s19
    %p32 = scmp.ge.s32.totalorder %s31, 1
    %s33 = scalar_select %p32, 0, %s31
    %s34 = sadd.s32 1, %s18
    %s35 = scalar_select %p32, %s34, %s18
    %p36 = scmp.ge.s32.totalorder %s35, 2
    %s37 = scalar_select %p36, 0, %s35
    %s38 = ssub.s32 %s18, %s37
    %s39 = ssub.s32 %s19, %s33
    %s40 = sor.u32 %s38, %s39
    %p41 = scmp.eq.s32.totalorder %s40, 0
    %s43 = sadd.s32 %s42, 1
    %s44 = scalar_select %p41, %s42, %s43
    %p47 = pneg %p41
    %p48 = scmp.eq.s32.totalorder %s11, 1
    %p49 = por %p47, %p48
    %p50 = scmp.ne.s32.totalorder %s42, %s45
    %p51 = scmp.eq.s32.totalorder %s11, 0
    %p52 = por %p50, %p51
    %p53 = scmp.ne.s32.totalorder %s42, %s45
    %p54 = scmp.eq.s32.totalorder %s16, 1
    %p55 = por %p53, %p54
    %p56 = scmp.ne.s32.totalorder %s45, %s46
    %p57 = scmp.eq.s32.totalorder %s16, 0
    %p58 = por %p56, %p57
    %p59 = scmp.ne.s32.totalorder %s45, %s46
    %p60 = scmp.eq.s32.totalorder %s17, 1
    %p61 = por %p59, %p60
    %p63 = scmp.ne.s32.totalorder %s46, %s62
    %p64 = scmp.eq.s32.totalorder %s17, 0
    %p65 = por %p63, %p64
    %s66 = ssub.s32 %s20, %s29
    %p67 = scmp.eq.s32.totalorder %s66, 0
    %s69 = sadd.s32 %s68, 1
    %s70 = scalar_select %p67, %s68, %s69
    %p73 = pneg %p67
    %p74 = scmp.eq.s32.totalorder %s11, 1
    %p75 = por %p73, %p74
    %p76 = scmp.ne.s32.totalorder %s68, %s71
    %p77 = scmp.eq.s32.totalorder %s11, 0
    %p78 = por %p76, %p77
    %p79 = scmp.ne.s32.totalorder %s68, %s71
    %p80 = scmp.eq.s32.totalorder %s16, 1
    %p81 = por %p79, %p80
    %p82 = scmp.ne.s32.totalorder %s71, %s72
    %p83 = scmp.eq.s32.totalorder %s16, 0
    %p84 = por %p82, %p83
    %p85 = scmp.ne.s32.totalorder %s71, %s72
    %p86 = scmp.eq.s32.totalorder %s17, 1
    %p87 = por %p85, %p86
    %p89 = scmp.ne.s32.totalorder %s72, %s88
    %p90 = scmp.eq.s32.totalorder %s17, 0
    %p91 = por %p89, %p90
    %s92 = ssub.s32 %s20, %s29
    %p93 = scmp.eq.s32.totalorder %s92, 0
    %s95 = sadd.s32 %s94, 1
    %s96 = scalar_select %p93, %s94, %s95
    %p99 = pneg %p93
    %p100 = scmp.eq.s32.totalorder %s11, 1
    %p101 = por %p99, %p100
    %p102 = scmp.ne.s32.totalorder %s94, %s97
    %p103 = scmp.eq.s32.totalorder %s11, 0
    %p104 = por %p102, %p103
    %p105 = scmp.ne.s32.totalorder %s94, %s97
    %p106 = scmp.eq.s32.totalorder %s16, 1
    %p107 = por %p105, %p106
    %p108 = scmp.ne.s32.totalorder %s97, %s98
    %p109 = scmp.eq.s32.totalorder %s16, 0
    %p110 = por %p108, %p109
    %p111 = scmp.ne.s32.totalorder %s97, %s98
    %p112 = scmp.eq.s32.totalorder %s17, 1
    %p113 = por %p111, %p112
    %p115 = scmp.ne.s32.totalorder %s98, %s114
    %p116 = scmp.eq.s32.totalorder %s17, 0
    %p117 = por %p115, %p116
    %s118 = ssub.s32 %s18, %s37
    %s119 = ssub.s32 %s20, %s29
    %s120 = sor.u32 %s118, %s119
    %p121 = scmp.eq.s32.totalorder %s120, 0
    %s123 = sadd.s32 %s122, 1
    %s124 = scalar_select %p121, %s122, %s123
    %p127 = pneg %p121
    %p128 = scmp.eq.s32.totalorder %s11, 1
    %p129 = por %p127, %p128
    %p130 = scmp.ne.s32.totalorder %s122, %s125
    %p131 = scmp.eq.s32.totalorder %s11, 0
    %p132 = por %p130, %p131
    %p133 = scmp.ne.s32.totalorder %s122, %s125
    %p134 = scmp.eq.s32.totalorder %s16, 1
    %p135 = por %p133, %p134
    %p136 = scmp.ne.s32.totalorder %s125, %s126
    %p137 = scmp.eq.s32.totalorder %s16, 0
    %p138 = por %p136, %p137
    %p139 = scmp.ne.s32.totalorder %s125, %s126
    %p140 = scmp.eq.s32.totalorder %s17, 1
    %p141 = por %p139, %p140
    %p143 = scmp.ne.s32.totalorder %s126, %s142
    %p144 = scmp.eq.s32.totalorder %s17, 0
    %p145 = por %p143, %p144
    %s146 = ssub.s32 %s18, %s37
    %s147 = ssub.s32 %s19, %s33
    %s148 = sor.u32 %s146, %s147
    %s149 = ssub.s32 %s20, %s29
    %s150 = sor.u32 %s148, %s149
    %p151 = scmp.eq.s32.totalorder %s150, 0
    %s153 = sadd.s32 %s152, 1
    %s154 = scalar_select %p151, %s152, %s153
    %p157 = pneg %p151
    %p158 = scmp.eq.s32.totalorder %s11, 1
    %p159 = por %p157, %p158
    %p160 = scmp.ne.s32.totalorder %s152, %s155
    %p161 = scmp.eq.s32.totalorder %s11, 0
    %p162 = por %p160, %p161
    %p163 = scmp.ne.s32.totalorder %s152, %s155
    %p164 = scmp.eq.s32.totalorder %s16, 1
    %p165 = por %p163, %p164
    %p166 = scmp.ne.s32.totalorder %s155, %s156
    %p167 = scmp.eq.s32.totalorder %s16, 0
    %p168 = por %p166, %p167
    %p169 = scmp.ne.s32.totalorder %s155, %s156
    %p170 = scmp.eq.s32.totalorder %s17, 1
    %p171 = por %p169, %p170
    %p173 = scmp.ne.s32.totalorder %s156, %s172
    %p174 = scmp.eq.s32.totalorder %s17, 0
    %p175 = por %p173, %p174
    %s176 = ssub.s32 %s18, %s37
    %s177 = ssub.s32 %s19, %s33
    %s178 = sor.u32 %s176, %s177
    %s179 = ssub.s32 %s20, %s29
    %s180 = sor.u32 %s178, %s179
    %p181 = scmp.eq.s32.totalorder %s180, 0
    %s183 = sadd.s32 %s182, 1
    %s184 = scalar_select %p181, %s182, %s183
    %p187 = pneg %p181
    %p188 = scmp.eq.s32.totalorder %s11, 1
    %p189 = por %p187, %p188
    %p190 = scmp.ne.s32.totalorder %s182, %s185
    %p191 = scmp.eq.s32.totalorder %s11, 0
    %p192 = por %p190, %p191
    %p193 = scmp.ne.s32.totalorder %s182, %s185
    %p194 = scmp.eq.s32.totalorder %s16, 1
    %p195 = por %p193, %p194
    %p196 = scmp.ne.s32.totalorder %s185, %s186
    %p197 = scmp.eq.s32.totalorder %s16, 0
    %p198 = por %p196, %p197
    %p199 = scmp.ne.s32.totalorder %s185, %s186
    %p200 = scmp.eq.s32.totalorder %s17, 1
    %p201 = por %p199, %p200
    %p203 = scmp.ne.s32.totalorder %s186, %s202
    %p204 = scmp.eq.s32.totalorder %s17, 0
    %p205 = por %p203, %p204
    %p206 = scmp.le.s32.totalorder 1, %s11
    %p207 = scmp.lt.s32.totalorder %s11, 3
    %p208 = pnand %p206, %p207
    %p209 = pneg %p208
    // Predicated region
    $region9: #{dit_forward.26} parent=5 // pred_check
      _
    $region10: #{dit_forward.26} parent=5 // pred_check_branch
      %211 = sbr.rel (%p208) target = $region12
    $region11: #{dit_forward.26} parent=5 // pred_region
      %s212 = ssub.s32 %s11, 1
      // Predicated region
      $region13: #{dit_forward.26} parent=11 // pred_check
        %p213 = pneg %p84
      $region14: #{dit_forward.26} parent=11 // pred_check_branch
        %215 = sbr.rel (%p213) target = $region16
      $region15: #{dit_forward.26} parent=11 // pred_region
        %p216 = scmp.lt.s32.totalorder %s23, 0
        %s217 = scalar_select %p216, %s23, 0
        %s218 = smul.addr %s217, 4
        %s219 = scalar_lea.vmem %s1, %s218
      $region16: #{dit_forward.26} parent=11 // pred_fallthru
        _
      // Predicated region
      $region17: #{dit_forward.26} parent=11 // pred_check
        %p220 = pneg %p110
      $region18: #{dit_forward.26} parent=11 // pred_check_branch
        %222 = sbr.rel (%p220) target = $region20
      $region19: #{dit_forward.26} parent=11 // pred_region
        %p223 = scmp.lt.s32.totalorder %s23, 0
        %s224 = scalar_select %p223, %s23, 0
        %s225 = scalar_lea.vmem %s2, %s224
      $region20: #{dit_forward.26} parent=11 // pred_fallthru
        _
    $region12: #{dit_forward.26} parent=5 // pred_fallthru
      _
    %p226 = scmp.lt.s32.totalorder %s11, 2
    // Predicated region
    $region21: #{dit_forward.26} parent=5 // pred_check
      %p227 = pneg %p226
    $region22: #{dit_forward.26} parent=5 // pred_check_branch
      %229 = sbr.rel (%p227) target = $region24
    $region23: #{dit_forward.26} parent=5 // pred_region
      // Predicated region
      $region25: #{dit_forward.26} parent=23 // pred_check
        %p230 = pneg %p52
      $region26: #{dit_forward.26} parent=23 // pred_check_branch
        %232 = sbr.rel (%p230) target = $region28
      $region27: #{dit_forward.26} parent=23 // pred_region
        %s233 = smul.u32 8, %s19
        %p234 = scmp.lt.s32.totalorder %s18, 1
        %s235 = scalar_select %p234, %s18, 1
        %p236 = scmp.lt.s32.totalorder %s233, 7
        %s237 = scalar_select %p236, %s233, 7
        %s238 = smul.addr %s235, 8
        %s239 = sadd.s32 %s237, %s238
        %s240 = smul.addr %s239, 8
        %s241 = scalar_lea.vmem %s0, %s240
        %s242 = smul.u32 8, %s19
      $region28: #{dit_forward.26} parent=23 // pred_fallthru
        _
      // Predicated region
      $region29: #{dit_forward.26} parent=23 // pred_check
        %p243 = pneg %p132
      $region30: #{dit_forward.26} parent=23 // pred_check_branch
        %245 = sbr.rel (%p243) target = $region32
      $region31: #{dit_forward.26} parent=23 // pred_region
        %p246 = scmp.lt.s32.totalorder %s18, 1
        %s247 = scalar_select %p246, %s18, 1
        %p248 = scmp.lt.s32.totalorder %s20, 0
        %s249 = scalar_select %p248, %s20, 0
        %s250 = sadd.s32 %s249, %s247
        %s251 = scalar_lea.vmem %s3, %s250
      $region32: #{dit_forward.26} parent=23 // pred_fallthru
        _
      // Predicated region
      $region33: #{dit_forward.26} parent=23 // pred_check
        %p252 = pneg %p162
      $region34: #{dit_forward.26} parent=23 // pred_check_branch
        %254 = sbr.rel (%p252) target = $region36
      $region35: #{dit_forward.26} parent=23 // pred_region
        %s255 = smul.u32 8, %s19
        %p256 = scmp.lt.s32.totalorder %s18, 1
        %s257 = scalar_select %p256, %s18, 1
        %p258 = scmp.lt.s32.totalorder %s255, 7
        %s259 = scalar_select %p258, %s255, 7
        %p260 = scmp.lt.s32.totalorder %s20, 0
        %s261 = scalar_select %p260, %s20, 0
        %s262 = sadd.s32 %s261, %s259
        %s263 = smul.addr %s257, 8
        %s264 = sadd.s32 %s262, %s263
        %s265 = smul.addr %s264, 8
        %s266 = scalar_lea.vmem %s4, %s265
        %s267 = smul.u32 8, %s19
      $region36: #{dit_forward.26} parent=23 // pred_fallthru
        _
    $region24: #{dit_forward.26} parent=5 // pred_fallthru
      _
    %p268 = scmp.le.s32.totalorder 1, %s11
    %p269 = scmp.lt.s32.totalorder %s11, 3
    %p270 = pnand %p268, %p269
    %p271 = pneg %p270
    // Predicated region
    $region37: #{dit_forward.26} parent=5 // pred_check
      _
    $region38: #{dit_forward.26} parent=5 // pred_check_branch
      %273 = sbr.rel (%p270) target = $region40
    $region39: #{dit_forward.26} parent=5 // pred_region
      %s274 = ssub.s32 %s11, 1
      %s275 = smul.u32 8, %s22
      %p276 = scmp.lt.s32.totalorder %s21, 1
      %s277 = scalar_select %p276, %s21, 1
      %p278 = scmp.lt.s32.totalorder %s275, 7
      %s279 = scalar_select %p278, %s275, 7
      %s280 = smul.addr %s277, 8
      %s281 = sadd.s32 %s279, %s280
      %s282 = smul.addr %s281, 8
      %s283 = scalar_lea.vmem %s0, %s282
      %p284 = pneg %p58
      %p285 = pneg %p55
      %p286 = scmp.lt.s32.totalorder %s23, 0
      %s287 = scalar_select %p286, %s23, 0
      %s288 = smul.addr %s287, 4
      %s289 = scalar_lea.vmem %s1, %s288
      %p290 = pneg %p84
      %p291 = pneg %p81
      %p292 = scmp.lt.s32.totalorder %s23, 0
      %s293 = scalar_select %p292, %s23, 0
      %s294 = scalar_lea.vmem %s2, %s293
      %p295 = pneg %p110
      %p296 = pneg %p107
      %p297 = scmp.lt.s32.totalorder %s21, 1
      %s298 = scalar_select %p297, %s21, 1
      %p299 = scmp.lt.s32.totalorder %s23, 0
      %s300 = scalar_select %p299, %s23, 0
      %s301 = sadd.s32 %s300, %s298
      %s302 = scalar_lea.vmem %s3, %s301
      %p303 = pneg %p138
      %p304 = pneg %p135
      %s305 = smul.u32 8, %s22
      %p306 = scmp.lt.s32.totalorder %s21, 1
      %s307 = scalar_select %p306, %s21, 1
      %p308 = scmp.lt.s32.totalorder %s305, 7
      %s309 = scalar_select %p308, %s305, 7
      %p310 = scmp.lt.s32.totalorder %s23, 0
      %s311 = scalar_select %p310, %s23, 0
      %s312 = sadd.s32 %s311, %s309
      %s313 = smul.addr %s307, 8
      %s314 = sadd.s32 %s312, %s313
      %s315 = smul.addr %s314, 8
      %s316 = scalar_lea.vmem %s4, %s315
      %p317 = pneg %p168
      %p318 = pneg %p165
      %p319 = pneg %p198
      %p320 = pneg %p195
      %s321 = smul.u32 8, %s22
      %p322 = scmp.lt.s32.totalorder %s21, 1
      %s323 = scalar_select %p322, %s21, 1
      %p324 = scmp.lt.s32.totalorder %s321, 7
      %s325 = scalar_select %p324, %s321, 7
      %p326 = scmp.lt.s32.totalorder %s23, 0
      %s327 = scalar_select %p326, %s23, 0
      %s328 = sadd.s32 %s327, %s325
      %s329 = smul.addr %s323, 8
      %s330 = sadd.s32 %s328, %s329
      %s331 = smul.addr %s330, 8
      %s332 = scalar_lea.vmem %s5, %s331
      %s333 = smul.u32 8, %s22
      %p334 = scmp.lt.s32.totalorder %s21, 1
      %s335 = scalar_select %p334, %s21, 1
      %p336 = scmp.lt.s32.totalorder %s333, 7
      %s337 = scalar_select %p336, %s333, 7
      %s338 = smul.addr %s335, 8
      %s339 = sadd.s32 %s337, %s338
      %s340 = smul.addr %s339, 8
      %s341 = scalar_lea.vmem %s0, %s340
      %s342 = smul.u32 8, %s22
      %p343 = scmp.lt.s32.totalorder %s23, 0
      %s344 = scalar_select %p343, %s23, 0
      %s345 = smul.addr %s344, 4
      %s346 = scalar_lea.vmem %s1, %s345
      %p347 = scmp.lt.s32.totalorder %s23, 0
      %s348 = scalar_select %p347, %s23, 0
      %s349 = scalar_lea.vmem %s2, %s348
      %p350 = scmp.lt.s32.totalorder %s21, 1
      %s351 = scalar_select %p350, %s21, 1
      %p352 = scmp.lt.s32.totalorder %s23, 0
      %s353 = scalar_select %p352, %s23, 0
      %s354 = sadd.s32 %s353, %s351
      %s355 = scalar_lea.vmem %s3, %s354
      %s356 = smul.u32 8, %s22
      %p357 = scmp.lt.s32.totalorder %s21, 1
      %s358 = scalar_select %p357, %s21, 1
      %p359 = scmp.lt.s32.totalorder %s356, 7
      %s360 = scalar_select %p359, %s356, 7
      %p361 = scmp.lt.s32.totalorder %s23, 0
      %s362 = scalar_select %p361, %s23, 0
      %s363 = sadd.s32 %s362, %s360
      %s364 = smul.addr %s358, 8
      %s365 = sadd.s32 %s363, %s364
      %s366 = smul.addr %s365, 8
      %s367 = scalar_lea.vmem %s4, %s366
      %s368 = smul.u32 8, %s22
      %s369 = smul.u32 8, %s22
      %p370 = scmp.lt.s32.totalorder %s21, 1
      %s371 = scalar_select %p370, %s21, 1
      %p372 = scmp.lt.s32.totalorder %s369, 7
      %s373 = scalar_select %p372, %s369, 7
      %p374 = scmp.lt.s32.totalorder %s23, 0
      %s375 = scalar_select %p374, %s23, 0
      %s376 = sadd.s32 %s375, %s373
      %s377 = smul.addr %s371, 8
      %s378 = sadd.s32 %s376, %s377
      %s379 = smul.addr %s378, 8
      %s380 = scalar_lea.vmem %s5, %s379
      %s381 = smul.u32 8, %s22
      %v383 = vld [vmem:[%s341] sm:$0xff]
      %v384 = vld [vmem:[%s341 + $0x8] sm:$0xff]
      %v385 = vld [vmem:[%s341 + $0x10] sm:$0xff]
      %v386 = vld [vmem:[%s341 + $0x18] sm:$0xff]
      %v387 = vld [vmem:[%s341 + $0x20] sm:$0xff]
      %v388 = vld [vmem:[%s341 + $0x28] sm:$0xff]
      %v389 = vld [vmem:[%s341 + $0x30] sm:$0xff]
      %v390 = vld [vmem:[%s341 + $0x38] sm:$0xff]
      %v391 = vpack.c.bf16 %v384, %v383
      %v392 = vpack.c.bf16 %v386, %v385
      %v393 = vpack.c.bf16 %v388, %v387
      %v394 = vpack.c.bf16 %v390, %v389
      %v395 = vld [vmem:[%s346] sm:$0xf]
      %v396 = vld [vmem:[%s346 + $0x4] sm:$0xf]
      %v397 = vld [vmem:[%s346 + $0x8] sm:$0xf]
      %v398 = vld [vmem:[%s346 + $0xc] sm:$0xf]
      %v399 = vld [vmem:[%s349] sm:$0x1]
      %v401 = vlaneseq
      %v402 = vshrl.u32 %v401, 7
      %v403 = vsub.s32 0, %v402
      %v404 = vrot.slane %v399, %v403
      %v410 = vunpack.c.l.b16 %v395
      %v411 = vunpack.c.l.b16 %v396
      %v412 = vunpack.c.l.b16 %v397
      %v413 = vunpack.c.l.b16 %v398
      %v414 = vpack.c.b16 %v411, %v410
      %v415 = vpack.c.b16 %v413, %v412
      %vm418 = vcmask 261120
      %v420 = vsel %vm418, %v391, 0
      %v423 = vsel %vm418, %v392, 0
      %v426 = vsel %vm418, %v393, 0
      %v429 = vsel %vm418, %v394, 0
      %431 = vmatprep.subr.bf16.mxu0 0
      %432 = vmatpush1.bf16.msra.mxu0 0
      %433 = vmatprep.subr.bf16.mxu0 0
      %434 = vmatpush1.bf16.msra.mxu0 0
      %435 = vmatprep.subr.bf16.mxu0 0
      %436 = vmatpush1.bf16.msra.mxu0 0
      %437 = vmatprep.subr.bf16.mxu0 0
      %438 = vmatpush1.bf16.msra.mxu0 0
      %439 = vmatprep.subr.bf16.mxu0 0
      %440 = vmatpush1.bf16.msra.mxu0 0
      %441 = vmatprep.subr.bf16.mxu0 0
      %442 = vmatpush1.bf16.msra.mxu0 0
      %443 = vmatprep.subr.bf16.mxu0 0
      %444 = vmatpush1.bf16.msra.mxu0 %v415
      %445 = vmatprep.subr.bf16.mxu0 0
      %446 = vmatpush1.bf16.msra.mxu0 %v414
      %447 = vmatprep.subr.bf16.mxu0 0
      %448 = vmatpush2.bf16.msra.mxu0 0
      %449 = vmatprep.subr.bf16.mxu0 0
      %450 = vmatpush2.bf16.msra.mxu0 0
      %451 = vmatprep.subr.bf16.mxu0 0
      %452 = vmatpush2.bf16.msra.mxu0 0
      %453 = vmatprep.subr.bf16.mxu0 0
      %454 = vmatpush2.bf16.msra.mxu0 0
      %455 = vmatprep.subr.bf16.mxu0 0
      %456 = vmatpush2.bf16.msra.mxu0 0
      %457 = vmatprep.subr.bf16.mxu0 0
      %458 = vmatpush2.bf16.msra.mxu0 0
      %459 = vmatprep.subr.bf16.mxu0 0
      %460 = vmatpush2.bf16.msra.mxu0 0
      %461 = vmatprep.subr.bf16.mxu0 0
      %462 = vmatpush2.bf16.msra.mxu0 0
      %463 = vmatprep.mubr.bf16.mxu0 0
      %464 = vmatmul.mubr.bf16.gmra.mxu0 %v420
      %v465 = vpop.f32.mrf.mxu0
      %v466 = vadd.f32 %v404, %v465
      %v467 = vpop.f32.mrf.mxu0
      %v468 = vpop.f32.mrf.mxu0
      %v469 = vadd.f32 %v404, %v468
      %v470 = vpop.f32.mrf.mxu0
      %471 = vmatprep.mubr.bf16.mxu0 0
      %472 = vmatmul.mubr.bf16.gmra.mxu0 %v423
      %v473 = vpop.f32.mrf.mxu0
      %v474 = vadd.f32 %v404, %v473
      %v475 = vpop.f32.mrf.mxu0
      %v476 = vpop.f32.mrf.mxu0
      %v477 = vadd.f32 %v404, %v476
      %v478 = vpop.f32.mrf.mxu0
      %479 = vmatprep.mubr.bf16.mxu0 0
      %480 = vmatmul.mubr.bf16.gmra.mxu0 %v426
      %v481 = vpop.f32.mrf.mxu0
      %v482 = vadd.f32 %v404, %v481
      %v483 = vpop.f32.mrf.mxu0
      %v484 = vpop.f32.mrf.mxu0
      %v485 = vadd.f32 %v404, %v484
      %v486 = vpop.f32.mrf.mxu0
      %487 = vmatprep.mubr.bf16.mxu0 0
      %488 = vmatmul.mubr.bf16.gmra.mxu0 %v429
      %v489 = vpop.f32.mrf.mxu0
      %v490 = vadd.f32 %v404, %v489
      %v491 = vpop.f32.mrf.mxu0
      %v492 = vpop.f32.mrf.mxu0
      %v493 = vadd.f32 %v404, %v492
      %v494 = vpop.f32.mrf.mxu0
      %495 = vdwg.mxu0
      %v496 = vld [vmem:[%s367] sm:$0xff]
      %v497 = vld [vmem:[%s367 + $0x8] sm:$0xff]
      %v498 = vld [vmem:[%s367 + $0x10] sm:$0xff]
      %v499 = vld [vmem:[%s367 + $0x18] sm:$0xff]
      %v500 = vld [vmem:[%s367 + $0x20] sm:$0xff]
      %v501 = vld [vmem:[%s367 + $0x28] sm:$0xff]
      %v502 = vld [vmem:[%s367 + $0x30] sm:$0xff]
      %v503 = vld [vmem:[%s367 + $0x38] sm:$0xff]
      %v504 = vld [vmem:[%s355] sm:$0x1]
      %v506 = vlaneseq
      %v507 = vshrl.u32 %v506, 7
      %v508 = vsub.s32 0, %v507
      %v509 = vrot.slane %v504, %v508
      %v511 = vmul.f32 %v509, %v466
      %v512 = vmul.f32 %v509, %v469
      %v513 = vmul.f32 %v509, %v474
      %v514 = vmul.f32 %v509, %v477
      %v515 = vmul.f32 %v509, %v482
      %v516 = vmul.f32 %v509, %v485
      %v517 = vmul.f32 %v509, %v490
      %v518 = vmul.f32 %v509, %v493
      %v519 = vadd.f32 %v496, %v511
      %v520 = vadd.f32 %v497, %v512
      %v521 = vadd.f32 %v498, %v513
      %v522 = vadd.f32 %v499, %v514
      %v523 = vadd.f32 %v500, %v515
      %v524 = vadd.f32 %v501, %v516
      %v525 = vadd.f32 %v502, %v517
      %v526 = vadd.f32 %v503, %v518
      %527 = vst.msk [vmem:[%s380] sm:$0xff] %vm418, %v519
      %528 = vst.msk [vmem:[%s380 + $0x8] sm:$0xff] %vm418, %v520
      %529 = vst.msk [vmem:[%s380 + $0x10] sm:$0xff] %vm418, %v521
      %530 = vst.msk [vmem:[%s380 + $0x18] sm:$0xff] %vm418, %v522
      %531 = vst.msk [vmem:[%s380 + $0x20] sm:$0xff] %vm418, %v523
      %532 = vst.msk [vmem:[%s380 + $0x28] sm:$0xff] %vm418, %v524
      %533 = vst.msk [vmem:[%s380 + $0x30] sm:$0xff] %vm418, %v525
      %534 = vst.msk [vmem:[%s380 + $0x38] sm:$0xff] %vm418, %v526
      %s535 = smul.u32 8, %s22
      %p536 = scmp.lt.s32.totalorder %s21, 1
      %s537 = scalar_select %p536, %s21, 1
      %p538 = scmp.lt.s32.totalorder %s535, 7
      %s539 = scalar_select %p538, %s535, 7
      %p540 = scmp.lt.s32.totalorder %s23, 0
      %s541 = scalar_select %p540, %s23, 0
      %s542 = sadd.s32 %s541, %s539
      %s543 = smul.addr %s537, 8
      %s544 = sadd.s32 %s542, %s543
      %s545 = smul.addr %s544, 8
      %s546 = scalar_lea.vmem %s5, %s545
      // Predicated region
      $region41: #{dit_forward.26} parent=39 // pred_check
        %p547 = pneg %p195
      $region42: #{dit_forward.26} parent=39 // pred_check_branch
        %549 = sbr.rel (%p547) target = $region44
      $region43: #{dit_forward.26} parent=39 // pred_region
        %s550 = smul.u32 8, %s22
      $region44: #{dit_forward.26} parent=39 // pred_fallthru
        _
    $region40: #{dit_forward.26} parent=5 // pred_fallthru
      _
    %p551 = scmp.le.s32.totalorder 2, %s11
    // Predicated region
    $region45: #{dit_forward.26} parent=5 // pred_check
      %p552 = pneg %p551
    $region46: #{dit_forward.26} parent=5 // pred_check_branch
      %554 = sbr.rel (%p552) target = $region48
    $region47: #{dit_forward.26} parent=5 // pred_region
      %s555 = ssub.s32 %s11, 2
      // Predicated region
      $region49: #{dit_forward.26} parent=47 // pred_check
        %p556 = pneg %p201
      $region50: #{dit_forward.26} parent=47 // pred_check_branch
        %558 = sbr.rel (%p556) target = $region52
      $region51: #{dit_forward.26} parent=47 // pred_region
        %s559 = smul.u32 8, %s25
        %p560 = scmp.lt.s32.totalorder %s24, 1
        %s561 = scalar_select %p560, %s24, 1
        %p562 = scmp.lt.s32.totalorder %s559, 7
        %s563 = scalar_select %p562, %s559, 7
        %p564 = scmp.lt.s32.totalorder %s26, 0
        %s565 = scalar_select %p564, %s26, 0
        %s566 = sadd.s32 %s565, %s563
        %s567 = smul.addr %s561, 8
        %s568 = sadd.s32 %s566, %s567
        %s569 = smul.addr %s568, 8
        %s570 = scalar_lea.vmem %s5, %s569
      $region52: #{dit_forward.26} parent=47 // pred_fallthru
        _
    $region48: #{dit_forward.26} parent=5 // pred_fallthru
      _
  $region6: #{dit_forward.26} parent=0 // loop_footer
    %s15 = sadd.s32 1, %s11
  $region7: #{dit_forward.26} parent=0 // loop_footer_branch
    %10 = sbr.rel target = $region3
  $region8: #{dit_forward.26} parent=0 // loop_exit
    _

// kernel: dit_forward.24
$region0: #{dit_forward.24}
  #allocation0 [shape = 'u32[]', space=smem, size = 0x4, offset = 0x4, fixed_abs, tag = 'smem constant byte address 0x4 - core index']
  #allocation1 [shape = 'u32[144,128]{1,0:T(1,128)}', space=vmem, size = 0x12000, scoped, tag = 'internal scratch']
  #allocation2 [shape = 'f32[128,64]{1,0:T(8,128)}', space=vmem, size = 0x10000, scoped, tag = 'scratch operand']
  %s0 = inlined_call_operand.vmem [shape: f32[128,32], index: 0, kind: input, shape index: {}]
  %s1 = inlined_call_operand.vmem [shape: bf16[32,64], index: 1, kind: input, shape index: {}]
  %s2 = inlined_call_operand.vmem [shape: f32[1,64], index: 2, kind: input, shape index: {}]
  %s3 = inlined_call_operand.vmem [shape: f32[128,64], index: 3, kind: output, shape index: {}]
  %s4 = sld [smem:[#allocation0]]
  $region30: #{dit_forward.24} parent=0
    _
  %s6 = ssub.s32 1, %s4
  %s7 = scalar_select 0, %s6, %s4
  // Predicated region
  $region2: #{dit_forward.24} parent=0 // pred_check
    _
  $region3: #{dit_forward.24} parent=0 // pred_check_branch
    %9 = sbr.rel (0) target = $region5
  $region4: #{dit_forward.24} parent=0 // pred_region
    _
  $region5: #{dit_forward.24} parent=0 // pred_fallthru
    _
  // Predicated region
  $region6: #{dit_forward.24} parent=0 // pred_check
    _
  $region7: #{dit_forward.24} parent=0 // pred_check_branch
    %11 = sbr.rel (0) target = $region9
  $region8: #{dit_forward.24} parent=0 // pred_region
    _
  $region9: #{dit_forward.24} parent=0 // pred_fallthru
    _
  // Predicated region
  $region10: #{dit_forward.24} parent=0 // pred_check
    _
  $region11: #{dit_forward.24} parent=0 // pred_check_branch
    %13 = sbr.rel (0) target = $region13
  $region12: #{dit_forward.24} parent=0 // pred_region
    _
  $region13: #{dit_forward.24} parent=0 // pred_fallthru
    _
  %p15 = scmp.eq.s32.totalorder 0, 0
  // Predicated region
  $region14: #{dit_forward.24} parent=0 // pred_check
    %p16 = pneg %p15
  $region15: #{dit_forward.24} parent=0 // pred_check_branch
    %18 = sbr.rel (%p16) target = $region17
  $region16: #{dit_forward.24} parent=0 // pred_region
    %vm19 = vcmask 523264
    %20 = vst.msk [vmem:[#allocation2] sm:$0xff] %vm19, 0.0
    %21 = vst.msk [vmem:[#allocation2 + $0x8] sm:$0xff] %vm19, 0.0
    %22 = vst.msk [vmem:[#allocation2 + $0x10] sm:$0xff] %vm19, 0.0
    %23 = vst.msk [vmem:[#allocation2 + $0x18] sm:$0xff] %vm19, 0.0
    %24 = vst.msk [vmem:[#allocation2 + $0x20] sm:$0xff] %vm19, 0.0
    %25 = vst.msk [vmem:[#allocation2 + $0x28] sm:$0xff] %vm19, 0.0
    %26 = vst.msk [vmem:[#allocation2 + $0x30] sm:$0xff] %vm19, 0.0
    %27 = vst.msk [vmem:[#allocation2 + $0x38] sm:$0xff] %vm19, 0.0
    %28 = vst.msk [vmem:[#allocation2 + $0x40] sm:$0xff] %vm19, 0.0
    %29 = vst.msk [vmem:[#allocation2 + $0x48] sm:$0xff] %vm19, 0.0
    %30 = vst.msk [vmem:[#allocation2 + $0x50] sm:$0xff] %vm19, 0.0
    %31 = vst.msk [vmem:[#allocation2 + $0x58] sm:$0xff] %vm19, 0.0
    %32 = vst.msk [vmem:[#allocation2 + $0x60] sm:$0xff] %vm19, 0.0
    %33 = vst.msk [vmem:[#allocation2 + $0x68] sm:$0xff] %vm19, 0.0
    %34 = vst.msk [vmem:[#allocation2 + $0x70] sm:$0xff] %vm19, 0.0
    %35 = vst.msk [vmem:[#allocation2 + $0x78] sm:$0xff] %vm19, 0.0
  $region17: #{dit_forward.24} parent=0 // pred_fallthru
    _
  %v36 = vld [vmem:[#allocation2] sm:$0xff]
  %v37 = vld [vmem:[#allocation2 + $0x8] sm:$0xff]
  %v38 = vld [vmem:[#allocation2 + $0x10] sm:$0xff]
  %v39 = vld [vmem:[#allocation2 + $0x18] sm:$0xff]
  %v40 = vld [vmem:[#allocation2 + $0x20] sm:$0xff]
  %v41 = vld [vmem:[#allocation2 + $0x28] sm:$0xff]
  %v42 = vld [vmem:[#allocation2 + $0x30] sm:$0xff]
  %v43 = vld [vmem:[#allocation2 + $0x38] sm:$0xff]
  %v44 = vld [vmem:[#allocation2 + $0x40] sm:$0xff]
  %v45 = vld [vmem:[#allocation2 + $0x48] sm:$0xff]
  %v46 = vld [vmem:[#allocation2 + $0x50] sm:$0xff]
  %v47 = vld [vmem:[#allocation2 + $0x58] sm:$0xff]
  %v48 = vld [vmem:[#allocation2 + $0x60] sm:$0xff]
  %v49 = vld [vmem:[#allocation2 + $0x68] sm:$0xff]
  %v50 = vld [vmem:[#allocation2 + $0x70] sm:$0xff]
  %v51 = vld [vmem:[#allocation2 + $0x78] sm:$0xff]
  %v52 = vld [vmem:[%s0] sm:$0xff]
  %v53 = vld [vmem:[%s0 + $0x8] sm:$0xff]
  %v54 = vld [vmem:[%s0 + $0x10] sm:$0xff]
  %v55 = vld [vmem:[%s0 + $0x18] sm:$0xff]
  %v56 = vld [vmem:[%s0 + $0x20] sm:$0xff]
  %v57 = vld [vmem:[%s0 + $0x28] sm:$0xff]
  %v58 = vld [vmem:[%s0 + $0x30] sm:$0xff]
  %v59 = vld [vmem:[%s0 + $0x38] sm:$0xff]
  %v60 = vld [vmem:[%s0 + $0x40] sm:$0xff]
  %v61 = vld [vmem:[%s0 + $0x48] sm:$0xff]
  %v62 = vld [vmem:[%s0 + $0x50] sm:$0xff]
  %v63 = vld [vmem:[%s0 + $0x58] sm:$0xff]
  %v64 = vld [vmem:[%s0 + $0x60] sm:$0xff]
  %v65 = vld [vmem:[%s0 + $0x68] sm:$0xff]
  %v66 = vld [vmem:[%s0 + $0x70] sm:$0xff]
  %v67 = vld [vmem:[%s0 + $0x78] sm:$0xff]
  %v68 = vpack.c.bf16 %v53, %v52
  %v69 = vpack.c.bf16 %v55, %v54
  %v70 = vpack.c.bf16 %v57, %v56
  %v71 = vpack.c.bf16 %v59, %v58
  %v72 = vpack.c.bf16 %v61, %v60
  %v73 = vpack.c.bf16 %v63, %v62
  %v74 = vpack.c.bf16 %v65, %v64
  %v75 = vpack.c.bf16 %v67, %v66
  %v76 = vld [vmem:[%s1] sm:$0xf]
  %v77 = vld [vmem:[%s1 + $0x4] sm:$0xf]
  %v78 = vld [vmem:[%s1 + $0x8] sm:$0xf]
  %v79 = vld [vmem:[%s1 + $0xc] sm:$0xf]
  %v84 = vunpack.c.l.b16 %v76
  %v85 = vunpack.c.l.b16 %v77
  %v86 = vunpack.c.l.b16 %v78
  %v87 = vunpack.c.l.b16 %v79
  %v88 = vpack.c.b16 %v85, %v84
  %v89 = vpack.c.b16 %v87, %v86
  %vm92 = vcmask 261120
  %v94 = vsel %vm92, %v68, 0
  %v97 = vsel %vm92, %v69, 0
  %v100 = vsel %vm92, %v70, 0
  %v103 = vsel %vm92, %v71, 0
  %v106 = vsel %vm92, %v72, 0
  %v109 = vsel %vm92, %v73, 0
  %v112 = vsel %vm92, %v74, 0
  %v115 = vsel %vm92, %v75, 0
  %117 = vmatprep.subr.bf16.mxu0 0
  %118 = vmatpush1.bf16.msra.mxu0 0
  %119 = vmatprep.subr.bf16.mxu0 0
  %120 = vmatpush1.bf16.msra.mxu0 0
  %121 = vmatprep.subr.bf16.mxu0 0
  %122 = vmatpush1.bf16.msra.mxu0 0
  %123 = vmatprep.subr.bf16.mxu0 0
  %124 = vmatpush1.bf16.msra.mxu0 0
  %125 = vmatprep.subr.bf16.mxu0 0
  %126 = vmatpush1.bf16.msra.mxu0 0
  %127 = vmatprep.subr.bf16.mxu0 0
  %128 = vmatpush1.bf16.msra.mxu0 0
  %129 = vmatprep.subr.bf16.mxu0 0
  %130 = vmatpush1.bf16.msra.mxu0 %v89
  %131 = vmatprep.subr.bf16.mxu0 0
  %132 = vmatpush1.bf16.msra.mxu0 %v88
  %133 = vmatprep.subr.bf16.mxu0 0
  %134 = vmatpush2.bf16.msra.mxu0 0
  %135 = vmatprep.subr.bf16.mxu0 0
  %136 = vmatpush2.bf16.msra.mxu0 0
  %137 = vmatprep.subr.bf16.mxu0 0
  %138 = vmatpush2.bf16.msra.mxu0 0
  %139 = vmatprep.subr.bf16.mxu0 0
  %140 = vmatpush2.bf16.msra.mxu0 0
  %141 = vmatprep.subr.bf16.mxu0 0
  %142 = vmatpush2.bf16.msra.mxu0 0
  %143 = vmatprep.subr.bf16.mxu0 0
  %144 = vmatpush2.bf16.msra.mxu0 0
  %145 = vmatprep.subr.bf16.mxu0 0
  %146 = vmatpush2.bf16.msra.mxu0 0
  %147 = vmatprep.subr.bf16.mxu0 0
  %148 = vmatpush2.bf16.msra.mxu0 0
  %149 = vmatprep.mubr.bf16.mxu0 0
  %150 = vmatmul.mubr.bf16.gmra.mxu0 %v94
  %v151 = vpop.f32.mrf.mxu0
  %v152 = vadd.f32 0.0, %v151
  %v153 = vpop.f32.mrf.mxu0
  %v154 = vpop.f32.mrf.mxu0
  %v155 = vadd.f32 0.0, %v154
  %v156 = vpop.f32.mrf.mxu0
  %157 = vmatprep.mubr.bf16.mxu0 0
  %158 = vmatmul.mubr.bf16.gmra.mxu0 %v97
  %v159 = vpop.f32.mrf.mxu0
  %v160 = vadd.f32 0.0, %v159
  %v161 = vpop.f32.mrf.mxu0
  %v162 = vpop.f32.mrf.mxu0
  %v163 = vadd.f32 0.0, %v162
  %v164 = vpop.f32.mrf.mxu0
  %165 = vmatprep.mubr.bf16.mxu0 0
  %166 = vmatmul.mubr.bf16.gmra.mxu0 %v100
  %v167 = vpop.f32.mrf.mxu0
  %v168 = vadd.f32 0.0, %v167
  %v169 = vpop.f32.mrf.mxu0
  %v170 = vpop.f32.mrf.mxu0
  %v171 = vadd.f32 0.0, %v170
  %v172 = vpop.f32.mrf.mxu0
  %173 = vmatprep.mubr.bf16.mxu0 0
  %174 = vmatmul.mubr.bf16.gmra.mxu0 %v103
  %v175 = vpop.f32.mrf.mxu0
  %v176 = vadd.f32 0.0, %v175
  %v177 = vpop.f32.mrf.mxu0
  %v178 = vpop.f32.mrf.mxu0
  %v179 = vadd.f32 0.0, %v178
  %v180 = vpop.f32.mrf.mxu0
  %181 = vmatprep.mubr.bf16.mxu0 0
  %182 = vmatmul.mubr.bf16.gmra.mxu0 %v106
  %v183 = vpop.f32.mrf.mxu0
  %v184 = vadd.f32 0.0, %v183
  %v185 = vpop.f32.mrf.mxu0
  %v186 = vpop.f32.mrf.mxu0
  %v187 = vadd.f32 0.0, %v186
  %v188 = vpop.f32.mrf.mxu0
  %189 = vmatprep.mubr.bf16.mxu0 0
  %190 = vmatmul.mubr.bf16.gmra.mxu0 %v109
  %v191 = vpop.f32.mrf.mxu0
  %v192 = vadd.f32 0.0, %v191
  %v193 = vpop.f32.mrf.mxu0
  %v194 = vpop.f32.mrf.mxu0
  %v195 = vadd.f32 0.0, %v194
  %v196 = vpop.f32.mrf.mxu0
  %197 = vmatprep.mubr.bf16.mxu0 0
  %198 = vmatmul.mubr.bf16.gmra.mxu0 %v112
  %v199 = vpop.f32.mrf.mxu0
  %v200 = vadd.f32 0.0, %v199
  %v201 = vpop.f32.mrf.mxu0
  %v202 = vpop.f32.mrf.mxu0
  %v203 = vadd.f32 0.0, %v202
  %v204 = vpop.f32.mrf.mxu0
  %205 = vmatprep.mubr.bf16.mxu0 0
  %206 = vmatmul.mubr.bf16.gmra.mxu0 %v115
  %v207 = vpop.f32.mrf.mxu0
  %v208 = vadd.f32 0.0, %v207
  %v209 = vpop.f32.mrf.mxu0
  %v210 = vpop.f32.mrf.mxu0
  %v211 = vadd.f32 0.0, %v210
  %v212 = vpop.f32.mrf.mxu0
  %213 = vdwg.mxu0
  %v214 = vadd.f32 %v36, %v152
  %v215 = vadd.f32 %v37, %v155
  %v216 = vadd.f32 %v38, %v160
  %v217 = vadd.f32 %v39, %v163
  %v218 = vadd.f32 %v40, %v168
  %v219 = vadd.f32 %v41, %v171
  %v220 = vadd.f32 %v42, %v176
  %v221 = vadd.f32 %v43, %v179
  %v222 = vadd.f32 %v44, %v184
  %v223 = vadd.f32 %v45, %v187
  %v224 = vadd.f32 %v46, %v192
  %v225 = vadd.f32 %v47, %v195
  %v226 = vadd.f32 %v48, %v200
  %v227 = vadd.f32 %v49, %v203
  %v228 = vadd.f32 %v50, %v208
  %v229 = vadd.f32 %v51, %v211
  %vm230 = vcmask 523264
  %231 = vst.msk [vmem:[#allocation2] sm:$0xff] %vm230, %v214
  %232 = vst.msk [vmem:[#allocation2 + $0x8] sm:$0xff] %vm230, %v215
  %233 = vst.msk [vmem:[#allocation2 + $0x10] sm:$0xff] %vm230, %v216
  %234 = vst.msk [vmem:[#allocation2 + $0x18] sm:$0xff] %vm230, %v217
  %235 = vst.msk [vmem:[#allocation2 + $0x20] sm:$0xff] %vm230, %v218
  %236 = vst.msk [vmem:[#allocation2 + $0x28] sm:$0xff] %vm230, %v219
  %237 = vst.msk [vmem:[#allocation2 + $0x30] sm:$0xff] %vm230, %v220
  %238 = vst.msk [vmem:[#allocation2 + $0x38] sm:$0xff] %vm230, %v221
  %239 = vst.msk [vmem:[#allocation2 + $0x40] sm:$0xff] %vm230, %v222
  %240 = vst.msk [vmem:[#allocation2 + $0x48] sm:$0xff] %vm230, %v223
  %241 = vst.msk [vmem:[#allocation2 + $0x50] sm:$0xff] %vm230, %v224
  %242 = vst.msk [vmem:[#allocation2 + $0x58] sm:$0xff] %vm230, %v225
  %243 = vst.msk [vmem:[#allocation2 + $0x60] sm:$0xff] %vm230, %v226
  %244 = vst.msk [vmem:[#allocation2 + $0x68] sm:$0xff] %vm230, %v227
  %245 = vst.msk [vmem:[#allocation2 + $0x70] sm:$0xff] %vm230, %v228
  %246 = vst.msk [vmem:[#allocation2 + $0x78] sm:$0xff] %vm230, %v229
  // Predicated region
  $region18: #{dit_forward.24} parent=0 // pred_check
    %p247 = pneg %p15
  $region19: #{dit_forward.24} parent=0 // pred_check_branch
    %249 = sbr.rel (%p247) target = $region21
  $region20: #{dit_forward.24} parent=0 // pred_region
    %v250 = vld [vmem:[#allocation2] sm:$0xff]
    %v251 = vld [vmem:[#allocation2 + $0x8] sm:$0xff]
    %v252 = vld [vmem:[#allocation2 + $0x10] sm:$0xff]
    %v253 = vld [vmem:[#allocation2 + $0x18] sm:$0xff]
    %v254 = vld [vmem:[#allocation2 + $0x20] sm:$0xff]
    %v255 = vld [vmem:[#allocation2 + $0x28] sm:$0xff]
    %v256 = vld [vmem:[#allocation2 + $0x30] sm:$0xff]
    %v257 = vld [vmem:[#allocation2 + $0x38] sm:$0xff]
    %v258 = vld [vmem:[#allocation2 + $0x40] sm:$0xff]
    %v259 = vld [vmem:[#allocation2 + $0x48] sm:$0xff]
    %v260 = vld [vmem:[#allocation2 + $0x50] sm:$0xff]
    %v261 = vld [vmem:[#allocation2 + $0x58] sm:$0xff]
    %v262 = vld [vmem:[#allocation2 + $0x60] sm:$0xff]
    %v263 = vld [vmem:[#allocation2 + $0x68] sm:$0xff]
    %v264 = vld [vmem:[#allocation2 + $0x70] sm:$0xff]
    %v265 = vld [vmem:[#allocation2 + $0x78] sm:$0xff]
    %v266 = vld [vmem:[%s2] sm:$0x1]
    %v268 = vlaneseq
    %v269 = vshrl.u32 %v268, 7
    %v270 = vsub.s32 0, %v269
    %v271 = vrot.slane %v266, %v270
    %v273 = vadd.f32 %v250, %v271
    %v274 = vadd.f32 %v251, %v271
    %v275 = vadd.f32 %v252, %v271
    %v276 = vadd.f32 %v253, %v271
    %v277 = vadd.f32 %v254, %v271
    %v278 = vadd.f32 %v255, %v271
    %v279 = vadd.f32 %v256, %v271
    %v280 = vadd.f32 %v257, %v271
    %v281 = vadd.f32 %v258, %v271
    %v282 = vadd.f32 %v259, %v271
    %v283 = vadd.f32 %v260, %v271
    %v284 = vadd.f32 %v261, %v271
    %v285 = vadd.f32 %v262, %v271
    %v286 = vadd.f32 %v263, %v271
    %v287 = vadd.f32 %v264, %v271
    %v288 = vadd.f32 %v265, %v271
    %289 = vst.msk [vmem:[%s3] sm:$0xff] %vm230, %v273
    %290 = vst.msk [vmem:[%s3 + $0x8] sm:$0xff] %vm230, %v274
    %291 = vst.msk [vmem:[%s3 + $0x10] sm:$0xff] %vm230, %v275
    %292 = vst.msk [vmem:[%s3 + $0x18] sm:$0xff] %vm230, %v276
    %293 = vst.msk [vmem:[%s3 + $0x20] sm:$0xff] %vm230, %v277
    %294 = vst.msk [vmem:[%s3 + $0x28] sm:$0xff] %vm230, %v278
    %295 = vst.msk [vmem:[%s3 + $0x30] sm:$0xff] %vm230, %v279
    %296 = vst.msk [vmem:[%s3 + $0x38] sm:$0xff] %vm230, %v280
    %297 = vst.msk [vmem:[%s3 + $0x40] sm:$0xff] %vm230, %v281
    %298 = vst.msk [vmem:[%s3 + $0x48] sm:$0xff] %vm230, %v282
    %299 = vst.msk [vmem:[%s3 + $0x50] sm:$0xff] %vm230, %v283
    %300 = vst.msk [vmem:[%s3 + $0x58] sm:$0xff] %vm230, %v284
    %301 = vst.msk [vmem:[%s3 + $0x60] sm:$0xff] %vm230, %v285
    %302 = vst.msk [vmem:[%s3 + $0x68] sm:$0xff] %vm230, %v286
    %303 = vst.msk [vmem:[%s3 + $0x70] sm:$0xff] %vm230, %v287
    %304 = vst.msk [vmem:[%s3 + $0x78] sm:$0xff] %vm230, %v288
  $region21: #{dit_forward.24} parent=0 // pred_fallthru
    _
  // Predicated region
  $region22: #{dit_forward.24} parent=0 // pred_check
    _
  $region23: #{dit_forward.24} parent=0 // pred_check_branch
    %306 = sbr.rel (0) target = $region25
  $region24: #{dit_forward.24} parent=0 // pred_region
    _
  $region25: #{dit_forward.24} parent=0 // pred_fallthru
    _
  // Predicated region
  $region26: #{dit_forward.24} parent=0 // pred_check
    _
  $region27: #{dit_forward.24} parent=0 // pred_check_branch
    %308 = sbr.rel (0) target = $region29
  $region28: #{dit_forward.24} parent=0 // pred_region
    _
  $region29: #{dit_forward.24} parent=0 // pred_fallthru
    _

// kernel: dit_forward.27
$region0: #{dit_forward.27}
  #allocation0 [shape = 'u32[]', space=smem, size = 0x4, offset = 0x4, fixed_abs, tag = 'smem constant byte address 0x4 - core index']
  #allocation1 [shape = 'u32[144,128]{1,0:T(1,128)}', space=vmem, size = 0x12000, scoped, tag = 'internal scratch']
  %s0 = inlined_call_operand.vmem [shape: f32[2,64,32], index: 0, kind: input, shape index: {}]
  %s1 = inlined_call_operand.vmem [shape: f32[2,1,32], index: 1, kind: input, shape index: {}]
  %s2 = inlined_call_operand.vmem [shape: f32[2,1,32], index: 2, kind: input, shape index: {}]
  %s3 = inlined_call_operand.vmem [shape: bf16[32,128], index: 3, kind: input, shape index: {}]
  %s4 = inlined_call_operand.vmem [shape: f32[1,128], index: 4, kind: input, shape index: {}]
  %s5 = inlined_call_operand.vmem [shape: f32[2,64,128], index: 5, kind: output, shape index: {}]
  %s6 = sld [smem:[#allocation0]]
  $region53: #{dit_forward.27} parent=0
    _
  %s8 = ssub.s32 1, %s6
  %s9 = scalar_select 0, %s8, %s6
  loop: start=0, step=1, limit=4
  $region2: #{dit_forward.27} parent=0 // loop_pre_header
    _
  $region3: #{dit_forward.27} parent=0 // loop_header
    %s11 = sphi 0, %s15
    %p12 = scmp.ge.s32.totalorder %s11, 4
    %s18 = sphi 0, %s37
    %s19 = sphi 0, %s33
    %s20 = sphi 0, %s29
    %s21 = sphi 0, %s18
    %s22 = sphi 0, %s19
    %s23 = sphi 0, %s20
    %s24 = sphi 0, %s21
    %s25 = sphi 0, %s22
    %s26 = sphi 0, %s23
    %s42 = sphi 0, %s44
    %s45 = sphi 0, %s42
    %s46 = sphi 0, %s45
    %s62 = sphi 0, %s46
    %s68 = sphi 0, %s70
    %s71 = sphi 0, %s68
    %s72 = sphi 0, %s71
    %s88 = sphi 0, %s72
    %s94 = sphi 0, %s96
    %s97 = sphi 0, %s94
    %s98 = sphi 0, %s97
    %s114 = sphi 0, %s98
    %s120 = sphi 0, %s122
    %s123 = sphi 0, %s120
    %s124 = sphi 0, %s123
    %s140 = sphi 0, %s124
    %s146 = sphi 0, %s148
    %s149 = sphi 0, %s146
    %s150 = sphi 0, %s149
    %s166 = sphi 0, %s150
    %s176 = sphi 0, %s178
    %s179 = sphi 0, %s176
    %s180 = sphi 0, %s179
    %s196 = sphi 0, %s180
  $region4: #{dit_forward.27} parent=0 // loop_header_branch
    %14 = sbr.rel (%p12) target = $region8
  $region5: #{dit_forward.27} parent=0 // loop_body
    %s16 = ssub.s32 %s11, 1
    %s17 = ssub.s32 %s11, 2
    %s27 = sadd.s32 1, %s20
    %p28 = scmp.ge.s32.totalorder %s27, 1
    %s29 = scalar_select %p28, 0, %s27
    %s30 = sadd.s32 1, %s19
    %s31 = scalar_select %p28, %s30, %s19
    %p32 = scmp.ge.s32.totalorder %s31, 1
    %s33 = scalar_select %p32, 0, %s31
    %s34 = sadd.s32 1, %s18
    %s35 = scalar_select %p32, %s34, %s18
    %p36 = scmp.ge.s32.totalorder %s35, 2
    %s37 = scalar_select %p36, 0, %s35
    %s38 = ssub.s32 %s18, %s37
    %s39 = ssub.s32 %s19, %s33
    %s40 = sor.u32 %s38, %s39
    %p41 = scmp.eq.s32.totalorder %s40, 0
    %s43 = sadd.s32 %s42, 1
    %s44 = scalar_select %p41, %s42, %s43
    %p47 = pneg %p41
    %p48 = scmp.eq.s32.totalorder %s11, 1
    %p49 = por %p47, %p48
    %p50 = scmp.ne.s32.totalorder %s42, %s45
    %p51 = scmp.eq.s32.totalorder %s11, 0
    %p52 = por %p50, %p51
    %p53 = scmp.ne.s32.totalorder %s42, %s45
    %p54 = scmp.eq.s32.totalorder %s16, 1
    %p55 = por %p53, %p54
    %p56 = scmp.ne.s32.totalorder %s45, %s46
    %p57 = scmp.eq.s32.totalorder %s16, 0
    %p58 = por %p56, %p57
    %p59 = scmp.ne.s32.totalorder %s45, %s46
    %p60 = scmp.eq.s32.totalorder %s17, 1
    %p61 = por %p59, %p60
    %p63 = scmp.ne.s32.totalorder %s46, %s62
    %p64 = scmp.eq.s32.totalorder %s17, 0
    %p65 = por %p63, %p64
    %s66 = ssub.s32 %s18, %s37
    %p67 = scmp.eq.s32.totalorder %s66, 0
    %s69 = sadd.s32 %s68, 1
    %s70 = scalar_select %p67, %s68, %s69
    %p73 = pneg %p67
    %p74 = scmp.eq.s32.totalorder %s11, 1
    %p75 = por %p73, %p74
    %p76 = scmp.ne.s32.totalorder %s68, %s71
    %p77 = scmp.eq.s32.totalorder %s11, 0
    %p78 = por %p76, %p77
    %p79 = scmp.ne.s32.totalorder %s68, %s71
    %p80 = scmp.eq.s32.totalorder %s16, 1
    %p81 = por %p79, %p80
    %p82 = scmp.ne.s32.totalorder %s71, %s72
    %p83 = scmp.eq.s32.totalorder %s16, 0
    %p84 = por %p82, %p83
    %p85 = scmp.ne.s32.totalorder %s71, %s72
    %p86 = scmp.eq.s32.totalorder %s17, 1
    %p87 = por %p85, %p86
    %p89 = scmp.ne.s32.totalorder %s72, %s88
    %p90 = scmp.eq.s32.totalorder %s17, 0
    %p91 = por %p89, %p90
    %s92 = ssub.s32 %s18, %s37
    %p93 = scmp.eq.s32.totalorder %s92, 0
    %s95 = sadd.s32 %s94, 1
    %s96 = scalar_select %p93, %s94, %s95
    %p99 = pneg %p93
    %p100 = scmp.eq.s32.totalorder %s11, 1
    %p101 = por %p99, %p100
    %p102 = scmp.ne.s32.totalorder %s94, %s97
    %p103 = scmp.eq.s32.totalorder %s11, 0
    %p104 = por %p102, %p103
    %p105 = scmp.ne.s32.totalorder %s94, %s97
    %p106 = scmp.eq.s32.totalorder %s16, 1
    %p107 = por %p105, %p106
    %p108 = scmp.ne.s32.totalorder %s97, %s98
    %p109 = scmp.eq.s32.totalorder %s16, 0
    %p110 = por %p108, %p109
    %p111 = scmp.ne.s32.totalorder %s97, %s98
    %p112 = scmp.eq.s32.totalorder %s17, 1
    %p113 = por %p111, %p112
    %p115 = scmp.ne.s32.totalorder %s98, %s114
    %p116 = scmp.eq.s32.totalorder %s17, 0
    %p117 = por %p115, %p116
    %s118 = ssub.s32 %s20, %s29
    %p119 = scmp.eq.s32.totalorder %s118, 0
    %s121 = sadd.s32 %s120, 1
    %s122 = scalar_select %p119, %s120, %s121
    %p125 = pneg %p119
    %p126 = scmp.eq.s32.totalorder %s11, 1
    %p127 = por %p125, %p126
    %p128 = scmp.ne.s32.totalorder %s120, %s123
    %p129 = scmp.eq.s32.totalorder %s11, 0
    %p130 = por %p128, %p129
    %p131 = scmp.ne.s32.totalorder %s120, %s123
    %p132 = scmp.eq.s32.totalorder %s16, 1
    %p133 = por %p131, %p132
    %p134 = scmp.ne.s32.totalorder %s123, %s124
    %p135 = scmp.eq.s32.totalorder %s16, 0
    %p136 = por %p134, %p135
    %p137 = scmp.ne.s32.totalorder %s123, %s124
    %p138 = scmp.eq.s32.totalorder %s17, 1
    %p139 = por %p137, %p138
    %p141 = scmp.ne.s32.totalorder %s124, %s140
    %p142 = scmp.eq.s32.totalorder %s17, 0
    %p143 = por %p141, %p142
    %s144 = ssub.s32 %s20, %s29
    %p145 = scmp.eq.s32.totalorder %s144, 0
    %s147 = sadd.s32 %s146, 1
    %s148 = scalar_select %p145, %s146, %s147
    %p151 = pneg %p145
    %p152 = scmp.eq.s32.totalorder %s11, 1
    %p153 = por %p151, %p152
    %p154 = scmp.ne.s32.totalorder %s146, %s149
    %p155 = scmp.eq.s32.totalorder %s11, 0
    %p156 = por %p154, %p155
    %p157 = scmp.ne.s32.totalorder %s146, %s149
    %p158 = scmp.eq.s32.totalorder %s16, 1
    %p159 = por %p157, %p158
    %p160 = scmp.ne.s32.totalorder %s149, %s150
    %p161 = scmp.eq.s32.totalorder %s16, 0
    %p162 = por %p160, %p161
    %p163 = scmp.ne.s32.totalorder %s149, %s150
    %p164 = scmp.eq.s32.totalorder %s17, 1
    %p165 = por %p163, %p164
    %p167 = scmp.ne.s32.totalorder %s150, %s166
    %p168 = scmp.eq.s32.totalorder %s17, 0
    %p169 = por %p167, %p168
    %s170 = ssub.s32 %s18, %s37
    %s171 = ssub.s32 %s19, %s33
    %s172 = sor.u32 %s170, %s171
    %s173 = ssub.s32 %s20, %s29
    %s174 = sor.u32 %s172, %s173
    %p175 = scmp.eq.s32.totalorder %s174, 0
    %s177 = sadd.s32 %s176, 1
    %s178 = scalar_select %p175, %s176, %s177
    %p181 = pneg %p175
    %p182 = scmp.eq.s32.totalorder %s11, 1
    %p183 = por %p181, %p182
    %p184 = scmp.ne.s32.totalorder %s176, %s179
    %p185 = scmp.eq.s32.totalorder %s11, 0
    %p186 = por %p184, %p185
    %p187 = scmp.ne.s32.totalorder %s176, %s179
    %p188 = scmp.eq.s32.totalorder %s16, 1
    %p189 = por %p187, %p188
    %p190 = scmp.ne.s32.totalorder %s179, %s180
    %p191 = scmp.eq.s32.totalorder %s16, 0
    %p192 = por %p190, %p191
    %p193 = scmp.ne.s32.totalorder %s179, %s180
    %p194 = scmp.eq.s32.totalorder %s17, 1
    %p195 = por %p193, %p194
    %p197 = scmp.ne.s32.totalorder %s180, %s196
    %p198 = scmp.eq.s32.totalorder %s17, 0
    %p199 = por %p197, %p198
    %p200 = scmp.le.s32.totalorder 1, %s11
    %p201 = scmp.lt.s32.totalorder %s11, 3
    %p202 = pnand %p200, %p201
    %p203 = pneg %p202
    // Predicated region
    $region9: #{dit_forward.27} parent=5 // pred_check
      _
    $region10: #{dit_forward.27} parent=5 // pred_check_branch
      %205 = sbr.rel (%p202) target = $region12
    $region11: #{dit_forward.27} parent=5 // pred_region
      %s206 = ssub.s32 %s11, 1
      // Predicated region
      $region13: #{dit_forward.27} parent=11 // pred_check
        %p207 = pneg %p136
      $region14: #{dit_forward.27} parent=11 // pred_check_branch
        %209 = sbr.rel (%p207) target = $region16
      $region15: #{dit_forward.27} parent=11 // pred_region
        %p210 = scmp.lt.s32.totalorder %s23, 0
        %s211 = scalar_select %p210, %s23, 0
        %s212 = smul.addr %s211, 4
        %s213 = scalar_lea.vmem %s3, %s212
      $region16: #{dit_forward.27} parent=11 // pred_fallthru
        _
      // Predicated region
      $region17: #{dit_forward.27} parent=11 // pred_check
        %p214 = pneg %p162
      $region18: #{dit_forward.27} parent=11 // pred_check_branch
        %216 = sbr.rel (%p214) target = $region20
      $region19: #{dit_forward.27} parent=11 // pred_region
        %p217 = scmp.lt.s32.totalorder %s23, 0
        %s218 = scalar_select %p217, %s23, 0
        %s219 = scalar_lea.vmem %s4, %s218
      $region20: #{dit_forward.27} parent=11 // pred_fallthru
        _
    $region12: #{dit_forward.27} parent=5 // pred_fallthru
      _
    %p220 = scmp.lt.s32.totalorder %s11, 2
    // Predicated region
    $region21: #{dit_forward.27} parent=5 // pred_check
      %p221 = pneg %p220
    $region22: #{dit_forward.27} parent=5 // pred_check_branch
      %223 = sbr.rel (%p221) target = $region24
    $region23: #{dit_forward.27} parent=5 // pred_region
      // Predicated region
      $region25: #{dit_forward.27} parent=23 // pred_check
        %p224 = pneg %p52
      $region26: #{dit_forward.27} parent=23 // pred_check_branch
        %226 = sbr.rel (%p224) target = $region28
      $region27: #{dit_forward.27} parent=23 // pred_region
        %s227 = smul.u32 8, %s19
        %p228 = scmp.lt.s32.totalorder %s18, 1
        %s229 = scalar_select %p228, %s18, 1
        %p230 = scmp.lt.s32.totalorder %s227, 7
        %s231 = scalar_select %p230, %s227, 7
        %s232 = smul.addr %s229, 8
        %s233 = sadd.s32 %s231, %s232
        %s234 = smul.addr %s233, 8
        %s235 = scalar_lea.vmem %s0, %s234
        %s236 = smul.u32 8, %s19
      $region28: #{dit_forward.27} parent=23 // pred_fallthru
        _
      // Predicated region
      $region29: #{dit_forward.27} parent=23 // pred_check
        %p237 = pneg %p78
      $region30: #{dit_forward.27} parent=23 // pred_check_branch
        %239 = sbr.rel (%p237) target = $region32
      $region31: #{dit_forward.27} parent=23 // pred_region
        %p240 = scmp.lt.s32.totalorder %s18, 1
        %s241 = scalar_select %p240, %s18, 1
        %s242 = scalar_lea.vmem %s1, %s241
      $region32: #{dit_forward.27} parent=23 // pred_fallthru
        _
      // Predicated region
      $region33: #{dit_forward.27} parent=23 // pred_check
        %p243 = pneg %p104
      $region34: #{dit_forward.27} parent=23 // pred_check_branch
        %245 = sbr.rel (%p243) target = $region36
      $region35: #{dit_forward.27} parent=23 // pred_region
        %p246 = scmp.lt.s32.totalorder %s18, 1
        %s247 = scalar_select %p246, %s18, 1
        %s248 = scalar_lea.vmem %s2, %s247
      $region36: #{dit_forward.27} parent=23 // pred_fallthru
        _
    $region24: #{dit_forward.27} parent=5 // pred_fallthru
      _
    %p249 = scmp.le.s32.totalorder 1, %s11
    %p250 = scmp.lt.s32.totalorder %s11, 3
    %p251 = pnand %p249, %p250
    %p252 = pneg %p251
    // Predicated region
    $region37: #{dit_forward.27} parent=5 // pred_check
      _
    $region38: #{dit_forward.27} parent=5 // pred_check_branch
      %254 = sbr.rel (%p251) target = $region40
    $region39: #{dit_forward.27} parent=5 // pred_region
      %s255 = ssub.s32 %s11, 1
      %s256 = smul.u32 8, %s22
      %p257 = scmp.lt.s32.totalorder %s21, 1
      %s258 = scalar_select %p257, %s21, 1
      %p259 = scmp.lt.s32.totalorder %s256, 7
      %s260 = scalar_select %p259, %s256, 7
      %s261 = smul.addr %s258, 8
      %s262 = sadd.s32 %s260, %s261
      %s263 = smul.addr %s262, 8
      %s264 = scalar_lea.vmem %s0, %s263
      %p265 = pneg %p58
      %p266 = pneg %p55
      %p267 = scmp.lt.s32.totalorder %s21, 1
      %s268 = scalar_select %p267, %s21, 1
      %s269 = scalar_lea.vmem %s1, %s268
      %p270 = pneg %p84
      %p271 = pneg %p81
      %p272 = scmp.lt.s32.totalorder %s21, 1
      %s273 = scalar_select %p272, %s21, 1
      %s274 = scalar_lea.vmem %s2, %s273
      %p275 = pneg %p110
      %p276 = pneg %p107
      %p277 = scmp.lt.s32.totalorder %s23, 0
      %s278 = scalar_select %p277, %s23, 0
      %s279 = smul.addr %s278, 4
      %s280 = scalar_lea.vmem %s3, %s279
      %p281 = pneg %p136
      %p282 = pneg %p133
      %p283 = scmp.lt.s32.totalorder %s23, 0
      %s284 = scalar_select %p283, %s23, 0
      %s285 = scalar_lea.vmem %s4, %s284
      %p286 = pneg %p162
      %p287 = pneg %p159
      %p288 = pneg %p192
      %p289 = pneg %p189
      %s290 = smul.u32 8, %s22
      %p291 = scmp.lt.s32.totalorder %s21, 1
      %s292 = scalar_select %p291, %s21, 1
      %p293 = scmp.lt.s32.totalorder %s290, 7
      %s294 = scalar_select %p293, %s290, 7
      %p295 = scmp.lt.s32.totalorder %s23, 0
      %s296 = scalar_select %p295, %s23, 0
      %s297 = sadd.s32 %s296, %s294
      %s298 = smul.addr %s292, 8
      %s299 = sadd.s32 %s297, %s298
      %s300 = smul.addr %s299, 8
      %s301 = scalar_lea.vmem %s5, %s300
      %s302 = smul.u32 8, %s22
      %p303 = scmp.lt.s32.totalorder %s21, 1
      %s304 = scalar_select %p303, %s21, 1
      %p305 = scmp.lt.s32.totalorder %s302, 7
      %s306 = scalar_select %p305, %s302, 7
      %s307 = smul.addr %s304, 8
      %s308 = sadd.s32 %s306, %s307
      %s309 = smul.addr %s308, 8
      %s310 = scalar_lea.vmem %s0, %s309
      %s311 = smul.u32 8, %s22
      %p312 = scmp.lt.s32.totalorder %s21, 1
      %s313 = scalar_select %p312, %s21, 1
      %s314 = scalar_lea.vmem %s1, %s313
      %p315 = scmp.lt.s32.totalorder %s21, 1
      %s316 = scalar_select %p315, %s21, 1
      %s317 = scalar_lea.vmem %s2, %s316
      %p318 = scmp.lt.s32.totalorder %s23, 0
      %s319 = scalar_select %p318, %s23, 0
      %s320 = smul.addr %s319, 4
      %s321 = scalar_lea.vmem %s3, %s320
      %p322 = scmp.lt.s32.totalorder %s23, 0
      %s323 = scalar_select %p322, %s23, 0
      %s324 = scalar_lea.vmem %s4, %s323
      %s325 = smul.u32 8, %s22
      %p326 = scmp.lt.s32.totalorder %s21, 1
      %s327 = scalar_select %p326, %s21, 1
      %p328 = scmp.lt.s32.totalorder %s325, 7
      %s329 = scalar_select %p328, %s325, 7
      %p330 = scmp.lt.s32.totalorder %s23, 0
      %s331 = scalar_select %p330, %s23, 0
      %s332 = sadd.s32 %s331, %s329
      %s333 = smul.addr %s327, 8
      %s334 = sadd.s32 %s332, %s333
      %s335 = smul.addr %s334, 8
      %s336 = scalar_lea.vmem %s5, %s335
      %s337 = smul.u32 8, %s22
      %v339 = vld [vmem:[%s310] sm:$0xff]
      %v340 = vld [vmem:[%s310 + $0x8] sm:$0xff]
      %v341 = vld [vmem:[%s310 + $0x10] sm:$0xff]
      %v342 = vld [vmem:[%s310 + $0x18] sm:$0xff]
      %v343 = vld [vmem:[%s310 + $0x20] sm:$0xff]
      %v344 = vld [vmem:[%s310 + $0x28] sm:$0xff]
      %v345 = vld [vmem:[%s310 + $0x30] sm:$0xff]
      %v346 = vld [vmem:[%s310 + $0x38] sm:$0xff]
      %vm347 = vcmask 261120
      %v348 = vsel %vm347, %v339, 0.0
      %349 = vadd.xlane.f32.xlu0 %v348
      %v350 = vpop.xlane.xlu0 %349
      %v351 = vsel %vm347, %v340, 0.0
      %352 = vadd.xlane.f32.xlu0 %v351
      %v353 = vpop.xlane.xlu0 %352
      %v354 = vsel %vm347, %v341, 0.0
      %355 = vadd.xlane.f32.xlu0 %v354
      %v356 = vpop.xlane.xlu0 %355
      %v357 = vsel %vm347, %v342, 0.0
      %358 = vadd.xlane.f32.xlu0 %v357
      %v359 = vpop.xlane.xlu0 %358
      %v360 = vsel %vm347, %v343, 0.0
      %361 = vadd.xlane.f32.xlu0 %v360
      %v362 = vpop.xlane.xlu0 %361
      %v363 = vsel %vm347, %v344, 0.0
      %364 = vadd.xlane.f32.xlu0 %v363
      %v365 = vpop.xlane.xlu0 %364
      %v366 = vsel %vm347, %v345, 0.0
      %367 = vadd.xlane.f32.xlu0 %v366
      %v368 = vpop.xlane.xlu0 %367
      %v369 = vsel %vm347, %v346, 0.0
      %370 = vadd.xlane.f32.xlu0 %v369
      %v371 = vpop.xlane.xlu0 %370
      %v372 = vrcp.pop 32.0
      %v373 = vmul.f32 %v350, %v372
      %v374 = vmul.f32 %v353, %v372
      %v375 = vmul.f32 %v356, %v372
      %v376 = vmul.f32 %v359, %v372
      %v377 = vmul.f32 %v362, %v372
      %v378 = vmul.f32 %v365, %v372
      %v379 = vmul.f32 %v368, %v372
      %v380 = vmul.f32 %v371, %v372
      %v381 = vsub.f32 %v339, %v373
      %v382 = vsub.f32 %v340, %v374
      %v383 = vsub.f32 %v341, %v375
      %v384 = vsub.f32 %v342, %v376
      %v385 = vsub.f32 %v343, %v377
      %v386 = vsub.f32 %v344, %v378
      %v387 = vsub.f32 %v345, %v379
      %v388 = vsub.f32 %v346, %v380
      %v389 = vmul.f32 %v381, %v381
      %v390 = vmul.f32 %v382, %v382
      %v391 = vmul.f32 %v383, %v383
      %v392 = vmul.f32 %v384, %v384
      %v393 = vmul.f32 %v385, %v385
      %v394 = vmul.f32 %v386, %v386
      %v395 = vmul.f32 %v387, %v387
      %v396 = vmul.f32 %v388, %v388
      %v397 = vsel %vm347, %v389, 0.0
      %398 = vadd.xlane.f32.xlu0 %v397
      %v399 = vpop.xlane.xlu0 %398
      %v400 = vsel %vm347, %v390, 0.0
      %401 = vadd.xlane.f32.xlu0 %v400
      %v402 = vpop.xlane.xlu0 %401
      %v403 = vsel %vm347, %v391, 0.0
      %404 = vadd.xlane.f32.xlu0 %v403
      %v405 = vpop.xlane.xlu0 %404
      %v406 = vsel %vm347, %v392, 0.0
      %407 = vadd.xlane.f32.xlu0 %v406
      %v408 = vpop.xlane.xlu0 %407
      %v409 = vsel %vm347, %v393, 0.0
      %410 = vadd.xlane.f32.xlu0 %v409
      %v411 = vpop.xlane.xlu0 %410
      %v412 = vsel %vm347, %v394, 0.0
      %413 = vadd.xlane.f32.xlu0 %v412
      %v414 = vpop.xlane.xlu0 %413
      %v415 = vsel %vm347, %v395, 0.0
      %416 = vadd.xlane.f32.xlu0 %v415
      %v417 = vpop.xlane.xlu0 %416
      %v418 = vsel %vm347, %v396, 0.0
      %419 = vadd.xlane.f32.xlu0 %v418
      %v420 = vpop.xlane.xlu0 %419
      %v421 = vmul.f32 %v399, %v372
      %v422 = vmul.f32 %v402, %v372
      %v423 = vmul.f32 %v405, %v372
      %v424 = vmul.f32 %v408, %v372
      %v425 = vmul.f32 %v411, %v372
      %v426 = vmul.f32 %v414, %v372
      %v427 = vmul.f32 %v417, %v372
      %v428 = vmul.f32 %v420, %v372
      %v429 = vadd.f32 %v421, 1e-06
      %v430 = vadd.f32 %v422, 1e-06
      %v431 = vadd.f32 %v423, 1e-06
      %v432 = vadd.f32 %v424, 1e-06
      %v433 = vadd.f32 %v425, 1e-06
      %v434 = vadd.f32 %v426, 1e-06
      %v435 = vadd.f32 %v427, 1e-06
      %v436 = vadd.f32 %v428, 1e-06
      %v437 = vrsqrt.pop %v429
      %v438 = vrsqrt.pop %v430
      %v439 = vrsqrt.pop %v431
      %v440 = vrsqrt.pop %v432
      %v441 = vrsqrt.pop %v433
      %v442 = vrsqrt.pop %v434
      %v443 = vrsqrt.pop %v435
      %v444 = vrsqrt.pop %v436
      %v445 = vmul.f32 %v381, %v437
      %v446 = vmul.f32 %v382, %v438
      %v447 = vmul.f32 %v383, %v439
      %v448 = vmul.f32 %v384, %v440
      %v449 = vmul.f32 %v385, %v441
      %v450 = vmul.f32 %v386, %v442
      %v451 = vmul.f32 %v387, %v443
      %v452 = vmul.f32 %v388, %v444
      %v453 = vld [vmem:[%s317] sm:$0x1]
      %v454 = vadd.f32 %v453, 1.0
      %v456 = vlaneseq
      %v457 = vshrl.u32 %v456, 7
      %v458 = vsub.s32 0, %v457
      %v459 = vrot.slane %v454, %v458
      %v461 = vmul.f32 %v445, %v459
      %v462 = vmul.f32 %v446, %v459
      %v463 = vmul.f32 %v447, %v459
      %v464 = vmul.f32 %v448, %v459
      %v465 = vmul.f32 %v449, %v459
      %v466 = vmul.f32 %v450, %v459
      %v467 = vmul.f32 %v451, %v459
      %v468 = vmul.f32 %v452, %v459
      %v469 = vld [vmem:[%s314] sm:$0x1]
      %v471 = vlaneseq
      %v472 = vshrl.u32 %v471, 7
      %v473 = vsub.s32 0, %v472
      %v474 = vrot.slane %v469, %v473
      %v476 = vadd.f32 %v461, %v474
      %v477 = vadd.f32 %v462, %v474
      %v478 = vadd.f32 %v463, %v474
      %v479 = vadd.f32 %v464, %v474
      %v480 = vadd.f32 %v465, %v474
      %v481 = vadd.f32 %v466, %v474
      %v482 = vadd.f32 %v467, %v474
      %v483 = vadd.f32 %v468, %v474
      %v484 = vpack.c.bf16 %v477, %v476
      %v485 = vpack.c.bf16 %v479, %v478
      %v486 = vpack.c.bf16 %v481, %v480
      %v487 = vpack.c.bf16 %v483, %v482
      %v488 = vld [vmem:[%s321] sm:$0xf]
      %v489 = vld [vmem:[%s321 + $0x4] sm:$0xf]
      %v490 = vld [vmem:[%s321 + $0x8] sm:$0xf]
      %v491 = vld [vmem:[%s321 + $0xc] sm:$0xf]
      %v492 = vld [vmem:[%s324] sm:$0x1]
      %v494 = vlaneseq
      %v495 = vshrl.u32 %v494, 7
      %v496 = vsub.s32 0, %v495
      %v497 = vrot.slane %v492, %v496
      %v503 = vunpack.c.l.b16 %v488
      %v504 = vunpack.c.l.b16 %v489
      %v505 = vunpack.c.l.b16 %v490
      %v506 = vunpack.c.l.b16 %v491
      %v507 = vpack.c.b16 %v504, %v503
      %v508 = vpack.c.b16 %v506, %v505
      %v512 = vsel %vm347, %v484, 0
      %v515 = vsel %vm347, %v485, 0
      %v518 = vsel %vm347, %v486, 0
      %v521 = vsel %vm347, %v487, 0
      %523 = vmatprep.subr.bf16.mxu0 0
      %524 = vmatpush1.bf16.msra.mxu0 0
      %525 = vmatprep.subr.bf16.mxu0 0
      %526 = vmatpush1.bf16.msra.mxu0 0
      %527 = vmatprep.subr.bf16.mxu0 0
      %528 = vmatpush1.bf16.msra.mxu0 0
      %529 = vmatprep.subr.bf16.mxu0 0
      %530 = vmatpush1.bf16.msra.mxu0 0
      %531 = vmatprep.subr.bf16.mxu0 0
      %532 = vmatpush1.bf16.msra.mxu0 0
      %533 = vmatprep.subr.bf16.mxu0 0
      %534 = vmatpush1.bf16.msra.mxu0 0
      %535 = vmatprep.subr.bf16.mxu0 0
      %536 = vmatpush1.bf16.msra.mxu0 %v508
      %537 = vmatprep.subr.bf16.mxu0 0
      %538 = vmatpush1.bf16.msra.mxu0 %v507
      %539 = vmatprep.subr.bf16.mxu0 0
      %540 = vmatpush2.bf16.msra.mxu0 0
      %541 = vmatprep.subr.bf16.mxu0 0
      %542 = vmatpush2.bf16.msra.mxu0 0
      %543 = vmatprep.subr.bf16.mxu0 0
      %544 = vmatpush2.bf16.msra.mxu0 0
      %545 = vmatprep.subr.bf16.mxu0 0
      %546 = vmatpush2.bf16.msra.mxu0 0
      %547 = vmatprep.subr.bf16.mxu0 0
      %548 = vmatpush2.bf16.msra.mxu0 0
      %549 = vmatprep.subr.bf16.mxu0 0
      %550 = vmatpush2.bf16.msra.mxu0 0
      %551 = vmatprep.subr.bf16.mxu0 0
      %552 = vmatpush2.bf16.msra.mxu0 0
      %553 = vmatprep.subr.bf16.mxu0 0
      %554 = vmatpush2.bf16.msra.mxu0 0
      %555 = vmatprep.mubr.bf16.mxu0 0
      %556 = vmatmul.mubr.bf16.gmra.mxu0 %v512
      %v557 = vpop.f32.mrf.mxu0
      %v558 = vadd.f32 %v497, %v557
      %v559 = vpop.f32.mrf.mxu0
      %v560 = vpop.f32.mrf.mxu0
      %v561 = vadd.f32 %v497, %v560
      %v562 = vpop.f32.mrf.mxu0
      %563 = vmatprep.mubr.bf16.mxu0 0
      %564 = vmatmul.mubr.bf16.gmra.mxu0 %v515
      %v565 = vpop.f32.mrf.mxu0
      %v566 = vadd.f32 %v497, %v565
      %v567 = vpop.f32.mrf.mxu0
      %v568 = vpop.f32.mrf.mxu0
      %v569 = vadd.f32 %v497, %v568
      %v570 = vpop.f32.mrf.mxu0
      %571 = vmatprep.mubr.bf16.mxu0 0
      %572 = vmatmul.mubr.bf16.gmra.mxu0 %v518
      %v573 = vpop.f32.mrf.mxu0
      %v574 = vadd.f32 %v497, %v573
      %v575 = vpop.f32.mrf.mxu0
      %v576 = vpop.f32.mrf.mxu0
      %v577 = vadd.f32 %v497, %v576
      %v578 = vpop.f32.mrf.mxu0
      %579 = vmatprep.mubr.bf16.mxu0 0
      %580 = vmatmul.mubr.bf16.gmra.mxu0 %v521
      %v581 = vpop.f32.mrf.mxu0
      %v582 = vadd.f32 %v497, %v581
      %v583 = vpop.f32.mrf.mxu0
      %v584 = vpop.f32.mrf.mxu0
      %v585 = vadd.f32 %v497, %v584
      %v586 = vpop.f32.mrf.mxu0
      %587 = vdwg.mxu0
      %v588 = vmul.f32 %v558, 0.5
      %v589 = vmul.f32 %v561, 0.5
      %v590 = vmul.f32 %v566, 0.5
      %v591 = vmul.f32 %v569, 0.5
      %v592 = vmul.f32 %v574, 0.5
      %v593 = vmul.f32 %v577, 0.5
      %v594 = vmul.f32 %v582, 0.5
      %v595 = vmul.f32 %v585, 0.5
      %v596 = vmul.f32 %v558, 0.044715
      %v597 = vmul.f32 %v561, 0.044715
      %v598 = vmul.f32 %v566, 0.044715
      %v599 = vmul.f32 %v569, 0.044715
      %v600 = vmul.f32 %v574, 0.044715
      %v601 = vmul.f32 %v577, 0.044715
      %v602 = vmul.f32 %v582, 0.044715
      %v603 = vmul.f32 %v585, 0.044715
      %v604 = vmul.f32 %v596, %v558
      %v605 = vmul.f32 %v597, %v561
      %v606 = vmul.f32 %v598, %v566
      %v607 = vmul.f32 %v599, %v569
      %v608 = vmul.f32 %v600, %v574
      %v609 = vmul.f32 %v601, %v577
      %v610 = vmul.f32 %v602, %v582
      %v611 = vmul.f32 %v603, %v585
      %v612 = vmul.f32 %v604, %v558
      %v613 = vmul.f32 %v605, %v561
      %v614 = vmul.f32 %v606, %v566
      %v615 = vmul.f32 %v607, %v569
      %v616 = vmul.f32 %v608, %v574
      %v617 = vmul.f32 %v609, %v577
      %v618 = vmul.f32 %v610, %v582
      %v619 = vmul.f32 %v611, %v585
      %v620 = vadd.f32 %v558, %v612
      %v621 = vadd.f32 %v561, %v613
      %v622 = vadd.f32 %v566, %v614
      %v623 = vadd.f32 %v569, %v615
      %v624 = vadd.f32 %v574, %v616
      %v625 = vadd.f32 %v577, %v617
      %v626 = vadd.f32 %v582, %v618
      %v627 = vadd.f32 %v585, %v619
      %v628 = vmul.f32 %v620, 0.7978846
      %v629 = vmul.f32 %v621, 0.7978846
      %v630 = vmul.f32 %v622, 0.7978846
      %v631 = vmul.f32 %v623, 0.7978846
      %v632 = vmul.f32 %v624, 0.7978846
      %v633 = vmul.f32 %v625, 0.7978846
      %v634 = vmul.f32 %v626, 0.7978846
      %v635 = vmul.f32 %v627, 0.7978846
      %v636 = vtanh.pop %v628
      %v637 = vtanh.pop %v629
      %v638 = vtanh.pop %v630
      %v639 = vtanh.pop %v631
      %v640 = vtanh.pop %v632
      %v641 = vtanh.pop %v633
      %v642 = vtanh.pop %v634
      %v643 = vtanh.pop %v635
      %v644 = vadd.f32 %v636, 1.0
      %v645 = vadd.f32 %v637, 1.0
      %v646 = vadd.f32 %v638, 1.0
      %v647 = vadd.f32 %v639, 1.0
      %v648 = vadd.f32 %v640, 1.0
      %v649 = vadd.f32 %v641, 1.0
      %v650 = vadd.f32 %v642, 1.0
      %v651 = vadd.f32 %v643, 1.0
      %v652 = vmul.f32 %v588, %v644
      %v653 = vmul.f32 %v589, %v645
      %v654 = vmul.f32 %v590, %v646
      %v655 = vmul.f32 %v591, %v647
      %v656 = vmul.f32 %v592, %v648
      %v657 = vmul.f32 %v593, %v649
      %v658 = vmul.f32 %v594, %v650
      %v659 = vmul.f32 %v595, %v651
      %660 = vst [vmem:[%s336] sm:$0xff] %v652
      %661 = vst [vmem:[%s336 + $0x8] sm:$0xff] %v653
      %662 = vst [vmem:[%s336 + $0x10] sm:$0xff] %v654
      %663 = vst [vmem:[%s336 + $0x18] sm:$0xff] %v655
      %664 = vst [vmem:[%s336 + $0x20] sm:$0xff] %v656
      %665 = vst [vmem:[%s336 + $0x28] sm:$0xff] %v657
      %666 = vst [vmem:[%s336 + $0x30] sm:$0xff] %v658
      %667 = vst [vmem:[%s336 + $0x38] sm:$0xff] %v659
      %s668 = smul.u32 8, %s22
      %p669 = scmp.lt.s32.totalorder %s21, 1
      %s670 = scalar_select %p669, %s21, 1
      %p671 = scmp.lt.s32.totalorder %s668, 7
      %s672 = scalar_select %p671, %s668, 7
      %p673 = scmp.lt.s32.totalorder %s23, 0
      %s674 = scalar_select %p673, %s23, 0
      %s675 = sadd.s32 %s674, %s672
      %s676 = smul.addr %s670, 8
      %s677 = sadd.s32 %s675, %s676
      %s678 = smul.addr %s677, 8
      %s679 = scalar_lea.vmem %s5, %s678
      // Predicated region
      $region41: #{dit_forward.27} parent=39 // pred_check
        %p680 = pneg %p189
      $region42: #{dit_forward.27} parent=39 // pred_check_branch
        %682 = sbr.rel (%p680) target = $region44
      $region43: #{dit_forward.27} parent=39 // pred_region
        %s683 = smul.u32 8, %s22
      $region44: #{dit_forward.27} parent=39 // pred_fallthru
        _
    $region40: #{dit_forward.27} parent=5 // pred_fallthru
      _
    %p684 = scmp.le.s32.totalorder 2, %s11
    // Predicated region
    $region45: #{dit_forward.27} parent=5 // pred_check
      %p685 = pneg %p684
    $region46: #{dit_forward.27} parent=5 // pred_check_branch
      %687 = sbr.rel (%p685) target = $region48
    $region47: #{dit_forward.27} parent=5 // pred_region
      %s688 = ssub.s32 %s11, 2
      // Predicated region
      $region49: #{dit_forward.27} parent=47 // pred_check
        %p689 = pneg %p195
      $region50: #{dit_forward.27} parent=47 // pred_check_branch
        %691 = sbr.rel (%p689) target = $region52
      $region51: #{dit_forward.27} parent=47 // pred_region
        %s692 = smul.u32 8, %s25
        %p693 = scmp.lt.s32.totalorder %s24, 1
        %s694 = scalar_select %p693, %s24, 1
        %p695 = scmp.lt.s32.totalorder %s692, 7
        %s696 = scalar_select %p695, %s692, 7
        %p697 = scmp.lt.s32.totalorder %s26, 0
        %s698 = scalar_select %p697, %s26, 0
        %s699 = sadd.s32 %s698, %s696
        %s700 = smul.addr %s694, 8
        %s701 = sadd.s32 %s699, %s700
        %s702 = smul.addr %s701, 8
        %s703 = scalar_lea.vmem %s5, %s702
      $region52: #{dit_forward.27} parent=47 // pred_fallthru
        _
    $region48: #{dit_forward.27} parent=5 // pred_fallthru
      _
  $region6: #{dit_forward.27} parent=0 // loop_footer
    %s15 = sadd.s32 1, %s11
  $region7: #{dit_forward.27} parent=0 // loop_footer_branch
    %10 = sbr.rel target = $region3
  $region8: #{dit_forward.27} parent=0 // loop_exit
    _

// kernel: dit_forward.25
$region0: #{dit_forward.25}
  #allocation0 [shape = 'u32[]', space=smem, size = 0x4, offset = 0x4, fixed_abs, tag = 'smem constant byte address 0x4 - core index']
  #allocation1 [shape = 'u32[144,128]{1,0:T(1,128)}', space=vmem, size = 0x12000, scoped, tag = 'internal scratch']
  %s0 = inlined_call_operand.vmem [shape: f32[8,64,8], index: 0, kind: input, shape index: {}]
  %s1 = inlined_call_operand.vmem [shape: f32[8,64,8], index: 1, kind: input, shape index: {}]
  %s2 = inlined_call_operand.vmem [shape: f32[8,64,8], index: 2, kind: input, shape index: {}]
  %s3 = inlined_call_operand.vmem [shape: f32[8,64,8], index: 3, kind: input, shape index: {}]
  %s4 = inlined_call_operand.vmem [shape: f32[8,64,8], index: 4, kind: input, shape index: {}]
  %s5 = inlined_call_operand.vmem [shape: f32[64,8], index: 5, kind: input, shape index: {}, may-alias: {5,7}]
  %s6 = inlined_call_operand.vmem [shape: f32[64,8], index: 6, kind: input, shape index: {}, may-alias: {6,8}]
  %s7 = inlined_call_operand.vmem [shape: f32[64,8], index: 7, kind: input, shape index: {}, may-alias: {5,7}]
  %s8 = inlined_call_operand.vmem [shape: f32[64,8], index: 8, kind: input, shape index: {}, may-alias: {6,8}]
  %s9 = inlined_call_operand.vmem [shape: f32[8,8], index: 9, kind: input, shape index: {}]
  %s10 = inlined_call_operand.vmem [shape: f32[8,64,8], index: 10, kind: output, shape index: {}]
  %s11 = sld [smem:[#allocation0]]
  $region73: #{dit_forward.25} parent=0
    _
  %s13 = ssub.s32 1, %s11
  %s14 = scalar_select 0, %s13, %s11
  loop: start=0, step=1, limit=10
  $region2: #{dit_forward.25} parent=0 // loop_pre_header
    _
  $region3: #{dit_forward.25} parent=0 // loop_header
    %s16 = sphi 0, %s20
    %p17 = scmp.ge.s32.totalorder %s16, 10
    %s23 = sphi 0, %s35
    %s24 = sphi 0, %s31
    %s25 = sphi 0, %s23
    %s26 = sphi 0, %s24
    %s27 = sphi 0, %s25
    %s28 = sphi 0, %s26
    %s40 = sphi 0, %s42
    %s43 = sphi 0, %s40
    %s44 = sphi 0, %s43
    %s60 = sphi 0, %s44
    %s66 = sphi 0, %s68
    %s69 = sphi 0, %s66
    %s70 = sphi 0, %s69
    %s86 = sphi 0, %s70
    %s92 = sphi 0, %s94
    %s95 = sphi 0, %s92
    %s96 = sphi 0, %s95
    %s112 = sphi 0, %s96
    %s118 = sphi 0, %s120
    %s121 = sphi 0, %s118
    %s122 = sphi 0, %s121
    %s138 = sphi 0, %s122
    %s144 = sphi 0, %s146
    %s147 = sphi 0, %s144
    %s148 = sphi 0, %s147
    %s164 = sphi 0, %s148
    %s170 = sphi 0, %s172
    %s173 = sphi 0, %s170
    %s174 = sphi 0, %s173
    %s190 = sphi 0, %s174
    %s196 = sphi 0, %s198
    %s199 = sphi 0, %s196
    %s200 = sphi 0, %s199
    %s216 = sphi 0, %s200
    %s220 = sphi 0, %s220
    %s222 = sphi 0, %s220
    %s223 = sphi 0, %s222
    %s237 = sphi 0, %s223
    %s241 = sphi 0, %s241
    %s243 = sphi 0, %s241
    %s244 = sphi 0, %s243
    %s258 = sphi 0, %s244
    %s262 = sphi 0, %s262
    %s264 = sphi 0, %s262
    %s265 = sphi 0, %s264
    %s279 = sphi 0, %s265
    %s287 = sphi 0, %s289
    %s290 = sphi 0, %s287
    %s291 = sphi 0, %s290
    %s307 = sphi 0, %s291
  $region4: #{dit_forward.25} parent=0 // loop_header_branch
    %19 = sbr.rel (%p17) target = $region8
  $region5: #{dit_forward.25} parent=0 // loop_body
    %s21 = ssub.s32 %s16, 1
    %s22 = ssub.s32 %s16, 2
    %s29 = sadd.s32 1, %s24
    %p30 = scmp.ge.s32.totalorder %s29, 1
    %s31 = scalar_select %p30, 0, %s29
    %s32 = sadd.s32 1, %s23
    %s33 = scalar_select %p30, %s32, %s23
    %p34 = scmp.ge.s32.totalorder %s33, 8
    %s35 = scalar_select %p34, 0, %s33
    %s36 = ssub.s32 %s23, %s35
    %s37 = ssub.s32 %s24, %s31
    %s38 = sor.u32 %s36, %s37
    %p39 = scmp.eq.s32.totalorder %s38, 0
    %s41 = sadd.s32 %s40, 1
    %s42 = scalar_select %p39, %s40, %s41
    %p45 = pneg %p39
    %p46 = scmp.eq.s32.totalorder %s16, 7
    %p47 = por %p45, %p46
    %p48 = scmp.ne.s32.totalorder %s40, %s43
    %p49 = scmp.eq.s32.totalorder %s16, 0
    %p50 = por %p48, %p49
    %p51 = scmp.ne.s32.totalorder %s40, %s43
    %p52 = scmp.eq.s32.totalorder %s21, 7
    %p53 = por %p51, %p52
    %p54 = scmp.ne.s32.totalorder %s43, %s44
    %p55 = scmp.eq.s32.totalorder %s21, 0
    %p56 = por %p54, %p55
    %p57 = scmp.ne.s32.totalorder %s43, %s44
    %p58 = scmp.eq.s32.totalorder %s22, 7
    %p59 = por %p57, %p58
    %p61 = scmp.ne.s32.totalorder %s44, %s60
    %p62 = scmp.eq.s32.totalorder %s22, 0
    %p63 = por %p61, %p62
    %s64 = ssub.s32 %s23, %s35
    %p65 = scmp.eq.s32.totalorder %s64, 0
    %s67 = sadd.s32 %s66, 1
    %s68 = scalar_select %p65, %s66, %s67
    %p71 = pneg %p65
    %p72 = scmp.eq.s32.totalorder %s16, 7
    %p73 = por %p71, %p72
    %p74 = scmp.ne.s32.totalorder %s66, %s69
    %p75 = scmp.eq.s32.totalorder %s16, 0
    %p76 = por %p74, %p75
    %p77 = scmp.ne.s32.totalorder %s66, %s69
    %p78 = scmp.eq.s32.totalorder %s21, 7
    %p79 = por %p77, %p78
    %p80 = scmp.ne.s32.totalorder %s69, %s70
    %p81 = scmp.eq.s32.totalorder %s21, 0
    %p82 = por %p80, %p81
    %p83 = scmp.ne.s32.totalorder %s69, %s70
    %p84 = scmp.eq.s32.totalorder %s22, 7
    %p85 = por %p83, %p84
    %p87 = scmp.ne.s32.totalorder %s70, %s86
    %p88 = scmp.eq.s32.totalorder %s22, 0
    %p89 = por %p87, %p88
    %s90 = ssub.s32 %s23, %s35
    %p91 = scmp.eq.s32.totalorder %s90, 0
    %s93 = sadd.s32 %s92, 1
    %s94 = scalar_select %p91, %s92, %s93
    %p97 = pneg %p91
    %p98 = scmp.eq.s32.totalorder %s16, 7
    %p99 = por %p97, %p98
    %p100 = scmp.ne.s32.totalorder %s92, %s95
    %p101 = scmp.eq.s32.totalorder %s16, 0
    %p102 = por %p100, %p101
    %p103 = scmp.ne.s32.totalorder %s92, %s95
    %p104 = scmp.eq.s32.totalorder %s21, 7
    %p105 = por %p103, %p104
    %p106 = scmp.ne.s32.totalorder %s95, %s96
    %p107 = scmp.eq.s32.totalorder %s21, 0
    %p108 = por %p106, %p107
    %p109 = scmp.ne.s32.totalorder %s95, %s96
    %p110 = scmp.eq.s32.totalorder %s22, 7
    %p111 = por %p109, %p110
    %p113 = scmp.ne.s32.totalorder %s96, %s112
    %p114 = scmp.eq.s32.totalorder %s22, 0
    %p115 = por %p113, %p114
    %s116 = ssub.s32 %s23, %s35
    %p117 = scmp.eq.s32.totalorder %s116, 0
    %s119 = sadd.s32 %s118, 1
    %s120 = scalar_select %p117, %s118, %s119
    %p123 = pneg %p117
    %p124 = scmp.eq.s32.totalorder %s16, 7
    %p125 = por %p123, %p124
    %p126 = scmp.ne.s32.totalorder %s118, %s121
    %p127 = scmp.eq.s32.totalorder %s16, 0
    %p128 = por %p126, %p127
    %p129 = scmp.ne.s32.totalorder %s118, %s121
    %p130 = scmp.eq.s32.totalorder %s21, 7
    %p131 = por %p129, %p130
    %p132 = scmp.ne.s32.totalorder %s121, %s122
    %p133 = scmp.eq.s32.totalorder %s21, 0
    %p134 = por %p132, %p133
    %p135 = scmp.ne.s32.totalorder %s121, %s122
    %p136 = scmp.eq.s32.totalorder %s22, 7
    %p137 = por %p135, %p136
    %p139 = scmp.ne.s32.totalorder %s122, %s138
    %p140 = scmp.eq.s32.totalorder %s22, 0
    %p141 = por %p139, %p140
    %s142 = ssub.s32 %s23, %s35
    %p143 = scmp.eq.s32.totalorder %s142, 0
    %s145 = sadd.s32 %s144, 1
    %s146 = scalar_select %p143, %s144, %s145
    %p149 = pneg %p143
    %p150 = scmp.eq.s32.totalorder %s16, 7
    %p151 = por %p149, %p150
    %p152 = scmp.ne.s32.totalorder %s144, %s147
    %p153 = scmp.eq.s32.totalorder %s16, 0
    %p154 = por %p152, %p153
    %p155 = scmp.ne.s32.totalorder %s144, %s147
    %p156 = scmp.eq.s32.totalorder %s21, 7
    %p157 = por %p155, %p156
    %p158 = scmp.ne.s32.totalorder %s147, %s148
    %p159 = scmp.eq.s32.totalorder %s21, 0
    %p160 = por %p158, %p159
    %p161 = scmp.ne.s32.totalorder %s147, %s148
    %p162 = scmp.eq.s32.totalorder %s22, 7
    %p163 = por %p161, %p162
    %p165 = scmp.ne.s32.totalorder %s148, %s164
    %p166 = scmp.eq.s32.totalorder %s22, 0
    %p167 = por %p165, %p166
    %s168 = ssub.s32 %s24, %s31
    %p169 = scmp.eq.s32.totalorder %s168, 0
    %s171 = sadd.s32 %s170, 1
    %s172 = scalar_select %p169, %s170, %s171
    %p175 = pneg %p169
    %p176 = scmp.eq.s32.totalorder %s16, 7
    %p177 = por %p175, %p176
    %p178 = scmp.ne.s32.totalorder %s170, %s173
    %p179 = scmp.eq.s32.totalorder %s16, 0
    %p180 = por %p178, %p179
    %p181 = scmp.ne.s32.totalorder %s170, %s173
    %p182 = scmp.eq.s32.totalorder %s21, 7
    %p183 = por %p181, %p182
    %p184 = scmp.ne.s32.totalorder %s173, %s174
    %p185 = scmp.eq.s32.totalorder %s21, 0
    %p186 = por %p184, %p185
    %p187 = scmp.ne.s32.totalorder %s173, %s174
    %p188 = scmp.eq.s32.totalorder %s22, 7
    %p189 = por %p187, %p188
    %p191 = scmp.ne.s32.totalorder %s174, %s190
    %p192 = scmp.eq.s32.totalorder %s22, 0
    %p193 = por %p191, %p192
    %s194 = ssub.s32 %s24, %s31
    %p195 = scmp.eq.s32.totalorder %s194, 0
    %s197 = sadd.s32 %s196, 1
    %s198 = scalar_select %p195, %s196, %s197
    %p201 = pneg %p195
    %p202 = scmp.eq.s32.totalorder %s16, 7
    %p203 = por %p201, %p202
    %p204 = scmp.ne.s32.totalorder %s196, %s199
    %p205 = scmp.eq.s32.totalorder %s16, 0
    %p206 = por %p204, %p205
    %p207 = scmp.ne.s32.totalorder %s196, %s199
    %p208 = scmp.eq.s32.totalorder %s21, 7
    %p209 = por %p207, %p208
    %p210 = scmp.ne.s32.totalorder %s199, %s200
    %p211 = scmp.eq.s32.totalorder %s21, 0
    %p212 = por %p210, %p211
    %p213 = scmp.ne.s32.totalorder %s199, %s200
    %p214 = scmp.eq.s32.totalorder %s22, 7
    %p215 = por %p213, %p214
    %p217 = scmp.ne.s32.totalorder %s200, %s216
    %p218 = scmp.eq.s32.totalorder %s22, 0
    %p219 = por %p217, %p218
    %s221 = sadd.s32 %s220, 1
    %p224 = scmp.eq.s32.totalorder %s16, 7
    %p225 = scmp.ne.s32.totalorder %s220, %s222
    %p226 = scmp.eq.s32.totalorder %s16, 0
    %p227 = por %p225, %p226
    %p228 = scmp.ne.s32.totalorder %s220, %s222
    %p229 = scmp.eq.s32.totalorder %s21, 7
    %p230 = por %p228, %p229
    %p231 = scmp.ne.s32.totalorder %s222, %s223
    %p232 = scmp.eq.s32.totalorder %s21, 0
    %p233 = por %p231, %p232
    %p234 = scmp.ne.s32.totalorder %s222, %s223
    %p235 = scmp.eq.s32.totalorder %s22, 7
    %p236 = por %p234, %p235
    %p238 = scmp.ne.s32.totalorder %s223, %s237
    %p239 = scmp.eq.s32.totalorder %s22, 0
    %p240 = por %p238, %p239
    %s242 = sadd.s32 %s241, 1
    %p245 = scmp.eq.s32.totalorder %s16, 7
    %p246 = scmp.ne.s32.totalorder %s241, %s243
    %p247 = scmp.eq.s32.totalorder %s16, 0
    %p248 = por %p246, %p247
    %p249 = scmp.ne.s32.totalorder %s241, %s243
    %p250 = scmp.eq.s32.totalorder %s21, 7
    %p251 = por %p249, %p250
    %p252 = scmp.ne.s32.totalorder %s243, %s244
    %p253 = scmp.eq.s32.totalorder %s21, 0
    %p254 = por %p252, %p253
    %p255 = scmp.ne.s32.totalorder %s243, %s244
    %p256 = scmp.eq.s32.totalorder %s22, 7
    %p257 = por %p255, %p256
    %p259 = scmp.ne.s32.totalorder %s244, %s258
    %p260 = scmp.eq.s32.totalorder %s22, 0
    %p261 = por %p259, %p260
    %s263 = sadd.s32 %s262, 1
    %p266 = scmp.eq.s32.totalorder %s16, 7
    %p267 = scmp.ne.s32.totalorder %s262, %s264
    %p268 = scmp.eq.s32.totalorder %s16, 0
    %p269 = por %p267, %p268
    %p270 = scmp.ne.s32.totalorder %s262, %s264
    %p271 = scmp.eq.s32.totalorder %s21, 7
    %p272 = por %p270, %p271
    %p273 = scmp.ne.s32.totalorder %s264, %s265
    %p274 = scmp.eq.s32.totalorder %s21, 0
    %p275 = por %p273, %p274
    %p276 = scmp.ne.s32.totalorder %s264, %s265
    %p277 = scmp.eq.s32.totalorder %s22, 7
    %p278 = por %p276, %p277
    %p280 = scmp.ne.s32.totalorder %s265, %s279
    %p281 = scmp.eq.s32.totalorder %s22, 0
    %p282 = por %p280, %p281
    %s283 = ssub.s32 %s23, %s35
    %s284 = ssub.s32 %s24, %s31
    %s285 = sor.u32 %s283, %s284
    %p286 = scmp.eq.s32.totalorder %s285, 0
    %s288 = sadd.s32 %s287, 1
    %s289 = scalar_select %p286, %s287, %s288
    %p292 = pneg %p286
    %p293 = scmp.eq.s32.totalorder %s16, 7
    %p294 = por %p292, %p293
    %p295 = scmp.ne.s32.totalorder %s287, %s290
    %p296 = scmp.eq.s32.totalorder %s16, 0
    %p297 = por %p295, %p296
    %p298 = scmp.ne.s32.totalorder %s287, %s290
    %p299 = scmp.eq.s32.totalorder %s21, 7
    %p300 = por %p298, %p299
    %p301 = scmp.ne.s32.totalorder %s290, %s291
    %p302 = scmp.eq.s32.totalorder %s21, 0
    %p303 = por %p301, %p302
    %p304 = scmp.ne.s32.totalorder %s290, %s291
    %p305 = scmp.eq.s32.totalorder %s22, 7
    %p306 = por %p304, %p305
    %p308 = scmp.ne.s32.totalorder %s291, %s307
    %p309 = scmp.eq.s32.totalorder %s22, 0
    %p310 = por %p308, %p309
    %p311 = scmp.le.s32.totalorder 1, %s16
    %p312 = scmp.lt.s32.totalorder %s16, 9
    %p313 = pnand %p311, %p312
    %p314 = pneg %p313
    // Predicated region
    $region9: #{dit_forward.25} parent=5 // pred_check
      _
    $region10: #{dit_forward.25} parent=5 // pred_check_branch
      %316 = sbr.rel (%p313) target = $region12
    $region11: #{dit_forward.25} parent=5 // pred_region
      %s317 = ssub.s32 %s16, 1
      // Predicated region
      $region13: #{dit_forward.25} parent=11 // pred_check
        %p318 = pneg %p186
      $region14: #{dit_forward.25} parent=11 // pred_check_branch
        %320 = sbr.rel (%p318) target = $region16
      $region15: #{dit_forward.25} parent=11 // pred_region
        %s321 = smul.u32 8, %s26
        %p322 = scmp.lt.s32.totalorder %s321, 7
        %s323 = scalar_select %p322, %s321, 7
        %s324 = smul.addr %s323, 8
        %s325 = scalar_lea.vmem %s5, %s324
        %s326 = smul.u32 8, %s26
      $region16: #{dit_forward.25} parent=11 // pred_fallthru
        _
      // Predicated region
      $region17: #{dit_forward.25} parent=11 // pred_check
        %p327 = pneg %p212
      $region18: #{dit_forward.25} parent=11 // pred_check_branch
        %329 = sbr.rel (%p327) target = $region20
      $region19: #{dit_forward.25} parent=11 // pred_region
        %s330 = smul.u32 8, %s26
        %p331 = scmp.lt.s32.totalorder %s330, 7
        %s332 = scalar_select %p331, %s330, 7
        %s333 = smul.addr %s332, 8
        %s334 = scalar_lea.vmem %s6, %s333
        %s335 = smul.u32 8, %s26
      $region20: #{dit_forward.25} parent=11 // pred_fallthru
        _
      // Predicated region
      $region21: #{dit_forward.25} parent=11 // pred_check
        %p336 = pneg %p233
      $region22: #{dit_forward.25} parent=11 // pred_check_branch
        %338 = sbr.rel (%p336) target = $region24
      $region23: #{dit_forward.25} parent=11 // pred_region
        _
      $region24: #{dit_forward.25} parent=11 // pred_fallthru
        _
      // Predicated region
      $region25: #{dit_forward.25} parent=11 // pred_check
        %p339 = pneg %p254
      $region26: #{dit_forward.25} parent=11 // pred_check_branch
        %341 = sbr.rel (%p339) target = $region28
      $region27: #{dit_forward.25} parent=11 // pred_region
        _
      $region28: #{dit_forward.25} parent=11 // pred_fallthru
        _
      // Predicated region
      $region29: #{dit_forward.25} parent=11 // pred_check
        %p342 = pneg %p275
      $region30: #{dit_forward.25} parent=11 // pred_check_branch
        %344 = sbr.rel (%p342) target = $region32
      $region31: #{dit_forward.25} parent=11 // pred_region
        _
      $region32: #{dit_forward.25} parent=11 // pred_fallthru
        _
    $region12: #{dit_forward.25} parent=5 // pred_fallthru
      _
    %p345 = scmp.lt.s32.totalorder %s16, 8
    // Predicated region
    $region33: #{dit_forward.25} parent=5 // pred_check
      %p346 = pneg %p345
    $region34: #{dit_forward.25} parent=5 // pred_check_branch
      %348 = sbr.rel (%p346) target = $region36
    $region35: #{dit_forward.25} parent=5 // pred_region
      // Predicated region
      $region37: #{dit_forward.25} parent=35 // pred_check
        %p349 = pneg %p50
      $region38: #{dit_forward.25} parent=35 // pred_check_branch
        %351 = sbr.rel (%p349) target = $region40
      $region39: #{dit_forward.25} parent=35 // pred_region
        %s352 = smul.u32 8, %s24
        %p353 = scmp.lt.s32.totalorder %s23, 7
        %s354 = scalar_select %p353, %s23, 7
        %p355 = scmp.lt.s32.totalorder %s352, 7
        %s356 = scalar_select %p355, %s352, 7
        %s357 = smul.addr %s354, 8
        %s358 = sadd.s32 %s356, %s357
        %s359 = smul.addr %s358, 8
        %s360 = scalar_lea.vmem %s0, %s359
        %s361 = smul.u32 8, %s24
      $region40: #{dit_forward.25} parent=35 // pred_fallthru
        _
      // Predicated region
      $region41: #{dit_forward.25} parent=35 // pred_check
        %p362 = pneg %p76
      $region42: #{dit_forward.25} parent=35 // pred_check_branch
        %364 = sbr.rel (%p362) target = $region44
      $region43: #{dit_forward.25} parent=35 // pred_region
        %p365 = scmp.lt.s32.totalorder %s23, 7
        %s366 = scalar_select %p365, %s23, 7
        %s367 = smul.addr %s366, 8
        %s368 = smul.addr %s367, 8
        %s369 = scalar_lea.vmem %s1, %s368
      $region44: #{dit_forward.25} parent=35 // pred_fallthru
        _
      // Predicated region
      $region45: #{dit_forward.25} parent=35 // pred_check
        %p370 = pneg %p102
      $region46: #{dit_forward.25} parent=35 // pred_check_branch
        %372 = sbr.rel (%p370) target = $region48
      $region47: #{dit_forward.25} parent=35 // pred_region
        %p373 = scmp.lt.s32.totalorder %s23, 7
        %s374 = scalar_select %p373, %s23, 7
        %s375 = smul.addr %s374, 8
        %s376 = smul.addr %s375, 8
        %s377 = scalar_lea.vmem %s2, %s376
      $region48: #{dit_forward.25} parent=35 // pred_fallthru
        _
      // Predicated region
      $region49: #{dit_forward.25} parent=35 // pred_check
        %p378 = pneg %p128
      $region50: #{dit_forward.25} parent=35 // pred_check_branch
        %380 = sbr.rel (%p378) target = $region52
      $region51: #{dit_forward.25} parent=35 // pred_region
        %p381 = scmp.lt.s32.totalorder %s23, 7
        %s382 = scalar_select %p381, %s23, 7
        %s383 = smul.addr %s382, 8
        %s384 = smul.addr %s383, 8
        %s385 = scalar_lea.vmem %s3, %s384
      $region52: #{dit_forward.25} parent=35 // pred_fallthru
        _
      // Predicated region
      $region53: #{dit_forward.25} parent=35 // pred_check
        %p386 = pneg %p154
      $region54: #{dit_forward.25} parent=35 // pred_check_branch
        %388 = sbr.rel (%p386) target = $region56
      $region55: #{dit_forward.25} parent=35 // pred_region
        %p389 = scmp.lt.s32.totalorder %s23, 7
        %s390 = scalar_select %p389, %s23, 7
        %s391 = smul.addr %s390, 8
        %s392 = smul.addr %s391, 8
        %s393 = scalar_lea.vmem %s4, %s392
      $region56: #{dit_forward.25} parent=35 // pred_fallthru
        _
    $region36: #{dit_forward.25} parent=5 // pred_fallthru
      _
    %p394 = scmp.le.s32.totalorder 1, %s16
    %p395 = scmp.lt.s32.totalorder %s16, 9
    %p396 = pnand %p394, %p395
    %p397 = pneg %p396
    // Predicated region
    $region57: #{dit_forward.25} parent=5 // pred_check
      _
    $region58: #{dit_forward.25} parent=5 // pred_check_branch
      %399 = sbr.rel (%p396) target = $region60
    $region59: #{dit_forward.25} parent=5 // pred_region
      %s400 = ssub.s32 %s16, 1
      %s401 = smul.u32 8, %s26
      %p402 = scmp.lt.s32.totalorder %s25, 7
      %s403 = scalar_select %p402, %s25, 7
      %p404 = scmp.lt.s32.totalorder %s401, 7
      %s405 = scalar_select %p404, %s401, 7
      %s406 = smul.addr %s403, 8
      %s407 = sadd.s32 %s405, %s406
      %s408 = smul.addr %s407, 8
      %s409 = scalar_lea.vmem %s0, %s408
      %p410 = pneg %p56
      %p411 = pneg %p53
      %p412 = scmp.lt.s32.totalorder %s25, 7
      %s413 = scalar_select %p412, %s25, 7
      %s414 = smul.addr %s413, 8
      %s415 = smul.addr %s414, 8
      %s416 = scalar_lea.vmem %s1, %s415
      %p417 = pneg %p82
      %p418 = pneg %p79
      %p419 = scmp.lt.s32.totalorder %s25, 7
      %s420 = scalar_select %p419, %s25, 7
      %s421 = smul.addr %s420, 8
      %s422 = smul.addr %s421, 8
      %s423 = scalar_lea.vmem %s2, %s422
      %p424 = pneg %p108
      %p425 = pneg %p105
      %p426 = scmp.lt.s32.totalorder %s25, 7
      %s427 = scalar_select %p426, %s25, 7
      %s428 = smul.addr %s427, 8
      %s429 = smul.addr %s428, 8
      %s430 = scalar_lea.vmem %s3, %s429
      %p431 = pneg %p134
      %p432 = pneg %p131
      %p433 = scmp.lt.s32.totalorder %s25, 7
      %s434 = scalar_select %p433, %s25, 7
      %s435 = smul.addr %s434, 8
      %s436 = smul.addr %s435, 8
      %s437 = scalar_lea.vmem %s4, %s436
      %p438 = pneg %p160
      %p439 = pneg %p157
      %s440 = smul.u32 8, %s26
      %p441 = scmp.lt.s32.totalorder %s440, 7
      %s442 = scalar_select %p441, %s440, 7
      %s443 = smul.addr %s442, 8
      %s444 = scalar_lea.vmem %s5, %s443
      %p445 = pneg %p186
      %p446 = pneg %p183
      %s447 = smul.u32 8, %s26
      %p448 = scmp.lt.s32.totalorder %s447, 7
      %s449 = scalar_select %p448, %s447, 7
      %s450 = smul.addr %s449, 8
      %s451 = scalar_lea.vmem %s6, %s450
      %p452 = pneg %p212
      %p453 = pneg %p209
      %p454 = pneg %p233
      %p455 = pneg %p230
      %p456 = pneg %p254
      %p457 = pneg %p251
      %p458 = pneg %p275
      %p459 = pneg %p272
      %p460 = pneg %p303
      %p461 = pneg %p300
      %s462 = smul.u32 8, %s26
      %p463 = scmp.lt.s32.totalorder %s25, 7
      %s464 = scalar_select %p463, %s25, 7
      %p465 = scmp.lt.s32.totalorder %s462, 7
      %s466 = scalar_select %p465, %s462, 7
      %s467 = smul.addr %s464, 8
      %s468 = sadd.s32 %s466, %s467
      %s469 = smul.addr %s468, 8
      %s470 = scalar_lea.vmem %s10, %s469
      %s471 = smul.u32 8, %s26
      %p472 = scmp.lt.s32.totalorder %s25, 7
      %s473 = scalar_select %p472, %s25, 7
      %p474 = scmp.lt.s32.totalorder %s471, 7
      %s475 = scalar_select %p474, %s471, 7
      %s476 = smul.addr %s473, 8
      %s477 = sadd.s32 %s475, %s476
      %s478 = smul.addr %s477, 8
      %s479 = scalar_lea.vmem %s0, %s478
      %s480 = smul.u32 8, %s26
      %p481 = scmp.lt.s32.totalorder %s25, 7
      %s482 = scalar_select %p481, %s25, 7
      %s483 = smul.addr %s482, 8
      %s484 = smul.addr %s483, 8
      %s485 = scalar_lea.vmem %s1, %s484
      %p486 = scmp.lt.s32.totalorder %s25, 7
      %s487 = scalar_select %p486, %s25, 7
      %s488 = smul.addr %s487, 8
      %s489 = smul.addr %s488, 8
      %s490 = scalar_lea.vmem %s2, %s489
      %p491 = scmp.lt.s32.totalorder %s25, 7
      %s492 = scalar_select %p491, %s25, 7
      %s493 = smul.addr %s492, 8
      %s494 = smul.addr %s493, 8
      %s495 = scalar_lea.vmem %s3, %s494
      %p496 = scmp.lt.s32.totalorder %s25, 7
      %s497 = scalar_select %p496, %s25, 7
      %s498 = smul.addr %s497, 8
      %s499 = smul.addr %s498, 8
      %s500 = scalar_lea.vmem %s4, %s499
      %s501 = smul.u32 8, %s26
      %p502 = scmp.lt.s32.totalorder %s501, 7
      %s503 = scalar_select %p502, %s501, 7
      %s504 = smul.addr %s503, 8
      %s505 = scalar_lea.vmem %s5, %s504
      %s506 = smul.u32 8, %s26
      %s507 = smul.u32 8, %s26
      %p508 = scmp.lt.s32.totalorder %s507, 7
      %s509 = scalar_select %p508, %s507, 7
      %s510 = smul.addr %s509, 8
      %s511 = scalar_lea.vmem %s6, %s510
      %s512 = smul.u32 8, %s26
      %s513 = smul.u32 8, %s26
      %p514 = scmp.lt.s32.totalorder %s25, 7
      %s515 = scalar_select %p514, %s25, 7
      %p516 = scmp.lt.s32.totalorder %s513, 7
      %s517 = scalar_select %p516, %s513, 7
      %s518 = smul.addr %s515, 8
      %s519 = sadd.s32 %s517, %s518
      %s520 = smul.addr %s519, 8
      %s521 = scalar_lea.vmem %s10, %s520
      %s522 = smul.u32 8, %s26
      %v524 = vld [vmem:[%s9] sm:$0xff]
      %v525 = vld [vmem:[%s479] sm:$0xff]
      %v526 = vld [vmem:[%s479 + $0x8] sm:$0xff]
      %v527 = vld [vmem:[%s479 + $0x10] sm:$0xff]
      %v528 = vld [vmem:[%s479 + $0x18] sm:$0xff]
      %v529 = vld [vmem:[%s479 + $0x20] sm:$0xff]
      %v530 = vld [vmem:[%s479 + $0x28] sm:$0xff]
      %v531 = vld [vmem:[%s479 + $0x30] sm:$0xff]
      %v532 = vld [vmem:[%s479 + $0x38] sm:$0xff]
      %v533 = vmul.f32 %v525, 0.35355338
      %v534 = vmul.f32 %v526, 0.35355338
      %v535 = vmul.f32 %v527, 0.35355338
      %v536 = vmul.f32 %v528, 0.35355338
      %v537 = vmul.f32 %v529, 0.35355338
      %v538 = vmul.f32 %v530, 0.35355338
      %v539 = vmul.f32 %v531, 0.35355338
      %v540 = vmul.f32 %v532, 0.35355338
      %v541 = vld [vmem:[%s505] sm:$0xff]
      %v542 = vld [vmem:[%s505 + $0x8] sm:$0xff]
      %v543 = vld [vmem:[%s505 + $0x10] sm:$0xff]
      %v544 = vld [vmem:[%s505 + $0x18] sm:$0xff]
      %v545 = vld [vmem:[%s505 + $0x20] sm:$0xff]
      %v546 = vld [vmem:[%s505 + $0x28] sm:$0xff]
      %v547 = vld [vmem:[%s505 + $0x30] sm:$0xff]
      %v548 = vld [vmem:[%s505 + $0x38] sm:$0xff]
      %v549 = vld [vmem:[%s511] sm:$0xff]
      %v550 = vld [vmem:[%s511 + $0x8] sm:$0xff]
      %v551 = vld [vmem:[%s511 + $0x10] sm:$0xff]
      %v552 = vld [vmem:[%s511 + $0x18] sm:$0xff]
      %v553 = vld [vmem:[%s511 + $0x20] sm:$0xff]
      %v554 = vld [vmem:[%s511 + $0x28] sm:$0xff]
      %v555 = vld [vmem:[%s511 + $0x30] sm:$0xff]
      %v556 = vld [vmem:[%s511 + $0x38] sm:$0xff]
      %vm557 = vcmask 64512
      %v559 = vsel %vm557, %v533, 0
      %v562 = vsel %vm557, %v534, 0
      %v565 = vsel %vm557, %v535, 0
      %v568 = vsel %vm557, %v536, 0
      %v571 = vsel %vm557, %v537, 0
      %v574 = vsel %vm557, %v538, 0
      %v577 = vsel %vm557, %v539, 0
      %v580 = vsel %vm557, %v540, 0
      %582 = vmatprep.subr.mxu0 0.0
      %583 = vmatpush1.msra.mxu0 0.0
      %584 = vmatprep.subr.mxu0 0.0
      %585 = vmatpush1.msra.mxu0 0.0
      %586 = vmatprep.subr.mxu0 0.0
      %587 = vmatpush1.msra.mxu0 0.0
      %588 = vmatprep.subr.mxu0 0.0
      %589 = vmatpush1.msra.mxu0 0.0
      %590 = vmatprep.subr.mxu0 0.0
      %591 = vmatpush1.msra.mxu0 0.0
      %592 = vmatprep.subr.mxu0 0.0
      %593 = vmatpush1.msra.mxu0 0.0
      %594 = vmatprep.subr.mxu0 0.0
      %595 = vmatpush1.msra.mxu0 0.0
      %596 = vmatprep.subr.mxu0 0.0
      %597 = vmatpush1.msra.mxu0 0.0
      %598 = vmatprep.subr.mxu0 0.0
      %599 = vmatpush1.msra.mxu0 0.0
      %600 = vmatprep.subr.mxu0 0.0
      %601 = vmatpush1.msra.mxu0 0.0
      %602 = vmatprep.subr.mxu0 0.0
      %603 = vmatpush1.msra.mxu0 0.0
      %604 = vmatprep.subr.mxu0 0.0
      %605 = vmatpush1.msra.mxu0 0.0
      %606 = vmatprep.subr.mxu0 0.0
      %607 = vmatpush1.msra.mxu0 0.0
      %608 = vmatprep.subr.mxu0 0.0
      %609 = vmatpush1.msra.mxu0 0.0
      %610 = vmatprep.subr.mxu0 0.0
      %611 = vmatpush1.msra.mxu0 0.0
      %612 = vmatprep.subr.mxu0 0.0
      %613 = vmatpush1.msra.mxu0 %v524
      %614 = vmatprep.subr.mxu0 0.0
      %615 = vmatpush2.msra.mxu0 0.0
      %616 = vmatprep.subr.mxu0 0.0
      %617 = vmatpush2.msra.mxu0 0.0
      %618 = vmatprep.subr.mxu0 0.0
      %619 = vmatpush2.msra.mxu0 0.0
      %620 = vmatprep.subr.mxu0 0.0
      %621 = vmatpush2.msra.mxu0 0.0
      %622 = vmatprep.subr.mxu0 0.0
      %623 = vmatpush2.msra.mxu0 0.0
      %624 = vmatprep.subr.mxu0 0.0
      %625 = vmatpush2.msra.mxu0 0.0
      %626 = vmatprep.subr.mxu0 0.0
      %627 = vmatpush2.msra.mxu0 0.0
      %628 = vmatprep.subr.mxu0 0.0
      %629 = vmatpush2.msra.mxu0 0.0
      %630 = vmatprep.subr.mxu0 0.0
      %631 = vmatpush2.msra.mxu0 0.0
      %632 = vmatprep.subr.mxu0 0.0
      %633 = vmatpush2.msra.mxu0 0.0
      %634 = vmatprep.subr.mxu0 0.0
      %635 = vmatpush2.msra.mxu0 0.0
      %636 = vmatprep.subr.mxu0 0.0
      %637 = vmatpush2.msra.mxu0 0.0
      %638 = vmatprep.subr.mxu0 0.0
      %639 = vmatpush2.msra.mxu0 0.0
      %640 = vmatprep.subr.mxu0 0.0
      %641 = vmatpush2.msra.mxu0 0.0
      %642 = vmatprep.subr.mxu0 0.0
      %643 = vmatpush2.msra.mxu0 0.0
      %644 = vmatprep.subr.mxu0 0.0
      %645 = vmatpush2.msra.mxu0 0.0
      %646 = vmatprep.mubr.f32.mxu0 0.0
      %647 = vmatmul.mubr.f32.gmra.mxu0 %v559
      %v648 = vpop.f32.mrf.mxu0
      %v649 = vadd.f32 0.0, %v648
      %v650 = vpop.f32.mrf.mxu0
      %651 = vmatprep.mubr.f32.mxu0 0.0
      %652 = vmatmul.mubr.f32.gmra.mxu0 %v562
      %v653 = vpop.f32.mrf.mxu0
      %v654 = vadd.f32 0.0, %v653
      %v655 = vpop.f32.mrf.mxu0
      %656 = vmatprep.mubr.f32.mxu0 0.0
      %657 = vmatmul.mubr.f32.gmra.mxu0 %v565
      %v658 = vpop.f32.mrf.mxu0
      %v659 = vadd.f32 0.0, %v658
      %v660 = vpop.f32.mrf.mxu0
      %661 = vmatprep.mubr.f32.mxu0 0.0
      %662 = vmatmul.mubr.f32.gmra.mxu0 %v568
      %v663 = vpop.f32.mrf.mxu0
      %v664 = vadd.f32 0.0, %v663
      %v665 = vpop.f32.mrf.mxu0
      %666 = vmatprep.mubr.f32.mxu0 0.0
      %667 = vmatmul.mubr.f32.gmra.mxu0 %v571
      %v668 = vpop.f32.mrf.mxu0
      %v669 = vadd.f32 0.0, %v668
      %v670 = vpop.f32.mrf.mxu0
      %671 = vmatprep.mubr.f32.mxu0 0.0
      %672 = vmatmul.mubr.f32.gmra.mxu0 %v574
      %v673 = vpop.f32.mrf.mxu0
      %v674 = vadd.f32 0.0, %v673
      %v675 = vpop.f32.mrf.mxu0
      %676 = vmatprep.mubr.f32.mxu0 0.0
      %677 = vmatmul.mubr.f32.gmra.mxu0 %v577
      %v678 = vpop.f32.mrf.mxu0
      %v679 = vadd.f32 0.0, %v678
      %v680 = vpop.f32.mrf.mxu0
      %681 = vmatprep.mubr.f32.mxu0 0.0
      %682 = vmatmul.mubr.f32.gmra.mxu0 %v580
      %v683 = vpop.f32.mrf.mxu0
      %v684 = vadd.f32 0.0, %v683
      %v685 = vpop.f32.mrf.mxu0
      %686 = vdwg.mxu0
      %v687 = vmul.f32 %v533, %v541
      %v688 = vmul.f32 %v534, %v542
      %v689 = vmul.f32 %v535, %v543
      %v690 = vmul.f32 %v536, %v544
      %v691 = vmul.f32 %v537, %v545
      %v692 = vmul.f32 %v538, %v546
      %v693 = vmul.f32 %v539, %v547
      %v694 = vmul.f32 %v540, %v548
      %v695 = vmul.f32 %v649, %v549
      %v696 = vmul.f32 %v654, %v550
      %v697 = vmul.f32 %v659, %v551
      %v698 = vmul.f32 %v664, %v552
      %v699 = vmul.f32 %v669, %v553
      %v700 = vmul.f32 %v674, %v554
      %v701 = vmul.f32 %v679, %v555
      %v702 = vmul.f32 %v684, %v556
      %v703 = vadd.f32 %v687, %v695
      %v704 = vadd.f32 %v688, %v696
      %v705 = vadd.f32 %v689, %v697
      %v706 = vadd.f32 %v690, %v698
      %v707 = vadd.f32 %v691, %v699
      %v708 = vadd.f32 %v692, %v700
      %v709 = vadd.f32 %v693, %v701
      %v710 = vadd.f32 %v694, %v702
      %v711 = vpack.c.bf16 %v704, %v703
      %v712 = vpack.c.bf16 %v706, %v705
      %v713 = vpack.c.bf16 %v708, %v707
      %v714 = vpack.c.bf16 %v710, %v709
      %v715 = vld [vmem:[%s485] sm:$0xff]
      %v716 = vld [vmem:[%s485 + $0x8] sm:$0xff]
      %v717 = vld [vmem:[%s485 + $0x10] sm:$0xff]
      %v718 = vld [vmem:[%s485 + $0x18] sm:$0xff]
      %v719 = vld [vmem:[%s485 + $0x20] sm:$0xff]
      %v720 = vld [vmem:[%s485 + $0x28] sm:$0xff]
      %v721 = vld [vmem:[%s485 + $0x30] sm:$0xff]
      %v722 = vld [vmem:[%s485 + $0x38] sm:$0xff]
      %v723 = vld [vmem:[%s7] sm:$0xff]
      %v724 = vld [vmem:[%s7 + $0x8] sm:$0xff]
      %v725 = vld [vmem:[%s7 + $0x10] sm:$0xff]
      %v726 = vld [vmem:[%s7 + $0x18] sm:$0xff]
      %v727 = vld [vmem:[%s7 + $0x20] sm:$0xff]
      %v728 = vld [vmem:[%s7 + $0x28] sm:$0xff]
      %v729 = vld [vmem:[%s7 + $0x30] sm:$0xff]
      %v730 = vld [vmem:[%s7 + $0x38] sm:$0xff]
      %v731 = vld [vmem:[%s8] sm:$0xff]
      %v732 = vld [vmem:[%s8 + $0x8] sm:$0xff]
      %v733 = vld [vmem:[%s8 + $0x10] sm:$0xff]
      %v734 = vld [vmem:[%s8 + $0x18] sm:$0xff]
      %v735 = vld [vmem:[%s8 + $0x20] sm:$0xff]
      %v736 = vld [vmem:[%s8 + $0x28] sm:$0xff]
      %v737 = vld [vmem:[%s8 + $0x30] sm:$0xff]
      %v738 = vld [vmem:[%s8 + $0x38] sm:$0xff]
      %v740 = vsel %vm557, %v715, 0
      %v743 = vsel %vm557, %v716, 0
      %v746 = vsel %vm557, %v717, 0
      %v749 = vsel %vm557, %v718, 0
      %v752 = vsel %vm557, %v719, 0
      %v755 = vsel %vm557, %v720, 0
      %v758 = vsel %vm557, %v721, 0
      %v761 = vsel %vm557, %v722, 0
      %763 = vmatprep.subr.mxu0 0.0
      %764 = vmatpush1.msra.mxu0 0.0
      %765 = vmatprep.subr.mxu0 0.0
      %766 = vmatpush1.msra.mxu0 0.0
      %767 = vmatprep.subr.mxu0 0.0
      %768 = vmatpush1.msra.mxu0 0.0
      %769 = vmatprep.subr.mxu0 0.0
      %770 = vmatpush1.msra.mxu0 0.0
      %771 = vmatprep.subr.mxu0 0.0
      %772 = vmatpush1.msra.mxu0 0.0
      %773 = vmatprep.subr.mxu0 0.0
      %774 = vmatpush1.msra.mxu0 0.0
      %775 = vmatprep.subr.mxu0 0.0
      %776 = vmatpush1.msra.mxu0 0.0
      %777 = vmatprep.subr.mxu0 0.0
      %778 = vmatpush1.msra.mxu0 0.0
      %779 = vmatprep.subr.mxu0 0.0
      %780 = vmatpush1.msra.mxu0 0.0
      %781 = vmatprep.subr.mxu0 0.0
      %782 = vmatpush1.msra.mxu0 0.0
      %783 = vmatprep.subr.mxu0 0.0
      %784 = vmatpush1.msra.mxu0 0.0
      %785 = vmatprep.subr.mxu0 0.0
      %786 = vmatpush1.msra.mxu0 0.0
      %787 = vmatprep.subr.mxu0 0.0
      %788 = vmatpush1.msra.mxu0 0.0
      %789 = vmatprep.subr.mxu0 0.0
      %790 = vmatpush1.msra.mxu0 0.0
      %791 = vmatprep.subr.mxu0 0.0
      %792 = vmatpush1.msra.mxu0 0.0
      %793 = vmatprep.subr.mxu0 0.0
      %794 = vmatpush1.msra.mxu0 %v524
      %795 = vmatprep.subr.mxu0 0.0
      %796 = vmatpush2.msra.mxu0 0.0
      %797 = vmatprep.subr.mxu0 0.0
      %798 = vmatpush2.msra.mxu0 0.0
      %799 = vmatprep.subr.mxu0 0.0
      %800 = vmatpush2.msra.mxu0 0.0
      %801 = vmatprep.subr.mxu0 0.0
      %802 = vmatpush2.msra.mxu0 0.0
      %803 = vmatprep.subr.mxu0 0.0
      %804 = vmatpush2.msra.mxu0 0.0
      %805 = vmatprep.subr.mxu0 0.0
      %806 = vmatpush2.msra.mxu0 0.0
      %807 = vmatprep.subr.mxu0 0.0
      %808 = vmatpush2.msra.mxu0 0.0
      %809 = vmatprep.subr.mxu0 0.0
      %810 = vmatpush2.msra.mxu0 0.0
      %811 = vmatprep.subr.mxu0 0.0
      %812 = vmatpush2.msra.mxu0 0.0
      %813 = vmatprep.subr.mxu0 0.0
      %814 = vmatpush2.msra.mxu0 0.0
      %815 = vmatprep.subr.mxu0 0.0
      %816 = vmatpush2.msra.mxu0 0.0
      %817 = vmatprep.subr.mxu0 0.0
      %818 = vmatpush2.msra.mxu0 0.0
      %819 = vmatprep.subr.mxu0 0.0
      %820 = vmatpush2.msra.mxu0 0.0
      %821 = vmatprep.subr.mxu0 0.0
      %822 = vmatpush2.msra.mxu0 0.0
      %823 = vmatprep.subr.mxu0 0.0
      %824 = vmatpush2.msra.mxu0 0.0
      %825 = vmatprep.subr.mxu0 0.0
      %826 = vmatpush2.msra.mxu0 0.0
      %827 = vmatprep.mubr.f32.mxu0 0.0
      %828 = vmatmul.mubr.f32.gmra.mxu0 %v740
      %v829 = vpop.f32.mrf.mxu0
      %v830 = vadd.f32 0.0, %v829
      %v831 = vpop.f32.mrf.mxu0
      %832 = vmatprep.mubr.f32.mxu0 0.0
      %833 = vmatmul.mubr.f32.gmra.mxu0 %v743
      %v834 = vpop.f32.mrf.mxu0
      %v835 = vadd.f32 0.0, %v834
      %v836 = vpop.f32.mrf.mxu0
      %837 = vmatprep.mubr.f32.mxu0 0.0
      %838 = vmatmul.mubr.f32.gmra.mxu0 %v746
      %v839 = vpop.f32.mrf.mxu0
      %v840 = vadd.f32 0.0, %v839
      %v841 = vpop.f32.mrf.mxu0
      %842 = vmatprep.mubr.f32.mxu0 0.0
      %843 = vmatmul.mubr.f32.gmra.mxu0 %v749
      %v844 = vpop.f32.mrf.mxu0
      %v845 = vadd.f32 0.0, %v844
      %v846 = vpop.f32.mrf.mxu0
      %847 = vmatprep.mubr.f32.mxu0 0.0
      %848 = vmatmul.mubr.f32.gmra.mxu0 %v752
      %v849 = vpop.f32.mrf.mxu0
      %v850 = vadd.f32 0.0, %v849
      %v851 = vpop.f32.mrf.mxu0
      %852 = vmatprep.mubr.f32.mxu0 0.0
      %853 = vmatmul.mubr.f32.gmra.mxu0 %v755
      %v854 = vpop.f32.mrf.mxu0
      %v855 = vadd.f32 0.0, %v854
      %v856 = vpop.f32.mrf.mxu0
      %857 = vmatprep.mubr.f32.mxu0 0.0
      %858 = vmatmul.mubr.f32.gmra.mxu0 %v758
      %v859 = vpop.f32.mrf.mxu0
      %v860 = vadd.f32 0.0, %v859
      %v861 = vpop.f32.mrf.mxu0
      %862 = vmatprep.mubr.f32.mxu0 0.0
      %863 = vmatmul.mubr.f32.gmra.mxu0 %v761
      %v864 = vpop.f32.mrf.mxu0
      %v865 = vadd.f32 0.0, %v864
      %v866 = vpop.f32.mrf.mxu0
      %867 = vdwg.mxu0
      %v868 = vmul.f32 %v715, %v723
      %v869 = vmul.f32 %v716, %v724
      %v870 = vmul.f32 %v717, %v725
      %v871 = vmul.f32 %v718, %v726
      %v872 = vmul.f32 %v719, %v727
      %v873 = vmul.f32 %v720, %v728
      %v874 = vmul.f32 %v721, %v729
      %v875 = vmul.f32 %v722, %v730
      %v876 = vmul.f32 %v830, %v731
      %v877 = vmul.f32 %v835, %v732
      %v878 = vmul.f32 %v840, %v733
      %v879 = vmul.f32 %v845, %v734
      %v880 = vmul.f32 %v850, %v735
      %v881 = vmul.f32 %v855, %v736
      %v882 = vmul.f32 %v860, %v737
      %v883 = vmul.f32 %v865, %v738
      %v884 = vadd.f32 %v868, %v876
      %v885 = vadd.f32 %v869, %v877
      %v886 = vadd.f32 %v870, %v878
      %v887 = vadd.f32 %v871, %v879
      %v888 = vadd.f32 %v872, %v880
      %v889 = vadd.f32 %v873, %v881
      %v890 = vadd.f32 %v874, %v882
      %v891 = vadd.f32 %v875, %v883
      %v892 = vpack.c.bf16 %v885, %v884
      %v893 = vpack.c.bf16 %v887, %v886
      %v894 = vpack.c.bf16 %v889, %v888
      %v895 = vpack.c.bf16 %v891, %v890
      %v896 = vld [vmem:[%s490] sm:$0xff]
      %v897 = vld [vmem:[%s490 + $0x8] sm:$0xff]
      %v898 = vld [vmem:[%s490 + $0x10] sm:$0xff]
      %v899 = vld [vmem:[%s490 + $0x18] sm:$0xff]
      %v900 = vld [vmem:[%s490 + $0x20] sm:$0xff]
      %v901 = vld [vmem:[%s490 + $0x28] sm:$0xff]
      %v902 = vld [vmem:[%s490 + $0x30] sm:$0xff]
      %v903 = vld [vmem:[%s490 + $0x38] sm:$0xff]
      %v905 = vsel %vm557, %v896, 0
      %v908 = vsel %vm557, %v897, 0
      %v911 = vsel %vm557, %v898, 0
      %v914 = vsel %vm557, %v899, 0
      %v917 = vsel %vm557, %v900, 0
      %v920 = vsel %vm557, %v901, 0
      %v923 = vsel %vm557, %v902, 0
      %v926 = vsel %vm557, %v903, 0
      %928 = vmatprep.subr.mxu0 0.0
      %929 = vmatpush1.msra.mxu0 0.0
      %930 = vmatprep.subr.mxu0 0.0
      %931 = vmatpush1.msra.mxu0 0.0
      %932 = vmatprep.subr.mxu0 0.0
      %933 = vmatpush1.msra.mxu0 0.0
      %934 = vmatprep.subr.mxu0 0.0
      %935 = vmatpush1.msra.mxu0 0.0
      %936 = vmatprep.subr.mxu0 0.0
      %937 = vmatpush1.msra.mxu0 0.0
      %938 = vmatprep.subr.mxu0 0.0
      %939 = vmatpush1.msra.mxu0 0.0
      %940 = vmatprep.subr.mxu0 0.0
      %941 = vmatpush1.msra.mxu0 0.0
      %942 = vmatprep.subr.mxu0 0.0
      %943 = vmatpush1.msra.mxu0 0.0
      %944 = vmatprep.subr.mxu0 0.0
      %945 = vmatpush1.msra.mxu0 0.0
      %946 = vmatprep.subr.mxu0 0.0
      %947 = vmatpush1.msra.mxu0 0.0
      %948 = vmatprep.subr.mxu0 0.0
      %949 = vmatpush1.msra.mxu0 0.0
      %950 = vmatprep.subr.mxu0 0.0
      %951 = vmatpush1.msra.mxu0 0.0
      %952 = vmatprep.subr.mxu0 0.0
      %953 = vmatpush1.msra.mxu0 0.0
      %954 = vmatprep.subr.mxu0 0.0
      %955 = vmatpush1.msra.mxu0 0.0
      %956 = vmatprep.subr.mxu0 0.0
      %957 = vmatpush1.msra.mxu0 0.0
      %958 = vmatprep.subr.mxu0 0.0
      %959 = vmatpush1.msra.mxu0 %v524
      %960 = vmatprep.subr.mxu0 0.0
      %961 = vmatpush2.msra.mxu0 0.0
      %962 = vmatprep.subr.mxu0 0.0
      %963 = vmatpush2.msra.mxu0 0.0
      %964 = vmatprep.subr.mxu0 0.0
      %965 = vmatpush2.msra.mxu0 0.0
      %966 = vmatprep.subr.mxu0 0.0
      %967 = vmatpush2.msra.mxu0 0.0
      %968 = vmatprep.subr.mxu0 0.0
      %969 = vmatpush2.msra.mxu0 0.0
      %970 = vmatprep.subr.mxu0 0.0
      %971 = vmatpush2.msra.mxu0 0.0
      %972 = vmatprep.subr.mxu0 0.0
      %973 = vmatpush2.msra.mxu0 0.0
      %974 = vmatprep.subr.mxu0 0.0
      %975 = vmatpush2.msra.mxu0 0.0
      %976 = vmatprep.subr.mxu0 0.0
      %977 = vmatpush2.msra.mxu0 0.0
      %978 = vmatprep.subr.mxu0 0.0
      %979 = vmatpush2.msra.mxu0 0.0
      %980 = vmatprep.subr.mxu0 0.0
      %981 = vmatpush2.msra.mxu0 0.0
      %982 = vmatprep.subr.mxu0 0.0
      %983 = vmatpush2.msra.mxu0 0.0
      %984 = vmatprep.subr.mxu0 0.0
      %985 = vmatpush2.msra.mxu0 0.0
      %986 = vmatprep.subr.mxu0 0.0
      %987 = vmatpush2.msra.mxu0 0.0
      %988 = vmatprep.subr.mxu0 0.0
      %989 = vmatpush2.msra.mxu0 0.0
      %990 = vmatprep.subr.mxu0 0.0
      %991 = vmatpush2.msra.mxu0 0.0
      %992 = vmatprep.mubr.f32.mxu0 0.0
      %993 = vmatmul.mubr.f32.gmra.mxu0 %v905
      %v994 = vpop.f32.mrf.mxu0
      %v995 = vadd.f32 0.0, %v994
      %v996 = vpop.f32.mrf.mxu0
      %997 = vmatprep.mubr.f32.mxu0 0.0
      %998 = vmatmul.mubr.f32.gmra.mxu0 %v908
      %v999 = vpop.f32.mrf.mxu0
      %v1000 = vadd.f32 0.0, %v999
      %v1001 = vpop.f32.mrf.mxu0
      %1002 = vmatprep.mubr.f32.mxu0 0.0
      %1003 = vmatmul.mubr.f32.gmra.mxu0 %v911
      %v1004 = vpop.f32.mrf.mxu0
      %v1005 = vadd.f32 0.0, %v1004
      %v1006 = vpop.f32.mrf.mxu0
      %1007 = vmatprep.mubr.f32.mxu0 0.0
      %1008 = vmatmul.mubr.f32.gmra.mxu0 %v914
      %v1009 = vpop.f32.mrf.mxu0
      %v1010 = vadd.f32 0.0, %v1009
      %v1011 = vpop.f32.mrf.mxu0
      %1012 = vmatprep.mubr.f32.mxu0 0.0
      %1013 = vmatmul.mubr.f32.gmra.mxu0 %v917
      %v1014 = vpop.f32.mrf.mxu0
      %v1015 = vadd.f32 0.0, %v1014
      %v1016 = vpop.f32.mrf.mxu0
      %1017 = vmatprep.mubr.f32.mxu0 0.0
      %1018 = vmatmul.mubr.f32.gmra.mxu0 %v920
      %v1019 = vpop.f32.mrf.mxu0
      %v1020 = vadd.f32 0.0, %v1019
      %v1021 = vpop.f32.mrf.mxu0
      %1022 = vmatprep.mubr.f32.mxu0 0.0
      %1023 = vmatmul.mubr.f32.gmra.mxu0 %v923
      %v1024 = vpop.f32.mrf.mxu0
      %v1025 = vadd.f32 0.0, %v1024
      %v1026 = vpop.f32.mrf.mxu0
      %1027 = vmatprep.mubr.f32.mxu0 0.0
      %1028 = vmatmul.mubr.f32.gmra.mxu0 %v926
      %v1029 = vpop.f32.mrf.mxu0
      %v1030 = vadd.f32 0.0, %v1029
      %v1031 = vpop.f32.mrf.mxu0
      %1032 = vdwg.mxu0
      %v1033 = vmul.f32 %v896, %v723
      %v1034 = vmul.f32 %v897, %v724
      %v1035 = vmul.f32 %v898, %v725
      %v1036 = vmul.f32 %v899, %v726
      %v1037 = vmul.f32 %v900, %v727
      %v1038 = vmul.f32 %v901, %v728
      %v1039 = vmul.f32 %v902, %v729
      %v1040 = vmul.f32 %v903, %v730
      %v1041 = vmul.f32 %v995, %v731
      %v1042 = vmul.f32 %v1000, %v732
      %v1043 = vmul.f32 %v1005, %v733
      %v1044 = vmul.f32 %v1010, %v734
      %v1045 = vmul.f32 %v1015, %v735
      %v1046 = vmul.f32 %v1020, %v736
      %v1047 = vmul.f32 %v1025, %v737
      %v1048 = vmul.f32 %v1030, %v738
      %v1049 = vadd.f32 %v1033, %v1041
      %v1050 = vadd.f32 %v1034, %v1042
      %v1051 = vadd.f32 %v1035, %v1043
      %v1052 = vadd.f32 %v1036, %v1044
      %v1053 = vadd.f32 %v1037, %v1045
      %v1054 = vadd.f32 %v1038, %v1046
      %v1055 = vadd.f32 %v1039, %v1047
      %v1056 = vadd.f32 %v1040, %v1048
      %v1057 = vpack.c.bf16 %v1050, %v1049
      %v1058 = vpack.c.bf16 %v1052, %v1051
      %v1059 = vpack.c.bf16 %v1054, %v1053
      %v1060 = vpack.c.bf16 %v1056, %v1055
      %v1062 = vsel %vm557, %v711, 0
      %v1065 = vsel %vm557, %v712, 0
      %v1068 = vsel %vm557, %v713, 0
      %v1071 = vsel %vm557, %v714, 0
      %v1074 = vsel %vm557, %v892, 0
      %v1077 = vsel %vm557, %v893, 0
      %v1080 = vsel %vm557, %v894, 0
      %v1083 = vsel %vm557, %v895, 0
      %1085 = vmatprep.subr.bf16.mxu0 0
      %1086 = vmatpush1.bf16.xpose.msra.mxu0 0
      %1087 = vmatprep.subr.bf16.mxu0 0
      %1088 = vmatpush1.bf16.xpose.msra.mxu0 0
      %1089 = vmatprep.subr.bf16.mxu0 0
      %1090 = vmatpush1.bf16.xpose.msra.mxu0 0
      %1091 = vmatprep.subr.bf16.mxu0 0
      %1092 = vmatpush1.bf16.xpose.msra.mxu0 0
      %1093 = vmatprep.subr.bf16.mxu0 0
      %1094 = vmatpush1.bf16.xpose.msra.mxu0 %v1083
      %1095 = vmatprep.subr.bf16.mxu0 0
      %1096 = vmatpush1.bf16.xpose.msra.mxu0 %v1080
      %1097 = vmatprep.subr.bf16.mxu0 0
      %1098 = vmatpush1.bf16.xpose.msra.mxu0 %v1077
      %1099 = vmatprep.subr.bf16.mxu0 0
      %1100 = vmatpush1.bf16.xpose.msra.mxu0 %v1074
      %1101 = vmatprep.subr.bf16.mxu0 0
      %1102 = vmatpush2.bf16.xpose.msra.mxu0 0
      %1103 = vmatprep.subr.bf16.mxu0 0
      %1104 = vmatpush2.bf16.xpose.msra.mxu0 0
      %1105 = vmatprep.subr.bf16.mxu0 0
      %1106 = vmatpush2.bf16.xpose.msra.mxu0 0
      %1107 = vmatprep.subr.bf16.mxu0 0
      %1108 = vmatpush2.bf16.xpose.msra.mxu0 0
      %1109 = vmatprep.subr.bf16.mxu0 0
      %1110 = vmatpush2.bf16.xpose.msra.mxu0 0
      %1111 = vmatprep.subr.bf16.mxu0 0
      %1112 = vmatpush2.bf16.xpose.msra.mxu0 0
      %1113 = vmatprep.subr.bf16.mxu0 0
      %1114 = vmatpush2.bf16.xpose.msra.mxu0 0
      %1115 = vmatprep.subr.bf16.mxu0 0
      %1116 = vmatpush2.bf16.xpose.msra.mxu0 0
      %1117 = vmatprep.mubr.bf16.mxu0 0
      %1118 = vmatmul.mubr.bf16.gmra.mxu0 %v1062
      %v1119 = vpop.f32.mrf.mxu0
      %v1120 = vadd.f32 0.0, %v1119
      %v1121 = vpop.f32.mrf.mxu0
      %v1122 = vpop.f32.mrf.mxu0
      %v1123 = vadd.f32 0.0, %v1122
      %v1124 = vpop.f32.mrf.mxu0
      %1125 = vmatprep.mubr.bf16.mxu0 0
      %1126 = vmatmul.mubr.bf16.gmra.mxu0 %v1065
      %v1127 = vpop.f32.mrf.mxu0
      %v1128 = vadd.f32 0.0, %v1127
      %v1129 = vpop.f32.mrf.mxu0
      %v1130 = vpop.f32.mrf.mxu0
      %v1131 = vadd.f32 0.0, %v1130
      %v1132 = vpop.f32.mrf.mxu0
      %1133 = vmatprep.mubr.bf16.mxu0 0
      %1134 = vmatmul.mubr.bf16.gmra.mxu0 %v1068
      %v1135 = vpop.f32.mrf.mxu0
      %v1136 = vadd.f32 0.0, %v1135
      %v1137 = vpop.f32.mrf.mxu0
      %v1138 = vpop.f32.mrf.mxu0
      %v1139 = vadd.f32 0.0, %v1138
      %v1140 = vpop.f32.mrf.mxu0
      %1141 = vmatprep.mubr.bf16.mxu0 0
      %1142 = vmatmul.mubr.bf16.gmra.mxu0 %v1071
      %v1143 = vpop.f32.mrf.mxu0
      %v1144 = vadd.f32 0.0, %v1143
      %v1145 = vpop.f32.mrf.mxu0
      %v1146 = vpop.f32.mrf.mxu0
      %v1147 = vadd.f32 0.0, %v1146
      %v1148 = vpop.f32.mrf.mxu0
      %1149 = vdwg.mxu0
      %v1151 = vsel %vm557, %v1057, 0
      %v1154 = vsel %vm557, %v1058, 0
      %v1157 = vsel %vm557, %v1059, 0
      %v1160 = vsel %vm557, %v1060, 0
      %1162 = vmatprep.subr.bf16.mxu0 0
      %1163 = vmatpush1.bf16.xpose.msra.mxu0 0
      %1164 = vmatprep.subr.bf16.mxu0 0
      %1165 = vmatpush1.bf16.xpose.msra.mxu0 0
      %1166 = vmatprep.subr.bf16.mxu0 0
      %1167 = vmatpush1.bf16.xpose.msra.mxu0 0
      %1168 = vmatprep.subr.bf16.mxu0 0
      %1169 = vmatpush1.bf16.xpose.msra.mxu0 0
      %1170 = vmatprep.subr.bf16.mxu0 0
      %1171 = vmatpush1.bf16.xpose.msra.mxu0 %v1160
      %1172 = vmatprep.subr.bf16.mxu0 0
      %1173 = vmatpush1.bf16.xpose.msra.mxu0 %v1157
      %1174 = vmatprep.subr.bf16.mxu0 0
      %1175 = vmatpush1.bf16.xpose.msra.mxu0 %v1154
      %1176 = vmatprep.subr.bf16.mxu0 0
      %1177 = vmatpush1.bf16.xpose.msra.mxu0 %v1151
      %1178 = vmatprep.subr.bf16.mxu0 0
      %1179 = vmatpush2.bf16.xpose.msra.mxu0 0
      %1180 = vmatprep.subr.bf16.mxu0 0
      %1181 = vmatpush2.bf16.xpose.msra.mxu0 0
      %1182 = vmatprep.subr.bf16.mxu0 0
      %1183 = vmatpush2.bf16.xpose.msra.mxu0 0
      %1184 = vmatprep.subr.bf16.mxu0 0
      %1185 = vmatpush2.bf16.xpose.msra.mxu0 0
      %1186 = vmatprep.subr.bf16.mxu0 0
      %1187 = vmatpush2.bf16.xpose.msra.mxu0 0
      %1188 = vmatprep.subr.bf16.mxu0 0
      %1189 = vmatpush2.bf16.xpose.msra.mxu0 0
      %1190 = vmatprep.subr.bf16.mxu0 0
      %1191 = vmatpush2.bf16.xpose.msra.mxu0 0
      %1192 = vmatprep.subr.bf16.mxu0 0
      %1193 = vmatpush2.bf16.xpose.msra.mxu0 0
      %1194 = vmatprep.mubr.bf16.mxu0 0
      %1195 = vmatmul.mubr.bf16.gmra.mxu0 %v1062
      %v1196 = vpop.f32.mrf.mxu0
      %v1197 = vadd.f32 0.0, %v1196
      %v1198 = vpop.f32.mrf.mxu0
      %v1199 = vpop.f32.mrf.mxu0
      %v1200 = vadd.f32 0.0, %v1199
      %v1201 = vpop.f32.mrf.mxu0
      %1202 = vmatprep.mubr.bf16.mxu0 0
      %1203 = vmatmul.mubr.bf16.gmra.mxu0 %v1065
      %v1204 = vpop.f32.mrf.mxu0
      %v1205 = vadd.f32 0.0, %v1204
      %v1206 = vpop.f32.mrf.mxu0
      %v1207 = vpop.f32.mrf.mxu0
      %v1208 = vadd.f32 0.0, %v1207
      %v1209 = vpop.f32.mrf.mxu0
      %1210 = vmatprep.mubr.bf16.mxu0 0
      %1211 = vmatmul.mubr.bf16.gmra.mxu0 %v1068
      %v1212 = vpop.f32.mrf.mxu0
      %v1213 = vadd.f32 0.0, %v1212
      %v1214 = vpop.f32.mrf.mxu0
      %v1215 = vpop.f32.mrf.mxu0
      %v1216 = vadd.f32 0.0, %v1215
      %v1217 = vpop.f32.mrf.mxu0
      %1218 = vmatprep.mubr.bf16.mxu0 0
      %1219 = vmatmul.mubr.bf16.gmra.mxu0 %v1071
      %v1220 = vpop.f32.mrf.mxu0
      %v1221 = vadd.f32 0.0, %v1220
      %v1222 = vpop.f32.mrf.mxu0
      %v1223 = vpop.f32.mrf.mxu0
      %v1224 = vadd.f32 0.0, %v1223
      %v1225 = vpop.f32.mrf.mxu0
      %1226 = vdwg.mxu0
      %vm1227 = vcmask 523264
      %v1228 = vsel %vm1227, %v1120, -inf
      %1229 = vmax.xlane.f32.xlu0 %v1228
      %v1230 = vpop.xlane.xlu0 %1229
      %v1231 = vsel %vm1227, %v1123, -inf
      %1232 = vmax.xlane.f32.xlu0 %v1231
      %v1233 = vpop.xlane.xlu0 %1232
      %v1234 = vsel %vm1227, %v1128, -inf
      %1235 = vmax.xlane.f32.xlu0 %v1234
      %v1236 = vpop.xlane.xlu0 %1235
      %v1237 = vsel %vm1227, %v1131, -inf
      %1238 = vmax.xlane.f32.xlu0 %v1237
      %v1239 = vpop.xlane.xlu0 %1238
      %v1240 = vsel %vm1227, %v1136, -inf
      %1241 = vmax.xlane.f32.xlu0 %v1240
      %v1242 = vpop.xlane.xlu0 %1241
      %v1243 = vsel %vm1227, %v1139, -inf
      %1244 = vmax.xlane.f32.xlu0 %v1243
      %v1245 = vpop.xlane.xlu0 %1244
      %v1246 = vsel %vm1227, %v1144, -inf
      %1247 = vmax.xlane.f32.xlu0 %v1246
      %v1248 = vpop.xlane.xlu0 %1247
      %v1249 = vsel %vm1227, %v1147, -inf
      %1250 = vmax.xlane.f32.xlu0 %v1249
      %v1251 = vpop.xlane.xlu0 %1250
      %v1252 = vsel %vm1227, %v1197, -inf
      %1253 = vmax.xlane.f32.xlu0 %v1252
      %v1254 = vpop.xlane.xlu0 %1253
      %v1255 = vsel %vm1227, %v1200, -inf
      %1256 = vmax.xlane.f32.xlu0 %v1255
      %v1257 = vpop.xlane.xlu0 %1256
      %v1258 = vsel %vm1227, %v1205, -inf
      %1259 = vmax.xlane.f32.xlu0 %v1258
      %v1260 = vpop.xlane.xlu0 %1259
      %v1261 = vsel %vm1227, %v1208, -inf
      %1262 = vmax.xlane.f32.xlu0 %v1261
      %v1263 = vpop.xlane.xlu0 %1262
      %v1264 = vsel %vm1227, %v1213, -inf
      %1265 = vmax.xlane.f32.xlu0 %v1264
      %v1266 = vpop.xlane.xlu0 %1265
      %v1267 = vsel %vm1227, %v1216, -inf
      %1268 = vmax.xlane.f32.xlu0 %v1267
      %v1269 = vpop.xlane.xlu0 %1268
      %v1270 = vsel %vm1227, %v1221, -inf
      %1271 = vmax.xlane.f32.xlu0 %v1270
      %v1272 = vpop.xlane.xlu0 %1271
      %v1273 = vsel %vm1227, %v1224, -inf
      %1274 = vmax.xlane.f32.xlu0 %v1273
      %v1275 = vpop.xlane.xlu0 %1274
      %v1276 = vmax.f32 %v1230, %v1254
      %v1277 = vmax.f32 %v1233, %v1257
      %v1278 = vmax.f32 %v1236, %v1260
      %v1279 = vmax.f32 %v1239, %v1263
      %v1280 = vmax.f32 %v1242, %v1266
      %v1281 = vmax.f32 %v1245, %v1269
      %v1282 = vmax.f32 %v1248, %v1272
      %v1283 = vmax.f32 %v1251, %v1275
      %v1284 = vsub.f32 %v1120, %v1276
      %v1285 = vsub.f32 %v1123, %v1277
      %v1286 = vsub.f32 %v1128, %v1278
      %v1287 = vsub.f32 %v1131, %v1279
      %v1288 = vsub.f32 %v1136, %v1280
      %v1289 = vsub.f32 %v1139, %v1281
      %v1290 = vsub.f32 %v1144, %v1282
      %v1291 = vsub.f32 %v1147, %v1283
      %v1292 = vmul.f32 %v1284, 1.442695
      %v1293 = vpow.pop %v1292
      %v1294 = vmul.f32 %v1285, 1.442695
      %v1295 = vpow.pop %v1294
      %v1296 = vmul.f32 %v1286, 1.442695
      %v1297 = vpow.pop %v1296
      %v1298 = vmul.f32 %v1287, 1.442695
      %v1299 = vpow.pop %v1298
      %v1300 = vmul.f32 %v1288, 1.442695
      %v1301 = vpow.pop %v1300
      %v1302 = vmul.f32 %v1289, 1.442695
      %v1303 = vpow.pop %v1302
      %v1304 = vmul.f32 %v1290, 1.442695
      %v1305 = vpow.pop %v1304
      %v1306 = vmul.f32 %v1291, 1.442695
      %v1307 = vpow.pop %v1306
      %v1308 = vsub.f32 %v1197, %v1276
      %v1309 = vsub.f32 %v1200, %v1277
      %v1310 = vsub.f32 %v1205, %v1278
      %v1311 = vsub.f32 %v1208, %v1279
      %v1312 = vsub.f32 %v1213, %v1280
      %v1313 = vsub.f32 %v1216, %v1281
      %v1314 = vsub.f32 %v1221, %v1282
      %v1315 = vsub.f32 %v1224, %v1283
      %v1316 = vmul.f32 %v1308, 1.442695
      %v1317 = vpow.pop %v1316
      %v1318 = vmul.f32 %v1309, 1.442695
      %v1319 = vpow.pop %v1318
      %v1320 = vmul.f32 %v1310, 1.442695
      %v1321 = vpow.pop %v1320
      %v1322 = vmul.f32 %v1311, 1.442695
      %v1323 = vpow.pop %v1322
      %v1324 = vmul.f32 %v1312, 1.442695
      %v1325 = vpow.pop %v1324
      %v1326 = vmul.f32 %v1313, 1.442695
      %v1327 = vpow.pop %v1326
      %v1328 = vmul.f32 %v1314, 1.442695
      %v1329 = vpow.pop %v1328
      %v1330 = vmul.f32 %v1315, 1.442695
      %v1331 = vpow.pop %v1330
      %v1332 = vsel %vm1227, %v1293, 0.0
      %1333 = vadd.xlane.f32.xlu0 %v1332
      %v1334 = vpop.xlane.xlu0 %1333
      %v1335 = vsel %vm1227, %v1295, 0.0
      %1336 = vadd.xlane.f32.xlu0 %v1335
      %v1337 = vpop.xlane.xlu0 %1336
      %v1338 = vsel %vm1227, %v1297, 0.0
      %1339 = vadd.xlane.f32.xlu0 %v1338
      %v1340 = vpop.xlane.xlu0 %1339
      %v1341 = vsel %vm1227, %v1299, 0.0
      %1342 = vadd.xlane.f32.xlu0 %v1341
      %v1343 = vpop.xlane.xlu0 %1342
      %v1344 = vsel %vm1227, %v1301, 0.0
      %1345 = vadd.xlane.f32.xlu0 %v1344
      %v1346 = vpop.xlane.xlu0 %1345
      %v1347 = vsel %vm1227, %v1303, 0.0
      %1348 = vadd.xlane.f32.xlu0 %v1347
      %v1349 = vpop.xlane.xlu0 %1348
      %v1350 = vsel %vm1227, %v1305, 0.0
      %1351 = vadd.xlane.f32.xlu0 %v1350
      %v1352 = vpop.xlane.xlu0 %1351
      %v1353 = vsel %vm1227, %v1307, 0.0
      %1354 = vadd.xlane.f32.xlu0 %v1353
      %v1355 = vpop.xlane.xlu0 %1354
      %v1356 = vsel %vm1227, %v1317, 0.0
      %1357 = vadd.xlane.f32.xlu0 %v1356
      %v1358 = vpop.xlane.xlu0 %1357
      %v1359 = vsel %vm1227, %v1319, 0.0
      %1360 = vadd.xlane.f32.xlu0 %v1359
      %v1361 = vpop.xlane.xlu0 %1360
      %v1362 = vsel %vm1227, %v1321, 0.0
      %1363 = vadd.xlane.f32.xlu0 %v1362
      %v1364 = vpop.xlane.xlu0 %1363
      %v1365 = vsel %vm1227, %v1323, 0.0
      %1366 = vadd.xlane.f32.xlu0 %v1365
      %v1367 = vpop.xlane.xlu0 %1366
      %v1368 = vsel %vm1227, %v1325, 0.0
      %1369 = vadd.xlane.f32.xlu0 %v1368
      %v1370 = vpop.xlane.xlu0 %1369
      %v1371 = vsel %vm1227, %v1327, 0.0
      %1372 = vadd.xlane.f32.xlu0 %v1371
      %v1373 = vpop.xlane.xlu0 %1372
      %v1374 = vsel %vm1227, %v1329, 0.0
      %1375 = vadd.xlane.f32.xlu0 %v1374
      %v1376 = vpop.xlane.xlu0 %1375
      %v1377 = vsel %vm1227, %v1331, 0.0
      %1378 = vadd.xlane.f32.xlu0 %v1377
      %v1379 = vpop.xlane.xlu0 %1378
      %v1380 = vadd.f32 %v1334, %v1358
      %v1381 = vadd.f32 %v1337, %v1361
      %v1382 = vadd.f32 %v1340, %v1364
      %v1383 = vadd.f32 %v1343, %v1367
      %v1384 = vadd.f32 %v1346, %v1370
      %v1385 = vadd.f32 %v1349, %v1373
      %v1386 = vadd.f32 %v1352, %v1376
      %v1387 = vadd.f32 %v1355, %v1379
      %v1388 = vpack.c.bf16 %v1295, %v1293
      %v1389 = vpack.c.bf16 %v1299, %v1297
      %v1390 = vpack.c.bf16 %v1303, %v1301
      %v1391 = vpack.c.bf16 %v1307, %v1305
      %v1392 = vld [vmem:[%s495] sm:$0xff]
      %v1393 = vld [vmem:[%s495 + $0x8] sm:$0xff]
      %v1394 = vld [vmem:[%s495 + $0x10] sm:$0xff]
      %v1395 = vld [vmem:[%s495 + $0x18] sm:$0xff]
      %v1396 = vld [vmem:[%s495 + $0x20] sm:$0xff]
      %v1397 = vld [vmem:[%s495 + $0x28] sm:$0xff]
      %v1398 = vld [vmem:[%s495 + $0x30] sm:$0xff]
      %v1399 = vld [vmem:[%s495 + $0x38] sm:$0xff]
      %v1400 = vpack.c.bf16 %v1393, %v1392
      %v1401 = vpack.c.bf16 %v1395, %v1394
      %v1402 = vpack.c.bf16 %v1397, %v1396
      %v1403 = vpack.c.bf16 %v1399, %v1398
      %v1404 = vpack.c.bf16 %v1319, %v1317
      %v1405 = vpack.c.bf16 %v1323, %v1321
      %v1406 = vpack.c.bf16 %v1327, %v1325
      %v1407 = vpack.c.bf16 %v1331, %v1329
      %v1408 = vld [vmem:[%s500] sm:$0xff]
      %v1409 = vld [vmem:[%s500 + $0x8] sm:$0xff]
      %v1410 = vld [vmem:[%s500 + $0x10] sm:$0xff]
      %v1411 = vld [vmem:[%s500 + $0x18] sm:$0xff]
      %v1412 = vld [vmem:[%s500 + $0x20] sm:$0xff]
      %v1413 = vld [vmem:[%s500 + $0x28] sm:$0xff]
      %v1414 = vld [vmem:[%s500 + $0x30] sm:$0xff]
      %v1415 = vld [vmem:[%s500 + $0x38] sm:$0xff]
      %v1416 = vpack.c.bf16 %v1409, %v1408
      %v1417 = vpack.c.bf16 %v1411, %v1410
      %v1418 = vpack.c.bf16 %v1413, %v1412
      %v1419 = vpack.c.bf16 %v1415, %v1414
      %v1421 = vsel %vm1227, %v1404, 0
      %v1424 = vsel %vm1227, %v1405, 0
      %v1427 = vsel %vm1227, %v1406, 0
      %v1430 = vsel %vm1227, %v1407, 0
      %1432 = vmatprep.subr.bf16.mxu0 0
      %1433 = vmatpush1.bf16.msra.mxu0 0
      %1434 = vmatprep.subr.bf16.mxu0 0
      %1435 = vmatpush1.bf16.msra.mxu0 0
      %1436 = vmatprep.subr.bf16.mxu0 0
      %1437 = vmatpush1.bf16.msra.mxu0 0
      %1438 = vmatprep.subr.bf16.mxu0 0
      %1439 = vmatpush1.bf16.msra.mxu0 0
      %1440 = vmatprep.subr.bf16.mxu0 0
      %1441 = vmatpush1.bf16.msra.mxu0 %v1419
      %1442 = vmatprep.subr.bf16.mxu0 0
      %1443 = vmatpush1.bf16.msra.mxu0 %v1418
      %1444 = vmatprep.subr.bf16.mxu0 0
      %1445 = vmatpush1.bf16.msra.mxu0 %v1417
      %1446 = vmatprep.subr.bf16.mxu0 0
      %1447 = vmatpush1.bf16.msra.mxu0 %v1416
      %1448 = vmatprep.subr.bf16.mxu0 0
      %1449 = vmatpush2.bf16.msra.mxu0 0
      %1450 = vmatprep.subr.bf16.mxu0 0
      %1451 = vmatpush2.bf16.msra.mxu0 0
      %1452 = vmatprep.subr.bf16.mxu0 0
      %1453 = vmatpush2.bf16.msra.mxu0 0
      %1454 = vmatprep.subr.bf16.mxu0 0
      %1455 = vmatpush2.bf16.msra.mxu0 0
      %1456 = vmatprep.subr.bf16.mxu0 0
      %1457 = vmatpush2.bf16.msra.mxu0 0
      %1458 = vmatprep.subr.bf16.mxu0 0
      %1459 = vmatpush2.bf16.msra.mxu0 0
      %1460 = vmatprep.subr.bf16.mxu0 0
      %1461 = vmatpush2.bf16.msra.mxu0 0
      %1462 = vmatprep.subr.bf16.mxu0 0
      %1463 = vmatpush2.bf16.msra.mxu0 0
      %1464 = vmatprep.mubr.bf16.mxu0 0
      %1465 = vmatmul.mubr.bf16.gmra.mxu0 %v1421
      %v1466 = vpop.f32.mrf.mxu0
      %v1467 = vadd.f32 0.0, %v1466
      %v1468 = vpop.f32.mrf.mxu0
      %v1469 = vpop.f32.mrf.mxu0
      %v1470 = vadd.f32 0.0, %v1469
      %v1471 = vpop.f32.mrf.mxu0
      %1472 = vmatprep.mubr.bf16.mxu0 0
      %1473 = vmatmul.mubr.bf16.gmra.mxu0 %v1424
      %v1474 = vpop.f32.mrf.mxu0
      %v1475 = vadd.f32 0.0, %v1474
      %v1476 = vpop.f32.mrf.mxu0
      %v1477 = vpop.f32.mrf.mxu0
      %v1478 = vadd.f32 0.0, %v1477
      %v1479 = vpop.f32.mrf.mxu0
      %1480 = vmatprep.mubr.bf16.mxu0 0
      %1481 = vmatmul.mubr.bf16.gmra.mxu0 %v1427
      %v1482 = vpop.f32.mrf.mxu0
      %v1483 = vadd.f32 0.0, %v1482
      %v1484 = vpop.f32.mrf.mxu0
      %v1485 = vpop.f32.mrf.mxu0
      %v1486 = vadd.f32 0.0, %v1485
      %v1487 = vpop.f32.mrf.mxu0
      %1488 = vmatprep.mubr.bf16.mxu0 0
      %1489 = vmatmul.mubr.bf16.gmra.mxu0 %v1430
      %v1490 = vpop.f32.mrf.mxu0
      %v1491 = vadd.f32 0.0, %v1490
      %v1492 = vpop.f32.mrf.mxu0
      %v1493 = vpop.f32.mrf.mxu0
      %v1494 = vadd.f32 0.0, %v1493
      %v1495 = vpop.f32.mrf.mxu0
      %1496 = vdwg.mxu0
      %v1498 = vsel %vm1227, %v1388, 0
      %v1501 = vsel %vm1227, %v1389, 0
      %v1504 = vsel %vm1227, %v1390, 0
      %v1507 = vsel %vm1227, %v1391, 0
      %1509 = vmatprep.subr.bf16.mxu0 0
      %1510 = vmatpush1.bf16.msra.mxu0 0
      %1511 = vmatprep.subr.bf16.mxu0 0
      %1512 = vmatpush1.bf16.msra.mxu0 0
      %1513 = vmatprep.subr.bf16.mxu0 0
      %1514 = vmatpush1.bf16.msra.mxu0 0
      %1515 = vmatprep.subr.bf16.mxu0 0
      %1516 = vmatpush1.bf16.msra.mxu0 0
      %1517 = vmatprep.subr.bf16.mxu0 0
      %1518 = vmatpush1.bf16.msra.mxu0 %v1403
      %1519 = vmatprep.subr.bf16.mxu0 0
      %1520 = vmatpush1.bf16.msra.mxu0 %v1402
      %1521 = vmatprep.subr.bf16.mxu0 0
      %1522 = vmatpush1.bf16.msra.mxu0 %v1401
      %1523 = vmatprep.subr.bf16.mxu0 0
      %1524 = vmatpush1.bf16.msra.mxu0 %v1400
      %1525 = vmatprep.subr.bf16.mxu0 0
      %1526 = vmatpush2.bf16.msra.mxu0 0
      %1527 = vmatprep.subr.bf16.mxu0 0
      %1528 = vmatpush2.bf16.msra.mxu0 0
      %1529 = vmatprep.subr.bf16.mxu0 0
      %1530 = vmatpush2.bf16.msra.mxu0 0
      %1531 = vmatprep.subr.bf16.mxu0 0
      %1532 = vmatpush2.bf16.msra.mxu0 0
      %1533 = vmatprep.subr.bf16.mxu0 0
      %1534 = vmatpush2.bf16.msra.mxu0 0
      %1535 = vmatprep.subr.bf16.mxu0 0
      %1536 = vmatpush2.bf16.msra.mxu0 0
      %1537 = vmatprep.subr.bf16.mxu0 0
      %1538 = vmatpush2.bf16.msra.mxu0 0
      %1539 = vmatprep.subr.bf16.mxu0 0
      %1540 = vmatpush2.bf16.msra.mxu0 0
      %1541 = vmatprep.mubr.bf16.mxu0 0
      %1542 = vmatmul.mubr.bf16.gmra.mxu0 %v1498
      %v1543 = vpop.f32.mrf.mxu0
      %v1544 = vadd.f32 %v1467, %v1543
      %v1545 = vpop.f32.mrf.mxu0
      %v1546 = vpop.f32.mrf.mxu0
      %v1547 = vadd.f32 %v1470, %v1546
      %v1548 = vpop.f32.mrf.mxu0
      %1549 = vmatprep.mubr.bf16.mxu0 0
      %1550 = vmatmul.mubr.bf16.gmra.mxu0 %v1501
      %v1551 = vpop.f32.mrf.mxu0
      %v1552 = vadd.f32 %v1475, %v1551
      %v1553 = vpop.f32.mrf.mxu0
      %v1554 = vpop.f32.mrf.mxu0
      %v1555 = vadd.f32 %v1478, %v1554
      %v1556 = vpop.f32.mrf.mxu0
      %1557 = vmatprep.mubr.bf16.mxu0 0
      %1558 = vmatmul.mubr.bf16.gmra.mxu0 %v1504
      %v1559 = vpop.f32.mrf.mxu0
      %v1560 = vadd.f32 %v1483, %v1559
      %v1561 = vpop.f32.mrf.mxu0
      %v1562 = vpop.f32.mrf.mxu0
      %v1563 = vadd.f32 %v1486, %v1562
      %v1564 = vpop.f32.mrf.mxu0
      %1565 = vmatprep.mubr.bf16.mxu0 0
      %1566 = vmatmul.mubr.bf16.gmra.mxu0 %v1507
      %v1567 = vpop.f32.mrf.mxu0
      %v1568 = vadd.f32 %v1491, %v1567
      %v1569 = vpop.f32.mrf.mxu0
      %v1570 = vpop.f32.mrf.mxu0
      %v1571 = vadd.f32 %v1494, %v1570
      %v1572 = vpop.f32.mrf.mxu0
      %1573 = vdwg.mxu0
      %v1574 = vrcp.pop %v1380
      %v1575 = vrcp.pop %v1381
      %v1576 = vrcp.pop %v1382
      %v1577 = vrcp.pop %v1383
      %v1578 = vrcp.pop %v1384
      %v1579 = vrcp.pop %v1385
      %v1580 = vrcp.pop %v1386
      %v1581 = vrcp.pop %v1387
      %v1582 = vmul.f32 %v1544, %v1574
      %v1583 = vmul.f32 %v1547, %v1575
      %v1584 = vmul.f32 %v1552, %v1576
      %v1585 = vmul.f32 %v1555, %v1577
      %v1586 = vmul.f32 %v1560, %v1578
      %v1587 = vmul.f32 %v1563, %v1579
      %v1588 = vmul.f32 %v1568, %v1580
      %v1589 = vmul.f32 %v1571, %v1581
      %1590 = vst.msk [vmem:[%s521] sm:$0xff] %vm557, %v1582
      %1591 = vst.msk [vmem:[%s521 + $0x8] sm:$0xff] %vm557, %v1583
      %1592 = vst.msk [vmem:[%s521 + $0x10] sm:$0xff] %vm557, %v1584
      %1593 = vst.msk [vmem:[%s521 + $0x18] sm:$0xff] %vm557, %v1585
      %1594 = vst.msk [vmem:[%s521 + $0x20] sm:$0xff] %vm557, %v1586
      %1595 = vst.msk [vmem:[%s521 + $0x28] sm:$0xff] %vm557, %v1587
      %1596 = vst.msk [vmem:[%s521 + $0x30] sm:$0xff] %vm557, %v1588
      %1597 = vst.msk [vmem:[%s521 + $0x38] sm:$0xff] %vm557, %v1589
      %s1598 = smul.u32 8, %s26
      %p1599 = scmp.lt.s32.totalorder %s25, 7
      %s1600 = scalar_select %p1599, %s25, 7
      %p1601 = scmp.lt.s32.totalorder %s1598, 7
      %s1602 = scalar_select %p1601, %s1598, 7
      %s1603 = smul.addr %s1600, 8
      %s1604 = sadd.s32 %s1602, %s1603
      %s1605 = smul.addr %s1604, 8
      %s1606 = scalar_lea.vmem %s10, %s1605
      // Predicated region
      $region61: #{dit_forward.25} parent=59 // pred_check
        %p1607 = pneg %p300
      $region62: #{dit_forward.25} parent=59 // pred_check_branch
        %1609 = sbr.rel (%p1607) target = $region64
      $region63: #{dit_forward.25} parent=59 // pred_region
        %s1610 = smul.u32 8, %s26
      $region64: #{dit_forward.25} parent=59 // pred_fallthru
        _
    $region60: #{dit_forward.25} parent=5 // pred_fallthru
      _
    %p1611 = scmp.le.s32.totalorder 2, %s16
    // Predicated region
    $region65: #{dit_forward.25} parent=5 // pred_check
      %p1612 = pneg %p1611
    $region66: #{dit_forward.25} parent=5 // pred_check_branch
      %1614 = sbr.rel (%p1612) target = $region68
    $region67: #{dit_forward.25} parent=5 // pred_region
      %s1615 = ssub.s32 %s16, 2
      // Predicated region
      $region69: #{dit_forward.25} parent=67 // pred_check
        %p1616 = pneg %p306
      $region70: #{dit_forward.25} parent=67 // pred_check_branch
        %1618 = sbr.rel (%p1616) target = $region72
      $region71: #{dit_forward.25} parent=67 // pred_region
        %s1619 = smul.u32 8, %s28
        %p1620 = scmp.lt.s32.totalorder %s27, 7
        %s1621 = scalar_select %p1620, %s27, 7
        %p1622 = scmp.lt.s32.totalorder %s1619, 7
        %s1623 = scalar_select %p1622, %s1619, 7
        %s1624 = smul.addr %s1621, 8
        %s1625 = sadd.s32 %s1623, %s1624
        %s1626 = smul.addr %s1625, 8
        %s1627 = scalar_lea.vmem %s10, %s1626
      $region72: #{dit_forward.25} parent=67 // pred_fallthru
        _
    $region68: #{dit_forward.25} parent=5 // pred_fallthru
      _
  $region6: #{dit_forward.25} parent=0 // loop_footer
    %s20 = sadd.s32 1, %s16
  $region7: #{dit_forward.25} parent=0 // loop_footer_branch
    %15 = sbr.rel target = $region3
  $region8: #{dit_forward.25} parent=0 // loop_exit
    _

// kernel: dit_forward.28
$region0: #{dit_forward.28}
  #allocation0 [shape = 'u32[]', space=smem, size = 0x4, offset = 0x4, fixed_abs, tag = 'smem constant byte address 0x4 - core index']
  #allocation1 [shape = 'u32[144,128]{1,0:T(1,128)}', space=vmem, size = 0x12000, scoped, tag = 'internal scratch']
  %s0 = inlined_call_operand.vmem [shape: f32[2,64,128], index: 0, kind: input, shape index: {}]
  %s1 = inlined_call_operand.vmem [shape: bf16[128,32], index: 1, kind: input, shape index: {}]
  %s2 = inlined_call_operand.vmem [shape: f32[1,32], index: 2, kind: input, shape index: {}]
  %s3 = inlined_call_operand.vmem [shape: f32[2,1,32], index: 3, kind: input, shape index: {}]
  %s4 = inlined_call_operand.vmem [shape: f32[2,64,32], index: 4, kind: input, shape index: {}]
  %s5 = inlined_call_operand.vmem [shape: f32[2,64,32], index: 5, kind: output, shape index: {}]
  %s6 = sld [smem:[#allocation0]]
  $region53: #{dit_forward.28} parent=0
    _
  %s8 = ssub.s32 1, %s6
  %s9 = scalar_select 0, %s8, %s6
  loop: start=0, step=1, limit=4
  $region2: #{dit_forward.28} parent=0 // loop_pre_header
    _
  $region3: #{dit_forward.28} parent=0 // loop_header
    %s11 = sphi 0, %s15
    %p12 = scmp.ge.s32.totalorder %s11, 4
    %s18 = sphi 0, %s37
    %s19 = sphi 0, %s33
    %s20 = sphi 0, %s29
    %s21 = sphi 0, %s18
    %s22 = sphi 0, %s19
    %s23 = sphi 0, %s20
    %s24 = sphi 0, %s21
    %s25 = sphi 0, %s22
    %s26 = sphi 0, %s23
    %s42 = sphi 0, %s44
    %s45 = sphi 0, %s42
    %s46 = sphi 0, %s45
    %s62 = sphi 0, %s46
    %s68 = sphi 0, %s70
    %s71 = sphi 0, %s68
    %s72 = sphi 0, %s71
    %s88 = sphi 0, %s72
    %s94 = sphi 0, %s96
    %s97 = sphi 0, %s94
    %s98 = sphi 0, %s97
    %s114 = sphi 0, %s98
    %s122 = sphi 0, %s124
    %s125 = sphi 0, %s122
    %s126 = sphi 0, %s125
    %s142 = sphi 0, %s126
    %s152 = sphi 0, %s154
    %s155 = sphi 0, %s152
    %s156 = sphi 0, %s155
    %s172 = sphi 0, %s156
    %s182 = sphi 0, %s184
    %s185 = sphi 0, %s182
    %s186 = sphi 0, %s185
    %s202 = sphi 0, %s186
  $region4: #{dit_forward.28} parent=0 // loop_header_branch
    %14 = sbr.rel (%p12) target = $region8
  $region5: #{dit_forward.28} parent=0 // loop_body
    %s16 = ssub.s32 %s11, 1
    %s17 = ssub.s32 %s11, 2
    %s27 = sadd.s32 1, %s20
    %p28 = scmp.ge.s32.totalorder %s27, 1
    %s29 = scalar_select %p28, 0, %s27
    %s30 = sadd.s32 1, %s19
    %s31 = scalar_select %p28, %s30, %s19
    %p32 = scmp.ge.s32.totalorder %s31, 1
    %s33 = scalar_select %p32, 0, %s31
    %s34 = sadd.s32 1, %s18
    %s35 = scalar_select %p32, %s34, %s18
    %p36 = scmp.ge.s32.totalorder %s35, 2
    %s37 = scalar_select %p36, 0, %s35
    %s38 = ssub.s32 %s18, %s37
    %s39 = ssub.s32 %s19, %s33
    %s40 = sor.u32 %s38, %s39
    %p41 = scmp.eq.s32.totalorder %s40, 0
    %s43 = sadd.s32 %s42, 1
    %s44 = scalar_select %p41, %s42, %s43
    %p47 = pneg %p41
    %p48 = scmp.eq.s32.totalorder %s11, 1
    %p49 = por %p47, %p48
    %p50 = scmp.ne.s32.totalorder %s42, %s45
    %p51 = scmp.eq.s32.totalorder %s11, 0
    %p52 = por %p50, %p51
    %p53 = scmp.ne.s32.totalorder %s42, %s45
    %p54 = scmp.eq.s32.totalorder %s16, 1
    %p55 = por %p53, %p54
    %p56 = scmp.ne.s32.totalorder %s45, %s46
    %p57 = scmp.eq.s32.totalorder %s16, 0
    %p58 = por %p56, %p57
    %p59 = scmp.ne.s32.totalorder %s45, %s46
    %p60 = scmp.eq.s32.totalorder %s17, 1
    %p61 = por %p59, %p60
    %p63 = scmp.ne.s32.totalorder %s46, %s62
    %p64 = scmp.eq.s32.totalorder %s17, 0
    %p65 = por %p63, %p64
    %s66 = ssub.s32 %s20, %s29
    %p67 = scmp.eq.s32.totalorder %s66, 0
    %s69 = sadd.s32 %s68, 1
    %s70 = scalar_select %p67, %s68, %s69
    %p73 = pneg %p67
    %p74 = scmp.eq.s32.totalorder %s11, 1
    %p75 = por %p73, %p74
    %p76 = scmp.ne.s32.totalorder %s68, %s71
    %p77 = scmp.eq.s32.totalorder %s11, 0
    %p78 = por %p76, %p77
    %p79 = scmp.ne.s32.totalorder %s68, %s71
    %p80 = scmp.eq.s32.totalorder %s16, 1
    %p81 = por %p79, %p80
    %p82 = scmp.ne.s32.totalorder %s71, %s72
    %p83 = scmp.eq.s32.totalorder %s16, 0
    %p84 = por %p82, %p83
    %p85 = scmp.ne.s32.totalorder %s71, %s72
    %p86 = scmp.eq.s32.totalorder %s17, 1
    %p87 = por %p85, %p86
    %p89 = scmp.ne.s32.totalorder %s72, %s88
    %p90 = scmp.eq.s32.totalorder %s17, 0
    %p91 = por %p89, %p90
    %s92 = ssub.s32 %s20, %s29
    %p93 = scmp.eq.s32.totalorder %s92, 0
    %s95 = sadd.s32 %s94, 1
    %s96 = scalar_select %p93, %s94, %s95
    %p99 = pneg %p93
    %p100 = scmp.eq.s32.totalorder %s11, 1
    %p101 = por %p99, %p100
    %p102 = scmp.ne.s32.totalorder %s94, %s97
    %p103 = scmp.eq.s32.totalorder %s11, 0
    %p104 = por %p102, %p103
    %p105 = scmp.ne.s32.totalorder %s94, %s97
    %p106 = scmp.eq.s32.totalorder %s16, 1
    %p107 = por %p105, %p106
    %p108 = scmp.ne.s32.totalorder %s97, %s98
    %p109 = scmp.eq.s32.totalorder %s16, 0
    %p110 = por %p108, %p109
    %p111 = scmp.ne.s32.totalorder %s97, %s98
    %p112 = scmp.eq.s32.totalorder %s17, 1
    %p113 = por %p111, %p112
    %p115 = scmp.ne.s32.totalorder %s98, %s114
    %p116 = scmp.eq.s32.totalorder %s17, 0
    %p117 = por %p115, %p116
    %s118 = ssub.s32 %s18, %s37
    %s119 = ssub.s32 %s20, %s29
    %s120 = sor.u32 %s118, %s119
    %p121 = scmp.eq.s32.totalorder %s120, 0
    %s123 = sadd.s32 %s122, 1
    %s124 = scalar_select %p121, %s122, %s123
    %p127 = pneg %p121
    %p128 = scmp.eq.s32.totalorder %s11, 1
    %p129 = por %p127, %p128
    %p130 = scmp.ne.s32.totalorder %s122, %s125
    %p131 = scmp.eq.s32.totalorder %s11, 0
    %p132 = por %p130, %p131
    %p133 = scmp.ne.s32.totalorder %s122, %s125
    %p134 = scmp.eq.s32.totalorder %s16, 1
    %p135 = por %p133, %p134
    %p136 = scmp.ne.s32.totalorder %s125, %s126
    %p137 = scmp.eq.s32.totalorder %s16, 0
    %p138 = por %p136, %p137
    %p139 = scmp.ne.s32.totalorder %s125, %s126
    %p140 = scmp.eq.s32.totalorder %s17, 1
    %p141 = por %p139, %p140
    %p143 = scmp.ne.s32.totalorder %s126, %s142
    %p144 = scmp.eq.s32.totalorder %s17, 0
    %p145 = por %p143, %p144
    %s146 = ssub.s32 %s18, %s37
    %s147 = ssub.s32 %s19, %s33
    %s148 = sor.u32 %s146, %s147
    %s149 = ssub.s32 %s20, %s29
    %s150 = sor.u32 %s148, %s149
    %p151 = scmp.eq.s32.totalorder %s150, 0
    %s153 = sadd.s32 %s152, 1
    %s154 = scalar_select %p151, %s152, %s153
    %p157 = pneg %p151
    %p158 = scmp.eq.s32.totalorder %s11, 1
    %p159 = por %p157, %p158
    %p160 = scmp.ne.s32.totalorder %s152, %s155
    %p161 = scmp.eq.s32.totalorder %s11, 0
    %p162 = por %p160, %p161
    %p163 = scmp.ne.s32.totalorder %s152, %s155
    %p164 = scmp.eq.s32.totalorder %s16, 1
    %p165 = por %p163, %p164
    %p166 = scmp.ne.s32.totalorder %s155, %s156
    %p167 = scmp.eq.s32.totalorder %s16, 0
    %p168 = por %p166, %p167
    %p169 = scmp.ne.s32.totalorder %s155, %s156
    %p170 = scmp.eq.s32.totalorder %s17, 1
    %p171 = por %p169, %p170
    %p173 = scmp.ne.s32.totalorder %s156, %s172
    %p174 = scmp.eq.s32.totalorder %s17, 0
    %p175 = por %p173, %p174
    %s176 = ssub.s32 %s18, %s37
    %s177 = ssub.s32 %s19, %s33
    %s178 = sor.u32 %s176, %s177
    %s179 = ssub.s32 %s20, %s29
    %s180 = sor.u32 %s178, %s179
    %p181 = scmp.eq.s32.totalorder %s180, 0
    %s183 = sadd.s32 %s182, 1
    %s184 = scalar_select %p181, %s182, %s183
    %p187 = pneg %p181
    %p188 = scmp.eq.s32.totalorder %s11, 1
    %p189 = por %p187, %p188
    %p190 = scmp.ne.s32.totalorder %s182, %s185
    %p191 = scmp.eq.s32.totalorder %s11, 0
    %p192 = por %p190, %p191
    %p193 = scmp.ne.s32.totalorder %s182, %s185
    %p194 = scmp.eq.s32.totalorder %s16, 1
    %p195 = por %p193, %p194
    %p196 = scmp.ne.s32.totalorder %s185, %s186
    %p197 = scmp.eq.s32.totalorder %s16, 0
    %p198 = por %p196, %p197
    %p199 = scmp.ne.s32.totalorder %s185, %s186
    %p200 = scmp.eq.s32.totalorder %s17, 1
    %p201 = por %p199, %p200
    %p203 = scmp.ne.s32.totalorder %s186, %s202
    %p204 = scmp.eq.s32.totalorder %s17, 0
    %p205 = por %p203, %p204
    %p206 = scmp.le.s32.totalorder 1, %s11
    %p207 = scmp.lt.s32.totalorder %s11, 3
    %p208 = pnand %p206, %p207
    %p209 = pneg %p208
    // Predicated region
    $region9: #{dit_forward.28} parent=5 // pred_check
      _
    $region10: #{dit_forward.28} parent=5 // pred_check_branch
      %211 = sbr.rel (%p208) target = $region12
    $region11: #{dit_forward.28} parent=5 // pred_region
      %s212 = ssub.s32 %s11, 1
      // Predicated region
      $region13: #{dit_forward.28} parent=11 // pred_check
        %p213 = pneg %p84
      $region14: #{dit_forward.28} parent=11 // pred_check_branch
        %215 = sbr.rel (%p213) target = $region16
      $region15: #{dit_forward.28} parent=11 // pred_region
        %p216 = scmp.lt.s32.totalorder %s23, 0
        %s217 = scalar_select %p216, %s23, 0
        %s218 = smul.addr %s217, 4
        %s219 = scalar_lea.vmem %s1, %s218
      $region16: #{dit_forward.28} parent=11 // pred_fallthru
        _
      // Predicated region
      $region17: #{dit_forward.28} parent=11 // pred_check
        %p220 = pneg %p110
      $region18: #{dit_forward.28} parent=11 // pred_check_branch
        %222 = sbr.rel (%p220) target = $region20
      $region19: #{dit_forward.28} parent=11 // pred_region
        %p223 = scmp.lt.s32.totalorder %s23, 0
        %s224 = scalar_select %p223, %s23, 0
        %s225 = scalar_lea.vmem %s2, %s224
      $region20: #{dit_forward.28} parent=11 // pred_fallthru
        _
    $region12: #{dit_forward.28} parent=5 // pred_fallthru
      _
    %p226 = scmp.lt.s32.totalorder %s11, 2
    // Predicated region
    $region21: #{dit_forward.28} parent=5 // pred_check
      %p227 = pneg %p226
    $region22: #{dit_forward.28} parent=5 // pred_check_branch
      %229 = sbr.rel (%p227) target = $region24
    $region23: #{dit_forward.28} parent=5 // pred_region
      // Predicated region
      $region25: #{dit_forward.28} parent=23 // pred_check
        %p230 = pneg %p52
      $region26: #{dit_forward.28} parent=23 // pred_check_branch
        %232 = sbr.rel (%p230) target = $region28
      $region27: #{dit_forward.28} parent=23 // pred_region
        %s233 = smul.u32 8, %s19
        %p234 = scmp.lt.s32.totalorder %s18, 1
        %s235 = scalar_select %p234, %s18, 1
        %p236 = scmp.lt.s32.totalorder %s233, 7
        %s237 = scalar_select %p236, %s233, 7
        %s238 = smul.addr %s235, 8
        %s239 = sadd.s32 %s237, %s238
        %s240 = smul.addr %s239, 8
        %s241 = scalar_lea.vmem %s0, %s240
        %s242 = smul.u32 8, %s19
      $region28: #{dit_forward.28} parent=23 // pred_fallthru
        _
      // Predicated region
      $region29: #{dit_forward.28} parent=23 // pred_check
        %p243 = pneg %p132
      $region30: #{dit_forward.28} parent=23 // pred_check_branch
        %245 = sbr.rel (%p243) target = $region32
      $region31: #{dit_forward.28} parent=23 // pred_region
        %p246 = scmp.lt.s32.totalorder %s18, 1
        %s247 = scalar_select %p246, %s18, 1
        %p248 = scmp.lt.s32.totalorder %s20, 0
        %s249 = scalar_select %p248, %s20, 0
        %s250 = sadd.s32 %s249, %s247
        %s251 = scalar_lea.vmem %s3, %s250
      $region32: #{dit_forward.28} parent=23 // pred_fallthru
        _
      // Predicated region
      $region33: #{dit_forward.28} parent=23 // pred_check
        %p252 = pneg %p162
      $region34: #{dit_forward.28} parent=23 // pred_check_branch
        %254 = sbr.rel (%p252) target = $region36
      $region35: #{dit_forward.28} parent=23 // pred_region
        %s255 = smul.u32 8, %s19
        %p256 = scmp.lt.s32.totalorder %s18, 1
        %s257 = scalar_select %p256, %s18, 1
        %p258 = scmp.lt.s32.totalorder %s255, 7
        %s259 = scalar_select %p258, %s255, 7
        %p260 = scmp.lt.s32.totalorder %s20, 0
        %s261 = scalar_select %p260, %s20, 0
        %s262 = sadd.s32 %s261, %s259
        %s263 = smul.addr %s257, 8
        %s264 = sadd.s32 %s262, %s263
        %s265 = smul.addr %s264, 8
        %s266 = scalar_lea.vmem %s4, %s265
        %s267 = smul.u32 8, %s19
      $region36: #{dit_forward.28} parent=23 // pred_fallthru
        _
    $region24: #{dit_forward.28} parent=5 // pred_fallthru
      _
    %p268 = scmp.le.s32.totalorder 1, %s11
    %p269 = scmp.lt.s32.totalorder %s11, 3
    %p270 = pnand %p268, %p269
    %p271 = pneg %p270
    // Predicated region
    $region37: #{dit_forward.28} parent=5 // pred_check
      _
    $region38: #{dit_forward.28} parent=5 // pred_check_branch
      %273 = sbr.rel (%p270) target = $region40
    $region39: #{dit_forward.28} parent=5 // pred_region
      %s274 = ssub.s32 %s11, 1
      %s275 = smul.u32 8, %s22
      %p276 = scmp.lt.s32.totalorder %s21, 1
      %s277 = scalar_select %p276, %s21, 1
      %p278 = scmp.lt.s32.totalorder %s275, 7
      %s279 = scalar_select %p278, %s275, 7
      %s280 = smul.addr %s277, 8
      %s281 = sadd.s32 %s279, %s280
      %s282 = smul.addr %s281, 8
      %s283 = scalar_lea.vmem %s0, %s282
      %p284 = pneg %p58
      %p285 = pneg %p55
      %p286 = scmp.lt.s32.totalorder %s23, 0
      %s287 = scalar_select %p286, %s23, 0
      %s288 = smul.addr %s287, 4
      %s289 = scalar_lea.vmem %s1, %s288
      %p290 = pneg %p84
      %p291 = pneg %p81
      %p292 = scmp.lt.s32.totalorder %s23, 0
      %s293 = scalar_select %p292, %s23, 0
      %s294 = scalar_lea.vmem %s2, %s293
      %p295 = pneg %p110
      %p296 = pneg %p107
      %p297 = scmp.lt.s32.totalorder %s21, 1
      %s298 = scalar_select %p297, %s21, 1
      %p299 = scmp.lt.s32.totalorder %s23, 0
      %s300 = scalar_select %p299, %s23, 0
      %s301 = sadd.s32 %s300, %s298
      %s302 = scalar_lea.vmem %s3, %s301
      %p303 = pneg %p138
      %p304 = pneg %p135
      %s305 = smul.u32 8, %s22
      %p306 = scmp.lt.s32.totalorder %s21, 1
      %s307 = scalar_select %p306, %s21, 1
      %p308 = scmp.lt.s32.totalorder %s305, 7
      %s309 = scalar_select %p308, %s305, 7
      %p310 = scmp.lt.s32.totalorder %s23, 0
      %s311 = scalar_select %p310, %s23, 0
      %s312 = sadd.s32 %s311, %s309
      %s313 = smul.addr %s307, 8
      %s314 = sadd.s32 %s312, %s313
      %s315 = smul.addr %s314, 8
      %s316 = scalar_lea.vmem %s4, %s315
      %p317 = pneg %p168
      %p318 = pneg %p165
      %p319 = pneg %p198
      %p320 = pneg %p195
      %s321 = smul.u32 8, %s22
      %p322 = scmp.lt.s32.totalorder %s21, 1
      %s323 = scalar_select %p322, %s21, 1
      %p324 = scmp.lt.s32.totalorder %s321, 7
      %s325 = scalar_select %p324, %s321, 7
      %p326 = scmp.lt.s32.totalorder %s23, 0
      %s327 = scalar_select %p326, %s23, 0
      %s328 = sadd.s32 %s327, %s325
      %s329 = smul.addr %s323, 8
      %s330 = sadd.s32 %s328, %s329
      %s331 = smul.addr %s330, 8
      %s332 = scalar_lea.vmem %s5, %s331
      %s333 = smul.u32 8, %s22
      %p334 = scmp.lt.s32.totalorder %s21, 1
      %s335 = scalar_select %p334, %s21, 1
      %p336 = scmp.lt.s32.totalorder %s333, 7
      %s337 = scalar_select %p336, %s333, 7
      %s338 = smul.addr %s335, 8
      %s339 = sadd.s32 %s337, %s338
      %s340 = smul.addr %s339, 8
      %s341 = scalar_lea.vmem %s0, %s340
      %s342 = smul.u32 8, %s22
      %p343 = scmp.lt.s32.totalorder %s23, 0
      %s344 = scalar_select %p343, %s23, 0
      %s345 = smul.addr %s344, 4
      %s346 = scalar_lea.vmem %s1, %s345
      %p347 = scmp.lt.s32.totalorder %s23, 0
      %s348 = scalar_select %p347, %s23, 0
      %s349 = scalar_lea.vmem %s2, %s348
      %p350 = scmp.lt.s32.totalorder %s21, 1
      %s351 = scalar_select %p350, %s21, 1
      %p352 = scmp.lt.s32.totalorder %s23, 0
      %s353 = scalar_select %p352, %s23, 0
      %s354 = sadd.s32 %s353, %s351
      %s355 = scalar_lea.vmem %s3, %s354
      %s356 = smul.u32 8, %s22
      %p357 = scmp.lt.s32.totalorder %s21, 1
      %s358 = scalar_select %p357, %s21, 1
      %p359 = scmp.lt.s32.totalorder %s356, 7
      %s360 = scalar_select %p359, %s356, 7
      %p361 = scmp.lt.s32.totalorder %s23, 0
      %s362 = scalar_select %p361, %s23, 0
      %s363 = sadd.s32 %s362, %s360
      %s364 = smul.addr %s358, 8
      %s365 = sadd.s32 %s363, %s364
      %s366 = smul.addr %s365, 8
      %s367 = scalar_lea.vmem %s4, %s366
      %s368 = smul.u32 8, %s22
      %s369 = smul.u32 8, %s22
      %p370 = scmp.lt.s32.totalorder %s21, 1
      %s371 = scalar_select %p370, %s21, 1
      %p372 = scmp.lt.s32.totalorder %s369, 7
      %s373 = scalar_select %p372, %s369, 7
      %p374 = scmp.lt.s32.totalorder %s23, 0
      %s375 = scalar_select %p374, %s23, 0
      %s376 = sadd.s32 %s375, %s373
      %s377 = smul.addr %s371, 8
      %s378 = sadd.s32 %s376, %s377
      %s379 = smul.addr %s378, 8
      %s380 = scalar_lea.vmem %s5, %s379
      %s381 = smul.u32 8, %s22
      %v383 = vld [vmem:[%s341] sm:$0xff]
      %v384 = vld [vmem:[%s341 + $0x8] sm:$0xff]
      %v385 = vld [vmem:[%s341 + $0x10] sm:$0xff]
      %v386 = vld [vmem:[%s341 + $0x18] sm:$0xff]
      %v387 = vld [vmem:[%s341 + $0x20] sm:$0xff]
      %v388 = vld [vmem:[%s341 + $0x28] sm:$0xff]
      %v389 = vld [vmem:[%s341 + $0x30] sm:$0xff]
      %v390 = vld [vmem:[%s341 + $0x38] sm:$0xff]
      %v391 = vpack.c.bf16 %v384, %v383
      %v392 = vpack.c.bf16 %v386, %v385
      %v393 = vpack.c.bf16 %v388, %v387
      %v394 = vpack.c.bf16 %v390, %v389
      %v395 = vld [vmem:[%s346] sm:$0xf]
      %v396 = vld [vmem:[%s346 + $0x4] sm:$0xf]
      %v397 = vld [vmem:[%s346 + $0x8] sm:$0xf]
      %v398 = vld [vmem:[%s346 + $0xc] sm:$0xf]
      %v399 = vld [vmem:[%s346 + $0x10] sm:$0xf]
      %v400 = vld [vmem:[%s346 + $0x14] sm:$0xf]
      %v401 = vld [vmem:[%s346 + $0x18] sm:$0xf]
      %v402 = vld [vmem:[%s346 + $0x1c] sm:$0xf]
      %v403 = vld [vmem:[%s346 + $0x20] sm:$0xf]
      %v404 = vld [vmem:[%s346 + $0x24] sm:$0xf]
      %v405 = vld [vmem:[%s346 + $0x28] sm:$0xf]
      %v406 = vld [vmem:[%s346 + $0x2c] sm:$0xf]
      %v407 = vld [vmem:[%s346 + $0x30] sm:$0xf]
      %v408 = vld [vmem:[%s346 + $0x34] sm:$0xf]
      %v409 = vld [vmem:[%s346 + $0x38] sm:$0xf]
      %v410 = vld [vmem:[%s346 + $0x3c] sm:$0xf]
      %v411 = vld [vmem:[%s349] sm:$0x1]
      %v413 = vlaneseq
      %v414 = vshrl.u32 %v413, 7
      %v415 = vsub.s32 0, %v414
      %v416 = vrot.slane %v411, %v415
      %v434 = vunpack.c.l.b16 %v395
      %v435 = vunpack.c.l.b16 %v396
      %v436 = vunpack.c.l.b16 %v397
      %v437 = vunpack.c.l.b16 %v398
      %v438 = vunpack.c.l.b16 %v399
      %v439 = vunpack.c.l.b16 %v400
      %v440 = vunpack.c.l.b16 %v401
      %v441 = vunpack.c.l.b16 %v402
      %v442 = vunpack.c.l.b16 %v403
      %v443 = vunpack.c.l.b16 %v404
      %v444 = vunpack.c.l.b16 %v405
      %v445 = vunpack.c.l.b16 %v406
      %v446 = vunpack.c.l.b16 %v407
      %v447 = vunpack.c.l.b16 %v408
      %v448 = vunpack.c.l.b16 %v409
      %v449 = vunpack.c.l.b16 %v410
      %v450 = vpack.c.b16 %v435, %v434
      %v451 = vpack.c.b16 %v437, %v436
      %v452 = vpack.c.b16 %v439, %v438
      %v453 = vpack.c.b16 %v441, %v440
      %v454 = vpack.c.b16 %v443, %v442
      %v455 = vpack.c.b16 %v445, %v444
      %v456 = vpack.c.b16 %v447, %v446
      %v457 = vpack.c.b16 %v449, %v448
      %466 = vmatprep.subr.bf16.mxu0 0
      %467 = vmatpush1.bf16.msra.mxu0 %v457
      %468 = vmatprep.subr.bf16.mxu0 0
      %469 = vmatpush1.bf16.msra.mxu0 %v456
      %470 = vmatprep.subr.bf16.mxu0 0
      %471 = vmatpush1.bf16.msra.mxu0 %v455
      %472 = vmatprep.subr.bf16.mxu0 0
      %473 = vmatpush1.bf16.msra.mxu0 %v454
      %474 = vmatprep.subr.bf16.mxu0 0
      %475 = vmatpush1.bf16.msra.mxu0 %v453
      %476 = vmatprep.subr.bf16.mxu0 0
      %477 = vmatpush1.bf16.msra.mxu0 %v452
      %478 = vmatprep.subr.bf16.mxu0 0
      %479 = vmatpush1.bf16.msra.mxu0 %v451
      %480 = vmatprep.subr.bf16.mxu0 0
      %481 = vmatpush1.bf16.msra.mxu0 %v450
      %482 = vmatprep.subr.bf16.mxu0 0
      %483 = vmatpush2.bf16.msra.mxu0 0
      %484 = vmatprep.subr.bf16.mxu0 0
      %485 = vmatpush2.bf16.msra.mxu0 0
      %486 = vmatprep.subr.bf16.mxu0 0
      %487 = vmatpush2.bf16.msra.mxu0 0
      %488 = vmatprep.subr.bf16.mxu0 0
      %489 = vmatpush2.bf16.msra.mxu0 0
      %490 = vmatprep.subr.bf16.mxu0 0
      %491 = vmatpush2.bf16.msra.mxu0 0
      %492 = vmatprep.subr.bf16.mxu0 0
      %493 = vmatpush2.bf16.msra.mxu0 0
      %494 = vmatprep.subr.bf16.mxu0 0
      %495 = vmatpush2.bf16.msra.mxu0 0
      %496 = vmatprep.subr.bf16.mxu0 0
      %497 = vmatpush2.bf16.msra.mxu0 0
      %498 = vmatprep.mubr.bf16.mxu0 0
      %499 = vmatmul.mubr.bf16.gmra.mxu0 %v391
      %v500 = vpop.f32.mrf.mxu0
      %v501 = vadd.f32 %v416, %v500
      %v502 = vpop.f32.mrf.mxu0
      %v503 = vpop.f32.mrf.mxu0
      %v504 = vadd.f32 %v416, %v503
      %v505 = vpop.f32.mrf.mxu0
      %506 = vmatprep.mubr.bf16.mxu0 0
      %507 = vmatmul.mubr.bf16.gmra.mxu0 %v392
      %v508 = vpop.f32.mrf.mxu0
      %v509 = vadd.f32 %v416, %v508
      %v510 = vpop.f32.mrf.mxu0
      %v511 = vpop.f32.mrf.mxu0
      %v512 = vadd.f32 %v416, %v511
      %v513 = vpop.f32.mrf.mxu0
      %514 = vmatprep.mubr.bf16.mxu0 0
      %515 = vmatmul.mubr.bf16.gmra.mxu0 %v393
      %v516 = vpop.f32.mrf.mxu0
      %v517 = vadd.f32 %v416, %v516
      %v518 = vpop.f32.mrf.mxu0
      %v519 = vpop.f32.mrf.mxu0
      %v520 = vadd.f32 %v416, %v519
      %v521 = vpop.f32.mrf.mxu0
      %522 = vmatprep.mubr.bf16.mxu0 0
      %523 = vmatmul.mubr.bf16.gmra.mxu0 %v394
      %v524 = vpop.f32.mrf.mxu0
      %v525 = vadd.f32 %v416, %v524
      %v526 = vpop.f32.mrf.mxu0
      %v527 = vpop.f32.mrf.mxu0
      %v528 = vadd.f32 %v416, %v527
      %v529 = vpop.f32.mrf.mxu0
      %530 = vdwg.mxu0
      %v531 = vld [vmem:[%s367] sm:$0xff]
      %v532 = vld [vmem:[%s367 + $0x8] sm:$0xff]
      %v533 = vld [vmem:[%s367 + $0x10] sm:$0xff]
      %v534 = vld [vmem:[%s367 + $0x18] sm:$0xff]
      %v535 = vld [vmem:[%s367 + $0x20] sm:$0xff]
      %v536 = vld [vmem:[%s367 + $0x28] sm:$0xff]
      %v537 = vld [vmem:[%s367 + $0x30] sm:$0xff]
      %v538 = vld [vmem:[%s367 + $0x38] sm:$0xff]
      %v539 = vld [vmem:[%s355] sm:$0x1]
      %v541 = vlaneseq
      %v542 = vshrl.u32 %v541, 7
      %v543 = vsub.s32 0, %v542
      %v544 = vrot.slane %v539, %v543
      %v546 = vmul.f32 %v544, %v501
      %v547 = vmul.f32 %v544, %v504
      %v548 = vmul.f32 %v544, %v509
      %v549 = vmul.f32 %v544, %v512
      %v550 = vmul.f32 %v544, %v517
      %v551 = vmul.f32 %v544, %v520
      %v552 = vmul.f32 %v544, %v525
      %v553 = vmul.f32 %v544, %v528
      %v554 = vadd.f32 %v531, %v546
      %v555 = vadd.f32 %v532, %v547
      %v556 = vadd.f32 %v533, %v548
      %v557 = vadd.f32 %v534, %v549
      %v558 = vadd.f32 %v535, %v550
      %v559 = vadd.f32 %v536, %v551
      %v560 = vadd.f32 %v537, %v552
      %v561 = vadd.f32 %v538, %v553
      %vm562 = vcmask 261120
      %563 = vst.msk [vmem:[%s380] sm:$0xff] %vm562, %v554
      %564 = vst.msk [vmem:[%s380 + $0x8] sm:$0xff] %vm562, %v555
      %565 = vst.msk [vmem:[%s380 + $0x10] sm:$0xff] %vm562, %v556
      %566 = vst.msk [vmem:[%s380 + $0x18] sm:$0xff] %vm562, %v557
      %567 = vst.msk [vmem:[%s380 + $0x20] sm:$0xff] %vm562, %v558
      %568 = vst.msk [vmem:[%s380 + $0x28] sm:$0xff] %vm562, %v559
      %569 = vst.msk [vmem:[%s380 + $0x30] sm:$0xff] %vm562, %v560
      %570 = vst.msk [vmem:[%s380 + $0x38] sm:$0xff] %vm562, %v561
      %s571 = smul.u32 8, %s22
      %p572 = scmp.lt.s32.totalorder %s21, 1
      %s573 = scalar_select %p572, %s21, 1
      %p574 = scmp.lt.s32.totalorder %s571, 7
      %s575 = scalar_select %p574, %s571, 7
      %p576 = scmp.lt.s32.totalorder %s23, 0
      %s577 = scalar_select %p576, %s23, 0
      %s578 = sadd.s32 %s577, %s575
      %s579 = smul.addr %s573, 8
      %s580 = sadd.s32 %s578, %s579
      %s581 = smul.addr %s580, 8
      %s582 = scalar_lea.vmem %s5, %s581
      // Predicated region
      $region41: #{dit_forward.28} parent=39 // pred_check
        %p583 = pneg %p195
      $region42: #{dit_forward.28} parent=39 // pred_check_branch
        %585 = sbr.rel (%p583) target = $region44
      $region43: #{dit_forward.28} parent=39 // pred_region
        %s586 = smul.u32 8, %s22
      $region44: #{dit_forward.28} parent=39 // pred_fallthru
        _
    $region40: #{dit_forward.28} parent=5 // pred_fallthru
      _
    %p587 = scmp.le.s32.totalorder 2, %s11
    // Predicated region
    $region45: #{dit_forward.28} parent=5 // pred_check
      %p588 = pneg %p587
    $region46: #{dit_forward.28} parent=5 // pred_check_branch
      %590 = sbr.rel (%p588) target = $region48
    $region47: #{dit_forward.28} parent=5 // pred_region
      %s591 = ssub.s32 %s11, 2
      // Predicated region
      $region49: #{dit_forward.28} parent=47 // pred_check
        %p592 = pneg %p201
      $region50: #{dit_forward.28} parent=47 // pred_check_branch
        %594 = sbr.rel (%p592) target = $region52
      $region51: #{dit_forward.28} parent=47 // pred_region
        %s595 = smul.u32 8, %s25
        %p596 = scmp.lt.s32.totalorder %s24, 1
        %s597 = scalar_select %p596, %s24, 1
        %p598 = scmp.lt.s32.totalorder %s595, 7
        %s599 = scalar_select %p598, %s595, 7
        %p600 = scmp.lt.s32.totalorder %s26, 0
        %s601 = scalar_select %p600, %s26, 0
        %s602 = sadd.s32 %s601, %s599
        %s603 = smul.addr %s597, 8
        %s604 = sadd.s32 %s602, %s603
        %s605 = smul.addr %s604, 8
        %s606 = scalar_lea.vmem %s5, %s605
      $region52: #{dit_forward.28} parent=47 // pred_fallthru
        _
    $region48: #{dit_forward.28} parent=5 // pred_fallthru
      _
  $region6: #{dit_forward.28} parent=0 // loop_footer
    %s15 = sadd.s32 1, %s11
  $region7: #{dit_forward.28} parent=0 // loop_footer_branch
    %10 = sbr.rel target = $region3
  $region8: #{dit_forward.28} parent=0 // loop_exit
    _

// kernel: dit_forward.35
$region0: #{dit_forward.35}
  #allocation0 [shape = 'u32[]', space=smem, size = 0x4, offset = 0x4, fixed_abs, tag = 'smem constant byte address 0x4 - core index']
  #allocation1 [shape = 'u32[144,128]{1,0:T(1,128)}', space=vmem, size = 0x12000, scoped, tag = 'internal scratch']
  %s0 = inlined_call_operand.vmem [shape: f32[2,64,32], index: 0, kind: input, shape index: {}]
  %s1 = inlined_call_operand.vmem [shape: f32[2,1,32], index: 1, kind: input, shape index: {}]
  %s2 = inlined_call_operand.vmem [shape: f32[2,1,32], index: 2, kind: input, shape index: {}]
  %s3 = inlined_call_operand.vmem [shape: bf16[32,16], index: 3, kind: input, shape index: {}]
  %s4 = inlined_call_operand.vmem [shape: f32[1,16], index: 4, kind: input, shape index: {}]
  %s5 = inlined_call_operand.vmem [shape: f32[2,64,16], index: 5, kind: output, shape index: {}]
  %s6 = sld [smem:[#allocation0]]
  $region53: #{dit_forward.35} parent=0
    _
  %s8 = ssub.s32 1, %s6
  %s9 = scalar_select 0, %s8, %s6
  loop: start=0, step=1, limit=4
  $region2: #{dit_forward.35} parent=0 // loop_pre_header
    _
  $region3: #{dit_forward.35} parent=0 // loop_header
    %s11 = sphi 0, %s15
    %p12 = scmp.ge.s32.totalorder %s11, 4
    %s18 = sphi 0, %s37
    %s19 = sphi 0, %s33
    %s20 = sphi 0, %s29
    %s21 = sphi 0, %s18
    %s22 = sphi 0, %s19
    %s23 = sphi 0, %s20
    %s24 = sphi 0, %s21
    %s25 = sphi 0, %s22
    %s26 = sphi 0, %s23
    %s42 = sphi 0, %s44
    %s45 = sphi 0, %s42
    %s46 = sphi 0, %s45
    %s62 = sphi 0, %s46
    %s68 = sphi 0, %s70
    %s71 = sphi 0, %s68
    %s72 = sphi 0, %s71
    %s88 = sphi 0, %s72
    %s94 = sphi 0, %s96
    %s97 = sphi 0, %s94
    %s98 = sphi 0, %s97
    %s114 = sphi 0, %s98
    %s120 = sphi 0, %s122
    %s123 = sphi 0, %s120
    %s124 = sphi 0, %s123
    %s140 = sphi 0, %s124
    %s146 = sphi 0, %s148
    %s149 = sphi 0, %s146
    %s150 = sphi 0, %s149
    %s166 = sphi 0, %s150
    %s176 = sphi 0, %s178
    %s179 = sphi 0, %s176
    %s180 = sphi 0, %s179
    %s196 = sphi 0, %s180
  $region4: #{dit_forward.35} parent=0 // loop_header_branch
    %14 = sbr.rel (%p12) target = $region8
  $region5: #{dit_forward.35} parent=0 // loop_body
    %s16 = ssub.s32 %s11, 1
    %s17 = ssub.s32 %s11, 2
    %s27 = sadd.s32 1, %s20
    %p28 = scmp.ge.s32.totalorder %s27, 1
    %s29 = scalar_select %p28, 0, %s27
    %s30 = sadd.s32 1, %s19
    %s31 = scalar_select %p28, %s30, %s19
    %p32 = scmp.ge.s32.totalorder %s31, 1
    %s33 = scalar_select %p32, 0, %s31
    %s34 = sadd.s32 1, %s18
    %s35 = scalar_select %p32, %s34, %s18
    %p36 = scmp.ge.s32.totalorder %s35, 2
    %s37 = scalar_select %p36, 0, %s35
    %s38 = ssub.s32 %s18, %s37
    %s39 = ssub.s32 %s19, %s33
    %s40 = sor.u32 %s38, %s39
    %p41 = scmp.eq.s32.totalorder %s40, 0
    %s43 = sadd.s32 %s42, 1
    %s44 = scalar_select %p41, %s42, %s43
    %p47 = pneg %p41
    %p48 = scmp.eq.s32.totalorder %s11, 1
    %p49 = por %p47, %p48
    %p50 = scmp.ne.s32.totalorder %s42, %s45
    %p51 = scmp.eq.s32.totalorder %s11, 0
    %p52 = por %p50, %p51
    %p53 = scmp.ne.s32.totalorder %s42, %s45
    %p54 = scmp.eq.s32.totalorder %s16, 1
    %p55 = por %p53, %p54
    %p56 = scmp.ne.s32.totalorder %s45, %s46
    %p57 = scmp.eq.s32.totalorder %s16, 0
    %p58 = por %p56, %p57
    %p59 = scmp.ne.s32.totalorder %s45, %s46
    %p60 = scmp.eq.s32.totalorder %s17, 1
    %p61 = por %p59, %p60
    %p63 = scmp.ne.s32.totalorder %s46, %s62
    %p64 = scmp.eq.s32.totalorder %s17, 0
    %p65 = por %p63, %p64
    %s66 = ssub.s32 %s18, %s37
    %p67 = scmp.eq.s32.totalorder %s66, 0
    %s69 = sadd.s32 %s68, 1
    %s70 = scalar_select %p67, %s68, %s69
    %p73 = pneg %p67
    %p74 = scmp.eq.s32.totalorder %s11, 1
    %p75 = por %p73, %p74
    %p76 = scmp.ne.s32.totalorder %s68, %s71
    %p77 = scmp.eq.s32.totalorder %s11, 0
    %p78 = por %p76, %p77
    %p79 = scmp.ne.s32.totalorder %s68, %s71
    %p80 = scmp.eq.s32.totalorder %s16, 1
    %p81 = por %p79, %p80
    %p82 = scmp.ne.s32.totalorder %s71, %s72
    %p83 = scmp.eq.s32.totalorder %s16, 0
    %p84 = por %p82, %p83
    %p85 = scmp.ne.s32.totalorder %s71, %s72
    %p86 = scmp.eq.s32.totalorder %s17, 1
    %p87 = por %p85, %p86
    %p89 = scmp.ne.s32.totalorder %s72, %s88
    %p90 = scmp.eq.s32.totalorder %s17, 0
    %p91 = por %p89, %p90
    %s92 = ssub.s32 %s18, %s37
    %p93 = scmp.eq.s32.totalorder %s92, 0
    %s95 = sadd.s32 %s94, 1
    %s96 = scalar_select %p93, %s94, %s95
    %p99 = pneg %p93
    %p100 = scmp.eq.s32.totalorder %s11, 1
    %p101 = por %p99, %p100
    %p102 = scmp.ne.s32.totalorder %s94, %s97
    %p103 = scmp.eq.s32.totalorder %s11, 0
    %p104 = por %p102, %p103
    %p105 = scmp.ne.s32.totalorder %s94, %s97
    %p106 = scmp.eq.s32.totalorder %s16, 1
    %p107 = por %p105, %p106
    %p108 = scmp.ne.s32.totalorder %s97, %s98
    %p109 = scmp.eq.s32.totalorder %s16, 0
    %p110 = por %p108, %p109
    %p111 = scmp.ne.s32.totalorder %s97, %s98
    %p112 = scmp.eq.s32.totalorder %s17, 1
    %p113 = por %p111, %p112
    %p115 = scmp.ne.s32.totalorder %s98, %s114
    %p116 = scmp.eq.s32.totalorder %s17, 0
    %p117 = por %p115, %p116
    %s118 = ssub.s32 %s20, %s29
    %p119 = scmp.eq.s32.totalorder %s118, 0
    %s121 = sadd.s32 %s120, 1
    %s122 = scalar_select %p119, %s120, %s121
    %p125 = pneg %p119
    %p126 = scmp.eq.s32.totalorder %s11, 1
    %p127 = por %p125, %p126
    %p128 = scmp.ne.s32.totalorder %s120, %s123
    %p129 = scmp.eq.s32.totalorder %s11, 0
    %p130 = por %p128, %p129
    %p131 = scmp.ne.s32.totalorder %s120, %s123
    %p132 = scmp.eq.s32.totalorder %s16, 1
    %p133 = por %p131, %p132
    %p134 = scmp.ne.s32.totalorder %s123, %s124
    %p135 = scmp.eq.s32.totalorder %s16, 0
    %p136 = por %p134, %p135
    %p137 = scmp.ne.s32.totalorder %s123, %s124
    %p138 = scmp.eq.s32.totalorder %s17, 1
    %p139 = por %p137, %p138
    %p141 = scmp.ne.s32.totalorder %s124, %s140
    %p142 = scmp.eq.s32.totalorder %s17, 0
    %p143 = por %p141, %p142
    %s144 = ssub.s32 %s20, %s29
    %p145 = scmp.eq.s32.totalorder %s144, 0
    %s147 = sadd.s32 %s146, 1
    %s148 = scalar_select %p145, %s146, %s147
    %p151 = pneg %p145
    %p152 = scmp.eq.s32.totalorder %s11, 1
    %p153 = por %p151, %p152
    %p154 = scmp.ne.s32.totalorder %s146, %s149
    %p155 = scmp.eq.s32.totalorder %s11, 0
    %p156 = por %p154, %p155
    %p157 = scmp.ne.s32.totalorder %s146, %s149
    %p158 = scmp.eq.s32.totalorder %s16, 1
    %p159 = por %p157, %p158
    %p160 = scmp.ne.s32.totalorder %s149, %s150
    %p161 = scmp.eq.s32.totalorder %s16, 0
    %p162 = por %p160, %p161
    %p163 = scmp.ne.s32.totalorder %s149, %s150
    %p164 = scmp.eq.s32.totalorder %s17, 1
    %p165 = por %p163, %p164
    %p167 = scmp.ne.s32.totalorder %s150, %s166
    %p168 = scmp.eq.s32.totalorder %s17, 0
    %p169 = por %p167, %p168
    %s170 = ssub.s32 %s18, %s37
    %s171 = ssub.s32 %s19, %s33
    %s172 = sor.u32 %s170, %s171
    %s173 = ssub.s32 %s20, %s29
    %s174 = sor.u32 %s172, %s173
    %p175 = scmp.eq.s32.totalorder %s174, 0
    %s177 = sadd.s32 %s176, 1
    %s178 = scalar_select %p175, %s176, %s177
    %p181 = pneg %p175
    %p182 = scmp.eq.s32.totalorder %s11, 1
    %p183 = por %p181, %p182
    %p184 = scmp.ne.s32.totalorder %s176, %s179
    %p185 = scmp.eq.s32.totalorder %s11, 0
    %p186 = por %p184, %p185
    %p187 = scmp.ne.s32.totalorder %s176, %s179
    %p188 = scmp.eq.s32.totalorder %s16, 1
    %p189 = por %p187, %p188
    %p190 = scmp.ne.s32.totalorder %s179, %s180
    %p191 = scmp.eq.s32.totalorder %s16, 0
    %p192 = por %p190, %p191
    %p193 = scmp.ne.s32.totalorder %s179, %s180
    %p194 = scmp.eq.s32.totalorder %s17, 1
    %p195 = por %p193, %p194
    %p197 = scmp.ne.s32.totalorder %s180, %s196
    %p198 = scmp.eq.s32.totalorder %s17, 0
    %p199 = por %p197, %p198
    %p200 = scmp.le.s32.totalorder 1, %s11
    %p201 = scmp.lt.s32.totalorder %s11, 3
    %p202 = pnand %p200, %p201
    %p203 = pneg %p202
    // Predicated region
    $region9: #{dit_forward.35} parent=5 // pred_check
      _
    $region10: #{dit_forward.35} parent=5 // pred_check_branch
      %205 = sbr.rel (%p202) target = $region12
    $region11: #{dit_forward.35} parent=5 // pred_region
      %s206 = ssub.s32 %s11, 1
      // Predicated region
      $region13: #{dit_forward.35} parent=11 // pred_check
        %p207 = pneg %p136
      $region14: #{dit_forward.35} parent=11 // pred_check_branch
        %209 = sbr.rel (%p207) target = $region16
      $region15: #{dit_forward.35} parent=11 // pred_region
        %p210 = scmp.lt.s32.totalorder %s23, 0
        %s211 = scalar_select %p210, %s23, 0
        %s212 = smul.addr %s211, 4
        %s213 = scalar_lea.vmem %s3, %s212
      $region16: #{dit_forward.35} parent=11 // pred_fallthru
        _
      // Predicated region
      $region17: #{dit_forward.35} parent=11 // pred_check
        %p214 = pneg %p162
      $region18: #{dit_forward.35} parent=11 // pred_check_branch
        %216 = sbr.rel (%p214) target = $region20
      $region19: #{dit_forward.35} parent=11 // pred_region
        %p217 = scmp.lt.s32.totalorder %s23, 0
        %s218 = scalar_select %p217, %s23, 0
        %s219 = scalar_lea.vmem %s4, %s218
      $region20: #{dit_forward.35} parent=11 // pred_fallthru
        _
    $region12: #{dit_forward.35} parent=5 // pred_fallthru
      _
    %p220 = scmp.lt.s32.totalorder %s11, 2
    // Predicated region
    $region21: #{dit_forward.35} parent=5 // pred_check
      %p221 = pneg %p220
    $region22: #{dit_forward.35} parent=5 // pred_check_branch
      %223 = sbr.rel (%p221) target = $region24
    $region23: #{dit_forward.35} parent=5 // pred_region
      // Predicated region
      $region25: #{dit_forward.35} parent=23 // pred_check
        %p224 = pneg %p52
      $region26: #{dit_forward.35} parent=23 // pred_check_branch
        %226 = sbr.rel (%p224) target = $region28
      $region27: #{dit_forward.35} parent=23 // pred_region
        %s227 = smul.u32 8, %s19
        %p228 = scmp.lt.s32.totalorder %s18, 1
        %s229 = scalar_select %p228, %s18, 1
        %p230 = scmp.lt.s32.totalorder %s227, 7
        %s231 = scalar_select %p230, %s227, 7
        %s232 = smul.addr %s229, 8
        %s233 = sadd.s32 %s231, %s232
        %s234 = smul.addr %s233, 8
        %s235 = scalar_lea.vmem %s0, %s234
        %s236 = smul.u32 8, %s19
      $region28: #{dit_forward.35} parent=23 // pred_fallthru
        _
      // Predicated region
      $region29: #{dit_forward.35} parent=23 // pred_check
        %p237 = pneg %p78
      $region30: #{dit_forward.35} parent=23 // pred_check_branch
        %239 = sbr.rel (%p237) target = $region32
      $region31: #{dit_forward.35} parent=23 // pred_region
        %p240 = scmp.lt.s32.totalorder %s18, 1
        %s241 = scalar_select %p240, %s18, 1
        %s242 = scalar_lea.vmem %s1, %s241
      $region32: #{dit_forward.35} parent=23 // pred_fallthru
        _
      // Predicated region
      $region33: #{dit_forward.35} parent=23 // pred_check
        %p243 = pneg %p104
      $region34: #{dit_forward.35} parent=23 // pred_check_branch
        %245 = sbr.rel (%p243) target = $region36
      $region35: #{dit_forward.35} parent=23 // pred_region
        %p246 = scmp.lt.s32.totalorder %s18, 1
        %s247 = scalar_select %p246, %s18, 1
        %s248 = scalar_lea.vmem %s2, %s247
      $region36: #{dit_forward.35} parent=23 // pred_fallthru
        _
    $region24: #{dit_forward.35} parent=5 // pred_fallthru
      _
    %p249 = scmp.le.s32.totalorder 1, %s11
    %p250 = scmp.lt.s32.totalorder %s11, 3
    %p251 = pnand %p249, %p250
    %p252 = pneg %p251
    // Predicated region
    $region37: #{dit_forward.35} parent=5 // pred_check
      _
    $region38: #{dit_forward.35} parent=5 // pred_check_branch
      %254 = sbr.rel (%p251) target = $region40
    $region39: #{dit_forward.35} parent=5 // pred_region
      %s255 = ssub.s32 %s11, 1
      %s256 = smul.u32 8, %s22
      %p257 = scmp.lt.s32.totalorder %s21, 1
      %s258 = scalar_select %p257, %s21, 1
      %p259 = scmp.lt.s32.totalorder %s256, 7
      %s260 = scalar_select %p259, %s256, 7
      %s261 = smul.addr %s258, 8
      %s262 = sadd.s32 %s260, %s261
      %s263 = smul.addr %s262, 8
      %s264 = scalar_lea.vmem %s0, %s263
      %p265 = pneg %p58
      %p266 = pneg %p55
      %p267 = scmp.lt.s32.totalorder %s21, 1
      %s268 = scalar_select %p267, %s21, 1
      %s269 = scalar_lea.vmem %s1, %s268
      %p270 = pneg %p84
      %p271 = pneg %p81
      %p272 = scmp.lt.s32.totalorder %s21, 1
      %s273 = scalar_select %p272, %s21, 1
      %s274 = scalar_lea.vmem %s2, %s273
      %p275 = pneg %p110
      %p276 = pneg %p107
      %p277 = scmp.lt.s32.totalorder %s23, 0
      %s278 = scalar_select %p277, %s23, 0
      %s279 = smul.addr %s278, 4
      %s280 = scalar_lea.vmem %s3, %s279
      %p281 = pneg %p136
      %p282 = pneg %p133
      %p283 = scmp.lt.s32.totalorder %s23, 0
      %s284 = scalar_select %p283, %s23, 0
      %s285 = scalar_lea.vmem %s4, %s284
      %p286 = pneg %p162
      %p287 = pneg %p159
      %p288 = pneg %p192
      %p289 = pneg %p189
      %s290 = smul.u32 8, %s22
      %p291 = scmp.lt.s32.totalorder %s21, 1
      %s292 = scalar_select %p291, %s21, 1
      %p293 = scmp.lt.s32.totalorder %s290, 7
      %s294 = scalar_select %p293, %s290, 7
      %p295 = scmp.lt.s32.totalorder %s23, 0
      %s296 = scalar_select %p295, %s23, 0
      %s297 = sadd.s32 %s296, %s294
      %s298 = smul.addr %s292, 8
      %s299 = sadd.s32 %s297, %s298
      %s300 = smul.addr %s299, 8
      %s301 = scalar_lea.vmem %s5, %s300
      %s302 = smul.u32 8, %s22
      %p303 = scmp.lt.s32.totalorder %s21, 1
      %s304 = scalar_select %p303, %s21, 1
      %p305 = scmp.lt.s32.totalorder %s302, 7
      %s306 = scalar_select %p305, %s302, 7
      %s307 = smul.addr %s304, 8
      %s308 = sadd.s32 %s306, %s307
      %s309 = smul.addr %s308, 8
      %s310 = scalar_lea.vmem %s0, %s309
      %s311 = smul.u32 8, %s22
      %p312 = scmp.lt.s32.totalorder %s21, 1
      %s313 = scalar_select %p312, %s21, 1
      %s314 = scalar_lea.vmem %s1, %s313
      %p315 = scmp.lt.s32.totalorder %s21, 1
      %s316 = scalar_select %p315, %s21, 1
      %s317 = scalar_lea.vmem %s2, %s316
      %p318 = scmp.lt.s32.totalorder %s23, 0
      %s319 = scalar_select %p318, %s23, 0
      %s320 = smul.addr %s319, 4
      %s321 = scalar_lea.vmem %s3, %s320
      %p322 = scmp.lt.s32.totalorder %s23, 0
      %s323 = scalar_select %p322, %s23, 0
      %s324 = scalar_lea.vmem %s4, %s323
      %s325 = smul.u32 8, %s22
      %p326 = scmp.lt.s32.totalorder %s21, 1
      %s327 = scalar_select %p326, %s21, 1
      %p328 = scmp.lt.s32.totalorder %s325, 7
      %s329 = scalar_select %p328, %s325, 7
      %p330 = scmp.lt.s32.totalorder %s23, 0
      %s331 = scalar_select %p330, %s23, 0
      %s332 = sadd.s32 %s331, %s329
      %s333 = smul.addr %s327, 8
      %s334 = sadd.s32 %s332, %s333
      %s335 = smul.addr %s334, 8
      %s336 = scalar_lea.vmem %s5, %s335
      %s337 = smul.u32 8, %s22
      %v339 = vld [vmem:[%s310] sm:$0xff]
      %v340 = vld [vmem:[%s310 + $0x8] sm:$0xff]
      %v341 = vld [vmem:[%s310 + $0x10] sm:$0xff]
      %v342 = vld [vmem:[%s310 + $0x18] sm:$0xff]
      %v343 = vld [vmem:[%s310 + $0x20] sm:$0xff]
      %v344 = vld [vmem:[%s310 + $0x28] sm:$0xff]
      %v345 = vld [vmem:[%s310 + $0x30] sm:$0xff]
      %v346 = vld [vmem:[%s310 + $0x38] sm:$0xff]
      %vm347 = vcmask 261120
      %v348 = vsel %vm347, %v339, 0.0
      %349 = vadd.xlane.f32.xlu0 %v348
      %v350 = vpop.xlane.xlu0 %349
      %v351 = vsel %vm347, %v340, 0.0
      %352 = vadd.xlane.f32.xlu0 %v351
      %v353 = vpop.xlane.xlu0 %352
      %v354 = vsel %vm347, %v341, 0.0
      %355 = vadd.xlane.f32.xlu0 %v354
      %v356 = vpop.xlane.xlu0 %355
      %v357 = vsel %vm347, %v342, 0.0
      %358 = vadd.xlane.f32.xlu0 %v357
      %v359 = vpop.xlane.xlu0 %358
      %v360 = vsel %vm347, %v343, 0.0
      %361 = vadd.xlane.f32.xlu0 %v360
      %v362 = vpop.xlane.xlu0 %361
      %v363 = vsel %vm347, %v344, 0.0
      %364 = vadd.xlane.f32.xlu0 %v363
      %v365 = vpop.xlane.xlu0 %364
      %v366 = vsel %vm347, %v345, 0.0
      %367 = vadd.xlane.f32.xlu0 %v366
      %v368 = vpop.xlane.xlu0 %367
      %v369 = vsel %vm347, %v346, 0.0
      %370 = vadd.xlane.f32.xlu0 %v369
      %v371 = vpop.xlane.xlu0 %370
      %v372 = vrcp.pop 32.0
      %v373 = vmul.f32 %v350, %v372
      %v374 = vmul.f32 %v353, %v372
      %v375 = vmul.f32 %v356, %v372
      %v376 = vmul.f32 %v359, %v372
      %v377 = vmul.f32 %v362, %v372
      %v378 = vmul.f32 %v365, %v372
      %v379 = vmul.f32 %v368, %v372
      %v380 = vmul.f32 %v371, %v372
      %v381 = vsub.f32 %v339, %v373
      %v382 = vsub.f32 %v340, %v374
      %v383 = vsub.f32 %v341, %v375
      %v384 = vsub.f32 %v342, %v376
      %v385 = vsub.f32 %v343, %v377
      %v386 = vsub.f32 %v344, %v378
      %v387 = vsub.f32 %v345, %v379
      %v388 = vsub.f32 %v346, %v380
      %v389 = vmul.f32 %v381, %v381
      %v390 = vmul.f32 %v382, %v382
      %v391 = vmul.f32 %v383, %v383
      %v392 = vmul.f32 %v384, %v384
      %v393 = vmul.f32 %v385, %v385
      %v394 = vmul.f32 %v386, %v386
      %v395 = vmul.f32 %v387, %v387
      %v396 = vmul.f32 %v388, %v388
      %v397 = vsel %vm347, %v389, 0.0
      %398 = vadd.xlane.f32.xlu0 %v397
      %v399 = vpop.xlane.xlu0 %398
      %v400 = vsel %vm347, %v390, 0.0
      %401 = vadd.xlane.f32.xlu0 %v400
      %v402 = vpop.xlane.xlu0 %401
      %v403 = vsel %vm347, %v391, 0.0
      %404 = vadd.xlane.f32.xlu0 %v403
      %v405 = vpop.xlane.xlu0 %404
      %v406 = vsel %vm347, %v392, 0.0
      %407 = vadd.xlane.f32.xlu0 %v406
      %v408 = vpop.xlane.xlu0 %407
      %v409 = vsel %vm347, %v393, 0.0
      %410 = vadd.xlane.f32.xlu0 %v409
      %v411 = vpop.xlane.xlu0 %410
      %v412 = vsel %vm347, %v394, 0.0
      %413 = vadd.xlane.f32.xlu0 %v412
      %v414 = vpop.xlane.xlu0 %413
      %v415 = vsel %vm347, %v395, 0.0
      %416 = vadd.xlane.f32.xlu0 %v415
      %v417 = vpop.xlane.xlu0 %416
      %v418 = vsel %vm347, %v396, 0.0
      %419 = vadd.xlane.f32.xlu0 %v418
      %v420 = vpop.xlane.xlu0 %419
      %v421 = vmul.f32 %v399, %v372
      %v422 = vmul.f32 %v402, %v372
      %v423 = vmul.f32 %v405, %v372
      %v424 = vmul.f32 %v408, %v372
      %v425 = vmul.f32 %v411, %v372
      %v426 = vmul.f32 %v414, %v372
      %v427 = vmul.f32 %v417, %v372
      %v428 = vmul.f32 %v420, %v372
      %v429 = vadd.f32 %v421, 1e-06
      %v430 = vadd.f32 %v422, 1e-06
      %v431 = vadd.f32 %v423, 1e-06
      %v432 = vadd.f32 %v424, 1e-06
      %v433 = vadd.f32 %v425, 1e-06
      %v434 = vadd.f32 %v426, 1e-06
      %v435 = vadd.f32 %v427, 1e-06
      %v436 = vadd.f32 %v428, 1e-06
      %v437 = vrsqrt.pop %v429
      %v438 = vrsqrt.pop %v430
      %v439 = vrsqrt.pop %v431
      %v440 = vrsqrt.pop %v432
      %v441 = vrsqrt.pop %v433
      %v442 = vrsqrt.pop %v434
      %v443 = vrsqrt.pop %v435
      %v444 = vrsqrt.pop %v436
      %v445 = vmul.f32 %v381, %v437
      %v446 = vmul.f32 %v382, %v438
      %v447 = vmul.f32 %v383, %v439
      %v448 = vmul.f32 %v384, %v440
      %v449 = vmul.f32 %v385, %v441
      %v450 = vmul.f32 %v386, %v442
      %v451 = vmul.f32 %v387, %v443
      %v452 = vmul.f32 %v388, %v444
      %v453 = vld [vmem:[%s317] sm:$0x1]
      %v454 = vadd.f32 %v453, 1.0
      %v456 = vlaneseq
      %v457 = vshrl.u32 %v456, 7
      %v458 = vsub.s32 0, %v457
      %v459 = vrot.slane %v454, %v458
      %v461 = vmul.f32 %v445, %v459
      %v462 = vmul.f32 %v446, %v459
      %v463 = vmul.f32 %v447, %v459
      %v464 = vmul.f32 %v448, %v459
      %v465 = vmul.f32 %v449, %v459
      %v466 = vmul.f32 %v450, %v459
      %v467 = vmul.f32 %v451, %v459
      %v468 = vmul.f32 %v452, %v459
      %v469 = vld [vmem:[%s314] sm:$0x1]
      %v471 = vlaneseq
      %v472 = vshrl.u32 %v471, 7
      %v473 = vsub.s32 0, %v472
      %v474 = vrot.slane %v469, %v473
      %v476 = vadd.f32 %v461, %v474
      %v477 = vadd.f32 %v462, %v474
      %v478 = vadd.f32 %v463, %v474
      %v479 = vadd.f32 %v464, %v474
      %v480 = vadd.f32 %v465, %v474
      %v481 = vadd.f32 %v466, %v474
      %v482 = vadd.f32 %v467, %v474
      %v483 = vadd.f32 %v468, %v474
      %v484 = vpack.c.bf16 %v477, %v476
      %v485 = vpack.c.bf16 %v479, %v478
      %v486 = vpack.c.bf16 %v481, %v480
      %v487 = vpack.c.bf16 %v483, %v482
      %v488 = vld [vmem:[%s321] sm:$0xf]
      %v489 = vld [vmem:[%s321 + $0x4] sm:$0xf]
      %v490 = vld [vmem:[%s321 + $0x8] sm:$0xf]
      %v491 = vld [vmem:[%s321 + $0xc] sm:$0xf]
      %v492 = vld [vmem:[%s324] sm:$0x1]
      %v494 = vlaneseq
      %v495 = vshrl.u32 %v494, 7
      %v496 = vsub.s32 0, %v495
      %v497 = vrot.slane %v492, %v496
      %v503 = vunpack.c.l.b16 %v488
      %v504 = vunpack.c.l.b16 %v489
      %v505 = vunpack.c.l.b16 %v490
      %v506 = vunpack.c.l.b16 %v491
      %v507 = vpack.c.b16 %v504, %v503
      %v508 = vpack.c.b16 %v506, %v505
      %v512 = vsel %vm347, %v484, 0
      %v515 = vsel %vm347, %v485, 0
      %v518 = vsel %vm347, %v486, 0
      %v521 = vsel %vm347, %v487, 0
      %523 = vmatprep.subr.bf16.mxu0 0
      %524 = vmatpush1.bf16.msra.mxu0 0
      %525 = vmatprep.subr.bf16.mxu0 0
      %526 = vmatpush1.bf16.msra.mxu0 0
      %527 = vmatprep.subr.bf16.mxu0 0
      %528 = vmatpush1.bf16.msra.mxu0 0
      %529 = vmatprep.subr.bf16.mxu0 0
      %530 = vmatpush1.bf16.msra.mxu0 0
      %531 = vmatprep.subr.bf16.mxu0 0
      %532 = vmatpush1.bf16.msra.mxu0 0
      %533 = vmatprep.subr.bf16.mxu0 0
      %534 = vmatpush1.bf16.msra.mxu0 0
      %535 = vmatprep.subr.bf16.mxu0 0
      %536 = vmatpush1.bf16.msra.mxu0 %v508
      %537 = vmatprep.subr.bf16.mxu0 0
      %538 = vmatpush1.bf16.msra.mxu0 %v507
      %539 = vmatprep.subr.bf16.mxu0 0
      %540 = vmatpush2.bf16.msra.mxu0 0
      %541 = vmatprep.subr.bf16.mxu0 0
      %542 = vmatpush2.bf16.msra.mxu0 0
      %543 = vmatprep.subr.bf16.mxu0 0
      %544 = vmatpush2.bf16.msra.mxu0 0
      %545 = vmatprep.subr.bf16.mxu0 0
      %546 = vmatpush2.bf16.msra.mxu0 0
      %547 = vmatprep.subr.bf16.mxu0 0
      %548 = vmatpush2.bf16.msra.mxu0 0
      %549 = vmatprep.subr.bf16.mxu0 0
      %550 = vmatpush2.bf16.msra.mxu0 0
      %551 = vmatprep.subr.bf16.mxu0 0
      %552 = vmatpush2.bf16.msra.mxu0 0
      %553 = vmatprep.subr.bf16.mxu0 0
      %554 = vmatpush2.bf16.msra.mxu0 0
      %555 = vmatprep.mubr.bf16.mxu0 0
      %556 = vmatmul.mubr.bf16.gmra.mxu0 %v512
      %v557 = vpop.f32.mrf.mxu0
      %v558 = vadd.f32 %v497, %v557
      %v559 = vpop.f32.mrf.mxu0
      %v560 = vpop.f32.mrf.mxu0
      %v561 = vadd.f32 %v497, %v560
      %v562 = vpop.f32.mrf.mxu0
      %563 = vmatprep.mubr.bf16.mxu0 0
      %564 = vmatmul.mubr.bf16.gmra.mxu0 %v515
      %v565 = vpop.f32.mrf.mxu0
      %v566 = vadd.f32 %v497, %v565
      %v567 = vpop.f32.mrf.mxu0
      %v568 = vpop.f32.mrf.mxu0
      %v569 = vadd.f32 %v497, %v568
      %v570 = vpop.f32.mrf.mxu0
      %571 = vmatprep.mubr.bf16.mxu0 0
      %572 = vmatmul.mubr.bf16.gmra.mxu0 %v518
      %v573 = vpop.f32.mrf.mxu0
      %v574 = vadd.f32 %v497, %v573
      %v575 = vpop.f32.mrf.mxu0
      %v576 = vpop.f32.mrf.mxu0
      %v577 = vadd.f32 %v497, %v576
      %v578 = vpop.f32.mrf.mxu0
      %579 = vmatprep.mubr.bf16.mxu0 0
      %580 = vmatmul.mubr.bf16.gmra.mxu0 %v521
      %v581 = vpop.f32.mrf.mxu0
      %v582 = vadd.f32 %v497, %v581
      %v583 = vpop.f32.mrf.mxu0
      %v584 = vpop.f32.mrf.mxu0
      %v585 = vadd.f32 %v497, %v584
      %v586 = vpop.f32.mrf.mxu0
      %587 = vdwg.mxu0
      %vm588 = vcmask 130048
      %589 = vst.msk [vmem:[%s336] sm:$0xff] %vm588, %v558
      %590 = vst.msk [vmem:[%s336 + $0x8] sm:$0xff] %vm588, %v561
      %591 = vst.msk [vmem:[%s336 + $0x10] sm:$0xff] %vm588, %v566
      %592 = vst.msk [vmem:[%s336 + $0x18] sm:$0xff] %vm588, %v569
      %593 = vst.msk [vmem:[%s336 + $0x20] sm:$0xff] %vm588, %v574
      %594 = vst.msk [vmem:[%s336 + $0x28] sm:$0xff] %vm588, %v577
      %595 = vst.msk [vmem:[%s336 + $0x30] sm:$0xff] %vm588, %v582
      %596 = vst.msk [vmem:[%s336 + $0x38] sm:$0xff] %vm588, %v585
      %s597 = smul.u32 8, %s22
      %p598 = scmp.lt.s32.totalorder %s21, 1
      %s599 = scalar_select %p598, %s21, 1
      %p600 = scmp.lt.s32.totalorder %s597, 7
      %s601 = scalar_select %p600, %s597, 7
      %p602 = scmp.lt.s32.totalorder %s23, 0
      %s603 = scalar_select %p602, %s23, 0
      %s604 = sadd.s32 %s603, %s601
      %s605 = smul.addr %s599, 8
      %s606 = sadd.s32 %s604, %s605
      %s607 = smul.addr %s606, 8
      %s608 = scalar_lea.vmem %s5, %s607
      // Predicated region
      $region41: #{dit_forward.35} parent=39 // pred_check
        %p609 = pneg %p189
      $region42: #{dit_forward.35} parent=39 // pred_check_branch
        %611 = sbr.rel (%p609) target = $region44
      $region43: #{dit_forward.35} parent=39 // pred_region
        %s612 = smul.u32 8, %s22
      $region44: #{dit_forward.35} parent=39 // pred_fallthru
        _
    $region40: #{dit_forward.35} parent=5 // pred_fallthru
      _
    %p613 = scmp.le.s32.totalorder 2, %s11
    // Predicated region
    $region45: #{dit_forward.35} parent=5 // pred_check
      %p614 = pneg %p613
    $region46: #{dit_forward.35} parent=5 // pred_check_branch
      %616 = sbr.rel (%p614) target = $region48
    $region47: #{dit_forward.35} parent=5 // pred_region
      %s617 = ssub.s32 %s11, 2
      // Predicated region
      $region49: #{dit_forward.35} parent=47 // pred_check
        %p618 = pneg %p195
      $region50: #{dit_forward.35} parent=47 // pred_check_branch
        %620 = sbr.rel (%p618) target = $region52
      $region51: #{dit_forward.35} parent=47 // pred_region
        %s621 = smul.u32 8, %s25
        %p622 = scmp.lt.s32.totalorder %s24, 1
        %s623 = scalar_select %p622, %s24, 1
        %p624 = scmp.lt.s32.totalorder %s621, 7
        %s625 = scalar_select %p624, %s621, 7
        %p626 = scmp.lt.s32.totalorder %s26, 0
        %s627 = scalar_select %p626, %s26, 0
        %s628 = sadd.s32 %s627, %s625
        %s629 = smul.addr %s623, 8
        %s630 = sadd.s32 %s628, %s629
        %s631 = smul.addr %s630, 8
        %s632 = scalar_lea.vmem %s5, %s631
      $region52: #{dit_forward.35} parent=47 // pred_fallthru
        _
    $region48: #{dit_forward.35} parent=5 // pred_fallthru
      _
  $region6: #{dit_forward.35} parent=0 // loop_footer
    %s15 = sadd.s32 1, %s11
  $region7: #{dit_forward.35} parent=0 // loop_footer_branch
    %10 = sbr.rel target = $region3
  $region8: #{dit_forward.35} parent=0 // loop_exit
    _

</llo_original>
